<compile_context>
chip_gen: v5e
topology: v5e:2x2
jax: 0.10.0
libtpu: 0.0.40
codegen_flags: <defaults>
</compile_context>

<pallas_src>
import functools

import jax
import jax.numpy as jnp
from jax.experimental import pallas as pl
from jax.experimental.pallas import tpu as pltpu


_COMPUTE_DTYPE = jnp.bfloat16    # MXU-native input dtype; accumulation stays f32
_TM_SINGLE_MAX = 2048            # M at or below this: latency-regime block path
_SPLIT_M_MIN = 256               # latency path: 2-way M grid (v7x megacore) above this
_TM_TRAIN = 1024                 # M tile for training-sized conv GEMMs (was 256)
_HEAD_B_SINGLE_MAX = 512         # B above this: B-tiled MLP head
_TB_HEAD = 256                   # B tile for the training-sized MLP head
_TRAIN_VMEM_LIMIT = 48 * 1024 * 1024   # explicit scoped-VMEM cap for tiled paths


# ----------------------------- Pallas kernels ------------------------------ #
def _gemm_bias_act_kernel(x_ref, w_ref, b_ref, o_ref, *, relu):
    """o = [relu](x @ w + b) on one VMEM tile; MXU matmul, f32 accumulation."""
    acc = jnp.dot(x_ref[...], w_ref[...], preferred_element_type=jnp.float32)
    acc = acc + b_ref[...]                       # b is (1, N) f32 -> broadcast over M
    if relu:
        acc = jnp.maximum(acc, 0.0)
    o_ref[...] = acc.astype(o_ref.dtype)


def _mlp_head_kernel(x_ref, w1_ref, b1_ref, w2_ref, b2_ref, o_ref):
    """Fused fc1 + ReLU + fc2: the hidden activation never leaves VMEM/vregs."""
    h = jnp.dot(x_ref[...], w1_ref[...], preferred_element_type=jnp.float32)
    h = jnp.maximum(h + b1_ref[...], 0.0)
    out = jnp.dot(h.astype(w2_ref.dtype), w2_ref[...],
                  preferred_element_type=jnp.float32)
    o_ref[...] = (out + b2_ref[...]).astype(o_ref.dtype)


def _mlp_head_split_kernel(x_ref, w1_ref, b1_ref, w2_ref, o_ref):
    """One hidden-dim shard of fc1+ReLU+fc2; writes a partial (B, A) block.

    q = sum_shards relu(x @ w1[:, shard] + b1[shard]) @ w2[shard, :]  (+ b2
    added once outside).  Splitting H is exact because ReLU is elementwise
    over hidden units."""
    h = jnp.dot(x_ref[...], w1_ref[...], preferred_element_type=jnp.float32)
    h = jnp.maximum(h + b1_ref[...], 0.0)
    partial = jnp.dot(h.astype(w2_ref.dtype), w2_ref[...],
                      preferred_element_type=jnp.float32)
    o_ref[0, :, :] = partial.astype(o_ref.dtype)


# ------------------------------ GEMM wrappers ------------------------------ #
def _gemm_cost(m, k, n, in_itemsize, out_itemsize):
    return pl.CostEstimate(
        flops=2 * m * k * n,
        transcendentals=0,
        bytes_accessed=(m * k + k * n) * in_itemsize + n * 4 + m * n * out_itemsize)


def pallas_linear(x, w, b2, *, relu=False, out_dtype=None):
    """x: [M, K] bf16, w: [K, N] bf16, b2: [1, N] f32  ->  [M, N]."""
    M, K = x.shape
    K2, N = w.shape
    assert K == K2, (K, K2)
    out_dtype = x.dtype if out_dtype is None else out_dtype
    kernel = functools.partial(_gemm_bias_act_kernel, relu=relu)
    in_sz = x.dtype.itemsize
    out_sz = jnp.dtype(out_dtype).itemsize

    if M <= _TM_SINGLE_MAX:
        # Latency regime (inference-sized patch matrices):
        #   * pad rows to a multiple of 16 (bf16 sublane packing),
        #   * for the bigger GEMMs use a 2-way "parallel" M grid so both v7x
        #     TensorCores work (harmless two pipelined steps on v5e/v6e).
        # Padded rows produce relu(bias) garbage that is sliced off below and
        # never accumulated over — do not sum over the padded output.
        n_m = 2 if M >= _SPLIT_M_MIN else 1
        align = 16 * n_m
        Mp = ((M + align - 1) // align) * align
        xp = jnp.pad(x, ((0, Mp - M), (0, 0))) if Mp != M else x
        tm = Mp // n_m
        y = pl.pallas_call(
            kernel,
            out_shape=jax.ShapeDtypeStruct((Mp, N), out_dtype),
            grid=(n_m,),
            in_specs=[
                pl.BlockSpec((tm, K), lambda i: (i, 0)),
                pl.BlockSpec((K, N), lambda i: (0, 0)),
                pl.BlockSpec((1, N), lambda i: (0, 0)),
            ],
            out_specs=pl.BlockSpec((tm, N), lambda i: (i, 0)),
            compiler_params=pltpu.CompilerParams(
                dimension_semantics=("parallel",) if n_m > 1 else ("arbitrary",)),
            cost_estimate=_gemm_cost(Mp, K, N, in_sz, out_sz),
        )(xp, w, b2)
        return y[:M] if Mp != M else y

    # Training-sized M: tile over M (TM=1024), weights/bias resident, megacore
    # 'parallel'; explicit VMEM limit so v5e's 16 MiB scoped default is not the cap.
    Mp = ((M + _TM_TRAIN - 1) // _TM_TRAIN) * _TM_TRAIN
    xp = jnp.pad(x, ((0, Mp - M), (0, 0))) if Mp != M else x
    y = pl.pallas_call(
        kernel,
        out_shape=jax.ShapeDtypeStruct((Mp, N), out_dtype),
        grid=(Mp // _TM_TRAIN,),
        in_specs=[
            pl.BlockSpec((_TM_TRAIN, K), lambda i: (i, 0)),
            pl.BlockSpec((K, N), lambda i: (0, 0)),
            pl.BlockSpec((1, N), lambda i: (0, 0)),
        ],
        out_specs=pl.BlockSpec((_TM_TRAIN, N), lambda i: (i, 0)),
        compiler_params=pltpu.CompilerParams(
            dimension_semantics=("parallel",),
            vmem_limit_bytes=_TRAIN_VMEM_LIMIT),
        cost_estimate=_gemm_cost(Mp, K, N, in_sz, out_sz),
    )(xp, w, b2)
    return y[:M] if Mp != M else y


def pallas_mlp_head(x, w1, b1, w2, b2):
    """q = relu(x @ w1 + b1) @ w2 + b2.   x: [B, K] bf16 -> [B, N] f32."""
    B, K = x.shape
    K1, H = w1.shape
    H2, N = w2.shape
    assert K == K1 and H == H2, (x.shape, w1.shape, w2.shape)
    cost = pl.CostEstimate(
        flops=2 * B * K * H + 2 * B * H * N,
        transcendentals=0,
        bytes_accessed=(B * K + K * H + H * N) * 2 + (H + N) * 4 + B * N * 4)

    if B <= _HEAD_B_SINGLE_MAX:
        if H % 2 == 0:
            # 2-way hidden-dim shard: halves the per-core fc1 weight DMA on
            # v7x (each TC loads 1.18 MB instead of 2.36 MB); ~neutral on 1-TC
            # v5e/v6e.  Each shard writes a partial (B, N) f32 block.
            Hh = H // 2
            partials = pl.pallas_call(
                _mlp_head_split_kernel,
                out_shape=jax.ShapeDtypeStruct((2, B, N), jnp.float32),
                grid=(2,),
                in_specs=[
                    pl.BlockSpec((B, K), lambda i: (0, 0)),
                    pl.BlockSpec((K, Hh), lambda i: (0, i)),
                    pl.BlockSpec((1, Hh), lambda i: (0, i)),
                    pl.BlockSpec((Hh, N), lambda i: (i, 0)),
                ],
                out_specs=pl.BlockSpec((1, B, N), lambda i: (i, 0, 0)),
                compiler_params=pltpu.CompilerParams(
                    dimension_semantics=("parallel",)),
                cost_estimate=cost,
            )(x, w1, b1, w2)
            return jnp.sum(partials, axis=0) + b2
        # Fallback (odd hidden dim): single fused block.
        return pl.pallas_call(
            _mlp_head_kernel,
            out_shape=jax.ShapeDtypeStruct((B, N), jnp.float32),
            grid=(1,),
            in_specs=[
                pl.BlockSpec((B, K), lambda i: (0, 0)),
                pl.BlockSpec((K, H), lambda i: (0, 0)),
                pl.BlockSpec((1, H), lambda i: (0, 0)),
                pl.BlockSpec((H, N), lambda i: (0, 0)),
                pl.BlockSpec((1, N), lambda i: (0, 0)),
            ],
            out_specs=pl.BlockSpec((B, N), lambda i: (0, 0)),
            compiler_params=pltpu.CompilerParams(
                dimension_semantics=("arbitrary",)),
            cost_estimate=cost,
        )(x, w1, b1, w2, b2)

    # Training-sized batch: tile over B (weights/biases resident), megacore
    # 'parallel', explicit VMEM cap.  Padded rows are sliced off (never summed).
    Bp = ((B + _TB_HEAD - 1) // _TB_HEAD) * _TB_HEAD
    xp = jnp.pad(x, ((0, Bp - B), (0, 0))) if Bp != B else x
    q = pl.pallas_call(
        _mlp_head_kernel,
        out_shape=jax.ShapeDtypeStruct((Bp, N), jnp.float32),
        grid=(Bp // _TB_HEAD,),
        in_specs=[
            pl.BlockSpec((_TB_HEAD, K), lambda i: (i, 0)),
            pl.BlockSpec((K, H), lambda i: (0, 0)),
            pl.BlockSpec((1, H), lambda i: (0, 0)),
            pl.BlockSpec((H, N), lambda i: (0, 0)),
            pl.BlockSpec((1, N), lambda i: (0, 0)),
        ],
        out_specs=pl.BlockSpec((_TB_HEAD, N), lambda i: (i, 0)),
        compiler_params=pltpu.CompilerParams(
            dimension_semantics=("parallel",),
            vmem_limit_bytes=_TRAIN_VMEM_LIMIT),
        cost_estimate=cost,
    )(xp, w1, b1, w2, b2)
    return q[:B] if Bp != B else q


# ------------------------------ conv (NHWC) -------------------------------- #
def _im2col_nhwc(x, kh, kw, stride):
    """x: [B, H, W, C] -> ([B*Ho*Wo, kh*kw*C], Ho, Wo).

    Patch features ordered (ki, kj, c) — no transposes needed in NHWC; matches
    the weight matrix built by prepare_params (w.transpose(2,3,1,0).reshape).
    TODO(synk): pull this patch extraction inside the kernel (full-network
    fusion); kept as XLA static-slice+concat glue to keep lowering risk low."""
    B, H, W, C = x.shape
    Ho = (H - kh) // stride + 1
    Wo = (W - kw) // stride + 1
    cols = []
    for i in range(kh):
        for j in range(kw):
            cols.append(x[:, i:i + stride * Ho:stride, j:j + stride * Wo:stride, :])
    p = jnp.concatenate(cols, axis=-1)            # [B, Ho, Wo, kh*kw*C]
    return p.reshape(B * Ho * Wo, kh * kw * C), Ho, Wo


def conv2d_nhwc(x, wmat, b2, kh, kw, stride, *, relu=True):
    """x: [B, H, W, C] bf16, wmat: [kh*kw*C, Cout] bf16, b2: [1, Cout] f32."""
    B = x.shape[0]
    patches, Ho, Wo = _im2col_nhwc(x, kh, kw, stride)
    y = pallas_linear(patches, wmat, b2, relu=relu, out_dtype=x.dtype)
    return y.reshape(B, Ho, Wo, wmat.shape[1])


# ------------------------------- QNetwork ---------------------------------- #
_CONV_LAYERS = (("conv1", 8, 4), ("conv2", 4, 2), ("conv3", 3, 1))


def _conv_out(s, k, st):
    return (s - k) // st + 1


def _conv_trunk_hw(input_size):
    h = _conv_out(_conv_out(_conv_out(input_size[0], 8, 4), 4, 2), 3, 1)
    w = _conv_out(_conv_out(_conv_out(input_size[1], 8, 4), 4, 2), 3, 1)
    return h, w


def init_qnetwork_params(key, action_size, in_channels=4, input_size=(80, 80)):
    """PyTorch-layout params with the default U(-1/sqrt(fan_in), +) init."""
    def u(k, shape, fan_in):
        bound = 1.0 / (fan_in ** 0.5)
        return jax.random.uniform(k, shape, jnp.float32, -bound, bound)

    ks = jax.random.split(key, 10)
    h3, w3 = _conv_trunk_hw(input_size)
    output_dim = 64 * h3 * w3
    params = {
        "conv1_w": u(ks[0], (32, in_channels, 8, 8), in_channels * 8 * 8),
        "conv1_b": u(ks[1], (32,), in_channels * 8 * 8),
        "conv2_w": u(ks[2], (64, 32, 4, 4), 32 * 4 * 4),
        "conv2_b": u(ks[3], (64,), 32 * 4 * 4),
        "conv3_w": u(ks[4], (64, 64, 3, 3), 64 * 3 * 3),
        "conv3_b": u(ks[5], (64,), 64 * 3 * 3),
        "fc1_w": u(ks[6], (512, output_dim), output_dim),   # torch [out, in]
        "fc1_b": u(ks[7], (512,), output_dim),
        "fc2_w": u(ks[8], (action_size, 512), 512),          # torch [out, in]
        "fc2_b": u(ks[9], (action_size,), 512),
    }
    return params, output_dim


def prepare_params(torch_params, input_size=(80, 80)):
    """Convert PyTorch-layout params to the kernel layout (one-time cost):
       * conv weights  [Cout,Cin,kh,kw] -> [kh*kw*Cin, Cout]   (bf16)
       * fc weights    [out,in]         -> [in, out]           (bf16),
         with fc1 rows permuted from NCHW-flatten to NHWC-flatten order
       * biases -> (1, N) f32."""
    tp = torch_params

    def conv_wmat(w):
        cout, cin, kh, kw = w.shape
        return (jnp.transpose(w, (2, 3, 1, 0))
                .reshape(kh * kw * cin, cout).astype(_COMPUTE_DTYPE))

    def bias2d(b):
        return b.reshape(1, -1).astype(jnp.float32)

    h3, w3 = _conv_trunk_hw(input_size)
    c3 = tp["conv3_w"].shape[0]
    k_total = c3 * h3 * w3
    assert tp["fc1_w"].shape[1] == k_total, (tp["fc1_w"].shape, k_total)
    # perm[k_nhwc] = k_nchw, where k_nchw = c*h3*w3 + h*w3 + w, k_nhwc = (h*w3+w)*c3 + c
    idx = jnp.arange(k_total).reshape(c3, h3, w3)
    perm = jnp.transpose(idx, (1, 2, 0)).reshape(-1)

    return {
        "conv1_w": conv_wmat(tp["conv1_w"]), "conv1_b": bias2d(tp["conv1_b"]),
        "conv2_w": conv_wmat(tp["conv2_w"]), "conv2_b": bias2d(tp["conv2_b"]),
        "conv3_w": conv_wmat(tp["conv3_w"]), "conv3_b": bias2d(tp["conv3_b"]),
        "fc1_w": tp["fc1_w"].T[perm, :].astype(_COMPUTE_DTYPE),
        "fc1_b": bias2d(tp["fc1_b"]),
        "fc2_w": tp["fc2_w"].T.astype(_COMPUTE_DTYPE),
        "fc2_b": bias2d(tp["fc2_b"]),
    }


def qnetwork_forward(params, state):
    """state: [B, C, H, W] f32 (NCHW, as in the PyTorch module) -> [B, A] f32."""
    x = jnp.transpose(state.astype(_COMPUTE_DTYPE), (0, 2, 3, 1))   # NHWC, once
    for name, k, s in _CONV_LAYERS:
        x = conv2d_nhwc(x, params[name + "_w"], params[name + "_b"], k, k, s)
    B = x.shape[0]
    x = x.reshape(B, -1)            # NHWC flatten; fc1_w rows were permuted to match
    return pallas_mlp_head(x, params["fc1_w"], params["fc1_b"],
                           params["fc2_w"], params["fc2_b"])


# ------------------------- pure-JAX reference check ------------------------ #
def qnetwork_reference(torch_params, state, compute_dtype=_COMPUTE_DTYPE):
    """Mirrors the PyTorch forward (and the kernel's bf16 rounding points)."""
    p = torch_params

    def conv(x, w, b, stride):
        y = jax.lax.conv_general_dilated(
            x, w.astype(compute_dtype), (stride, stride), "VALID",
            dimension_numbers=("NCHW", "OIHW", "NCHW"),
            preferred_element_type=jnp.float32)
        return jnp.maximum(y + b.reshape(1, -1, 1, 1), 0.0).astype(compute_dtype)

    x = state.astype(compute_dtype)
    x = conv(x, p["conv1_w"], p["conv1_b"], 4)
    x = conv(x, p["conv2_w"], p["conv2_b"], 2)
    x = conv(x, p["conv3_w"], p["conv3_b"], 1)
    x = x.reshape(x.shape[0], -1)                         # NCHW flatten, like torch
    h = jnp.dot(x, p["fc1_w"].T.astype(compute_dtype),
                preferred_element_type=jnp.float32) + p["fc1_b"]
    h = jnp.maximum(h, 0.0).astype(compute_dtype)
    q = jnp.dot(h, p["fc2_w"].T.astype(compute_dtype),
                preferred_element_type=jnp.float32) + p["fc2_b"]
    return q


if __name__ == "__main__":
    key = jax.random.PRNGKey(0)
    k_params, k_input = jax.random.split(key)

    batch = 2
    in_channels = 4
    input_size = (80, 80)            # module default: 80 -> 19 -> 8 -> 6 spatial
    action_size = 6

    torch_params, output_dim = init_qnetwork_params(
        k_params, action_size, in_channels=in_channels, input_size=input_size)
    assert output_dim == 64 * 6 * 6  # matches torch _compute_output_dim
    params = prepare_params(torch_params, input_size=input_size)

    state = jax.random.normal(
        k_input, (batch, in_channels, *input_size), dtype=jnp.float32)

    fwd = jax.jit(qnetwork_forward)
    q_values = jax.block_until_ready(fwd(params, state))

    assert q_values.shape == (batch, action_size), q_values.shape
    assert q_values.dtype == jnp.float32

    # Correctness check vs. a pure-JAX reference of the PyTorch module
    # (same bf16 rounding points; remaining diff is accumulation order only).
    q_ref = jax.jit(qnetwork_reference)(torch_params, state)
    assert jnp.allclose(q_values, q_ref.astype(jnp.float32), rtol=2e-2, atol=5e-3), (
        float(jnp.max(jnp.abs(q_values - q_ref))))

    print("KERNEL_OK")
</pallas_src>

<mosaic_0001>
module attributes {stable_mosaic.version = 11 : i64} {
  func.func @_gemm_bias_act_kernel(%arg0: i32, %arg1: memref<368x256xbf16, #tpu.memory_space<vmem>>, %arg2: memref<256x32xbf16, #tpu.memory_space<vmem>>, %arg3: memref<1x32xf32, #tpu.memory_space<vmem>>, %arg4: memref<368x32xbf16, #tpu.memory_space<vmem>>) attributes {dimension_semantics = [#tpu.dimension_semantics<parallel>], iteration_bounds = array<i64: 2>, scalar_prefetch = 0 : i64, scratch_operands = 0 : i64, tpu.core_type = #tpu.core_type<tc>, window_params = [{transform_indices = @transform_0, window_bounds = array<i64: 368, 256>}, {pipeline_mode = #tpu.pipeline_mode<synchronous>, transform_indices = @transform_1, window_bounds = array<i64: 256, 32>}, {pipeline_mode = #tpu.pipeline_mode<synchronous>, transform_indices = @transform_2, window_bounds = array<i64: 1, 32>}, {transform_indices = @transform_3, window_bounds = array<i64: 368, 32>}]} {
    %c0 = arith.constant 0 : index
    %c0_0 = arith.constant 0 : index
    %0 = vector.load %arg1[%c0, %c0_0] : memref<368x256xbf16, #tpu.memory_space<vmem>>, vector<368x256xbf16>
    %c0_1 = arith.constant 0 : index
    %c0_2 = arith.constant 0 : index
    %1 = vector.load %arg2[%c0_1, %c0_2] : memref<256x32xbf16, #tpu.memory_space<vmem>>, vector<256x32xbf16>
    %cst = arith.constant dense<0.000000e+00> : vector<368x32xf32>
    %2 = tpu.matmul %0, %1, %cst {dimension_numbers = #tpu.dot_dimension_numbers<[1], [0], [0], [1], [0, 0, 1, 1], [], []>} : vector<368x256xbf16>, vector<256x32xbf16>, vector<368x32xf32> -> vector<368x32xf32>
    %c0_3 = arith.constant 0 : index
    %c0_4 = arith.constant 0 : index
    %3 = vector.load %arg3[%c0_3, %c0_4] : memref<1x32xf32, #tpu.memory_space<vmem>>, vector<1x32xf32>
    %4 = vector.broadcast %3 : vector<1x32xf32> to vector<368x32xf32>
    %5 = arith.addf %2, %4 : vector<368x32xf32>
    %cst_5 = arith.constant 0.000000e+00 : f32
    %6 = vector.broadcast %cst_5 : f32 to vector<368x32xf32>
    %7 = arith.maximumf %5, %6 : vector<368x32xf32>
    %8 = arith.truncf %7 : vector<368x32xf32> to vector<368x32xbf16>
    %c0_6 = arith.constant 0 : index
    %c0_7 = arith.constant 0 : index
    %9 = vector.load %arg4[%c0_6, %c0_7] : memref<368x32xbf16, #tpu.memory_space<vmem>>, vector<368x32xbf16>
    tpu.vector_store %arg4[%c0_6, %c0_7], %8 {strides = array<i32>} : memref<368x32xbf16, #tpu.memory_space<vmem>>, vector<368x32xbf16>,
    return
  }
  func.func @transform_0(%arg0: i32) -> (i32, i32) {
    %c0_i32 = arith.constant 0 : i32
    %c0_i32_0 = arith.constant 0 : i32
    return %arg0, %c0_i32 : i32, i32
  }
  func.func @transform_1(%arg0: i32) -> (i32, i32) {
    %c0_i32 = arith.constant 0 : i32
    %c0_i32_0 = arith.constant 0 : i32
    %c0_i32_1 = arith.constant 0 : i32
    return %c0_i32, %c0_i32_0 : i32, i32
  }
  func.func @transform_2(%arg0: i32) -> (i32, i32) {
    %c0_i32 = arith.constant 0 : i32
    %c0_i32_0 = arith.constant 0 : i32
    %c0_i32_1 = arith.constant 0 : i32
    return %c0_i32, %c0_i32_0 : i32, i32
  }
  func.func @transform_3(%arg0: i32) -> (i32, i32) {
    %c0_i32 = arith.constant 0 : i32
    %c0_i32_0 = arith.constant 0 : i32
    return %arg0, %c0_i32 : i32, i32
  }
}

module attributes {stable_mosaic.version = 11 : i64} {
  func.func @_gemm_bias_act_kernel(%arg0: i32, %arg1: memref<128x512xbf16, #tpu.memory_space<vmem>>, %arg2: memref<512x64xbf16, #tpu.memory_space<vmem>>, %arg3: memref<1x64xf32, #tpu.memory_space<vmem>>, %arg4: memref<128x64xbf16, #tpu.memory_space<vmem>>) attributes {dimension_semantics = [#tpu.dimension_semantics<arbitrary>], iteration_bounds = array<i64: 1>, scalar_prefetch = 0 : i64, scratch_operands = 0 : i64, tpu.core_type = #tpu.core_type<tc>, window_params = [{transform_indices = @transform_0, window_bounds = array<i64: 128, 512>}, {pipeline_mode = #tpu.pipeline_mode<synchronous>, transform_indices = @transform_1, window_bounds = array<i64: 512, 64>}, {pipeline_mode = #tpu.pipeline_mode<synchronous>, transform_indices = @transform_2, window_bounds = array<i64: 1, 64>}, {transform_indices = @transform_3, window_bounds = array<i64: 128, 64>}]} {
    %c0 = arith.constant 0 : index
    %c0_0 = arith.constant 0 : index
    %0 = vector.load %arg1[%c0, %c0_0] : memref<128x512xbf16, #tpu.memory_space<vmem>>, vector<128x512xbf16>
    %c0_1 = arith.constant 0 : index
    %c0_2 = arith.constant 0 : index
    %1 = vector.load %arg2[%c0_1, %c0_2] : memref<512x64xbf16, #tpu.memory_space<vmem>>, vector<512x64xbf16>
    %cst = arith.constant dense<0.000000e+00> : vector<128x64xf32>
    %2 = tpu.matmul %0, %1, %cst {dimension_numbers = #tpu.dot_dimension_numbers<[1], [0], [0], [1], [0, 0, 1, 1], [], []>} : vector<128x512xbf16>, vector<512x64xbf16>, vector<128x64xf32> -> vector<128x64xf32>
    %c0_3 = arith.constant 0 : index
    %c0_4 = arith.constant 0 : index
    %3 = vector.load %arg3[%c0_3, %c0_4] : memref<1x64xf32, #tpu.memory_space<vmem>>, vector<1x64xf32>
    %4 = vector.broadcast %3 : vector<1x64xf32> to vector<128x64xf32>
    %5 = arith.addf %2, %4 : vector<128x64xf32>
    %cst_5 = arith.constant 0.000000e+00 : f32
    %6 = vector.broadcast %cst_5 : f32 to vector<128x64xf32>
    %7 = arith.maximumf %5, %6 : vector<128x64xf32>
    %8 = arith.truncf %7 : vector<128x64xf32> to vector<128x64xbf16>
    %c0_6 = arith.constant 0 : index
    %c0_7 = arith.constant 0 : index
    %9 = vector.load %arg4[%c0_6, %c0_7] : memref<128x64xbf16, #tpu.memory_space<vmem>>, vector<128x64xbf16>
    tpu.vector_store %arg4[%c0_6, %c0_7], %8 {strides = array<i32>} : memref<128x64xbf16, #tpu.memory_space<vmem>>, vector<128x64xbf16>,
    return
  }
  func.func @transform_0(%arg0: i32) -> (i32, i32) {
    %c0_i32 = arith.constant 0 : i32
    %c0_i32_0 = arith.constant 0 : i32
    return %arg0, %c0_i32 : i32, i32
  }
  func.func @transform_1(%arg0: i32) -> (i32, i32) {
    %c0_i32 = arith.constant 0 : i32
    %c0_i32_0 = arith.constant 0 : i32
    %c0_i32_1 = arith.constant 0 : i32
    return %c0_i32, %c0_i32_0 : i32, i32
  }
  func.func @transform_2(%arg0: i32) -> (i32, i32) {
    %c0_i32 = arith.constant 0 : i32
    %c0_i32_0 = arith.constant 0 : i32
    %c0_i32_1 = arith.constant 0 : i32
    return %c0_i32, %c0_i32_0 : i32, i32
  }
  func.func @transform_3(%arg0: i32) -> (i32, i32) {
    %c0_i32 = arith.constant 0 : i32
    %c0_i32_0 = arith.constant 0 : i32
    return %arg0, %c0_i32 : i32, i32
  }
}

module attributes {stable_mosaic.version = 11 : i64} {
  func.func @_gemm_bias_act_kernel(%arg0: i32, %arg1: memref<80x576xbf16, #tpu.memory_space<vmem>>, %arg2: memref<576x64xbf16, #tpu.memory_space<vmem>>, %arg3: memref<1x64xf32, #tpu.memory_space<vmem>>, %arg4: memref<80x64xbf16, #tpu.memory_space<vmem>>) attributes {dimension_semantics = [#tpu.dimension_semantics<arbitrary>], iteration_bounds = array<i64: 1>, scalar_prefetch = 0 : i64, scratch_operands = 0 : i64, tpu.core_type = #tpu.core_type<tc>, window_params = [{transform_indices = @transform_0, window_bounds = array<i64: 80, 576>}, {pipeline_mode = #tpu.pipeline_mode<synchronous>, transform_indices = @transform_1, window_bounds = array<i64: 576, 64>}, {pipeline_mode = #tpu.pipeline_mode<synchronous>, transform_indices = @transform_2, window_bounds = array<i64: 1, 64>}, {transform_indices = @transform_3, window_bounds = array<i64: 80, 64>}]} {
    %c0 = arith.constant 0 : index
    %c0_0 = arith.constant 0 : index
    %0 = vector.load %arg1[%c0, %c0_0] : memref<80x576xbf16, #tpu.memory_space<vmem>>, vector<80x576xbf16>
    %c0_1 = arith.constant 0 : index
    %c0_2 = arith.constant 0 : index
    %1 = vector.load %arg2[%c0_1, %c0_2] : memref<576x64xbf16, #tpu.memory_space<vmem>>, vector<576x64xbf16>
    %cst = arith.constant dense<0.000000e+00> : vector<80x64xf32>
    %2 = tpu.matmul %0, %1, %cst {dimension_numbers = #tpu.dot_dimension_numbers<[1], [0], [0], [1], [0, 0, 1, 1], [], []>} : vector<80x576xbf16>, vector<576x64xbf16>, vector<80x64xf32> -> vector<80x64xf32>
    %c0_3 = arith.constant 0 : index
    %c0_4 = arith.constant 0 : index
    %3 = vector.load %arg3[%c0_3, %c0_4] : memref<1x64xf32, #tpu.memory_space<vmem>>, vector<1x64xf32>
    %4 = vector.broadcast %3 : vector<1x64xf32> to vector<80x64xf32>
    %5 = arith.addf %2, %4 : vector<80x64xf32>
    %cst_5 = arith.constant 0.000000e+00 : f32
    %6 = vector.broadcast %cst_5 : f32 to vector<80x64xf32>
    %7 = arith.maximumf %5, %6 : vector<80x64xf32>
    %8 = arith.truncf %7 : vector<80x64xf32> to vector<80x64xbf16>
    %c0_6 = arith.constant 0 : index
    %c0_7 = arith.constant 0 : index
    %9 = vector.load %arg4[%c0_6, %c0_7] : memref<80x64xbf16, #tpu.memory_space<vmem>>, vector<80x64xbf16>
    tpu.vector_store %arg4[%c0_6, %c0_7], %8 {strides = array<i32>} : memref<80x64xbf16, #tpu.memory_space<vmem>>, vector<80x64xbf16>,
    return
  }
  func.func @transform_0(%arg0: i32) -> (i32, i32) {
    %c0_i32 = arith.constant 0 : i32
    %c0_i32_0 = arith.constant 0 : i32
    return %arg0, %c0_i32 : i32, i32
  }
  func.func @transform_1(%arg0: i32) -> (i32, i32) {
    %c0_i32 = arith.constant 0 : i32
    %c0_i32_0 = arith.constant 0 : i32
    %c0_i32_1 = arith.constant 0 : i32
    return %c0_i32, %c0_i32_0 : i32, i32
  }
  func.func @transform_2(%arg0: i32) -> (i32, i32) {
    %c0_i32 = arith.constant 0 : i32
    %c0_i32_0 = arith.constant 0 : i32
    %c0_i32_1 = arith.constant 0 : i32
    return %c0_i32, %c0_i32_0 : i32, i32
  }
  func.func @transform_3(%arg0: i32) -> (i32, i32) {
    %c0_i32 = arith.constant 0 : i32
    %c0_i32_0 = arith.constant 0 : i32
    return %arg0, %c0_i32 : i32, i32
  }
}

module attributes {stable_mosaic.version = 11 : i64} {
  func.func @_mlp_head_split_kernel(%arg0: i32, %arg1: memref<2x2304xbf16, #tpu.memory_space<vmem>>, %arg2: memref<2304x256xbf16, #tpu.memory_space<vmem>>, %arg3: memref<1x256xf32, #tpu.memory_space<vmem>>, %arg4: memref<256x6xbf16, #tpu.memory_space<vmem>>, %arg5: memref<1x2x6xf32, #tpu.memory_space<vmem>>) attributes {dimension_semantics = [#tpu.dimension_semantics<parallel>], iteration_bounds = array<i64: 2>, scalar_prefetch = 0 : i64, scratch_operands = 0 : i64, tpu.core_type = #tpu.core_type<tc>, window_params = [{pipeline_mode = #tpu.pipeline_mode<synchronous>, transform_indices = @transform_0, window_bounds = array<i64: 2, 2304>}, {transform_indices = @transform_1, window_bounds = array<i64: 2304, 256>}, {transform_indices = @transform_2, window_bounds = array<i64: 1, 256>}, {transform_indices = @transform_3, window_bounds = array<i64: 256, 6>}, {transform_indices = @transform_4, window_bounds = array<i64: 1, 2, 6>}]} {
    %c0 = arith.constant 0 : index
    %c0_0 = arith.constant 0 : index
    %0 = vector.load %arg1[%c0, %c0_0] : memref<2x2304xbf16, #tpu.memory_space<vmem>>, vector<2x2304xbf16>
    %c0_1 = arith.constant 0 : index
    %c0_2 = arith.constant 0 : index
    %1 = vector.load %arg2[%c0_1, %c0_2] : memref<2304x256xbf16, #tpu.memory_space<vmem>>, vector<2304x256xbf16>
    %cst = arith.constant dense<0.000000e+00> : vector<2x256xf32>
    %2 = tpu.matmul %0, %1, %cst {dimension_numbers = #tpu.dot_dimension_numbers<[1], [0], [0], [1], [0, 0, 1, 1], [], []>} : vector<2x2304xbf16>, vector<2304x256xbf16>, vector<2x256xf32> -> vector<2x256xf32>
    %c0_3 = arith.constant 0 : index
    %c0_4 = arith.constant 0 : index
    %3 = vector.load %arg3[%c0_3, %c0_4] : memref<1x256xf32, #tpu.memory_space<vmem>>, vector<1x256xf32>
    %4 = vector.broadcast %3 : vector<1x256xf32> to vector<2x256xf32>
    %5 = arith.addf %2, %4 : vector<2x256xf32>
    %cst_5 = arith.constant 0.000000e+00 : f32
    %6 = vector.broadcast %cst_5 : f32 to vector<2x256xf32>
    %7 = arith.maximumf %5, %6 : vector<2x256xf32>
    %8 = arith.truncf %7 : vector<2x256xf32> to vector<2x256xbf16>
    %c0_6 = arith.constant 0 : index
    %c0_7 = arith.constant 0 : index
    %9 = vector.load %arg4[%c0_6, %c0_7] : memref<256x6xbf16, #tpu.memory_space<vmem>>, vector<256x6xbf16>
    %cst_8 = arith.constant dense<0.000000e+00> : vector<2x6xf32>
    %10 = tpu.matmul %8, %9, %cst_8 {dimension_numbers = #tpu.dot_dimension_numbers<[1], [0], [0], [1], [0, 0, 1, 1], [], []>} : vector<2x256xbf16>, vector<256x6xbf16>, vector<2x6xf32> -> vector<2x6xf32>
    %c0_9 = arith.constant 0 : index
    %c0_10 = arith.constant 0 : index
    %c0_11 = arith.constant 0 : index
    %11 = vector.load %arg5[%c0_9, %c0_10, %c0_11] : memref<1x2x6xf32, #tpu.memory_space<vmem>>, vector<1x2x6xf32>
    %12 = vector.shape_cast %11 : vector<1x2x6xf32> to vector<2x6xf32>
    %13 = vector.shape_cast %10 : vector<2x6xf32> to vector<1x2x6xf32>
    tpu.vector_store %arg5[%c0_9, %c0_10, %c0_11], %13 {strides = array<i32>} : memref<1x2x6xf32, #tpu.memory_space<vmem>>, vector<1x2x6xf32>,
    return
  }
  func.func @transform_0(%arg0: i32) -> (i32, i32) {
    %c0_i32 = arith.constant 0 : i32
    %c0_i32_0 = arith.constant 0 : i32
    %c0_i32_1 = arith.constant 0 : i32
    return %c0_i32, %c0_i32_0 : i32, i32
  }
  func.func @transform_1(%arg0: i32) -> (i32, i32) {
    %c0_i32 = arith.constant 0 : i32
    %c0_i32_0 = arith.constant 0 : i32
    return %c0_i32, %arg0 : i32, i32
  }
  func.func @transform_2(%arg0: i32) -> (i32, i32) {
    %c0_i32 = arith.constant 0 : i32
    %c0_i32_0 = arith.constant 0 : i32
    return %c0_i32, %arg0 : i32, i32
  }
  func.func @transform_3(%arg0: i32) -> (i32, i32) {
    %c0_i32 = arith.constant 0 : i32
    %c0_i32_0 = arith.constant 0 : i32
    return %arg0, %c0_i32 : i32, i32
  }
  func.func @transform_4(%arg0: i32) -> (i32, i32, i32) {
    %c0_i32 = arith.constant 0 : i32
    %c0_i32_0 = arith.constant 0 : i32
    %c0_i32_1 = arith.constant 0 : i32
    return %arg0, %c0_i32, %c0_i32_0 : i32, i32, i32
  }
}

</mosaic_0001>

<llo_original>
// kernel: qnetwork_forward.4
$region0: #{qnetwork_forward.4}
  #allocation0 [shape = 'u32[]', space=smem, size = 0x4, offset = 0x4, fixed_abs, tag = 'smem constant byte address 0x4 - core index']
  #allocation1 [shape = 'u32[72,128]{1,0:T(1,128)}', space=vmem, size = 0x9000, scoped, tag = 'internal scratch']
  %s0 = inlined_call_operand.vmem [shape: bf16[736,256], index: 0, kind: input, shape index: {}]
  %s1 = inlined_call_operand.vmem [shape: bf16[256,32], index: 1, kind: input, shape index: {}]
  %s2 = inlined_call_operand.vmem [shape: f32[1,32], index: 2, kind: input, shape index: {}]
  %s3 = inlined_call_operand.vmem [shape: bf16[736,32], index: 3, kind: output, shape index: {}]
  %s4 = sld [smem:[#allocation0]]
  $region45: #{qnetwork_forward.4} parent=0
    _
  %s6 = ssub.s32 1, %s4
  %s7 = scalar_select 0, %s6, %s4
  loop: start=0, step=1, limit=4
  $region2: #{qnetwork_forward.4} parent=0 // loop_pre_header
    _
  $region3: #{qnetwork_forward.4} parent=0 // loop_header
    %s9 = sphi 0, %s13
    %p10 = scmp.ge.s32.totalorder %s9, 4
    %s19 = sphi 0, %s21
    %s22 = sphi 0, %s19
    %s23 = sphi 0, %s22
    %s39 = sphi 0, %s23
    %s43 = sphi 0, %s43
    %s45 = sphi 0, %s43
    %s46 = sphi 0, %s45
    %s60 = sphi 0, %s46
    %s64 = sphi 0, %s64
    %s66 = sphi 0, %s64
    %s67 = sphi 0, %s66
    %s81 = sphi 0, %s67
    %s87 = sphi 0, %s89
    %s90 = sphi 0, %s87
    %s91 = sphi 0, %s90
    %s107 = sphi 0, %s91
  $region4: #{qnetwork_forward.4} parent=0 // loop_header_branch
    %12 = sbr.rel (%p10) target = $region8
  $region5: #{qnetwork_forward.4} parent=0 // loop_body
    %s14 = ssub.s32 %s9, 1
    %s15 = ssub.s32 %s9, 2
    %s16 = sadd.s32 %s9, 1
    %s17 = ssub.s32 %s9, %s16
    %p18 = scmp.eq.s32.totalorder %s17, 0
    %s20 = sadd.s32 %s19, 1
    %s21 = scalar_select %p18, %s19, %s20
    %p24 = pneg %p18
    %p25 = scmp.eq.s32.totalorder %s9, 1
    %p26 = por %p24, %p25
    %p27 = scmp.ne.s32.totalorder %s19, %s22
    %p28 = scmp.eq.s32.totalorder %s9, 0
    %p29 = por %p27, %p28
    %p30 = scmp.ne.s32.totalorder %s19, %s22
    %p31 = scmp.eq.s32.totalorder %s14, 1
    %p32 = por %p30, %p31
    %p33 = scmp.ne.s32.totalorder %s22, %s23
    %p34 = scmp.eq.s32.totalorder %s14, 0
    %p35 = por %p33, %p34
    %p36 = scmp.ne.s32.totalorder %s22, %s23
    %p37 = scmp.eq.s32.totalorder %s15, 1
    %p38 = por %p36, %p37
    %p40 = scmp.ne.s32.totalorder %s23, %s39
    %p41 = scmp.eq.s32.totalorder %s15, 0
    %p42 = por %p40, %p41
    %s44 = sadd.s32 %s43, 1
    %p47 = scmp.eq.s32.totalorder %s9, 1
    %p48 = scmp.ne.s32.totalorder %s43, %s45
    %p49 = scmp.eq.s32.totalorder %s9, 0
    %p50 = por %p48, %p49
    %p51 = scmp.ne.s32.totalorder %s43, %s45
    %p52 = scmp.eq.s32.totalorder %s14, 1
    %p53 = por %p51, %p52
    %p54 = scmp.ne.s32.totalorder %s45, %s46
    %p55 = scmp.eq.s32.totalorder %s14, 0
    %p56 = por %p54, %p55
    %p57 = scmp.ne.s32.totalorder %s45, %s46
    %p58 = scmp.eq.s32.totalorder %s15, 1
    %p59 = por %p57, %p58
    %p61 = scmp.ne.s32.totalorder %s46, %s60
    %p62 = scmp.eq.s32.totalorder %s15, 0
    %p63 = por %p61, %p62
    %s65 = sadd.s32 %s64, 1
    %p68 = scmp.eq.s32.totalorder %s9, 1
    %p69 = scmp.ne.s32.totalorder %s64, %s66
    %p70 = scmp.eq.s32.totalorder %s9, 0
    %p71 = por %p69, %p70
    %p72 = scmp.ne.s32.totalorder %s64, %s66
    %p73 = scmp.eq.s32.totalorder %s14, 1
    %p74 = por %p72, %p73
    %p75 = scmp.ne.s32.totalorder %s66, %s67
    %p76 = scmp.eq.s32.totalorder %s14, 0
    %p77 = por %p75, %p76
    %p78 = scmp.ne.s32.totalorder %s66, %s67
    %p79 = scmp.eq.s32.totalorder %s15, 1
    %p80 = por %p78, %p79
    %p82 = scmp.ne.s32.totalorder %s67, %s81
    %p83 = scmp.eq.s32.totalorder %s15, 0
    %p84 = por %p82, %p83
    %s85 = ssub.s32 %s9, %s16
    %p86 = scmp.eq.s32.totalorder %s85, 0
    %s88 = sadd.s32 %s87, 1
    %s89 = scalar_select %p86, %s87, %s88
    %p92 = pneg %p86
    %p93 = scmp.eq.s32.totalorder %s9, 1
    %p94 = por %p92, %p93
    %p95 = scmp.ne.s32.totalorder %s87, %s90
    %p96 = scmp.eq.s32.totalorder %s9, 0
    %p97 = por %p95, %p96
    %p98 = scmp.ne.s32.totalorder %s87, %s90
    %p99 = scmp.eq.s32.totalorder %s14, 1
    %p100 = por %p98, %p99
    %p101 = scmp.ne.s32.totalorder %s90, %s91
    %p102 = scmp.eq.s32.totalorder %s14, 0
    %p103 = por %p101, %p102
    %p104 = scmp.ne.s32.totalorder %s90, %s91
    %p105 = scmp.eq.s32.totalorder %s15, 1
    %p106 = por %p104, %p105
    %p108 = scmp.ne.s32.totalorder %s91, %s107
    %p109 = scmp.eq.s32.totalorder %s15, 0
    %p110 = por %p108, %p109
    %p111 = scmp.le.s32.totalorder 1, %s9
    %p112 = scmp.lt.s32.totalorder %s9, 3
    %p113 = pnand %p111, %p112
    %p114 = pneg %p113
    // Predicated region
    $region9: #{qnetwork_forward.4} parent=5 // pred_check
      _
    $region10: #{qnetwork_forward.4} parent=5 // pred_check_branch
      %116 = sbr.rel (%p113) target = $region12
    $region11: #{qnetwork_forward.4} parent=5 // pred_region
      %s117 = ssub.s32 %s9, 1
      // Predicated region
      $region13: #{qnetwork_forward.4} parent=11 // pred_check
        %p118 = pneg %p56
      $region14: #{qnetwork_forward.4} parent=11 // pred_check_branch
        %120 = sbr.rel (%p118) target = $region16
      $region15: #{qnetwork_forward.4} parent=11 // pred_region
        _
      $region16: #{qnetwork_forward.4} parent=11 // pred_fallthru
        _
      // Predicated region
      $region17: #{qnetwork_forward.4} parent=11 // pred_check
        %p121 = pneg %p77
      $region18: #{qnetwork_forward.4} parent=11 // pred_check_branch
        %123 = sbr.rel (%p121) target = $region20
      $region19: #{qnetwork_forward.4} parent=11 // pred_region
        _
      $region20: #{qnetwork_forward.4} parent=11 // pred_fallthru
        _
    $region12: #{qnetwork_forward.4} parent=5 // pred_fallthru
      _
    %p124 = scmp.lt.s32.totalorder %s9, 2
    // Predicated region
    $region21: #{qnetwork_forward.4} parent=5 // pred_check
      %p125 = pneg %p124
    $region22: #{qnetwork_forward.4} parent=5 // pred_check_branch
      %127 = sbr.rel (%p125) target = $region24
    $region23: #{qnetwork_forward.4} parent=5 // pred_region
      // Predicated region
      $region25: #{qnetwork_forward.4} parent=23 // pred_check
        %p128 = pneg %p29
      $region26: #{qnetwork_forward.4} parent=23 // pred_check_branch
        %130 = sbr.rel (%p128) target = $region28
      $region27: #{qnetwork_forward.4} parent=23 // pred_region
        %s131 = smul.u32 46, %s9
        %p132 = scmp.lt.s32.totalorder %s131, 91
        %s133 = scalar_select %p132, %s131, 91
        %s134 = smul.addr %s133, 2
        %s135 = smul.addr %s134, 4
        %s136 = scalar_lea.vmem %s0, %s135
        %s137 = smul.u32 46, %s9
      $region28: #{qnetwork_forward.4} parent=23 // pred_fallthru
        _
    $region24: #{qnetwork_forward.4} parent=5 // pred_fallthru
      _
    %p138 = scmp.le.s32.totalorder 1, %s9
    %p139 = scmp.lt.s32.totalorder %s9, 3
    %p140 = pnand %p138, %p139
    %p141 = pneg %p140
    // Predicated region
    $region29: #{qnetwork_forward.4} parent=5 // pred_check
      _
    $region30: #{qnetwork_forward.4} parent=5 // pred_check_branch
      %143 = sbr.rel (%p140) target = $region32
    $region31: #{qnetwork_forward.4} parent=5 // pred_region
      %s144 = ssub.s32 %s9, 1
      %s145 = smul.u32 46, %s14
      %p146 = scmp.lt.s32.totalorder %s145, 91
      %s147 = scalar_select %p146, %s145, 91
      %s148 = smul.addr %s147, 2
      %s149 = smul.addr %s148, 4
      %s150 = scalar_lea.vmem %s0, %s149
      %p151 = pneg %p35
      %p152 = pneg %p32
      %p153 = pneg %p56
      %p154 = pneg %p53
      %p155 = pneg %p77
      %p156 = pneg %p74
      %p157 = pneg %p103
      %p158 = pneg %p100
      %s159 = smul.u32 46, %s14
      %p160 = scmp.lt.s32.totalorder %s159, 91
      %s161 = scalar_select %p160, %s159, 91
      %s162 = smul.addr %s161, 4
      %s163 = scalar_lea.vmem %s3, %s162
      %s164 = smul.u32 46, %s14
      %p165 = scmp.lt.s32.totalorder %s164, 91
      %s166 = scalar_select %p165, %s164, 91
      %s167 = smul.addr %s166, 2
      %s168 = smul.addr %s167, 4
      %s169 = scalar_lea.vmem %s0, %s168
      %s170 = smul.u32 46, %s14
      %s171 = smul.u32 46, %s14
      %p172 = scmp.lt.s32.totalorder %s171, 91
      %s173 = scalar_select %p172, %s171, 91
      %s174 = smul.addr %s173, 4
      %s175 = scalar_lea.vmem %s3, %s174
      %s176 = smul.u32 46, %s14
      %v177 = vld [vmem:[%s169] sm:$0xff]
      %v178 = vld [vmem:[%s169 + $0x8] sm:$0xff]
      %v179 = vld [vmem:[%s169 + $0x10] sm:$0xff]
      %v180 = vld [vmem:[%s169 + $0x18] sm:$0xff]
      %v181 = vld [vmem:[%s169 + $0x20] sm:$0xff]
      %v182 = vld [vmem:[%s169 + $0x28] sm:$0xff]
      %v183 = vld [vmem:[%s169 + $0x30] sm:$0xff]
      %v184 = vld [vmem:[%s169 + $0x38] sm:$0xff]
      %v185 = vld [vmem:[%s169 + $0x40] sm:$0xff]
      %v186 = vld [vmem:[%s169 + $0x48] sm:$0xff]
      %v187 = vld [vmem:[%s169 + $0x50] sm:$0xff]
      %v188 = vld [vmem:[%s169 + $0x58] sm:$0xff]
      %v189 = vld [vmem:[%s169 + $0x60] sm:$0xff]
      %v190 = vld [vmem:[%s169 + $0x68] sm:$0xff]
      %v191 = vld [vmem:[%s169 + $0x70] sm:$0xff]
      %v192 = vld [vmem:[%s169 + $0x78] sm:$0xff]
      %v193 = vld [vmem:[%s169 + $0x80] sm:$0xff]
      %v194 = vld [vmem:[%s169 + $0x88] sm:$0xff]
      %v195 = vld [vmem:[%s169 + $0x90] sm:$0xff]
      %v196 = vld [vmem:[%s169 + $0x98] sm:$0xff]
      %v197 = vld [vmem:[%s169 + $0xa0] sm:$0xff]
      %v198 = vld [vmem:[%s169 + $0xa8] sm:$0xff]
      %v199 = vld [vmem:[%s169 + $0xb0] sm:$0xff]
      %v200 = vld [vmem:[%s169 + $0xb8] sm:$0xff]
      %v201 = vld [vmem:[%s169 + $0xc0] sm:$0xff]
      %v202 = vld [vmem:[%s169 + $0xc8] sm:$0xff]
      %v203 = vld [vmem:[%s169 + $0xd0] sm:$0xff]
      %v204 = vld [vmem:[%s169 + $0xd8] sm:$0xff]
      %v205 = vld [vmem:[%s169 + $0xe0] sm:$0xff]
      %v206 = vld [vmem:[%s169 + $0xe8] sm:$0xff]
      %v207 = vld [vmem:[%s169 + $0xf0] sm:$0xff]
      %v208 = vld [vmem:[%s169 + $0xf8] sm:$0xff]
      %v209 = vld [vmem:[%s169 + $0x100] sm:$0xff]
      %v210 = vld [vmem:[%s169 + $0x108] sm:$0xff]
      %v211 = vld [vmem:[%s169 + $0x110] sm:$0xff]
      %v212 = vld [vmem:[%s169 + $0x118] sm:$0xff]
      %v213 = vld [vmem:[%s169 + $0x120] sm:$0xff]
      %v214 = vld [vmem:[%s169 + $0x128] sm:$0xff]
      %v215 = vld [vmem:[%s169 + $0x130] sm:$0xff]
      %v216 = vld [vmem:[%s169 + $0x138] sm:$0xff]
      %v217 = vld [vmem:[%s169 + $0x140] sm:$0xff]
      %v218 = vld [vmem:[%s169 + $0x148] sm:$0xff]
      %v219 = vld [vmem:[%s169 + $0x150] sm:$0xff]
      %v220 = vld [vmem:[%s169 + $0x158] sm:$0xff]
      %v221 = vld [vmem:[%s169 + $0x160] sm:$0xff]
      %v222 = vld [vmem:[%s169 + $0x168] sm:$0xff]
      %v223 = vld [vmem:[%s1] sm:$0xf]
      %v224 = vld [vmem:[%s1 + $0x4] sm:$0xf]
      %v225 = vld [vmem:[%s1 + $0x8] sm:$0xf]
      %v226 = vld [vmem:[%s1 + $0xc] sm:$0xf]
      %v227 = vld [vmem:[%s1 + $0x10] sm:$0xf]
      %v228 = vld [vmem:[%s1 + $0x14] sm:$0xf]
      %v229 = vld [vmem:[%s1 + $0x18] sm:$0xf]
      %v230 = vld [vmem:[%s1 + $0x1c] sm:$0xf]
      %v231 = vld [vmem:[%s1 + $0x20] sm:$0xf]
      %v232 = vld [vmem:[%s1 + $0x24] sm:$0xf]
      %v233 = vld [vmem:[%s1 + $0x28] sm:$0xf]
      %v234 = vld [vmem:[%s1 + $0x2c] sm:$0xf]
      %v235 = vld [vmem:[%s1 + $0x30] sm:$0xf]
      %v236 = vld [vmem:[%s1 + $0x34] sm:$0xf]
      %v237 = vld [vmem:[%s1 + $0x38] sm:$0xf]
      %v238 = vld [vmem:[%s1 + $0x3c] sm:$0xf]
      %v239 = vld [vmem:[%s1 + $0x40] sm:$0xf]
      %v240 = vld [vmem:[%s1 + $0x44] sm:$0xf]
      %v241 = vld [vmem:[%s1 + $0x48] sm:$0xf]
      %v242 = vld [vmem:[%s1 + $0x4c] sm:$0xf]
      %v243 = vld [vmem:[%s1 + $0x50] sm:$0xf]
      %v244 = vld [vmem:[%s1 + $0x54] sm:$0xf]
      %v245 = vld [vmem:[%s1 + $0x58] sm:$0xf]
      %v246 = vld [vmem:[%s1 + $0x5c] sm:$0xf]
      %v247 = vld [vmem:[%s1 + $0x60] sm:$0xf]
      %v248 = vld [vmem:[%s1 + $0x64] sm:$0xf]
      %v249 = vld [vmem:[%s1 + $0x68] sm:$0xf]
      %v250 = vld [vmem:[%s1 + $0x6c] sm:$0xf]
      %v251 = vld [vmem:[%s1 + $0x70] sm:$0xf]
      %v252 = vld [vmem:[%s1 + $0x74] sm:$0xf]
      %v253 = vld [vmem:[%s1 + $0x78] sm:$0xf]
      %v254 = vld [vmem:[%s1 + $0x7c] sm:$0xf]
      %v255 = vld [vmem:[%s2] sm:$0x1]
      %v257 = vperm.slane %v255, 0
      %v305 = vunpack.c.l.b16 %v177
      %v306 = vunpack.c.h.b16 %v177
      %v307 = vunpack.c.l.b16 %v178
      %v308 = vunpack.c.h.b16 %v178
      %v309 = vunpack.c.l.b16 %v179
      %v310 = vunpack.c.h.b16 %v179
      %v311 = vunpack.c.l.b16 %v180
      %v312 = vunpack.c.h.b16 %v180
      %v313 = vunpack.c.l.b16 %v181
      %v314 = vunpack.c.h.b16 %v181
      %v315 = vunpack.c.l.b16 %v182
      %v316 = vunpack.c.h.b16 %v182
      %v317 = vunpack.c.l.b16 %v183
      %v318 = vunpack.c.h.b16 %v183
      %v319 = vunpack.c.l.b16 %v184
      %v320 = vunpack.c.h.b16 %v184
      %v321 = vunpack.c.l.b16 %v185
      %v322 = vunpack.c.h.b16 %v185
      %v323 = vunpack.c.l.b16 %v186
      %v324 = vunpack.c.h.b16 %v186
      %v325 = vunpack.c.l.b16 %v187
      %v326 = vunpack.c.h.b16 %v187
      %v327 = vunpack.c.l.b16 %v188
      %v328 = vunpack.c.h.b16 %v188
      %v329 = vunpack.c.l.b16 %v189
      %v330 = vunpack.c.h.b16 %v189
      %v331 = vunpack.c.l.b16 %v190
      %v332 = vunpack.c.h.b16 %v190
      %v333 = vunpack.c.l.b16 %v191
      %v334 = vunpack.c.h.b16 %v191
      %v335 = vunpack.c.l.b16 %v192
      %v336 = vunpack.c.h.b16 %v192
      %v337 = vunpack.c.l.b16 %v193
      %v338 = vunpack.c.h.b16 %v193
      %v339 = vunpack.c.l.b16 %v194
      %v340 = vunpack.c.h.b16 %v194
      %v341 = vunpack.c.l.b16 %v195
      %v342 = vunpack.c.h.b16 %v195
      %v343 = vunpack.c.l.b16 %v196
      %v344 = vunpack.c.h.b16 %v196
      %v345 = vunpack.c.l.b16 %v197
      %v346 = vunpack.c.h.b16 %v197
      %v347 = vunpack.c.l.b16 %v198
      %v348 = vunpack.c.h.b16 %v198
      %v349 = vunpack.c.l.b16 %v199
      %v350 = vunpack.c.h.b16 %v199
      %v351 = vunpack.c.l.b16 %v200
      %v352 = vunpack.c.h.b16 %v200
      %v353 = vunpack.c.l.b16 %v201
      %v354 = vunpack.c.h.b16 %v201
      %v355 = vunpack.c.l.b16 %v202
      %v356 = vunpack.c.h.b16 %v202
      %v357 = vunpack.c.l.b16 %v203
      %v358 = vunpack.c.h.b16 %v203
      %v359 = vunpack.c.l.b16 %v204
      %v360 = vunpack.c.h.b16 %v204
      %v361 = vunpack.c.l.b16 %v205
      %v362 = vunpack.c.h.b16 %v205
      %v363 = vunpack.c.l.b16 %v206
      %v364 = vunpack.c.h.b16 %v206
      %v365 = vunpack.c.l.b16 %v207
      %v366 = vunpack.c.h.b16 %v207
      %v367 = vunpack.c.l.b16 %v208
      %v368 = vunpack.c.h.b16 %v208
      %v369 = vunpack.c.l.b16 %v209
      %v370 = vunpack.c.h.b16 %v209
      %v371 = vunpack.c.l.b16 %v210
      %v372 = vunpack.c.h.b16 %v210
      %v373 = vunpack.c.l.b16 %v211
      %v374 = vunpack.c.h.b16 %v211
      %v375 = vunpack.c.l.b16 %v212
      %v376 = vunpack.c.h.b16 %v212
      %v377 = vunpack.c.l.b16 %v213
      %v378 = vunpack.c.h.b16 %v213
      %v379 = vunpack.c.l.b16 %v214
      %v380 = vunpack.c.h.b16 %v214
      %v381 = vunpack.c.l.b16 %v215
      %v382 = vunpack.c.h.b16 %v215
      %v383 = vunpack.c.l.b16 %v216
      %v384 = vunpack.c.h.b16 %v216
      %v385 = vunpack.c.l.b16 %v217
      %v386 = vunpack.c.h.b16 %v217
      %v387 = vunpack.c.l.b16 %v218
      %v388 = vunpack.c.h.b16 %v218
      %v389 = vunpack.c.l.b16 %v219
      %v390 = vunpack.c.h.b16 %v219
      %v391 = vunpack.c.l.b16 %v220
      %v392 = vunpack.c.h.b16 %v220
      %v393 = vunpack.c.l.b16 %v221
      %v394 = vunpack.c.h.b16 %v221
      %v395 = vunpack.c.l.b16 %v222
      %v396 = vunpack.c.h.b16 %v222
      %v397 = vpack.c.b16 %v307, %v305
      %v398 = vpack.c.b16 %v308, %v306
      %v399 = vpack.c.b16 %v311, %v309
      %v400 = vpack.c.b16 %v312, %v310
      %v401 = vpack.c.b16 %v315, %v313
      %v402 = vpack.c.b16 %v316, %v314
      %v403 = vpack.c.b16 %v319, %v317
      %v404 = vpack.c.b16 %v320, %v318
      %v405 = vpack.c.b16 %v323, %v321
      %v406 = vpack.c.b16 %v324, %v322
      %v407 = vpack.c.b16 %v327, %v325
      %v408 = vpack.c.b16 %v328, %v326
      %v409 = vpack.c.b16 %v331, %v329
      %v410 = vpack.c.b16 %v332, %v330
      %v411 = vpack.c.b16 %v335, %v333
      %v412 = vpack.c.b16 %v336, %v334
      %v413 = vpack.c.b16 %v339, %v337
      %v414 = vpack.c.b16 %v340, %v338
      %v415 = vpack.c.b16 %v343, %v341
      %v416 = vpack.c.b16 %v344, %v342
      %v417 = vpack.c.b16 %v347, %v345
      %v418 = vpack.c.b16 %v348, %v346
      %v419 = vpack.c.b16 %v351, %v349
      %v420 = vpack.c.b16 %v352, %v350
      %v421 = vpack.c.b16 %v355, %v353
      %v422 = vpack.c.b16 %v356, %v354
      %v423 = vpack.c.b16 %v359, %v357
      %v424 = vpack.c.b16 %v360, %v358
      %v425 = vpack.c.b16 %v363, %v361
      %v426 = vpack.c.b16 %v364, %v362
      %v427 = vpack.c.b16 %v367, %v365
      %v428 = vpack.c.b16 %v368, %v366
      %v429 = vpack.c.b16 %v371, %v369
      %v430 = vpack.c.b16 %v372, %v370
      %v431 = vpack.c.b16 %v375, %v373
      %v432 = vpack.c.b16 %v376, %v374
      %v433 = vpack.c.b16 %v379, %v377
      %v434 = vpack.c.b16 %v380, %v378
      %v435 = vpack.c.b16 %v383, %v381
      %v436 = vpack.c.b16 %v384, %v382
      %v437 = vpack.c.b16 %v387, %v385
      %v438 = vpack.c.b16 %v388, %v386
      %v439 = vpack.c.b16 %v391, %v389
      %v440 = vpack.c.b16 %v392, %v390
      %v441 = vpack.c.b16 %v395, %v393
      %v442 = vpack.c.b16 %v396, %v394
      %v521 = vunpack.c.l.b16 %v223
      %v522 = vunpack.c.l.b16 %v224
      %v523 = vunpack.c.l.b16 %v225
      %v524 = vunpack.c.l.b16 %v226
      %v525 = vunpack.c.l.b16 %v227
      %v526 = vunpack.c.l.b16 %v228
      %v527 = vunpack.c.l.b16 %v229
      %v528 = vunpack.c.l.b16 %v230
      %v529 = vunpack.c.l.b16 %v231
      %v530 = vunpack.c.l.b16 %v232
      %v531 = vunpack.c.l.b16 %v233
      %v532 = vunpack.c.l.b16 %v234
      %v533 = vunpack.c.l.b16 %v235
      %v534 = vunpack.c.l.b16 %v236
      %v535 = vunpack.c.l.b16 %v237
      %v536 = vunpack.c.l.b16 %v238
      %v537 = vunpack.c.l.b16 %v239
      %v538 = vunpack.c.l.b16 %v240
      %v539 = vunpack.c.l.b16 %v241
      %v540 = vunpack.c.l.b16 %v242
      %v541 = vunpack.c.l.b16 %v243
      %v542 = vunpack.c.l.b16 %v244
      %v543 = vunpack.c.l.b16 %v245
      %v544 = vunpack.c.l.b16 %v246
      %v545 = vunpack.c.l.b16 %v247
      %v546 = vunpack.c.l.b16 %v248
      %v547 = vunpack.c.l.b16 %v249
      %v548 = vunpack.c.l.b16 %v250
      %v549 = vunpack.c.l.b16 %v251
      %v550 = vunpack.c.l.b16 %v252
      %v551 = vunpack.c.l.b16 %v253
      %v552 = vunpack.c.l.b16 %v254
      %v553 = vpack.c.b16 %v522, %v521
      %v554 = vpack.c.b16 %v524, %v523
      %v555 = vpack.c.b16 %v526, %v525
      %v556 = vpack.c.b16 %v528, %v527
      %v557 = vpack.c.b16 %v530, %v529
      %v558 = vpack.c.b16 %v532, %v531
      %v559 = vpack.c.b16 %v534, %v533
      %v560 = vpack.c.b16 %v536, %v535
      %v561 = vpack.c.b16 %v538, %v537
      %v562 = vpack.c.b16 %v540, %v539
      %v563 = vpack.c.b16 %v542, %v541
      %v564 = vpack.c.b16 %v544, %v543
      %v565 = vpack.c.b16 %v546, %v545
      %v566 = vpack.c.b16 %v548, %v547
      %v567 = vpack.c.b16 %v550, %v549
      %v568 = vpack.c.b16 %v552, %v551
      %585 = vmatpush.bf16.msra.mxu0 %v560
      %586 = vmatpush.bf16.msra.mxu0 %v559
      %587 = vmatpush.bf16.msra.mxu0 %v558
      %588 = vmatpush.bf16.msra.mxu0 %v557
      %589 = vmatpush.bf16.msra.mxu0 %v556
      %590 = vmatpush.bf16.msra.mxu0 %v555
      %591 = vmatpush.bf16.msra.mxu0 %v554
      %592 = vmatpush.bf16.msra.mxu0 %v553
      %593 = vmatmul.bf16.gmra.mxu0 %v397
      %v594 = vpop.f32.mrf.mxu0
      %v595 = vadd.f32 %v257, %v594
      %v596 = vpop.f32.mrf.mxu0
      %v597 = vadd.f32 %v257, %v596
      %598 = vmatmul.bf16.gmra.mxu0 %v399
      %v599 = vpop.f32.mrf.mxu0
      %v600 = vadd.f32 %v257, %v599
      %v601 = vpop.f32.mrf.mxu0
      %v602 = vadd.f32 %v257, %v601
      %603 = vmatmul.bf16.gmra.mxu0 %v401
      %v604 = vpop.f32.mrf.mxu0
      %v605 = vadd.f32 %v257, %v604
      %v606 = vpop.f32.mrf.mxu0
      %v607 = vadd.f32 %v257, %v606
      %608 = vmatmul.bf16.gmra.mxu0 %v403
      %v609 = vpop.f32.mrf.mxu0
      %v610 = vadd.f32 %v257, %v609
      %v611 = vpop.f32.mrf.mxu0
      %v612 = vadd.f32 %v257, %v611
      %613 = vmatmul.bf16.gmra.mxu0 %v405
      %v614 = vpop.f32.mrf.mxu0
      %v615 = vadd.f32 %v257, %v614
      %v616 = vpop.f32.mrf.mxu0
      %v617 = vadd.f32 %v257, %v616
      %618 = vmatmul.bf16.gmra.mxu0 %v407
      %v619 = vpop.f32.mrf.mxu0
      %v620 = vadd.f32 %v257, %v619
      %v621 = vpop.f32.mrf.mxu0
      %v622 = vadd.f32 %v257, %v621
      %623 = vmatmul.bf16.gmra.mxu0 %v409
      %v624 = vpop.f32.mrf.mxu0
      %v625 = vadd.f32 %v257, %v624
      %v626 = vpop.f32.mrf.mxu0
      %v627 = vadd.f32 %v257, %v626
      %628 = vmatmul.bf16.gmra.mxu0 %v411
      %v629 = vpop.f32.mrf.mxu0
      %v630 = vadd.f32 %v257, %v629
      %v631 = vpop.f32.mrf.mxu0
      %v632 = vadd.f32 %v257, %v631
      %633 = vmatmul.bf16.gmra.mxu0 %v413
      %v634 = vpop.f32.mrf.mxu0
      %v635 = vadd.f32 %v257, %v634
      %v636 = vpop.f32.mrf.mxu0
      %v637 = vadd.f32 %v257, %v636
      %638 = vmatmul.bf16.gmra.mxu0 %v415
      %v639 = vpop.f32.mrf.mxu0
      %v640 = vadd.f32 %v257, %v639
      %v641 = vpop.f32.mrf.mxu0
      %v642 = vadd.f32 %v257, %v641
      %643 = vmatmul.bf16.gmra.mxu0 %v417
      %v644 = vpop.f32.mrf.mxu0
      %v645 = vadd.f32 %v257, %v644
      %v646 = vpop.f32.mrf.mxu0
      %v647 = vadd.f32 %v257, %v646
      %648 = vmatmul.bf16.gmra.mxu0 %v419
      %v649 = vpop.f32.mrf.mxu0
      %v650 = vadd.f32 %v257, %v649
      %v651 = vpop.f32.mrf.mxu0
      %v652 = vadd.f32 %v257, %v651
      %653 = vmatmul.bf16.gmra.mxu0 %v421
      %v654 = vpop.f32.mrf.mxu0
      %v655 = vadd.f32 %v257, %v654
      %v656 = vpop.f32.mrf.mxu0
      %v657 = vadd.f32 %v257, %v656
      %658 = vmatmul.bf16.gmra.mxu0 %v423
      %v659 = vpop.f32.mrf.mxu0
      %v660 = vadd.f32 %v257, %v659
      %v661 = vpop.f32.mrf.mxu0
      %v662 = vadd.f32 %v257, %v661
      %663 = vmatmul.bf16.gmra.mxu0 %v425
      %v664 = vpop.f32.mrf.mxu0
      %v665 = vadd.f32 %v257, %v664
      %v666 = vpop.f32.mrf.mxu0
      %v667 = vadd.f32 %v257, %v666
      %668 = vmatmul.bf16.gmra.mxu0 %v427
      %v669 = vpop.f32.mrf.mxu0
      %v670 = vadd.f32 %v257, %v669
      %v671 = vpop.f32.mrf.mxu0
      %v672 = vadd.f32 %v257, %v671
      %673 = vmatmul.bf16.gmra.mxu0 %v429
      %v674 = vpop.f32.mrf.mxu0
      %v675 = vadd.f32 %v257, %v674
      %v676 = vpop.f32.mrf.mxu0
      %v677 = vadd.f32 %v257, %v676
      %678 = vmatmul.bf16.gmra.mxu0 %v431
      %v679 = vpop.f32.mrf.mxu0
      %v680 = vadd.f32 %v257, %v679
      %v681 = vpop.f32.mrf.mxu0
      %v682 = vadd.f32 %v257, %v681
      %683 = vmatmul.bf16.gmra.mxu0 %v433
      %v684 = vpop.f32.mrf.mxu0
      %v685 = vadd.f32 %v257, %v684
      %v686 = vpop.f32.mrf.mxu0
      %v687 = vadd.f32 %v257, %v686
      %688 = vmatmul.bf16.gmra.mxu0 %v435
      %v689 = vpop.f32.mrf.mxu0
      %v690 = vadd.f32 %v257, %v689
      %v691 = vpop.f32.mrf.mxu0
      %v692 = vadd.f32 %v257, %v691
      %693 = vmatmul.bf16.gmra.mxu0 %v437
      %v694 = vpop.f32.mrf.mxu0
      %v695 = vadd.f32 %v257, %v694
      %v696 = vpop.f32.mrf.mxu0
      %v697 = vadd.f32 %v257, %v696
      %698 = vmatmul.bf16.gmra.mxu0 %v439
      %v699 = vpop.f32.mrf.mxu0
      %v700 = vadd.f32 %v257, %v699
      %v701 = vpop.f32.mrf.mxu0
      %v702 = vadd.f32 %v257, %v701
      %703 = vmatmul.bf16.gmra.mxu0 %v441
      %v704 = vpop.f32.mrf.mxu0
      %v705 = vadd.f32 %v257, %v704
      %v706 = vpop.f32.mrf.mxu0
      %v707 = vadd.f32 %v257, %v706
      %708 = vdwg.mxu0
      %709 = vmatpush.bf16.msra.mxu0 %v568
      %710 = vmatpush.bf16.msra.mxu0 %v567
      %711 = vmatpush.bf16.msra.mxu0 %v566
      %712 = vmatpush.bf16.msra.mxu0 %v565
      %713 = vmatpush.bf16.msra.mxu0 %v564
      %714 = vmatpush.bf16.msra.mxu0 %v563
      %715 = vmatpush.bf16.msra.mxu0 %v562
      %716 = vmatpush.bf16.msra.mxu0 %v561
      %717 = vmatmul.bf16.gmra.mxu0 %v398
      %v718 = vpop.f32.mrf.mxu0
      %v719 = vadd.f32 %v595, %v718
      %v720 = vpop.f32.mrf.mxu0
      %v721 = vadd.f32 %v597, %v720
      %722 = vmatmul.bf16.gmra.mxu0 %v400
      %v723 = vpop.f32.mrf.mxu0
      %v724 = vadd.f32 %v600, %v723
      %v725 = vpop.f32.mrf.mxu0
      %v726 = vadd.f32 %v602, %v725
      %727 = vmatmul.bf16.gmra.mxu0 %v402
      %v728 = vpop.f32.mrf.mxu0
      %v729 = vadd.f32 %v605, %v728
      %v730 = vpop.f32.mrf.mxu0
      %v731 = vadd.f32 %v607, %v730
      %732 = vmatmul.bf16.gmra.mxu0 %v404
      %v733 = vpop.f32.mrf.mxu0
      %v734 = vadd.f32 %v610, %v733
      %v735 = vpop.f32.mrf.mxu0
      %v736 = vadd.f32 %v612, %v735
      %737 = vmatmul.bf16.gmra.mxu0 %v406
      %v738 = vpop.f32.mrf.mxu0
      %v739 = vadd.f32 %v615, %v738
      %v740 = vpop.f32.mrf.mxu0
      %v741 = vadd.f32 %v617, %v740
      %742 = vmatmul.bf16.gmra.mxu0 %v408
      %v743 = vpop.f32.mrf.mxu0
      %v744 = vadd.f32 %v620, %v743
      %v745 = vpop.f32.mrf.mxu0
      %v746 = vadd.f32 %v622, %v745
      %747 = vmatmul.bf16.gmra.mxu0 %v410
      %v748 = vpop.f32.mrf.mxu0
      %v749 = vadd.f32 %v625, %v748
      %v750 = vpop.f32.mrf.mxu0
      %v751 = vadd.f32 %v627, %v750
      %752 = vmatmul.bf16.gmra.mxu0 %v412
      %v753 = vpop.f32.mrf.mxu0
      %v754 = vadd.f32 %v630, %v753
      %v755 = vpop.f32.mrf.mxu0
      %v756 = vadd.f32 %v632, %v755
      %757 = vmatmul.bf16.gmra.mxu0 %v414
      %v758 = vpop.f32.mrf.mxu0
      %v759 = vadd.f32 %v635, %v758
      %v760 = vpop.f32.mrf.mxu0
      %v761 = vadd.f32 %v637, %v760
      %762 = vmatmul.bf16.gmra.mxu0 %v416
      %v763 = vpop.f32.mrf.mxu0
      %v764 = vadd.f32 %v640, %v763
      %v765 = vpop.f32.mrf.mxu0
      %v766 = vadd.f32 %v642, %v765
      %767 = vmatmul.bf16.gmra.mxu0 %v418
      %v768 = vpop.f32.mrf.mxu0
      %v769 = vadd.f32 %v645, %v768
      %v770 = vpop.f32.mrf.mxu0
      %v771 = vadd.f32 %v647, %v770
      %772 = vmatmul.bf16.gmra.mxu0 %v420
      %v773 = vpop.f32.mrf.mxu0
      %v774 = vadd.f32 %v650, %v773
      %v775 = vpop.f32.mrf.mxu0
      %v776 = vadd.f32 %v652, %v775
      %777 = vmatmul.bf16.gmra.mxu0 %v422
      %v778 = vpop.f32.mrf.mxu0
      %v779 = vadd.f32 %v655, %v778
      %v780 = vpop.f32.mrf.mxu0
      %v781 = vadd.f32 %v657, %v780
      %782 = vmatmul.bf16.gmra.mxu0 %v424
      %v783 = vpop.f32.mrf.mxu0
      %v784 = vadd.f32 %v660, %v783
      %v785 = vpop.f32.mrf.mxu0
      %v786 = vadd.f32 %v662, %v785
      %787 = vmatmul.bf16.gmra.mxu0 %v426
      %v788 = vpop.f32.mrf.mxu0
      %v789 = vadd.f32 %v665, %v788
      %v790 = vpop.f32.mrf.mxu0
      %v791 = vadd.f32 %v667, %v790
      %792 = vmatmul.bf16.gmra.mxu0 %v428
      %v793 = vpop.f32.mrf.mxu0
      %v794 = vadd.f32 %v670, %v793
      %v795 = vpop.f32.mrf.mxu0
      %v796 = vadd.f32 %v672, %v795
      %797 = vmatmul.bf16.gmra.mxu0 %v430
      %v798 = vpop.f32.mrf.mxu0
      %v799 = vadd.f32 %v675, %v798
      %v800 = vpop.f32.mrf.mxu0
      %v801 = vadd.f32 %v677, %v800
      %802 = vmatmul.bf16.gmra.mxu0 %v432
      %v803 = vpop.f32.mrf.mxu0
      %v804 = vadd.f32 %v680, %v803
      %v805 = vpop.f32.mrf.mxu0
      %v806 = vadd.f32 %v682, %v805
      %807 = vmatmul.bf16.gmra.mxu0 %v434
      %v808 = vpop.f32.mrf.mxu0
      %v809 = vadd.f32 %v685, %v808
      %v810 = vpop.f32.mrf.mxu0
      %v811 = vadd.f32 %v687, %v810
      %812 = vmatmul.bf16.gmra.mxu0 %v436
      %v813 = vpop.f32.mrf.mxu0
      %v814 = vadd.f32 %v690, %v813
      %v815 = vpop.f32.mrf.mxu0
      %v816 = vadd.f32 %v692, %v815
      %817 = vmatmul.bf16.gmra.mxu0 %v438
      %v818 = vpop.f32.mrf.mxu0
      %v819 = vadd.f32 %v695, %v818
      %v820 = vpop.f32.mrf.mxu0
      %v821 = vadd.f32 %v697, %v820
      %822 = vmatmul.bf16.gmra.mxu0 %v440
      %v823 = vpop.f32.mrf.mxu0
      %v824 = vadd.f32 %v700, %v823
      %v825 = vpop.f32.mrf.mxu0
      %v826 = vadd.f32 %v702, %v825
      %827 = vmatmul.bf16.gmra.mxu0 %v442
      %v828 = vpop.f32.mrf.mxu0
      %v829 = vadd.f32 %v705, %v828
      %v830 = vpop.f32.mrf.mxu0
      %v831 = vadd.f32 %v707, %v830
      %832 = vdwg.mxu0
      %v833 = vmax.f32 %v719, 0.0
      %v834 = vmax.f32 %v721, 0.0
      %v835 = vmax.f32 %v724, 0.0
      %v836 = vmax.f32 %v726, 0.0
      %v837 = vmax.f32 %v729, 0.0
      %v838 = vmax.f32 %v731, 0.0
      %v839 = vmax.f32 %v734, 0.0
      %v840 = vmax.f32 %v736, 0.0
      %v841 = vmax.f32 %v739, 0.0
      %v842 = vmax.f32 %v741, 0.0
      %v843 = vmax.f32 %v744, 0.0
      %v844 = vmax.f32 %v746, 0.0
      %v845 = vmax.f32 %v749, 0.0
      %v846 = vmax.f32 %v751, 0.0
      %v847 = vmax.f32 %v754, 0.0
      %v848 = vmax.f32 %v756, 0.0
      %v849 = vmax.f32 %v759, 0.0
      %v850 = vmax.f32 %v761, 0.0
      %v851 = vmax.f32 %v764, 0.0
      %v852 = vmax.f32 %v766, 0.0
      %v853 = vmax.f32 %v769, 0.0
      %v854 = vmax.f32 %v771, 0.0
      %v855 = vmax.f32 %v774, 0.0
      %v856 = vmax.f32 %v776, 0.0
      %v857 = vmax.f32 %v779, 0.0
      %v858 = vmax.f32 %v781, 0.0
      %v859 = vmax.f32 %v784, 0.0
      %v860 = vmax.f32 %v786, 0.0
      %v861 = vmax.f32 %v789, 0.0
      %v862 = vmax.f32 %v791, 0.0
      %v863 = vmax.f32 %v794, 0.0
      %v864 = vmax.f32 %v796, 0.0
      %v865 = vmax.f32 %v799, 0.0
      %v866 = vmax.f32 %v801, 0.0
      %v867 = vmax.f32 %v804, 0.0
      %v868 = vmax.f32 %v806, 0.0
      %v869 = vmax.f32 %v809, 0.0
      %v870 = vmax.f32 %v811, 0.0
      %v871 = vmax.f32 %v814, 0.0
      %v872 = vmax.f32 %v816, 0.0
      %v873 = vmax.f32 %v819, 0.0
      %v874 = vmax.f32 %v821, 0.0
      %v875 = vmax.f32 %v824, 0.0
      %v876 = vmax.f32 %v826, 0.0
      %v877 = vmax.f32 %v829, 0.0
      %v878 = vmax.f32 %v831, 0.0
      %v879 = vpack.c.bf16 %v833, %v833
      %v880 = vpack.c.bf16 %v834, %v834
      %v881 = vpack.c.bf16 %v835, %v835
      %v882 = vpack.c.bf16 %v836, %v836
      %v883 = vpack.c.bf16 %v837, %v837
      %v884 = vpack.c.bf16 %v838, %v838
      %v885 = vpack.c.bf16 %v839, %v839
      %v886 = vpack.c.bf16 %v840, %v840
      %v887 = vpack.c.bf16 %v841, %v841
      %v888 = vpack.c.bf16 %v842, %v842
      %v889 = vpack.c.bf16 %v843, %v843
      %v890 = vpack.c.bf16 %v844, %v844
      %v891 = vpack.c.bf16 %v845, %v845
      %v892 = vpack.c.bf16 %v846, %v846
      %v893 = vpack.c.bf16 %v847, %v847
      %v894 = vpack.c.bf16 %v848, %v848
      %v895 = vpack.c.bf16 %v849, %v849
      %v896 = vpack.c.bf16 %v850, %v850
      %v897 = vpack.c.bf16 %v851, %v851
      %v898 = vpack.c.bf16 %v852, %v852
      %v899 = vpack.c.bf16 %v853, %v853
      %v900 = vpack.c.bf16 %v854, %v854
      %v901 = vpack.c.bf16 %v855, %v855
      %v902 = vpack.c.bf16 %v856, %v856
      %v903 = vpack.c.bf16 %v857, %v857
      %v904 = vpack.c.bf16 %v858, %v858
      %v905 = vpack.c.bf16 %v859, %v859
      %v906 = vpack.c.bf16 %v860, %v860
      %v907 = vpack.c.bf16 %v861, %v861
      %v908 = vpack.c.bf16 %v862, %v862
      %v909 = vpack.c.bf16 %v863, %v863
      %v910 = vpack.c.bf16 %v864, %v864
      %v911 = vpack.c.bf16 %v865, %v865
      %v912 = vpack.c.bf16 %v866, %v866
      %v913 = vpack.c.bf16 %v867, %v867
      %v914 = vpack.c.bf16 %v868, %v868
      %v915 = vpack.c.bf16 %v869, %v869
      %v916 = vpack.c.bf16 %v870, %v870
      %v917 = vpack.c.bf16 %v871, %v871
      %v918 = vpack.c.bf16 %v872, %v872
      %v919 = vpack.c.bf16 %v873, %v873
      %v920 = vpack.c.bf16 %v874, %v874
      %v921 = vpack.c.bf16 %v875, %v875
      %v922 = vpack.c.bf16 %v876, %v876
      %v923 = vpack.c.bf16 %v877, %v877
      %v924 = vpack.c.bf16 %v878, %v878
      %vm925 = vcmask 257024
      %926 = vst.msk [vmem:[%s175] sm:$0xf] %vm925, %v879
      %927 = vst.msk [vmem:[%s175 + $0x4] sm:$0xf] %vm925, %v880
      %928 = vst.msk [vmem:[%s175 + $0x8] sm:$0xf] %vm925, %v881
      %929 = vst.msk [vmem:[%s175 + $0xc] sm:$0xf] %vm925, %v882
      %930 = vst.msk [vmem:[%s175 + $0x10] sm:$0xf] %vm925, %v883
      %931 = vst.msk [vmem:[%s175 + $0x14] sm:$0xf] %vm925, %v884
      %932 = vst.msk [vmem:[%s175 + $0x18] sm:$0xf] %vm925, %v885
      %933 = vst.msk [vmem:[%s175 + $0x1c] sm:$0xf] %vm925, %v886
      %934 = vst.msk [vmem:[%s175 + $0x20] sm:$0xf] %vm925, %v887
      %935 = vst.msk [vmem:[%s175 + $0x24] sm:$0xf] %vm925, %v888
      %936 = vst.msk [vmem:[%s175 + $0x28] sm:$0xf] %vm925, %v889
      %937 = vst.msk [vmem:[%s175 + $0x2c] sm:$0xf] %vm925, %v890
      %938 = vst.msk [vmem:[%s175 + $0x30] sm:$0xf] %vm925, %v891
      %939 = vst.msk [vmem:[%s175 + $0x34] sm:$0xf] %vm925, %v892
      %940 = vst.msk [vmem:[%s175 + $0x38] sm:$0xf] %vm925, %v893
      %941 = vst.msk [vmem:[%s175 + $0x3c] sm:$0xf] %vm925, %v894
      %942 = vst.msk [vmem:[%s175 + $0x40] sm:$0xf] %vm925, %v895
      %943 = vst.msk [vmem:[%s175 + $0x44] sm:$0xf] %vm925, %v896
      %944 = vst.msk [vmem:[%s175 + $0x48] sm:$0xf] %vm925, %v897
      %945 = vst.msk [vmem:[%s175 + $0x4c] sm:$0xf] %vm925, %v898
      %946 = vst.msk [vmem:[%s175 + $0x50] sm:$0xf] %vm925, %v899
      %947 = vst.msk [vmem:[%s175 + $0x54] sm:$0xf] %vm925, %v900
      %948 = vst.msk [vmem:[%s175 + $0x58] sm:$0xf] %vm925, %v901
      %949 = vst.msk [vmem:[%s175 + $0x5c] sm:$0xf] %vm925, %v902
      %950 = vst.msk [vmem:[%s175 + $0x60] sm:$0xf] %vm925, %v903
      %951 = vst.msk [vmem:[%s175 + $0x64] sm:$0xf] %vm925, %v904
      %952 = vst.msk [vmem:[%s175 + $0x68] sm:$0xf] %vm925, %v905
      %953 = vst.msk [vmem:[%s175 + $0x6c] sm:$0xf] %vm925, %v906
      %954 = vst.msk [vmem:[%s175 + $0x70] sm:$0xf] %vm925, %v907
      %955 = vst.msk [vmem:[%s175 + $0x74] sm:$0xf] %vm925, %v908
      %956 = vst.msk [vmem:[%s175 + $0x78] sm:$0xf] %vm925, %v909
      %957 = vst.msk [vmem:[%s175 + $0x7c] sm:$0xf] %vm925, %v910
      %958 = vst.msk [vmem:[%s175 + $0x80] sm:$0xf] %vm925, %v911
      %959 = vst.msk [vmem:[%s175 + $0x84] sm:$0xf] %vm925, %v912
      %960 = vst.msk [vmem:[%s175 + $0x88] sm:$0xf] %vm925, %v913
      %961 = vst.msk [vmem:[%s175 + $0x8c] sm:$0xf] %vm925, %v914
      %962 = vst.msk [vmem:[%s175 + $0x90] sm:$0xf] %vm925, %v915
      %963 = vst.msk [vmem:[%s175 + $0x94] sm:$0xf] %vm925, %v916
      %964 = vst.msk [vmem:[%s175 + $0x98] sm:$0xf] %vm925, %v917
      %965 = vst.msk [vmem:[%s175 + $0x9c] sm:$0xf] %vm925, %v918
      %966 = vst.msk [vmem:[%s175 + $0xa0] sm:$0xf] %vm925, %v919
      %967 = vst.msk [vmem:[%s175 + $0xa4] sm:$0xf] %vm925, %v920
      %968 = vst.msk [vmem:[%s175 + $0xa8] sm:$0xf] %vm925, %v921
      %969 = vst.msk [vmem:[%s175 + $0xac] sm:$0xf] %vm925, %v922
      %970 = vst.msk [vmem:[%s175 + $0xb0] sm:$0xf] %vm925, %v923
      %971 = vst.msk [vmem:[%s175 + $0xb4] sm:$0xf] %vm925, %v924
      %s972 = smul.u32 46, %s14
      %p973 = scmp.lt.s32.totalorder %s972, 91
      %s974 = scalar_select %p973, %s972, 91
      %s975 = smul.addr %s974, 4
      %s976 = scalar_lea.vmem %s3, %s975
      // Predicated region
      $region33: #{qnetwork_forward.4} parent=31 // pred_check
        %p977 = pneg %p100
      $region34: #{qnetwork_forward.4} parent=31 // pred_check_branch
        %979 = sbr.rel (%p977) target = $region36
      $region35: #{qnetwork_forward.4} parent=31 // pred_region
        %s980 = smul.u32 46, %s14
      $region36: #{qnetwork_forward.4} parent=31 // pred_fallthru
        _
    $region32: #{qnetwork_forward.4} parent=5 // pred_fallthru
      _
    %p981 = scmp.le.s32.totalorder 2, %s9
    // Predicated region
    $region37: #{qnetwork_forward.4} parent=5 // pred_check
      %p982 = pneg %p981
    $region38: #{qnetwork_forward.4} parent=5 // pred_check_branch
      %984 = sbr.rel (%p982) target = $region40
    $region39: #{qnetwork_forward.4} parent=5 // pred_region
      %s985 = ssub.s32 %s9, 2
      // Predicated region
      $region41: #{qnetwork_forward.4} parent=39 // pred_check
        %p986 = pneg %p106
      $region42: #{qnetwork_forward.4} parent=39 // pred_check_branch
        %988 = sbr.rel (%p986) target = $region44
      $region43: #{qnetwork_forward.4} parent=39 // pred_region
        %s989 = smul.u32 46, %s15
        %p990 = scmp.lt.s32.totalorder %s989, 91
        %s991 = scalar_select %p990, %s989, 91
        %s992 = smul.addr %s991, 4
        %s993 = scalar_lea.vmem %s3, %s992
      $region44: #{qnetwork_forward.4} parent=39 // pred_fallthru
        _
    $region40: #{qnetwork_forward.4} parent=5 // pred_fallthru
      _
  $region6: #{qnetwork_forward.4} parent=0 // loop_footer
    %s13 = sadd.s32 1, %s9
  $region7: #{qnetwork_forward.4} parent=0 // loop_footer_branch
    %8 = sbr.rel target = $region3
  $region8: #{qnetwork_forward.4} parent=0 // loop_exit
    _

// kernel: qnetwork_forward.5
$region0: #{qnetwork_forward.5}
  #allocation0 [shape = 'u32[]', space=smem, size = 0x4, offset = 0x4, fixed_abs, tag = 'smem constant byte address 0x4 - core index']
  #allocation1 [shape = 'u32[72,128]{1,0:T(1,128)}', space=vmem, size = 0x9000, scoped, tag = 'internal scratch']
  %s0 = inlined_call_operand.vmem [shape: bf16[128,512], index: 0, kind: input, shape index: {}]
  %s1 = inlined_call_operand.vmem [shape: bf16[512,64], index: 1, kind: input, shape index: {}]
  %s2 = inlined_call_operand.vmem [shape: f32[1,64], index: 2, kind: input, shape index: {}]
  %s3 = inlined_call_operand.vmem [shape: bf16[128,64], index: 3, kind: output, shape index: {}]
  %s4 = sld [smem:[#allocation0]]
  $region22: #{qnetwork_forward.5} parent=0
    _
  %s6 = ssub.s32 1, %s4
  %s7 = scalar_select 0, %s6, %s4
  // Predicated region
  $region2: #{qnetwork_forward.5} parent=0 // pred_check
    _
  $region3: #{qnetwork_forward.5} parent=0 // pred_check_branch
    %9 = sbr.rel (0) target = $region5
  $region4: #{qnetwork_forward.5} parent=0 // pred_region
    _
  $region5: #{qnetwork_forward.5} parent=0 // pred_fallthru
    _
  // Predicated region
  $region6: #{qnetwork_forward.5} parent=0 // pred_check
    _
  $region7: #{qnetwork_forward.5} parent=0 // pred_check_branch
    %11 = sbr.rel (0) target = $region9
  $region8: #{qnetwork_forward.5} parent=0 // pred_region
    _
  $region9: #{qnetwork_forward.5} parent=0 // pred_fallthru
    _
  // Predicated region
  $region10: #{qnetwork_forward.5} parent=0 // pred_check
    _
  $region11: #{qnetwork_forward.5} parent=0 // pred_check_branch
    %13 = sbr.rel (0) target = $region13
  $region12: #{qnetwork_forward.5} parent=0 // pred_region
    _
  $region13: #{qnetwork_forward.5} parent=0 // pred_fallthru
    _
  %v14 = vld [vmem:[%s0] sm:$0xff]
  %v15 = vld [vmem:[%s0 + $0x8] sm:$0xff]
  %v16 = vld [vmem:[%s0 + $0x10] sm:$0xff]
  %v17 = vld [vmem:[%s0 + $0x18] sm:$0xff]
  %v18 = vld [vmem:[%s0 + $0x20] sm:$0xff]
  %v19 = vld [vmem:[%s0 + $0x28] sm:$0xff]
  %v20 = vld [vmem:[%s0 + $0x30] sm:$0xff]
  %v21 = vld [vmem:[%s0 + $0x38] sm:$0xff]
  %v22 = vld [vmem:[%s0 + $0x40] sm:$0xff]
  %v23 = vld [vmem:[%s0 + $0x48] sm:$0xff]
  %v24 = vld [vmem:[%s0 + $0x50] sm:$0xff]
  %v25 = vld [vmem:[%s0 + $0x58] sm:$0xff]
  %v26 = vld [vmem:[%s0 + $0x60] sm:$0xff]
  %v27 = vld [vmem:[%s0 + $0x68] sm:$0xff]
  %v28 = vld [vmem:[%s0 + $0x70] sm:$0xff]
  %v29 = vld [vmem:[%s0 + $0x78] sm:$0xff]
  %v30 = vld [vmem:[%s0 + $0x80] sm:$0xff]
  %v31 = vld [vmem:[%s0 + $0x88] sm:$0xff]
  %v32 = vld [vmem:[%s0 + $0x90] sm:$0xff]
  %v33 = vld [vmem:[%s0 + $0x98] sm:$0xff]
  %v34 = vld [vmem:[%s0 + $0xa0] sm:$0xff]
  %v35 = vld [vmem:[%s0 + $0xa8] sm:$0xff]
  %v36 = vld [vmem:[%s0 + $0xb0] sm:$0xff]
  %v37 = vld [vmem:[%s0 + $0xb8] sm:$0xff]
  %v38 = vld [vmem:[%s0 + $0xc0] sm:$0xff]
  %v39 = vld [vmem:[%s0 + $0xc8] sm:$0xff]
  %v40 = vld [vmem:[%s0 + $0xd0] sm:$0xff]
  %v41 = vld [vmem:[%s0 + $0xd8] sm:$0xff]
  %v42 = vld [vmem:[%s0 + $0xe0] sm:$0xff]
  %v43 = vld [vmem:[%s0 + $0xe8] sm:$0xff]
  %v44 = vld [vmem:[%s0 + $0xf0] sm:$0xff]
  %v45 = vld [vmem:[%s0 + $0xf8] sm:$0xff]
  %v46 = vld [vmem:[%s1] sm:$0xf]
  %v47 = vld [vmem:[%s1 + $0x4] sm:$0xf]
  %v48 = vld [vmem:[%s1 + $0x8] sm:$0xf]
  %v49 = vld [vmem:[%s1 + $0xc] sm:$0xf]
  %v50 = vld [vmem:[%s1 + $0x10] sm:$0xf]
  %v51 = vld [vmem:[%s1 + $0x14] sm:$0xf]
  %v52 = vld [vmem:[%s1 + $0x18] sm:$0xf]
  %v53 = vld [vmem:[%s1 + $0x1c] sm:$0xf]
  %v54 = vld [vmem:[%s1 + $0x20] sm:$0xf]
  %v55 = vld [vmem:[%s1 + $0x24] sm:$0xf]
  %v56 = vld [vmem:[%s1 + $0x28] sm:$0xf]
  %v57 = vld [vmem:[%s1 + $0x2c] sm:$0xf]
  %v58 = vld [vmem:[%s1 + $0x30] sm:$0xf]
  %v59 = vld [vmem:[%s1 + $0x34] sm:$0xf]
  %v60 = vld [vmem:[%s1 + $0x38] sm:$0xf]
  %v61 = vld [vmem:[%s1 + $0x3c] sm:$0xf]
  %v62 = vld [vmem:[%s1 + $0x40] sm:$0xf]
  %v63 = vld [vmem:[%s1 + $0x44] sm:$0xf]
  %v64 = vld [vmem:[%s1 + $0x48] sm:$0xf]
  %v65 = vld [vmem:[%s1 + $0x4c] sm:$0xf]
  %v66 = vld [vmem:[%s1 + $0x50] sm:$0xf]
  %v67 = vld [vmem:[%s1 + $0x54] sm:$0xf]
  %v68 = vld [vmem:[%s1 + $0x58] sm:$0xf]
  %v69 = vld [vmem:[%s1 + $0x5c] sm:$0xf]
  %v70 = vld [vmem:[%s1 + $0x60] sm:$0xf]
  %v71 = vld [vmem:[%s1 + $0x64] sm:$0xf]
  %v72 = vld [vmem:[%s1 + $0x68] sm:$0xf]
  %v73 = vld [vmem:[%s1 + $0x6c] sm:$0xf]
  %v74 = vld [vmem:[%s1 + $0x70] sm:$0xf]
  %v75 = vld [vmem:[%s1 + $0x74] sm:$0xf]
  %v76 = vld [vmem:[%s1 + $0x78] sm:$0xf]
  %v77 = vld [vmem:[%s1 + $0x7c] sm:$0xf]
  %v78 = vld [vmem:[%s1 + $0x80] sm:$0xf]
  %v79 = vld [vmem:[%s1 + $0x84] sm:$0xf]
  %v80 = vld [vmem:[%s1 + $0x88] sm:$0xf]
  %v81 = vld [vmem:[%s1 + $0x8c] sm:$0xf]
  %v82 = vld [vmem:[%s1 + $0x90] sm:$0xf]
  %v83 = vld [vmem:[%s1 + $0x94] sm:$0xf]
  %v84 = vld [vmem:[%s1 + $0x98] sm:$0xf]
  %v85 = vld [vmem:[%s1 + $0x9c] sm:$0xf]
  %v86 = vld [vmem:[%s1 + $0xa0] sm:$0xf]
  %v87 = vld [vmem:[%s1 + $0xa4] sm:$0xf]
  %v88 = vld [vmem:[%s1 + $0xa8] sm:$0xf]
  %v89 = vld [vmem:[%s1 + $0xac] sm:$0xf]
  %v90 = vld [vmem:[%s1 + $0xb0] sm:$0xf]
  %v91 = vld [vmem:[%s1 + $0xb4] sm:$0xf]
  %v92 = vld [vmem:[%s1 + $0xb8] sm:$0xf]
  %v93 = vld [vmem:[%s1 + $0xbc] sm:$0xf]
  %v94 = vld [vmem:[%s1 + $0xc0] sm:$0xf]
  %v95 = vld [vmem:[%s1 + $0xc4] sm:$0xf]
  %v96 = vld [vmem:[%s1 + $0xc8] sm:$0xf]
  %v97 = vld [vmem:[%s1 + $0xcc] sm:$0xf]
  %v98 = vld [vmem:[%s1 + $0xd0] sm:$0xf]
  %v99 = vld [vmem:[%s1 + $0xd4] sm:$0xf]
  %v100 = vld [vmem:[%s1 + $0xd8] sm:$0xf]
  %v101 = vld [vmem:[%s1 + $0xdc] sm:$0xf]
  %v102 = vld [vmem:[%s1 + $0xe0] sm:$0xf]
  %v103 = vld [vmem:[%s1 + $0xe4] sm:$0xf]
  %v104 = vld [vmem:[%s1 + $0xe8] sm:$0xf]
  %v105 = vld [vmem:[%s1 + $0xec] sm:$0xf]
  %v106 = vld [vmem:[%s1 + $0xf0] sm:$0xf]
  %v107 = vld [vmem:[%s1 + $0xf4] sm:$0xf]
  %v108 = vld [vmem:[%s1 + $0xf8] sm:$0xf]
  %v109 = vld [vmem:[%s1 + $0xfc] sm:$0xf]
  %v110 = vld [vmem:[%s2] sm:$0x1]
  %v112 = vperm.slane %v110, 0
  %v146 = vunpack.c.l.b16 %v14
  %v147 = vunpack.c.h.b16 %v14
  %v148 = vunpack.c.l.b16 %v15
  %v149 = vunpack.c.h.b16 %v15
  %v150 = vunpack.c.l.b16 %v16
  %v151 = vunpack.c.h.b16 %v16
  %v152 = vunpack.c.l.b16 %v17
  %v153 = vunpack.c.h.b16 %v17
  %v154 = vunpack.c.l.b16 %v18
  %v155 = vunpack.c.h.b16 %v18
  %v156 = vunpack.c.l.b16 %v19
  %v157 = vunpack.c.h.b16 %v19
  %v158 = vunpack.c.l.b16 %v20
  %v159 = vunpack.c.h.b16 %v20
  %v160 = vunpack.c.l.b16 %v21
  %v161 = vunpack.c.h.b16 %v21
  %v162 = vunpack.c.l.b16 %v22
  %v163 = vunpack.c.h.b16 %v22
  %v164 = vunpack.c.l.b16 %v23
  %v165 = vunpack.c.h.b16 %v23
  %v166 = vunpack.c.l.b16 %v24
  %v167 = vunpack.c.h.b16 %v24
  %v168 = vunpack.c.l.b16 %v25
  %v169 = vunpack.c.h.b16 %v25
  %v170 = vunpack.c.l.b16 %v26
  %v171 = vunpack.c.h.b16 %v26
  %v172 = vunpack.c.l.b16 %v27
  %v173 = vunpack.c.h.b16 %v27
  %v174 = vunpack.c.l.b16 %v28
  %v175 = vunpack.c.h.b16 %v28
  %v176 = vunpack.c.l.b16 %v29
  %v177 = vunpack.c.h.b16 %v29
  %v178 = vunpack.c.l.b16 %v30
  %v179 = vunpack.c.h.b16 %v30
  %v180 = vunpack.c.l.b16 %v31
  %v181 = vunpack.c.h.b16 %v31
  %v182 = vunpack.c.l.b16 %v32
  %v183 = vunpack.c.h.b16 %v32
  %v184 = vunpack.c.l.b16 %v33
  %v185 = vunpack.c.h.b16 %v33
  %v186 = vunpack.c.l.b16 %v34
  %v187 = vunpack.c.h.b16 %v34
  %v188 = vunpack.c.l.b16 %v35
  %v189 = vunpack.c.h.b16 %v35
  %v190 = vunpack.c.l.b16 %v36
  %v191 = vunpack.c.h.b16 %v36
  %v192 = vunpack.c.l.b16 %v37
  %v193 = vunpack.c.h.b16 %v37
  %v194 = vunpack.c.l.b16 %v38
  %v195 = vunpack.c.h.b16 %v38
  %v196 = vunpack.c.l.b16 %v39
  %v197 = vunpack.c.h.b16 %v39
  %v198 = vunpack.c.l.b16 %v40
  %v199 = vunpack.c.h.b16 %v40
  %v200 = vunpack.c.l.b16 %v41
  %v201 = vunpack.c.h.b16 %v41
  %v202 = vunpack.c.l.b16 %v42
  %v203 = vunpack.c.h.b16 %v42
  %v204 = vunpack.c.l.b16 %v43
  %v205 = vunpack.c.h.b16 %v43
  %v206 = vunpack.c.l.b16 %v44
  %v207 = vunpack.c.h.b16 %v44
  %v208 = vunpack.c.l.b16 %v45
  %v209 = vunpack.c.h.b16 %v45
  %v210 = vpack.c.b16 %v150, %v146
  %v211 = vpack.c.b16 %v151, %v147
  %v212 = vpack.c.b16 %v152, %v148
  %v213 = vpack.c.b16 %v153, %v149
  %v214 = vpack.c.b16 %v158, %v154
  %v215 = vpack.c.b16 %v159, %v155
  %v216 = vpack.c.b16 %v160, %v156
  %v217 = vpack.c.b16 %v161, %v157
  %v218 = vpack.c.b16 %v166, %v162
  %v219 = vpack.c.b16 %v167, %v163
  %v220 = vpack.c.b16 %v168, %v164
  %v221 = vpack.c.b16 %v169, %v165
  %v222 = vpack.c.b16 %v174, %v170
  %v223 = vpack.c.b16 %v175, %v171
  %v224 = vpack.c.b16 %v176, %v172
  %v225 = vpack.c.b16 %v177, %v173
  %v226 = vpack.c.b16 %v182, %v178
  %v227 = vpack.c.b16 %v183, %v179
  %v228 = vpack.c.b16 %v184, %v180
  %v229 = vpack.c.b16 %v185, %v181
  %v230 = vpack.c.b16 %v190, %v186
  %v231 = vpack.c.b16 %v191, %v187
  %v232 = vpack.c.b16 %v192, %v188
  %v233 = vpack.c.b16 %v193, %v189
  %v234 = vpack.c.b16 %v198, %v194
  %v235 = vpack.c.b16 %v199, %v195
  %v236 = vpack.c.b16 %v200, %v196
  %v237 = vpack.c.b16 %v201, %v197
  %v238 = vpack.c.b16 %v206, %v202
  %v239 = vpack.c.b16 %v207, %v203
  %v240 = vpack.c.b16 %v208, %v204
  %v241 = vpack.c.b16 %v209, %v205
  %v338 = vunpack.c.l.b16 %v46
  %v339 = vunpack.c.l.b16 %v47
  %v340 = vunpack.c.l.b16 %v48
  %v341 = vunpack.c.l.b16 %v49
  %v342 = vunpack.c.l.b16 %v50
  %v343 = vunpack.c.l.b16 %v51
  %v344 = vunpack.c.l.b16 %v52
  %v345 = vunpack.c.l.b16 %v53
  %v346 = vunpack.c.l.b16 %v54
  %v347 = vunpack.c.l.b16 %v55
  %v348 = vunpack.c.l.b16 %v56
  %v349 = vunpack.c.l.b16 %v57
  %v350 = vunpack.c.l.b16 %v58
  %v351 = vunpack.c.l.b16 %v59
  %v352 = vunpack.c.l.b16 %v60
  %v353 = vunpack.c.l.b16 %v61
  %v354 = vunpack.c.l.b16 %v62
  %v355 = vunpack.c.l.b16 %v63
  %v356 = vunpack.c.l.b16 %v64
  %v357 = vunpack.c.l.b16 %v65
  %v358 = vunpack.c.l.b16 %v66
  %v359 = vunpack.c.l.b16 %v67
  %v360 = vunpack.c.l.b16 %v68
  %v361 = vunpack.c.l.b16 %v69
  %v362 = vunpack.c.l.b16 %v70
  %v363 = vunpack.c.l.b16 %v71
  %v364 = vunpack.c.l.b16 %v72
  %v365 = vunpack.c.l.b16 %v73
  %v366 = vunpack.c.l.b16 %v74
  %v367 = vunpack.c.l.b16 %v75
  %v368 = vunpack.c.l.b16 %v76
  %v369 = vunpack.c.l.b16 %v77
  %v370 = vunpack.c.l.b16 %v78
  %v371 = vunpack.c.l.b16 %v79
  %v372 = vunpack.c.l.b16 %v80
  %v373 = vunpack.c.l.b16 %v81
  %v374 = vunpack.c.l.b16 %v82
  %v375 = vunpack.c.l.b16 %v83
  %v376 = vunpack.c.l.b16 %v84
  %v377 = vunpack.c.l.b16 %v85
  %v378 = vunpack.c.l.b16 %v86
  %v379 = vunpack.c.l.b16 %v87
  %v380 = vunpack.c.l.b16 %v88
  %v381 = vunpack.c.l.b16 %v89
  %v382 = vunpack.c.l.b16 %v90
  %v383 = vunpack.c.l.b16 %v91
  %v384 = vunpack.c.l.b16 %v92
  %v385 = vunpack.c.l.b16 %v93
  %v386 = vunpack.c.l.b16 %v94
  %v387 = vunpack.c.l.b16 %v95
  %v388 = vunpack.c.l.b16 %v96
  %v389 = vunpack.c.l.b16 %v97
  %v390 = vunpack.c.l.b16 %v98
  %v391 = vunpack.c.l.b16 %v99
  %v392 = vunpack.c.l.b16 %v100
  %v393 = vunpack.c.l.b16 %v101
  %v394 = vunpack.c.l.b16 %v102
  %v395 = vunpack.c.l.b16 %v103
  %v396 = vunpack.c.l.b16 %v104
  %v397 = vunpack.c.l.b16 %v105
  %v398 = vunpack.c.l.b16 %v106
  %v399 = vunpack.c.l.b16 %v107
  %v400 = vunpack.c.l.b16 %v108
  %v401 = vunpack.c.l.b16 %v109
  %v402 = vpack.c.b16 %v339, %v338
  %v403 = vpack.c.b16 %v341, %v340
  %v404 = vpack.c.b16 %v343, %v342
  %v405 = vpack.c.b16 %v345, %v344
  %v406 = vpack.c.b16 %v347, %v346
  %v407 = vpack.c.b16 %v349, %v348
  %v408 = vpack.c.b16 %v351, %v350
  %v409 = vpack.c.b16 %v353, %v352
  %v410 = vpack.c.b16 %v355, %v354
  %v411 = vpack.c.b16 %v357, %v356
  %v412 = vpack.c.b16 %v359, %v358
  %v413 = vpack.c.b16 %v361, %v360
  %v414 = vpack.c.b16 %v363, %v362
  %v415 = vpack.c.b16 %v365, %v364
  %v416 = vpack.c.b16 %v367, %v366
  %v417 = vpack.c.b16 %v369, %v368
  %v418 = vpack.c.b16 %v371, %v370
  %v419 = vpack.c.b16 %v373, %v372
  %v420 = vpack.c.b16 %v375, %v374
  %v421 = vpack.c.b16 %v377, %v376
  %v422 = vpack.c.b16 %v379, %v378
  %v423 = vpack.c.b16 %v381, %v380
  %v424 = vpack.c.b16 %v383, %v382
  %v425 = vpack.c.b16 %v385, %v384
  %v426 = vpack.c.b16 %v387, %v386
  %v427 = vpack.c.b16 %v389, %v388
  %v428 = vpack.c.b16 %v391, %v390
  %v429 = vpack.c.b16 %v393, %v392
  %v430 = vpack.c.b16 %v395, %v394
  %v431 = vpack.c.b16 %v397, %v396
  %v432 = vpack.c.b16 %v399, %v398
  %v433 = vpack.c.b16 %v401, %v400
  %466 = vmatpush.bf16.msra.mxu0 %v409
  %467 = vmatpush.bf16.msra.mxu0 %v408
  %468 = vmatpush.bf16.msra.mxu0 %v407
  %469 = vmatpush.bf16.msra.mxu0 %v406
  %470 = vmatpush.bf16.msra.mxu0 %v405
  %471 = vmatpush.bf16.msra.mxu0 %v404
  %472 = vmatpush.bf16.msra.mxu0 %v403
  %473 = vmatpush.bf16.msra.mxu0 %v402
  %474 = vmatmul.bf16.gmra.mxu0 %v210
  %v475 = vpop.f32.mrf.mxu0
  %v476 = vadd.f32 %v112, %v475
  %v477 = vpop.f32.mrf.mxu0
  %v478 = vadd.f32 %v112, %v477
  %479 = vmatmul.bf16.gmra.mxu0 %v214
  %v480 = vpop.f32.mrf.mxu0
  %v481 = vadd.f32 %v112, %v480
  %v482 = vpop.f32.mrf.mxu0
  %v483 = vadd.f32 %v112, %v482
  %484 = vmatmul.bf16.gmra.mxu0 %v218
  %v485 = vpop.f32.mrf.mxu0
  %v486 = vadd.f32 %v112, %v485
  %v487 = vpop.f32.mrf.mxu0
  %v488 = vadd.f32 %v112, %v487
  %489 = vmatmul.bf16.gmra.mxu0 %v222
  %v490 = vpop.f32.mrf.mxu0
  %v491 = vadd.f32 %v112, %v490
  %v492 = vpop.f32.mrf.mxu0
  %v493 = vadd.f32 %v112, %v492
  %494 = vmatmul.bf16.gmra.mxu0 %v226
  %v495 = vpop.f32.mrf.mxu0
  %v496 = vadd.f32 %v112, %v495
  %v497 = vpop.f32.mrf.mxu0
  %v498 = vadd.f32 %v112, %v497
  %499 = vmatmul.bf16.gmra.mxu0 %v230
  %v500 = vpop.f32.mrf.mxu0
  %v501 = vadd.f32 %v112, %v500
  %v502 = vpop.f32.mrf.mxu0
  %v503 = vadd.f32 %v112, %v502
  %504 = vmatmul.bf16.gmra.mxu0 %v234
  %v505 = vpop.f32.mrf.mxu0
  %v506 = vadd.f32 %v112, %v505
  %v507 = vpop.f32.mrf.mxu0
  %v508 = vadd.f32 %v112, %v507
  %509 = vmatmul.bf16.gmra.mxu0 %v238
  %v510 = vpop.f32.mrf.mxu0
  %v511 = vadd.f32 %v112, %v510
  %v512 = vpop.f32.mrf.mxu0
  %v513 = vadd.f32 %v112, %v512
  %514 = vdwg.mxu0
  %515 = vmatpush.bf16.msra.mxu0 %v417
  %516 = vmatpush.bf16.msra.mxu0 %v416
  %517 = vmatpush.bf16.msra.mxu0 %v415
  %518 = vmatpush.bf16.msra.mxu0 %v414
  %519 = vmatpush.bf16.msra.mxu0 %v413
  %520 = vmatpush.bf16.msra.mxu0 %v412
  %521 = vmatpush.bf16.msra.mxu0 %v411
  %522 = vmatpush.bf16.msra.mxu0 %v410
  %523 = vmatmul.bf16.gmra.mxu0 %v211
  %v524 = vpop.f32.mrf.mxu0
  %v525 = vadd.f32 %v476, %v524
  %v526 = vpop.f32.mrf.mxu0
  %v527 = vadd.f32 %v478, %v526
  %528 = vmatmul.bf16.gmra.mxu0 %v215
  %v529 = vpop.f32.mrf.mxu0
  %v530 = vadd.f32 %v481, %v529
  %v531 = vpop.f32.mrf.mxu0
  %v532 = vadd.f32 %v483, %v531
  %533 = vmatmul.bf16.gmra.mxu0 %v219
  %v534 = vpop.f32.mrf.mxu0
  %v535 = vadd.f32 %v486, %v534
  %v536 = vpop.f32.mrf.mxu0
  %v537 = vadd.f32 %v488, %v536
  %538 = vmatmul.bf16.gmra.mxu0 %v223
  %v539 = vpop.f32.mrf.mxu0
  %v540 = vadd.f32 %v491, %v539
  %v541 = vpop.f32.mrf.mxu0
  %v542 = vadd.f32 %v493, %v541
  %543 = vmatmul.bf16.gmra.mxu0 %v227
  %v544 = vpop.f32.mrf.mxu0
  %v545 = vadd.f32 %v496, %v544
  %v546 = vpop.f32.mrf.mxu0
  %v547 = vadd.f32 %v498, %v546
  %548 = vmatmul.bf16.gmra.mxu0 %v231
  %v549 = vpop.f32.mrf.mxu0
  %v550 = vadd.f32 %v501, %v549
  %v551 = vpop.f32.mrf.mxu0
  %v552 = vadd.f32 %v503, %v551
  %553 = vmatmul.bf16.gmra.mxu0 %v235
  %v554 = vpop.f32.mrf.mxu0
  %v555 = vadd.f32 %v506, %v554
  %v556 = vpop.f32.mrf.mxu0
  %v557 = vadd.f32 %v508, %v556
  %558 = vmatmul.bf16.gmra.mxu0 %v239
  %v559 = vpop.f32.mrf.mxu0
  %v560 = vadd.f32 %v511, %v559
  %v561 = vpop.f32.mrf.mxu0
  %v562 = vadd.f32 %v513, %v561
  %563 = vdwg.mxu0
  %564 = vmatpush.bf16.msra.mxu0 %v425
  %565 = vmatpush.bf16.msra.mxu0 %v424
  %566 = vmatpush.bf16.msra.mxu0 %v423
  %567 = vmatpush.bf16.msra.mxu0 %v422
  %568 = vmatpush.bf16.msra.mxu0 %v421
  %569 = vmatpush.bf16.msra.mxu0 %v420
  %570 = vmatpush.bf16.msra.mxu0 %v419
  %571 = vmatpush.bf16.msra.mxu0 %v418
  %572 = vmatmul.bf16.gmra.mxu0 %v212
  %v573 = vpop.f32.mrf.mxu0
  %v574 = vadd.f32 %v525, %v573
  %v575 = vpop.f32.mrf.mxu0
  %v576 = vadd.f32 %v527, %v575
  %577 = vmatmul.bf16.gmra.mxu0 %v216
  %v578 = vpop.f32.mrf.mxu0
  %v579 = vadd.f32 %v530, %v578
  %v580 = vpop.f32.mrf.mxu0
  %v581 = vadd.f32 %v532, %v580
  %582 = vmatmul.bf16.gmra.mxu0 %v220
  %v583 = vpop.f32.mrf.mxu0
  %v584 = vadd.f32 %v535, %v583
  %v585 = vpop.f32.mrf.mxu0
  %v586 = vadd.f32 %v537, %v585
  %587 = vmatmul.bf16.gmra.mxu0 %v224
  %v588 = vpop.f32.mrf.mxu0
  %v589 = vadd.f32 %v540, %v588
  %v590 = vpop.f32.mrf.mxu0
  %v591 = vadd.f32 %v542, %v590
  %592 = vmatmul.bf16.gmra.mxu0 %v228
  %v593 = vpop.f32.mrf.mxu0
  %v594 = vadd.f32 %v545, %v593
  %v595 = vpop.f32.mrf.mxu0
  %v596 = vadd.f32 %v547, %v595
  %597 = vmatmul.bf16.gmra.mxu0 %v232
  %v598 = vpop.f32.mrf.mxu0
  %v599 = vadd.f32 %v550, %v598
  %v600 = vpop.f32.mrf.mxu0
  %v601 = vadd.f32 %v552, %v600
  %602 = vmatmul.bf16.gmra.mxu0 %v236
  %v603 = vpop.f32.mrf.mxu0
  %v604 = vadd.f32 %v555, %v603
  %v605 = vpop.f32.mrf.mxu0
  %v606 = vadd.f32 %v557, %v605
  %607 = vmatmul.bf16.gmra.mxu0 %v240
  %v608 = vpop.f32.mrf.mxu0
  %v609 = vadd.f32 %v560, %v608
  %v610 = vpop.f32.mrf.mxu0
  %v611 = vadd.f32 %v562, %v610
  %612 = vdwg.mxu0
  %613 = vmatpush.bf16.msra.mxu0 %v433
  %614 = vmatpush.bf16.msra.mxu0 %v432
  %615 = vmatpush.bf16.msra.mxu0 %v431
  %616 = vmatpush.bf16.msra.mxu0 %v430
  %617 = vmatpush.bf16.msra.mxu0 %v429
  %618 = vmatpush.bf16.msra.mxu0 %v428
  %619 = vmatpush.bf16.msra.mxu0 %v427
  %620 = vmatpush.bf16.msra.mxu0 %v426
  %621 = vmatmul.bf16.gmra.mxu0 %v213
  %v622 = vpop.f32.mrf.mxu0
  %v623 = vadd.f32 %v574, %v622
  %v624 = vpop.f32.mrf.mxu0
  %v625 = vadd.f32 %v576, %v624
  %626 = vmatmul.bf16.gmra.mxu0 %v217
  %v627 = vpop.f32.mrf.mxu0
  %v628 = vadd.f32 %v579, %v627
  %v629 = vpop.f32.mrf.mxu0
  %v630 = vadd.f32 %v581, %v629
  %631 = vmatmul.bf16.gmra.mxu0 %v221
  %v632 = vpop.f32.mrf.mxu0
  %v633 = vadd.f32 %v584, %v632
  %v634 = vpop.f32.mrf.mxu0
  %v635 = vadd.f32 %v586, %v634
  %636 = vmatmul.bf16.gmra.mxu0 %v225
  %v637 = vpop.f32.mrf.mxu0
  %v638 = vadd.f32 %v589, %v637
  %v639 = vpop.f32.mrf.mxu0
  %v640 = vadd.f32 %v591, %v639
  %641 = vmatmul.bf16.gmra.mxu0 %v229
  %v642 = vpop.f32.mrf.mxu0
  %v643 = vadd.f32 %v594, %v642
  %v644 = vpop.f32.mrf.mxu0
  %v645 = vadd.f32 %v596, %v644
  %646 = vmatmul.bf16.gmra.mxu0 %v233
  %v647 = vpop.f32.mrf.mxu0
  %v648 = vadd.f32 %v599, %v647
  %v649 = vpop.f32.mrf.mxu0
  %v650 = vadd.f32 %v601, %v649
  %651 = vmatmul.bf16.gmra.mxu0 %v237
  %v652 = vpop.f32.mrf.mxu0
  %v653 = vadd.f32 %v604, %v652
  %v654 = vpop.f32.mrf.mxu0
  %v655 = vadd.f32 %v606, %v654
  %656 = vmatmul.bf16.gmra.mxu0 %v241
  %v657 = vpop.f32.mrf.mxu0
  %v658 = vadd.f32 %v609, %v657
  %v659 = vpop.f32.mrf.mxu0
  %v660 = vadd.f32 %v611, %v659
  %661 = vdwg.mxu0
  %v662 = vmax.f32 %v623, 0.0
  %v663 = vmax.f32 %v625, 0.0
  %v664 = vmax.f32 %v628, 0.0
  %v665 = vmax.f32 %v630, 0.0
  %v666 = vmax.f32 %v633, 0.0
  %v667 = vmax.f32 %v635, 0.0
  %v668 = vmax.f32 %v638, 0.0
  %v669 = vmax.f32 %v640, 0.0
  %v670 = vmax.f32 %v643, 0.0
  %v671 = vmax.f32 %v645, 0.0
  %v672 = vmax.f32 %v648, 0.0
  %v673 = vmax.f32 %v650, 0.0
  %v674 = vmax.f32 %v653, 0.0
  %v675 = vmax.f32 %v655, 0.0
  %v676 = vmax.f32 %v658, 0.0
  %v677 = vmax.f32 %v660, 0.0
  %v678 = vpack.c.bf16 %v662, %v662
  %v679 = vpack.c.bf16 %v663, %v663
  %v680 = vpack.c.bf16 %v664, %v664
  %v681 = vpack.c.bf16 %v665, %v665
  %v682 = vpack.c.bf16 %v666, %v666
  %v683 = vpack.c.bf16 %v667, %v667
  %v684 = vpack.c.bf16 %v668, %v668
  %v685 = vpack.c.bf16 %v669, %v669
  %v686 = vpack.c.bf16 %v670, %v670
  %v687 = vpack.c.bf16 %v671, %v671
  %v688 = vpack.c.bf16 %v672, %v672
  %v689 = vpack.c.bf16 %v673, %v673
  %v690 = vpack.c.bf16 %v674, %v674
  %v691 = vpack.c.bf16 %v675, %v675
  %v692 = vpack.c.bf16 %v676, %v676
  %v693 = vpack.c.bf16 %v677, %v677
  %vm694 = vcmask 519168
  %695 = vst.msk [vmem:[%s3] sm:$0xf] %vm694, %v678
  %696 = vst.msk [vmem:[%s3 + $0x4] sm:$0xf] %vm694, %v679
  %697 = vst.msk [vmem:[%s3 + $0x8] sm:$0xf] %vm694, %v680
  %698 = vst.msk [vmem:[%s3 + $0xc] sm:$0xf] %vm694, %v681
  %699 = vst.msk [vmem:[%s3 + $0x10] sm:$0xf] %vm694, %v682
  %700 = vst.msk [vmem:[%s3 + $0x14] sm:$0xf] %vm694, %v683
  %701 = vst.msk [vmem:[%s3 + $0x18] sm:$0xf] %vm694, %v684
  %702 = vst.msk [vmem:[%s3 + $0x1c] sm:$0xf] %vm694, %v685
  %703 = vst.msk [vmem:[%s3 + $0x20] sm:$0xf] %vm694, %v686
  %704 = vst.msk [vmem:[%s3 + $0x24] sm:$0xf] %vm694, %v687
  %705 = vst.msk [vmem:[%s3 + $0x28] sm:$0xf] %vm694, %v688
  %706 = vst.msk [vmem:[%s3 + $0x2c] sm:$0xf] %vm694, %v689
  %707 = vst.msk [vmem:[%s3 + $0x30] sm:$0xf] %vm694, %v690
  %708 = vst.msk [vmem:[%s3 + $0x34] sm:$0xf] %vm694, %v691
  %709 = vst.msk [vmem:[%s3 + $0x38] sm:$0xf] %vm694, %v692
  %710 = vst.msk [vmem:[%s3 + $0x3c] sm:$0xf] %vm694, %v693
  // Predicated region
  $region14: #{qnetwork_forward.5} parent=0 // pred_check
    _
  $region15: #{qnetwork_forward.5} parent=0 // pred_check_branch
    %712 = sbr.rel (0) target = $region17
  $region16: #{qnetwork_forward.5} parent=0 // pred_region
    _
  $region17: #{qnetwork_forward.5} parent=0 // pred_fallthru
    _
  // Predicated region
  $region18: #{qnetwork_forward.5} parent=0 // pred_check
    _
  $region19: #{qnetwork_forward.5} parent=0 // pred_check_branch
    %714 = sbr.rel (0) target = $region21
  $region20: #{qnetwork_forward.5} parent=0 // pred_region
    _
  $region21: #{qnetwork_forward.5} parent=0 // pred_fallthru
    _

// kernel: qnetwork_forward.6
$region0: #{qnetwork_forward.6}
  #allocation0 [shape = 'u32[]', space=smem, size = 0x4, offset = 0x4, fixed_abs, tag = 'smem constant byte address 0x4 - core index']
  #allocation1 [shape = 'u32[72,128]{1,0:T(1,128)}', space=vmem, size = 0x9000, scoped, tag = 'internal scratch']
  %s0 = inlined_call_operand.vmem [shape: bf16[80,576], index: 0, kind: input, shape index: {}]
  %s1 = inlined_call_operand.vmem [shape: bf16[576,64], index: 1, kind: input, shape index: {}]
  %s2 = inlined_call_operand.vmem [shape: f32[1,64], index: 2, kind: input, shape index: {}]
  %s3 = inlined_call_operand.vmem [shape: bf16[80,64], index: 3, kind: output, shape index: {}]
  %s4 = sld [smem:[#allocation0]]
  $region22: #{qnetwork_forward.6} parent=0
    _
  %s6 = ssub.s32 1, %s4
  %s7 = scalar_select 0, %s6, %s4
  // Predicated region
  $region2: #{qnetwork_forward.6} parent=0 // pred_check
    _
  $region3: #{qnetwork_forward.6} parent=0 // pred_check_branch
    %9 = sbr.rel (0) target = $region5
  $region4: #{qnetwork_forward.6} parent=0 // pred_region
    _
  $region5: #{qnetwork_forward.6} parent=0 // pred_fallthru
    _
  // Predicated region
  $region6: #{qnetwork_forward.6} parent=0 // pred_check
    _
  $region7: #{qnetwork_forward.6} parent=0 // pred_check_branch
    %11 = sbr.rel (0) target = $region9
  $region8: #{qnetwork_forward.6} parent=0 // pred_region
    _
  $region9: #{qnetwork_forward.6} parent=0 // pred_fallthru
    _
  // Predicated region
  $region10: #{qnetwork_forward.6} parent=0 // pred_check
    _
  $region11: #{qnetwork_forward.6} parent=0 // pred_check_branch
    %13 = sbr.rel (0) target = $region13
  $region12: #{qnetwork_forward.6} parent=0 // pred_region
    _
  $region13: #{qnetwork_forward.6} parent=0 // pred_fallthru
    _
  %v15 = vld [vmem:[%s0] sm:$0xff]
  %v16 = vld [vmem:[%s0 + $0x8] sm:$0xff]
  %v17 = vld [vmem:[%s0 + $0x10] sm:$0xf]
  %v18 = vld [vmem:[%s0 + $0x14] sm:$0xff]
  %v19 = vld [vmem:[%s0 + $0x1c] sm:$0xff]
  %v20 = vld [vmem:[%s0 + $0x24] sm:$0xf]
  %v21 = vld [vmem:[%s0 + $0x28] sm:$0xff]
  %v22 = vld [vmem:[%s0 + $0x30] sm:$0xff]
  %v23 = vld [vmem:[%s0 + $0x38] sm:$0xf]
  %v24 = vld [vmem:[%s0 + $0x3c] sm:$0xff]
  %v25 = vld [vmem:[%s0 + $0x44] sm:$0xff]
  %v26 = vld [vmem:[%s0 + $0x4c] sm:$0xf]
  %v27 = vld [vmem:[%s0 + $0x50] sm:$0xff]
  %v28 = vld [vmem:[%s0 + $0x58] sm:$0xff]
  %v29 = vld [vmem:[%s0 + $0x60] sm:$0xf]
  %v30 = vld [vmem:[%s0 + $0x64] sm:$0xff]
  %v31 = vld [vmem:[%s0 + $0x6c] sm:$0xff]
  %v32 = vld [vmem:[%s0 + $0x74] sm:$0xf]
  %v33 = vld [vmem:[%s0 + $0x78] sm:$0xff]
  %v34 = vld [vmem:[%s0 + $0x80] sm:$0xff]
  %v35 = vld [vmem:[%s0 + $0x88] sm:$0xf]
  %v36 = vld [vmem:[%s0 + $0x8c] sm:$0xff]
  %v37 = vld [vmem:[%s0 + $0x94] sm:$0xff]
  %v38 = vld [vmem:[%s0 + $0x9c] sm:$0xf]
  %v39 = vld [vmem:[%s0 + $0xa0] sm:$0xff]
  %v40 = vld [vmem:[%s0 + $0xa8] sm:$0xff]
  %v41 = vld [vmem:[%s0 + $0xb0] sm:$0xf]
  %v42 = vld [vmem:[%s0 + $0xb4] sm:$0xff]
  %v43 = vld [vmem:[%s0 + $0xbc] sm:$0xff]
  %v44 = vld [vmem:[%s0 + $0xc4] sm:$0xf]
  %v45 = vld [vmem:[%s1] sm:$0xf]
  %v46 = vld [vmem:[%s1 + $0x4] sm:$0xf]
  %v47 = vld [vmem:[%s1 + $0x8] sm:$0xf]
  %v48 = vld [vmem:[%s1 + $0xc] sm:$0xf]
  %v49 = vld [vmem:[%s1 + $0x10] sm:$0xf]
  %v50 = vld [vmem:[%s1 + $0x14] sm:$0xf]
  %v51 = vld [vmem:[%s1 + $0x18] sm:$0xf]
  %v52 = vld [vmem:[%s1 + $0x1c] sm:$0xf]
  %v53 = vld [vmem:[%s1 + $0x20] sm:$0xf]
  %v54 = vld [vmem:[%s1 + $0x24] sm:$0xf]
  %v55 = vld [vmem:[%s1 + $0x28] sm:$0xf]
  %v56 = vld [vmem:[%s1 + $0x2c] sm:$0xf]
  %v57 = vld [vmem:[%s1 + $0x30] sm:$0xf]
  %v58 = vld [vmem:[%s1 + $0x34] sm:$0xf]
  %v59 = vld [vmem:[%s1 + $0x38] sm:$0xf]
  %v60 = vld [vmem:[%s1 + $0x3c] sm:$0xf]
  %v61 = vld [vmem:[%s1 + $0x40] sm:$0xf]
  %v62 = vld [vmem:[%s1 + $0x44] sm:$0xf]
  %v63 = vld [vmem:[%s1 + $0x48] sm:$0xf]
  %v64 = vld [vmem:[%s1 + $0x4c] sm:$0xf]
  %v65 = vld [vmem:[%s1 + $0x50] sm:$0xf]
  %v66 = vld [vmem:[%s1 + $0x54] sm:$0xf]
  %v67 = vld [vmem:[%s1 + $0x58] sm:$0xf]
  %v68 = vld [vmem:[%s1 + $0x5c] sm:$0xf]
  %v69 = vld [vmem:[%s1 + $0x60] sm:$0xf]
  %v70 = vld [vmem:[%s1 + $0x64] sm:$0xf]
  %v71 = vld [vmem:[%s1 + $0x68] sm:$0xf]
  %v72 = vld [vmem:[%s1 + $0x6c] sm:$0xf]
  %v73 = vld [vmem:[%s1 + $0x70] sm:$0xf]
  %v74 = vld [vmem:[%s1 + $0x74] sm:$0xf]
  %v75 = vld [vmem:[%s1 + $0x78] sm:$0xf]
  %v76 = vld [vmem:[%s1 + $0x7c] sm:$0xf]
  %v77 = vld [vmem:[%s1 + $0x80] sm:$0xf]
  %v78 = vld [vmem:[%s1 + $0x84] sm:$0xf]
  %v79 = vld [vmem:[%s1 + $0x88] sm:$0xf]
  %v80 = vld [vmem:[%s1 + $0x8c] sm:$0xf]
  %v81 = vld [vmem:[%s1 + $0x90] sm:$0xf]
  %v82 = vld [vmem:[%s1 + $0x94] sm:$0xf]
  %v83 = vld [vmem:[%s1 + $0x98] sm:$0xf]
  %v84 = vld [vmem:[%s1 + $0x9c] sm:$0xf]
  %v85 = vld [vmem:[%s1 + $0xa0] sm:$0xf]
  %v86 = vld [vmem:[%s1 + $0xa4] sm:$0xf]
  %v87 = vld [vmem:[%s1 + $0xa8] sm:$0xf]
  %v88 = vld [vmem:[%s1 + $0xac] sm:$0xf]
  %v89 = vld [vmem:[%s1 + $0xb0] sm:$0xf]
  %v90 = vld [vmem:[%s1 + $0xb4] sm:$0xf]
  %v91 = vld [vmem:[%s1 + $0xb8] sm:$0xf]
  %v92 = vld [vmem:[%s1 + $0xbc] sm:$0xf]
  %v93 = vld [vmem:[%s1 + $0xc0] sm:$0xf]
  %v94 = vld [vmem:[%s1 + $0xc4] sm:$0xf]
  %v95 = vld [vmem:[%s1 + $0xc8] sm:$0xf]
  %v96 = vld [vmem:[%s1 + $0xcc] sm:$0xf]
  %v97 = vld [vmem:[%s1 + $0xd0] sm:$0xf]
  %v98 = vld [vmem:[%s1 + $0xd4] sm:$0xf]
  %v99 = vld [vmem:[%s1 + $0xd8] sm:$0xf]
  %v100 = vld [vmem:[%s1 + $0xdc] sm:$0xf]
  %v101 = vld [vmem:[%s1 + $0xe0] sm:$0xf]
  %v102 = vld [vmem:[%s1 + $0xe4] sm:$0xf]
  %v103 = vld [vmem:[%s1 + $0xe8] sm:$0xf]
  %v104 = vld [vmem:[%s1 + $0xec] sm:$0xf]
  %v105 = vld [vmem:[%s1 + $0xf0] sm:$0xf]
  %v106 = vld [vmem:[%s1 + $0xf4] sm:$0xf]
  %v107 = vld [vmem:[%s1 + $0xf8] sm:$0xf]
  %v108 = vld [vmem:[%s1 + $0xfc] sm:$0xf]
  %v109 = vld [vmem:[%s1 + $0x100] sm:$0xf]
  %v110 = vld [vmem:[%s1 + $0x104] sm:$0xf]
  %v111 = vld [vmem:[%s1 + $0x108] sm:$0xf]
  %v112 = vld [vmem:[%s1 + $0x10c] sm:$0xf]
  %v113 = vld [vmem:[%s1 + $0x110] sm:$0xf]
  %v114 = vld [vmem:[%s1 + $0x114] sm:$0xf]
  %v115 = vld [vmem:[%s1 + $0x118] sm:$0xf]
  %v116 = vld [vmem:[%s1 + $0x11c] sm:$0xf]
  %v117 = vld [vmem:[%s2] sm:$0x1]
  %v119 = vperm.slane %v117, 0
  %v151 = vunpack.c.l.b16 %v15
  %v152 = vunpack.c.h.b16 %v15
  %v153 = vunpack.c.l.b16 %v16
  %v154 = vunpack.c.h.b16 %v16
  %v155 = vunpack.c.l.b16 %v17
  %v156 = vunpack.c.l.b16 %v18
  %v157 = vunpack.c.h.b16 %v18
  %v158 = vunpack.c.l.b16 %v19
  %v159 = vunpack.c.h.b16 %v19
  %v160 = vunpack.c.l.b16 %v20
  %v161 = vunpack.c.l.b16 %v21
  %v162 = vunpack.c.h.b16 %v21
  %v163 = vunpack.c.l.b16 %v22
  %v164 = vunpack.c.h.b16 %v22
  %v165 = vunpack.c.l.b16 %v23
  %v166 = vunpack.c.l.b16 %v24
  %v167 = vunpack.c.h.b16 %v24
  %v168 = vunpack.c.l.b16 %v25
  %v169 = vunpack.c.h.b16 %v25
  %v170 = vunpack.c.l.b16 %v26
  %v171 = vunpack.c.l.b16 %v27
  %v172 = vunpack.c.h.b16 %v27
  %v173 = vunpack.c.l.b16 %v28
  %v174 = vunpack.c.h.b16 %v28
  %v175 = vunpack.c.l.b16 %v29
  %v176 = vunpack.c.l.b16 %v30
  %v177 = vunpack.c.h.b16 %v30
  %v178 = vunpack.c.l.b16 %v31
  %v179 = vunpack.c.h.b16 %v31
  %v180 = vunpack.c.l.b16 %v32
  %v181 = vunpack.c.l.b16 %v33
  %v182 = vunpack.c.h.b16 %v33
  %v183 = vunpack.c.l.b16 %v34
  %v184 = vunpack.c.h.b16 %v34
  %v185 = vunpack.c.l.b16 %v35
  %v186 = vunpack.c.l.b16 %v36
  %v187 = vunpack.c.h.b16 %v36
  %v188 = vunpack.c.l.b16 %v37
  %v189 = vunpack.c.h.b16 %v37
  %v190 = vunpack.c.l.b16 %v38
  %v191 = vunpack.c.l.b16 %v39
  %v192 = vunpack.c.h.b16 %v39
  %v193 = vunpack.c.l.b16 %v40
  %v194 = vunpack.c.h.b16 %v40
  %v195 = vunpack.c.l.b16 %v41
  %v196 = vunpack.c.l.b16 %v42
  %v197 = vunpack.c.h.b16 %v42
  %v198 = vunpack.c.l.b16 %v43
  %v199 = vunpack.c.h.b16 %v43
  %v200 = vunpack.c.l.b16 %v44
  %v201 = vpack.c.b16 %v156, %v151
  %v202 = vpack.c.b16 %v157, %v152
  %v203 = vpack.c.b16 %v158, %v153
  %v204 = vpack.c.b16 %v159, %v154
  %v205 = vpack.c.b16 %v160, %v155
  %v206 = vpack.c.b16 %v166, %v161
  %v207 = vpack.c.b16 %v167, %v162
  %v208 = vpack.c.b16 %v168, %v163
  %v209 = vpack.c.b16 %v169, %v164
  %v210 = vpack.c.b16 %v170, %v165
  %v211 = vpack.c.b16 %v176, %v171
  %v212 = vpack.c.b16 %v177, %v172
  %v213 = vpack.c.b16 %v178, %v173
  %v214 = vpack.c.b16 %v179, %v174
  %v215 = vpack.c.b16 %v180, %v175
  %v216 = vpack.c.b16 %v186, %v181
  %v217 = vpack.c.b16 %v187, %v182
  %v218 = vpack.c.b16 %v188, %v183
  %v219 = vpack.c.b16 %v189, %v184
  %v220 = vpack.c.b16 %v190, %v185
  %v221 = vpack.c.b16 %v196, %v191
  %v222 = vpack.c.b16 %v197, %v192
  %v223 = vpack.c.b16 %v198, %v193
  %v224 = vpack.c.b16 %v199, %v194
  %v225 = vpack.c.b16 %v200, %v195
  %v318 = vunpack.c.l.b16 %v45
  %v319 = vunpack.c.l.b16 %v46
  %v320 = vunpack.c.l.b16 %v47
  %v321 = vunpack.c.l.b16 %v48
  %v322 = vunpack.c.l.b16 %v49
  %v323 = vunpack.c.l.b16 %v50
  %v324 = vunpack.c.l.b16 %v51
  %v325 = vunpack.c.l.b16 %v52
  %v326 = vunpack.c.l.b16 %v53
  %v327 = vunpack.c.l.b16 %v54
  %v328 = vunpack.c.l.b16 %v55
  %v329 = vunpack.c.l.b16 %v56
  %v330 = vunpack.c.l.b16 %v57
  %v331 = vunpack.c.l.b16 %v58
  %v332 = vunpack.c.l.b16 %v59
  %v333 = vunpack.c.l.b16 %v60
  %v334 = vunpack.c.l.b16 %v61
  %v335 = vunpack.c.l.b16 %v62
  %v336 = vunpack.c.l.b16 %v63
  %v337 = vunpack.c.l.b16 %v64
  %v338 = vunpack.c.l.b16 %v65
  %v339 = vunpack.c.l.b16 %v66
  %v340 = vunpack.c.l.b16 %v67
  %v341 = vunpack.c.l.b16 %v68
  %v342 = vunpack.c.l.b16 %v69
  %v343 = vunpack.c.l.b16 %v70
  %v344 = vunpack.c.l.b16 %v71
  %v345 = vunpack.c.l.b16 %v72
  %v346 = vunpack.c.l.b16 %v73
  %v347 = vunpack.c.l.b16 %v74
  %v348 = vunpack.c.l.b16 %v75
  %v349 = vunpack.c.l.b16 %v76
  %v350 = vunpack.c.l.b16 %v77
  %v351 = vunpack.c.l.b16 %v78
  %v352 = vunpack.c.l.b16 %v79
  %v353 = vunpack.c.l.b16 %v80
  %v354 = vunpack.c.l.b16 %v81
  %v355 = vunpack.c.l.b16 %v82
  %v356 = vunpack.c.l.b16 %v83
  %v357 = vunpack.c.l.b16 %v84
  %v358 = vunpack.c.l.b16 %v85
  %v359 = vunpack.c.l.b16 %v86
  %v360 = vunpack.c.l.b16 %v87
  %v361 = vunpack.c.l.b16 %v88
  %v362 = vunpack.c.l.b16 %v89
  %v363 = vunpack.c.l.b16 %v90
  %v364 = vunpack.c.l.b16 %v91
  %v365 = vunpack.c.l.b16 %v92
  %v366 = vunpack.c.l.b16 %v93
  %v367 = vunpack.c.l.b16 %v94
  %v368 = vunpack.c.l.b16 %v95
  %v369 = vunpack.c.l.b16 %v96
  %v370 = vunpack.c.l.b16 %v97
  %v371 = vunpack.c.l.b16 %v98
  %v372 = vunpack.c.l.b16 %v99
  %v373 = vunpack.c.l.b16 %v100
  %v374 = vunpack.c.l.b16 %v101
  %v375 = vunpack.c.l.b16 %v102
  %v376 = vunpack.c.l.b16 %v103
  %v377 = vunpack.c.l.b16 %v104
  %v378 = vunpack.c.l.b16 %v105
  %v379 = vunpack.c.l.b16 %v106
  %v380 = vunpack.c.l.b16 %v107
  %v381 = vunpack.c.l.b16 %v108
  %v382 = vunpack.c.l.b16 %v109
  %v383 = vunpack.c.l.b16 %v110
  %v384 = vunpack.c.l.b16 %v111
  %v385 = vunpack.c.l.b16 %v112
  %v386 = vunpack.c.l.b16 %v113
  %v387 = vunpack.c.l.b16 %v114
  %v388 = vunpack.c.l.b16 %v115
  %v389 = vunpack.c.l.b16 %v116
  %v390 = vpack.c.b16 %v319, %v318
  %v391 = vpack.c.b16 %v321, %v320
  %v392 = vpack.c.b16 %v323, %v322
  %v393 = vpack.c.b16 %v325, %v324
  %v394 = vpack.c.b16 %v327, %v326
  %v395 = vpack.c.b16 %v329, %v328
  %v396 = vpack.c.b16 %v331, %v330
  %v397 = vpack.c.b16 %v333, %v332
  %v398 = vpack.c.b16 %v335, %v334
  %v399 = vpack.c.b16 %v337, %v336
  %v400 = vpack.c.b16 %v339, %v338
  %v401 = vpack.c.b16 %v341, %v340
  %v402 = vpack.c.b16 %v343, %v342
  %v403 = vpack.c.b16 %v345, %v344
  %v404 = vpack.c.b16 %v347, %v346
  %v405 = vpack.c.b16 %v349, %v348
  %v406 = vpack.c.b16 %v351, %v350
  %v407 = vpack.c.b16 %v353, %v352
  %v408 = vpack.c.b16 %v355, %v354
  %v409 = vpack.c.b16 %v357, %v356
  %v410 = vpack.c.b16 %v359, %v358
  %v411 = vpack.c.b16 %v361, %v360
  %v412 = vpack.c.b16 %v363, %v362
  %v413 = vpack.c.b16 %v365, %v364
  %v414 = vpack.c.b16 %v367, %v366
  %v415 = vpack.c.b16 %v369, %v368
  %v416 = vpack.c.b16 %v371, %v370
  %v417 = vpack.c.b16 %v373, %v372
  %v418 = vpack.c.b16 %v375, %v374
  %v419 = vpack.c.b16 %v377, %v376
  %v420 = vpack.c.b16 %v379, %v378
  %v421 = vpack.c.b16 %v381, %v380
  %v422 = vpack.c.b16 %v383, %v382
  %v423 = vpack.c.b16 %v385, %v384
  %v424 = vpack.c.b16 %v387, %v386
  %v425 = vpack.c.b16 %v389, %v388
  %vm462 = vcmask 523264
  %v464 = vsel %vm462, %v205, 0
  %v467 = vsel %vm462, %v210, 0
  %v470 = vsel %vm462, %v215, 0
  %v473 = vsel %vm462, %v220, 0
  %v476 = vsel %vm462, %v225, 0
  %478 = vmatpush.bf16.msra.mxu0 %v397
  %479 = vmatpush.bf16.msra.mxu0 %v396
  %480 = vmatpush.bf16.msra.mxu0 %v395
  %481 = vmatpush.bf16.msra.mxu0 %v394
  %482 = vmatpush.bf16.msra.mxu0 %v393
  %483 = vmatpush.bf16.msra.mxu0 %v392
  %484 = vmatpush.bf16.msra.mxu0 %v391
  %485 = vmatpush.bf16.msra.mxu0 %v390
  %486 = vmatmul.bf16.gmra.mxu0 %v201
  %v487 = vpop.f32.mrf.mxu0
  %v488 = vadd.f32 %v119, %v487
  %v489 = vpop.f32.mrf.mxu0
  %v490 = vadd.f32 %v119, %v489
  %491 = vmatmul.bf16.gmra.mxu0 %v206
  %v492 = vpop.f32.mrf.mxu0
  %v493 = vadd.f32 %v119, %v492
  %v494 = vpop.f32.mrf.mxu0
  %v495 = vadd.f32 %v119, %v494
  %496 = vmatmul.bf16.gmra.mxu0 %v211
  %v497 = vpop.f32.mrf.mxu0
  %v498 = vadd.f32 %v119, %v497
  %v499 = vpop.f32.mrf.mxu0
  %v500 = vadd.f32 %v119, %v499
  %501 = vmatmul.bf16.gmra.mxu0 %v216
  %v502 = vpop.f32.mrf.mxu0
  %v503 = vadd.f32 %v119, %v502
  %v504 = vpop.f32.mrf.mxu0
  %v505 = vadd.f32 %v119, %v504
  %506 = vmatmul.bf16.gmra.mxu0 %v221
  %v507 = vpop.f32.mrf.mxu0
  %v508 = vadd.f32 %v119, %v507
  %v509 = vpop.f32.mrf.mxu0
  %v510 = vadd.f32 %v119, %v509
  %511 = vdwg.mxu0
  %512 = vmatpush.bf16.msra.mxu0 %v405
  %513 = vmatpush.bf16.msra.mxu0 %v404
  %514 = vmatpush.bf16.msra.mxu0 %v403
  %515 = vmatpush.bf16.msra.mxu0 %v402
  %516 = vmatpush.bf16.msra.mxu0 %v401
  %517 = vmatpush.bf16.msra.mxu0 %v400
  %518 = vmatpush.bf16.msra.mxu0 %v399
  %519 = vmatpush.bf16.msra.mxu0 %v398
  %520 = vmatmul.bf16.gmra.mxu0 %v202
  %v521 = vpop.f32.mrf.mxu0
  %v522 = vadd.f32 %v488, %v521
  %v523 = vpop.f32.mrf.mxu0
  %v524 = vadd.f32 %v490, %v523
  %525 = vmatmul.bf16.gmra.mxu0 %v207
  %v526 = vpop.f32.mrf.mxu0
  %v527 = vadd.f32 %v493, %v526
  %v528 = vpop.f32.mrf.mxu0
  %v529 = vadd.f32 %v495, %v528
  %530 = vmatmul.bf16.gmra.mxu0 %v212
  %v531 = vpop.f32.mrf.mxu0
  %v532 = vadd.f32 %v498, %v531
  %v533 = vpop.f32.mrf.mxu0
  %v534 = vadd.f32 %v500, %v533
  %535 = vmatmul.bf16.gmra.mxu0 %v217
  %v536 = vpop.f32.mrf.mxu0
  %v537 = vadd.f32 %v503, %v536
  %v538 = vpop.f32.mrf.mxu0
  %v539 = vadd.f32 %v505, %v538
  %540 = vmatmul.bf16.gmra.mxu0 %v222
  %v541 = vpop.f32.mrf.mxu0
  %v542 = vadd.f32 %v508, %v541
  %v543 = vpop.f32.mrf.mxu0
  %v544 = vadd.f32 %v510, %v543
  %545 = vdwg.mxu0
  %546 = vmatpush.bf16.msra.mxu0 %v413
  %547 = vmatpush.bf16.msra.mxu0 %v412
  %548 = vmatpush.bf16.msra.mxu0 %v411
  %549 = vmatpush.bf16.msra.mxu0 %v410
  %550 = vmatpush.bf16.msra.mxu0 %v409
  %551 = vmatpush.bf16.msra.mxu0 %v408
  %552 = vmatpush.bf16.msra.mxu0 %v407
  %553 = vmatpush.bf16.msra.mxu0 %v406
  %554 = vmatmul.bf16.gmra.mxu0 %v203
  %v555 = vpop.f32.mrf.mxu0
  %v556 = vadd.f32 %v522, %v555
  %v557 = vpop.f32.mrf.mxu0
  %v558 = vadd.f32 %v524, %v557
  %559 = vmatmul.bf16.gmra.mxu0 %v208
  %v560 = vpop.f32.mrf.mxu0
  %v561 = vadd.f32 %v527, %v560
  %v562 = vpop.f32.mrf.mxu0
  %v563 = vadd.f32 %v529, %v562
  %564 = vmatmul.bf16.gmra.mxu0 %v213
  %v565 = vpop.f32.mrf.mxu0
  %v566 = vadd.f32 %v532, %v565
  %v567 = vpop.f32.mrf.mxu0
  %v568 = vadd.f32 %v534, %v567
  %569 = vmatmul.bf16.gmra.mxu0 %v218
  %v570 = vpop.f32.mrf.mxu0
  %v571 = vadd.f32 %v537, %v570
  %v572 = vpop.f32.mrf.mxu0
  %v573 = vadd.f32 %v539, %v572
  %574 = vmatmul.bf16.gmra.mxu0 %v223
  %v575 = vpop.f32.mrf.mxu0
  %v576 = vadd.f32 %v542, %v575
  %v577 = vpop.f32.mrf.mxu0
  %v578 = vadd.f32 %v544, %v577
  %579 = vdwg.mxu0
  %580 = vmatpush.bf16.msra.mxu0 %v421
  %581 = vmatpush.bf16.msra.mxu0 %v420
  %582 = vmatpush.bf16.msra.mxu0 %v419
  %583 = vmatpush.bf16.msra.mxu0 %v418
  %584 = vmatpush.bf16.msra.mxu0 %v417
  %585 = vmatpush.bf16.msra.mxu0 %v416
  %586 = vmatpush.bf16.msra.mxu0 %v415
  %587 = vmatpush.bf16.msra.mxu0 %v414
  %588 = vmatmul.bf16.gmra.mxu0 %v204
  %v589 = vpop.f32.mrf.mxu0
  %v590 = vadd.f32 %v556, %v589
  %v591 = vpop.f32.mrf.mxu0
  %v592 = vadd.f32 %v558, %v591
  %593 = vmatmul.bf16.gmra.mxu0 %v209
  %v594 = vpop.f32.mrf.mxu0
  %v595 = vadd.f32 %v561, %v594
  %v596 = vpop.f32.mrf.mxu0
  %v597 = vadd.f32 %v563, %v596
  %598 = vmatmul.bf16.gmra.mxu0 %v214
  %v599 = vpop.f32.mrf.mxu0
  %v600 = vadd.f32 %v566, %v599
  %v601 = vpop.f32.mrf.mxu0
  %v602 = vadd.f32 %v568, %v601
  %603 = vmatmul.bf16.gmra.mxu0 %v219
  %v604 = vpop.f32.mrf.mxu0
  %v605 = vadd.f32 %v571, %v604
  %v606 = vpop.f32.mrf.mxu0
  %v607 = vadd.f32 %v573, %v606
  %608 = vmatmul.bf16.gmra.mxu0 %v224
  %v609 = vpop.f32.mrf.mxu0
  %v610 = vadd.f32 %v576, %v609
  %v611 = vpop.f32.mrf.mxu0
  %v612 = vadd.f32 %v578, %v611
  %613 = vdwg.mxu0
  %614 = vmatpush.bf16.msra.mxu0 0
  %615 = vmatpush.bf16.msra.mxu0 0
  %616 = vmatpush.bf16.msra.mxu0 0
  %617 = vmatpush.bf16.msra.mxu0 0
  %618 = vmatpush.bf16.msra.mxu0 %v425
  %619 = vmatpush.bf16.msra.mxu0 %v424
  %620 = vmatpush.bf16.msra.mxu0 %v423
  %621 = vmatpush.bf16.msra.mxu0 %v422
  %622 = vmatmul.bf16.gmra.mxu0 %v464
  %v623 = vpop.f32.mrf.mxu0
  %v624 = vadd.f32 %v590, %v623
  %v625 = vpop.f32.mrf.mxu0
  %v626 = vadd.f32 %v592, %v625
  %627 = vmatmul.bf16.gmra.mxu0 %v467
  %v628 = vpop.f32.mrf.mxu0
  %v629 = vadd.f32 %v595, %v628
  %v630 = vpop.f32.mrf.mxu0
  %v631 = vadd.f32 %v597, %v630
  %632 = vmatmul.bf16.gmra.mxu0 %v470
  %v633 = vpop.f32.mrf.mxu0
  %v634 = vadd.f32 %v600, %v633
  %v635 = vpop.f32.mrf.mxu0
  %v636 = vadd.f32 %v602, %v635
  %637 = vmatmul.bf16.gmra.mxu0 %v473
  %v638 = vpop.f32.mrf.mxu0
  %v639 = vadd.f32 %v605, %v638
  %v640 = vpop.f32.mrf.mxu0
  %v641 = vadd.f32 %v607, %v640
  %642 = vmatmul.bf16.gmra.mxu0 %v476
  %v643 = vpop.f32.mrf.mxu0
  %v644 = vadd.f32 %v610, %v643
  %v645 = vpop.f32.mrf.mxu0
  %v646 = vadd.f32 %v612, %v645
  %647 = vdwg.mxu0
  %v648 = vmax.f32 %v624, 0.0
  %v649 = vmax.f32 %v626, 0.0
  %v650 = vmax.f32 %v629, 0.0
  %v651 = vmax.f32 %v631, 0.0
  %v652 = vmax.f32 %v634, 0.0
  %v653 = vmax.f32 %v636, 0.0
  %v654 = vmax.f32 %v639, 0.0
  %v655 = vmax.f32 %v641, 0.0
  %v656 = vmax.f32 %v644, 0.0
  %v657 = vmax.f32 %v646, 0.0
  %v658 = vpack.c.bf16 %v648, %v648
  %v659 = vpack.c.bf16 %v649, %v649
  %v660 = vpack.c.bf16 %v650, %v650
  %v661 = vpack.c.bf16 %v651, %v651
  %v662 = vpack.c.bf16 %v652, %v652
  %v663 = vpack.c.bf16 %v653, %v653
  %v664 = vpack.c.bf16 %v654, %v654
  %v665 = vpack.c.bf16 %v655, %v655
  %v666 = vpack.c.bf16 %v656, %v656
  %v667 = vpack.c.bf16 %v657, %v657
  %vm668 = vcmask 519168
  %669 = vst.msk [vmem:[%s3] sm:$0xf] %vm668, %v658
  %670 = vst.msk [vmem:[%s3 + $0x4] sm:$0xf] %vm668, %v659
  %671 = vst.msk [vmem:[%s3 + $0x8] sm:$0xf] %vm668, %v660
  %672 = vst.msk [vmem:[%s3 + $0xc] sm:$0xf] %vm668, %v661
  %673 = vst.msk [vmem:[%s3 + $0x10] sm:$0xf] %vm668, %v662
  %674 = vst.msk [vmem:[%s3 + $0x14] sm:$0xf] %vm668, %v663
  %675 = vst.msk [vmem:[%s3 + $0x18] sm:$0xf] %vm668, %v664
  %676 = vst.msk [vmem:[%s3 + $0x1c] sm:$0xf] %vm668, %v665
  %677 = vst.msk [vmem:[%s3 + $0x20] sm:$0xf] %vm668, %v666
  %678 = vst.msk [vmem:[%s3 + $0x24] sm:$0xf] %vm668, %v667
  // Predicated region
  $region14: #{qnetwork_forward.6} parent=0 // pred_check
    _
  $region15: #{qnetwork_forward.6} parent=0 // pred_check_branch
    %680 = sbr.rel (0) target = $region17
  $region16: #{qnetwork_forward.6} parent=0 // pred_region
    _
  $region17: #{qnetwork_forward.6} parent=0 // pred_fallthru
    _
  // Predicated region
  $region18: #{qnetwork_forward.6} parent=0 // pred_check
    _
  $region19: #{qnetwork_forward.6} parent=0 // pred_check_branch
    %682 = sbr.rel (0) target = $region21
  $region20: #{qnetwork_forward.6} parent=0 // pred_region
    _
  $region21: #{qnetwork_forward.6} parent=0 // pred_fallthru
    _

// kernel: qnetwork_forward.7
$region0: #{qnetwork_forward.7}
  #allocation0 [shape = 'u32[]', space=smem, size = 0x4, offset = 0x4, fixed_abs, tag = 'smem constant byte address 0x4 - core index']
  #allocation1 [shape = 'u32[72,128]{1,0:T(1,128)}', space=vmem, size = 0x9000, scoped, tag = 'internal scratch']
  %s0 = inlined_call_operand.vmem [shape: bf16[2,2304], index: 0, kind: input, shape index: {}]
  %s1 = inlined_call_operand.vmem [shape: bf16[2304,512], index: 1, kind: input, shape index: {}]
  %s2 = inlined_call_operand.vmem [shape: f32[1,512], index: 2, kind: input, shape index: {}]
  %s3 = inlined_call_operand.vmem [shape: bf16[512,6], index: 3, kind: input, shape index: {}]
  %s4 = inlined_call_operand.vmem [shape: f32[2,2,6], index: 4, kind: output, shape index: {}]
  %s5 = sld [smem:[#allocation0]]
  $region101: #{qnetwork_forward.7} parent=0
    _
  %s7 = ssub.s32 1, %s5
  %s8 = scalar_select 0, %s7, %s5
  $region1: #{qnetwork_forward.7} parent=0
    #allocation2 [shape = 'u8[2359296]{0}', space=vmem, size = 0x240000, scoped, tag = 'input window, operand 1']
    loop: start=0, step=1, limit=4
    $region2: #{qnetwork_forward.7} parent=1 // loop_pre_header
      _
    $region3: #{qnetwork_forward.7} parent=1 // loop_header
      %s10 = sphi 0, %s14
      %p11 = scmp.ge.s32.totalorder %s10, 4
      %s18 = sphi 0, %s18
      %s20 = sphi 0, %s18
      %s21 = sphi 0, %s20
      %s35 = sphi 0, %s21
      %s41 = sphi 0, %s43
      %s44 = sphi 0, %s41
      %s45 = sphi 0, %s44
      %s61 = sphi 0, %s45
      %s67 = sphi 0, %s69
      %s70 = sphi 0, %s67
      %s71 = sphi 0, %s70
      %s87 = sphi 0, %s71
      %s93 = sphi 0, %s95
      %s96 = sphi 0, %s93
      %s97 = sphi 0, %s96
      %s113 = sphi 0, %s97
      %s119 = sphi 0, %s121
      %s122 = sphi 0, %s119
      %s123 = sphi 0, %s122
      %s139 = sphi 0, %s123
    $region4: #{qnetwork_forward.7} parent=1 // loop_header_branch
      %13 = sbr.rel (%p11) target = $region8
    $region5: #{qnetwork_forward.7} parent=1 // loop_body
      %s15 = ssub.s32 %s10, 1
      %s16 = ssub.s32 %s10, 2
      %s17 = sadd.s32 %s10, 1
      %s19 = sadd.s32 %s18, 1
      %p22 = scmp.eq.s32.totalorder %s10, 1
      %p23 = scmp.ne.s32.totalorder %s18, %s20
      %p24 = scmp.eq.s32.totalorder %s10, 0
      %p25 = por %p23, %p24
      %p26 = scmp.ne.s32.totalorder %s18, %s20
      %p27 = scmp.eq.s32.totalorder %s15, 1
      %p28 = por %p26, %p27
      %p29 = scmp.ne.s32.totalorder %s20, %s21
      %p30 = scmp.eq.s32.totalorder %s15, 0
      %p31 = por %p29, %p30
      %p32 = scmp.ne.s32.totalorder %s20, %s21
      %p33 = scmp.eq.s32.totalorder %s16, 1
      %p34 = por %p32, %p33
      %p36 = scmp.ne.s32.totalorder %s21, %s35
      %p37 = scmp.eq.s32.totalorder %s16, 0
      %p38 = por %p36, %p37
      %s39 = ssub.s32 %s10, %s17
      %p40 = scmp.eq.s32.totalorder %s39, 0
      %s42 = sadd.s32 %s41, 1
      %s43 = scalar_select %p40, %s41, %s42
      %p46 = pneg %p40
      %p47 = scmp.eq.s32.totalorder %s10, 1
      %p48 = por %p46, %p47
      %p49 = scmp.ne.s32.totalorder %s41, %s44
      %p50 = scmp.eq.s32.totalorder %s10, 0
      %p51 = por %p49, %p50
      %p52 = scmp.ne.s32.totalorder %s41, %s44
      %p53 = scmp.eq.s32.totalorder %s15, 1
      %p54 = por %p52, %p53
      %p55 = scmp.ne.s32.totalorder %s44, %s45
      %p56 = scmp.eq.s32.totalorder %s15, 0
      %p57 = por %p55, %p56
      %p58 = scmp.ne.s32.totalorder %s44, %s45
      %p59 = scmp.eq.s32.totalorder %s16, 1
      %p60 = por %p58, %p59
      %p62 = scmp.ne.s32.totalorder %s45, %s61
      %p63 = scmp.eq.s32.totalorder %s16, 0
      %p64 = por %p62, %p63
      %s65 = ssub.s32 %s10, %s17
      %p66 = scmp.eq.s32.totalorder %s65, 0
      %s68 = sadd.s32 %s67, 1
      %s69 = scalar_select %p66, %s67, %s68
      %p72 = pneg %p66
      %p73 = scmp.eq.s32.totalorder %s10, 1
      %p74 = por %p72, %p73
      %p75 = scmp.ne.s32.totalorder %s67, %s70
      %p76 = scmp.eq.s32.totalorder %s10, 0
      %p77 = por %p75, %p76
      %p78 = scmp.ne.s32.totalorder %s67, %s70
      %p79 = scmp.eq.s32.totalorder %s15, 1
      %p80 = por %p78, %p79
      %p81 = scmp.ne.s32.totalorder %s70, %s71
      %p82 = scmp.eq.s32.totalorder %s15, 0
      %p83 = por %p81, %p82
      %p84 = scmp.ne.s32.totalorder %s70, %s71
      %p85 = scmp.eq.s32.totalorder %s16, 1
      %p86 = por %p84, %p85
      %p88 = scmp.ne.s32.totalorder %s71, %s87
      %p89 = scmp.eq.s32.totalorder %s16, 0
      %p90 = por %p88, %p89
      %s91 = ssub.s32 %s10, %s17
      %p92 = scmp.eq.s32.totalorder %s91, 0
      %s94 = sadd.s32 %s93, 1
      %s95 = scalar_select %p92, %s93, %s94
      %p98 = pneg %p92
      %p99 = scmp.eq.s32.totalorder %s10, 1
      %p100 = por %p98, %p99
      %p101 = scmp.ne.s32.totalorder %s93, %s96
      %p102 = scmp.eq.s32.totalorder %s10, 0
      %p103 = por %p101, %p102
      %p104 = scmp.ne.s32.totalorder %s93, %s96
      %p105 = scmp.eq.s32.totalorder %s15, 1
      %p106 = por %p104, %p105
      %p107 = scmp.ne.s32.totalorder %s96, %s97
      %p108 = scmp.eq.s32.totalorder %s15, 0
      %p109 = por %p107, %p108
      %p110 = scmp.ne.s32.totalorder %s96, %s97
      %p111 = scmp.eq.s32.totalorder %s16, 1
      %p112 = por %p110, %p111
      %p114 = scmp.ne.s32.totalorder %s97, %s113
      %p115 = scmp.eq.s32.totalorder %s16, 0
      %p116 = por %p114, %p115
      %s117 = ssub.s32 %s10, %s17
      %p118 = scmp.eq.s32.totalorder %s117, 0
      %s120 = sadd.s32 %s119, 1
      %s121 = scalar_select %p118, %s119, %s120
      %p124 = pneg %p118
      %p125 = scmp.eq.s32.totalorder %s10, 1
      %p126 = por %p124, %p125
      %p127 = scmp.ne.s32.totalorder %s119, %s122
      %p128 = scmp.eq.s32.totalorder %s10, 0
      %p129 = por %p127, %p128
      %p130 = scmp.ne.s32.totalorder %s119, %s122
      %p131 = scmp.eq.s32.totalorder %s15, 1
      %p132 = por %p130, %p131
      %p133 = scmp.ne.s32.totalorder %s122, %s123
      %p134 = scmp.eq.s32.totalorder %s15, 0
      %p135 = por %p133, %p134
      %p136 = scmp.ne.s32.totalorder %s122, %s123
      %p137 = scmp.eq.s32.totalorder %s16, 1
      %p138 = por %p136, %p137
      %p140 = scmp.ne.s32.totalorder %s123, %s139
      %p141 = scmp.eq.s32.totalorder %s16, 0
      %p142 = por %p140, %p141
      %p143 = scmp.le.s32.totalorder 1, %s10
      %p144 = scmp.lt.s32.totalorder %s10, 3
      %p145 = pnand %p143, %p144
      %p146 = pneg %p145
      // Predicated region
      $region9: #{qnetwork_forward.7} parent=5 // pred_check
        _
      $region10: #{qnetwork_forward.7} parent=5 // pred_check_branch
        %148 = sbr.rel (%p145) target = $region12
      $region11: #{qnetwork_forward.7} parent=5 // pred_region
        %s149 = ssub.s32 %s10, 1
        // Predicated region
        $region13: #{qnetwork_forward.7} parent=11 // pred_check
          %p150 = pneg %p31
        $region14: #{qnetwork_forward.7} parent=11 // pred_check_branch
          %152 = sbr.rel (%p150) target = $region16
        $region15: #{qnetwork_forward.7} parent=11 // pred_region
          _
        $region16: #{qnetwork_forward.7} parent=11 // pred_fallthru
          _
      $region12: #{qnetwork_forward.7} parent=5 // pred_fallthru
        _
      %p153 = scmp.lt.s32.totalorder %s10, 2
      // Predicated region
      $region17: #{qnetwork_forward.7} parent=5 // pred_check
        %p154 = pneg %p153
      $region18: #{qnetwork_forward.7} parent=5 // pred_check_branch
        %156 = sbr.rel (%p154) target = $region20
      $region19: #{qnetwork_forward.7} parent=5 // pred_region
        // Predicated region
        $region21: #{qnetwork_forward.7} parent=19 // pred_check
          %p157 = pneg %p51
        $region22: #{qnetwork_forward.7} parent=19 // pred_check_branch
          %159 = sbr.rel (%p157) target = $region24
        $region23: #{qnetwork_forward.7} parent=19 // pred_region
          %s160 = sand.u32 %s41, 1
          %s161 = sand.u32 %s41, 1
          %s162 = smul.addr %s161, 2304
          %s163 = scalar_lea.vmem [#allocation2], %s162
          %s164 = smul.u32 2, %s10
          %s165 = smul.addr %s164, 4
          %s166 = scalar_lea.vmem %s1, %s165
          // Predicated region
          $region25: #{qnetwork_forward.7} parent=23 // pred_check
            _
          $region26: #{qnetwork_forward.7} parent=23 // pred_check_branch
            %168 = sbr.rel (0) target = $region28
          $region27: #{qnetwork_forward.7} parent=23 // pred_region
            // Predicated region
            $region29: #{qnetwork_forward.7} parent=27 // pred_check
              _
            $region30: #{qnetwork_forward.7} parent=27 // pred_check_branch
              %170 = sbr.rel (0) target = $region32
            $region31: #{qnetwork_forward.7} parent=27 // pred_region
              // Predicated region
              $region44: #{qnetwork_forward.7} parent=31 // pred_check
                _
              $region45: #{qnetwork_forward.7} parent=31 // pred_check_branch
                %760 = sbr.rel (0) target = $region47
              $region46: #{qnetwork_forward.7} parent=31 // pred_region
                loop: start=0, step=1, limit=1
                $region48: #{qnetwork_forward.7} parent=46 // loop_pre_header
                  _
                $region49: #{qnetwork_forward.7} parent=46 // loop_header
                  %s762 = sphi 0, %s766
                  %p763 = scmp.ge.s32.totalorder %s762, 1
                  %s767 = sphi 0, %s1348
                  %s768 = sphi %s166, %s1351
                  %s769 = sphi %s163, %s1352
                $region50: #{qnetwork_forward.7} parent=46 // loop_header_branch
                  %765 = sbr.rel (%p763) target = $region54
                $region51: #{qnetwork_forward.7} parent=46 // loop_body
                  %v770 = vld [vmem:[%s768] sm:$0xff]
                  %771 = vst [vmem:[%s769] sm:$0xff] %v770
                  %v772 = vld [vmem:[%s768 + $0x10] sm:$0xff]
                  %773 = vst [vmem:[%s769 + $0x8] sm:$0xff] %v772
                  %v774 = vld [vmem:[%s768 + $0x20] sm:$0xff]
                  %775 = vst [vmem:[%s769 + $0x10] sm:$0xff] %v774
                  %v776 = vld [vmem:[%s768 + $0x30] sm:$0xff]
                  %777 = vst [vmem:[%s769 + $0x18] sm:$0xff] %v776
                  %v778 = vld [vmem:[%s768 + $0x40] sm:$0xff]
                  %779 = vst [vmem:[%s769 + $0x20] sm:$0xff] %v778
                  %v780 = vld [vmem:[%s768 + $0x50] sm:$0xff]
                  %781 = vst [vmem:[%s769 + $0x28] sm:$0xff] %v780
                  %v782 = vld [vmem:[%s768 + $0x60] sm:$0xff]
                  %783 = vst [vmem:[%s769 + $0x30] sm:$0xff] %v782
                  %v784 = vld [vmem:[%s768 + $0x70] sm:$0xff]
                  %785 = vst [vmem:[%s769 + $0x38] sm:$0xff] %v784
                  %v786 = vld [vmem:[%s768 + $0x80] sm:$0xff]
                  %787 = vst [vmem:[%s769 + $0x40] sm:$0xff] %v786
                  %v788 = vld [vmem:[%s768 + $0x90] sm:$0xff]
                  %789 = vst [vmem:[%s769 + $0x48] sm:$0xff] %v788
                  %v790 = vld [vmem:[%s768 + $0xa0] sm:$0xff]
                  %791 = vst [vmem:[%s769 + $0x50] sm:$0xff] %v790
                  %v792 = vld [vmem:[%s768 + $0xb0] sm:$0xff]
                  %793 = vst [vmem:[%s769 + $0x58] sm:$0xff] %v792
                  %v794 = vld [vmem:[%s768 + $0xc0] sm:$0xff]
                  %795 = vst [vmem:[%s769 + $0x60] sm:$0xff] %v794
                  %v796 = vld [vmem:[%s768 + $0xd0] sm:$0xff]
                  %797 = vst [vmem:[%s769 + $0x68] sm:$0xff] %v796
                  %v798 = vld [vmem:[%s768 + $0xe0] sm:$0xff]
                  %799 = vst [vmem:[%s769 + $0x70] sm:$0xff] %v798
                  %v800 = vld [vmem:[%s768 + $0xf0] sm:$0xff]
                  %801 = vst [vmem:[%s769 + $0x78] sm:$0xff] %v800
                  %v802 = vld [vmem:[%s768 + $0x100] sm:$0xff]
                  %803 = vst [vmem:[%s769 + $0x80] sm:$0xff] %v802
                  %v804 = vld [vmem:[%s768 + $0x110] sm:$0xff]
                  %805 = vst [vmem:[%s769 + $0x88] sm:$0xff] %v804
                  %v806 = vld [vmem:[%s768 + $0x120] sm:$0xff]
                  %807 = vst [vmem:[%s769 + $0x90] sm:$0xff] %v806
                  %v808 = vld [vmem:[%s768 + $0x130] sm:$0xff]
                  %809 = vst [vmem:[%s769 + $0x98] sm:$0xff] %v808
                  %v810 = vld [vmem:[%s768 + $0x140] sm:$0xff]
                  %811 = vst [vmem:[%s769 + $0xa0] sm:$0xff] %v810
                  %v812 = vld [vmem:[%s768 + $0x150] sm:$0xff]
                  %813 = vst [vmem:[%s769 + $0xa8] sm:$0xff] %v812
                  %v814 = vld [vmem:[%s768 + $0x160] sm:$0xff]
                  %815 = vst [vmem:[%s769 + $0xb0] sm:$0xff] %v814
                  %v816 = vld [vmem:[%s768 + $0x170] sm:$0xff]
                  %817 = vst [vmem:[%s769 + $0xb8] sm:$0xff] %v816
                  %v818 = vld [vmem:[%s768 + $0x180] sm:$0xff]
                  %819 = vst [vmem:[%s769 + $0xc0] sm:$0xff] %v818
                  %v820 = vld [vmem:[%s768 + $0x190] sm:$0xff]
                  %821 = vst [vmem:[%s769 + $0xc8] sm:$0xff] %v820
                  %v822 = vld [vmem:[%s768 + $0x1a0] sm:$0xff]
                  %823 = vst [vmem:[%s769 + $0xd0] sm:$0xff] %v822
                  %v824 = vld [vmem:[%s768 + $0x1b0] sm:$0xff]
                  %825 = vst [vmem:[%s769 + $0xd8] sm:$0xff] %v824
                  %v826 = vld [vmem:[%s768 + $0x1c0] sm:$0xff]
                  %827 = vst [vmem:[%s769 + $0xe0] sm:$0xff] %v826
                  %v828 = vld [vmem:[%s768 + $0x1d0] sm:$0xff]
                  %829 = vst [vmem:[%s769 + $0xe8] sm:$0xff] %v828
                  %v830 = vld [vmem:[%s768 + $0x1e0] sm:$0xff]
                  %831 = vst [vmem:[%s769 + $0xf0] sm:$0xff] %v830
                  %v832 = vld [vmem:[%s768 + $0x1f0] sm:$0xff]
                  %833 = vst [vmem:[%s769 + $0xf8] sm:$0xff] %v832
                  %v834 = vld [vmem:[%s768 + $0x200] sm:$0xff]
                  %835 = vst [vmem:[%s769 + $0x100] sm:$0xff] %v834
                  %v836 = vld [vmem:[%s768 + $0x210] sm:$0xff]
                  %837 = vst [vmem:[%s769 + $0x108] sm:$0xff] %v836
                  %v838 = vld [vmem:[%s768 + $0x220] sm:$0xff]
                  %839 = vst [vmem:[%s769 + $0x110] sm:$0xff] %v838
                  %v840 = vld [vmem:[%s768 + $0x230] sm:$0xff]
                  %841 = vst [vmem:[%s769 + $0x118] sm:$0xff] %v840
                  %v842 = vld [vmem:[%s768 + $0x240] sm:$0xff]
                  %843 = vst [vmem:[%s769 + $0x120] sm:$0xff] %v842
                  %v844 = vld [vmem:[%s768 + $0x250] sm:$0xff]
                  %845 = vst [vmem:[%s769 + $0x128] sm:$0xff] %v844
                  %v846 = vld [vmem:[%s768 + $0x260] sm:$0xff]
                  %847 = vst [vmem:[%s769 + $0x130] sm:$0xff] %v846
                  %v848 = vld [vmem:[%s768 + $0x270] sm:$0xff]
                  %849 = vst [vmem:[%s769 + $0x138] sm:$0xff] %v848
                  %v850 = vld [vmem:[%s768 + $0x280] sm:$0xff]
                  %851 = vst [vmem:[%s769 + $0x140] sm:$0xff] %v850
                  %v852 = vld [vmem:[%s768 + $0x290] sm:$0xff]
                  %853 = vst [vmem:[%s769 + $0x148] sm:$0xff] %v852
                  %v854 = vld [vmem:[%s768 + $0x2a0] sm:$0xff]
                  %855 = vst [vmem:[%s769 + $0x150] sm:$0xff] %v854
                  %v856 = vld [vmem:[%s768 + $0x2b0] sm:$0xff]
                  %857 = vst [vmem:[%s769 + $0x158] sm:$0xff] %v856
                  %v858 = vld [vmem:[%s768 + $0x2c0] sm:$0xff]
                  %859 = vst [vmem:[%s769 + $0x160] sm:$0xff] %v858
                  %v860 = vld [vmem:[%s768 + $0x2d0] sm:$0xff]
                  %861 = vst [vmem:[%s769 + $0x168] sm:$0xff] %v860
                  %v862 = vld [vmem:[%s768 + $0x2e0] sm:$0xff]
                  %863 = vst [vmem:[%s769 + $0x170] sm:$0xff] %v862
                  %v864 = vld [vmem:[%s768 + $0x2f0] sm:$0xff]
                  %865 = vst [vmem:[%s769 + $0x178] sm:$0xff] %v864
                  %v866 = vld [vmem:[%s768 + $0x300] sm:$0xff]
                  %867 = vst [vmem:[%s769 + $0x180] sm:$0xff] %v866
                  %v868 = vld [vmem:[%s768 + $0x310] sm:$0xff]
                  %869 = vst [vmem:[%s769 + $0x188] sm:$0xff] %v868
                  %v870 = vld [vmem:[%s768 + $0x320] sm:$0xff]
                  %871 = vst [vmem:[%s769 + $0x190] sm:$0xff] %v870
                  %v872 = vld [vmem:[%s768 + $0x330] sm:$0xff]
                  %873 = vst [vmem:[%s769 + $0x198] sm:$0xff] %v872
                  %v874 = vld [vmem:[%s768 + $0x340] sm:$0xff]
                  %875 = vst [vmem:[%s769 + $0x1a0] sm:$0xff] %v874
                  %v876 = vld [vmem:[%s768 + $0x350] sm:$0xff]
                  %877 = vst [vmem:[%s769 + $0x1a8] sm:$0xff] %v876
                  %v878 = vld [vmem:[%s768 + $0x360] sm:$0xff]
                  %879 = vst [vmem:[%s769 + $0x1b0] sm:$0xff] %v878
                  %v880 = vld [vmem:[%s768 + $0x370] sm:$0xff]
                  %881 = vst [vmem:[%s769 + $0x1b8] sm:$0xff] %v880
                  %v882 = vld [vmem:[%s768 + $0x380] sm:$0xff]
                  %883 = vst [vmem:[%s769 + $0x1c0] sm:$0xff] %v882
                  %v884 = vld [vmem:[%s768 + $0x390] sm:$0xff]
                  %885 = vst [vmem:[%s769 + $0x1c8] sm:$0xff] %v884
                  %v886 = vld [vmem:[%s768 + $0x3a0] sm:$0xff]
                  %887 = vst [vmem:[%s769 + $0x1d0] sm:$0xff] %v886
                  %v888 = vld [vmem:[%s768 + $0x3b0] sm:$0xff]
                  %889 = vst [vmem:[%s769 + $0x1d8] sm:$0xff] %v888
                  %v890 = vld [vmem:[%s768 + $0x3c0] sm:$0xff]
                  %891 = vst [vmem:[%s769 + $0x1e0] sm:$0xff] %v890
                  %v892 = vld [vmem:[%s768 + $0x3d0] sm:$0xff]
                  %893 = vst [vmem:[%s769 + $0x1e8] sm:$0xff] %v892
                  %v894 = vld [vmem:[%s768 + $0x3e0] sm:$0xff]
                  %895 = vst [vmem:[%s769 + $0x1f0] sm:$0xff] %v894
                  %v896 = vld [vmem:[%s768 + $0x3f0] sm:$0xff]
                  %897 = vst [vmem:[%s769 + $0x1f8] sm:$0xff] %v896
                  %v898 = vld [vmem:[%s768 + $0x400] sm:$0xff]
                  %899 = vst [vmem:[%s769 + $0x200] sm:$0xff] %v898
                  %v900 = vld [vmem:[%s768 + $0x410] sm:$0xff]
                  %901 = vst [vmem:[%s769 + $0x208] sm:$0xff] %v900
                  %v902 = vld [vmem:[%s768 + $0x420] sm:$0xff]
                  %903 = vst [vmem:[%s769 + $0x210] sm:$0xff] %v902
                  %v904 = vld [vmem:[%s768 + $0x430] sm:$0xff]
                  %905 = vst [vmem:[%s769 + $0x218] sm:$0xff] %v904
                  %v906 = vld [vmem:[%s768 + $0x440] sm:$0xff]
                  %907 = vst [vmem:[%s769 + $0x220] sm:$0xff] %v906
                  %v908 = vld [vmem:[%s768 + $0x450] sm:$0xff]
                  %909 = vst [vmem:[%s769 + $0x228] sm:$0xff] %v908
                  %v910 = vld [vmem:[%s768 + $0x460] sm:$0xff]
                  %911 = vst [vmem:[%s769 + $0x230] sm:$0xff] %v910
                  %v912 = vld [vmem:[%s768 + $0x470] sm:$0xff]
                  %913 = vst [vmem:[%s769 + $0x238] sm:$0xff] %v912
                  %v914 = vld [vmem:[%s768 + $0x480] sm:$0xff]
                  %915 = vst [vmem:[%s769 + $0x240] sm:$0xff] %v914
                  %v916 = vld [vmem:[%s768 + $0x490] sm:$0xff]
                  %917 = vst [vmem:[%s769 + $0x248] sm:$0xff] %v916
                  %v918 = vld [vmem:[%s768 + $0x4a0] sm:$0xff]
                  %919 = vst [vmem:[%s769 + $0x250] sm:$0xff] %v918
                  %v920 = vld [vmem:[%s768 + $0x4b0] sm:$0xff]
                  %921 = vst [vmem:[%s769 + $0x258] sm:$0xff] %v920
                  %v922 = vld [vmem:[%s768 + $0x4c0] sm:$0xff]
                  %923 = vst [vmem:[%s769 + $0x260] sm:$0xff] %v922
                  %v924 = vld [vmem:[%s768 + $0x4d0] sm:$0xff]
                  %925 = vst [vmem:[%s769 + $0x268] sm:$0xff] %v924
                  %v926 = vld [vmem:[%s768 + $0x4e0] sm:$0xff]
                  %927 = vst [vmem:[%s769 + $0x270] sm:$0xff] %v926
                  %v928 = vld [vmem:[%s768 + $0x4f0] sm:$0xff]
                  %929 = vst [vmem:[%s769 + $0x278] sm:$0xff] %v928
                  %v930 = vld [vmem:[%s768 + $0x500] sm:$0xff]
                  %931 = vst [vmem:[%s769 + $0x280] sm:$0xff] %v930
                  %v932 = vld [vmem:[%s768 + $0x510] sm:$0xff]
                  %933 = vst [vmem:[%s769 + $0x288] sm:$0xff] %v932
                  %v934 = vld [vmem:[%s768 + $0x520] sm:$0xff]
                  %935 = vst [vmem:[%s769 + $0x290] sm:$0xff] %v934
                  %v936 = vld [vmem:[%s768 + $0x530] sm:$0xff]
                  %937 = vst [vmem:[%s769 + $0x298] sm:$0xff] %v936
                  %v938 = vld [vmem:[%s768 + $0x540] sm:$0xff]
                  %939 = vst [vmem:[%s769 + $0x2a0] sm:$0xff] %v938
                  %v940 = vld [vmem:[%s768 + $0x550] sm:$0xff]
                  %941 = vst [vmem:[%s769 + $0x2a8] sm:$0xff] %v940
                  %v942 = vld [vmem:[%s768 + $0x560] sm:$0xff]
                  %943 = vst [vmem:[%s769 + $0x2b0] sm:$0xff] %v942
                  %v944 = vld [vmem:[%s768 + $0x570] sm:$0xff]
                  %945 = vst [vmem:[%s769 + $0x2b8] sm:$0xff] %v944
                  %v946 = vld [vmem:[%s768 + $0x580] sm:$0xff]
                  %947 = vst [vmem:[%s769 + $0x2c0] sm:$0xff] %v946
                  %v948 = vld [vmem:[%s768 + $0x590] sm:$0xff]
                  %949 = vst [vmem:[%s769 + $0x2c8] sm:$0xff] %v948
                  %v950 = vld [vmem:[%s768 + $0x5a0] sm:$0xff]
                  %951 = vst [vmem:[%s769 + $0x2d0] sm:$0xff] %v950
                  %v952 = vld [vmem:[%s768 + $0x5b0] sm:$0xff]
                  %953 = vst [vmem:[%s769 + $0x2d8] sm:$0xff] %v952
                  %v954 = vld [vmem:[%s768 + $0x5c0] sm:$0xff]
                  %955 = vst [vmem:[%s769 + $0x2e0] sm:$0xff] %v954
                  %v956 = vld [vmem:[%s768 + $0x5d0] sm:$0xff]
                  %957 = vst [vmem:[%s769 + $0x2e8] sm:$0xff] %v956
                  %v958 = vld [vmem:[%s768 + $0x5e0] sm:$0xff]
                  %959 = vst [vmem:[%s769 + $0x2f0] sm:$0xff] %v958
                  %v960 = vld [vmem:[%s768 + $0x5f0] sm:$0xff]
                  %961 = vst [vmem:[%s769 + $0x2f8] sm:$0xff] %v960
                  %v962 = vld [vmem:[%s768 + $0x600] sm:$0xff]
                  %963 = vst [vmem:[%s769 + $0x300] sm:$0xff] %v962
                  %v964 = vld [vmem:[%s768 + $0x610] sm:$0xff]
                  %965 = vst [vmem:[%s769 + $0x308] sm:$0xff] %v964
                  %v966 = vld [vmem:[%s768 + $0x620] sm:$0xff]
                  %967 = vst [vmem:[%s769 + $0x310] sm:$0xff] %v966
                  %v968 = vld [vmem:[%s768 + $0x630] sm:$0xff]
                  %969 = vst [vmem:[%s769 + $0x318] sm:$0xff] %v968
                  %v970 = vld [vmem:[%s768 + $0x640] sm:$0xff]
                  %971 = vst [vmem:[%s769 + $0x320] sm:$0xff] %v970
                  %v972 = vld [vmem:[%s768 + $0x650] sm:$0xff]
                  %973 = vst [vmem:[%s769 + $0x328] sm:$0xff] %v972
                  %v974 = vld [vmem:[%s768 + $0x660] sm:$0xff]
                  %975 = vst [vmem:[%s769 + $0x330] sm:$0xff] %v974
                  %v976 = vld [vmem:[%s768 + $0x670] sm:$0xff]
                  %977 = vst [vmem:[%s769 + $0x338] sm:$0xff] %v976
                  %v978 = vld [vmem:[%s768 + $0x680] sm:$0xff]
                  %979 = vst [vmem:[%s769 + $0x340] sm:$0xff] %v978
                  %v980 = vld [vmem:[%s768 + $0x690] sm:$0xff]
                  %981 = vst [vmem:[%s769 + $0x348] sm:$0xff] %v980
                  %v982 = vld [vmem:[%s768 + $0x6a0] sm:$0xff]
                  %983 = vst [vmem:[%s769 + $0x350] sm:$0xff] %v982
                  %v984 = vld [vmem:[%s768 + $0x6b0] sm:$0xff]
                  %985 = vst [vmem:[%s769 + $0x358] sm:$0xff] %v984
                  %v986 = vld [vmem:[%s768 + $0x6c0] sm:$0xff]
                  %987 = vst [vmem:[%s769 + $0x360] sm:$0xff] %v986
                  %v988 = vld [vmem:[%s768 + $0x6d0] sm:$0xff]
                  %989 = vst [vmem:[%s769 + $0x368] sm:$0xff] %v988
                  %v990 = vld [vmem:[%s768 + $0x6e0] sm:$0xff]
                  %991 = vst [vmem:[%s769 + $0x370] sm:$0xff] %v990
                  %v992 = vld [vmem:[%s768 + $0x6f0] sm:$0xff]
                  %993 = vst [vmem:[%s769 + $0x378] sm:$0xff] %v992
                  %v994 = vld [vmem:[%s768 + $0x700] sm:$0xff]
                  %995 = vst [vmem:[%s769 + $0x380] sm:$0xff] %v994
                  %v996 = vld [vmem:[%s768 + $0x710] sm:$0xff]
                  %997 = vst [vmem:[%s769 + $0x388] sm:$0xff] %v996
                  %v998 = vld [vmem:[%s768 + $0x720] sm:$0xff]
                  %999 = vst [vmem:[%s769 + $0x390] sm:$0xff] %v998
                  %v1000 = vld [vmem:[%s768 + $0x730] sm:$0xff]
                  %1001 = vst [vmem:[%s769 + $0x398] sm:$0xff] %v1000
                  %v1002 = vld [vmem:[%s768 + $0x740] sm:$0xff]
                  %1003 = vst [vmem:[%s769 + $0x3a0] sm:$0xff] %v1002
                  %v1004 = vld [vmem:[%s768 + $0x750] sm:$0xff]
                  %1005 = vst [vmem:[%s769 + $0x3a8] sm:$0xff] %v1004
                  %v1006 = vld [vmem:[%s768 + $0x760] sm:$0xff]
                  %1007 = vst [vmem:[%s769 + $0x3b0] sm:$0xff] %v1006
                  %v1008 = vld [vmem:[%s768 + $0x770] sm:$0xff]
                  %1009 = vst [vmem:[%s769 + $0x3b8] sm:$0xff] %v1008
                  %v1010 = vld [vmem:[%s768 + $0x780] sm:$0xff]
                  %1011 = vst [vmem:[%s769 + $0x3c0] sm:$0xff] %v1010
                  %v1012 = vld [vmem:[%s768 + $0x790] sm:$0xff]
                  %1013 = vst [vmem:[%s769 + $0x3c8] sm:$0xff] %v1012
                  %v1014 = vld [vmem:[%s768 + $0x7a0] sm:$0xff]
                  %1015 = vst [vmem:[%s769 + $0x3d0] sm:$0xff] %v1014
                  %v1016 = vld [vmem:[%s768 + $0x7b0] sm:$0xff]
                  %1017 = vst [vmem:[%s769 + $0x3d8] sm:$0xff] %v1016
                  %v1018 = vld [vmem:[%s768 + $0x7c0] sm:$0xff]
                  %1019 = vst [vmem:[%s769 + $0x3e0] sm:$0xff] %v1018
                  %v1020 = vld [vmem:[%s768 + $0x7d0] sm:$0xff]
                  %1021 = vst [vmem:[%s769 + $0x3e8] sm:$0xff] %v1020
                  %v1022 = vld [vmem:[%s768 + $0x7e0] sm:$0xff]
                  %1023 = vst [vmem:[%s769 + $0x3f0] sm:$0xff] %v1022
                  %v1024 = vld [vmem:[%s768 + $0x7f0] sm:$0xff]
                  %1025 = vst [vmem:[%s769 + $0x3f8] sm:$0xff] %v1024
                  %v1026 = vld [vmem:[%s768 + $0x800] sm:$0xff]
                  %1027 = vst [vmem:[%s769 + $0x400] sm:$0xff] %v1026
                  %v1028 = vld [vmem:[%s768 + $0x810] sm:$0xff]
                  %1029 = vst [vmem:[%s769 + $0x408] sm:$0xff] %v1028
                  %v1030 = vld [vmem:[%s768 + $0x820] sm:$0xff]
                  %1031 = vst [vmem:[%s769 + $0x410] sm:$0xff] %v1030
                  %v1032 = vld [vmem:[%s768 + $0x830] sm:$0xff]
                  %1033 = vst [vmem:[%s769 + $0x418] sm:$0xff] %v1032
                  %v1034 = vld [vmem:[%s768 + $0x840] sm:$0xff]
                  %1035 = vst [vmem:[%s769 + $0x420] sm:$0xff] %v1034
                  %v1036 = vld [vmem:[%s768 + $0x850] sm:$0xff]
                  %1037 = vst [vmem:[%s769 + $0x428] sm:$0xff] %v1036
                  %v1038 = vld [vmem:[%s768 + $0x860] sm:$0xff]
                  %1039 = vst [vmem:[%s769 + $0x430] sm:$0xff] %v1038
                  %v1040 = vld [vmem:[%s768 + $0x870] sm:$0xff]
                  %1041 = vst [vmem:[%s769 + $0x438] sm:$0xff] %v1040
                  %v1042 = vld [vmem:[%s768 + $0x880] sm:$0xff]
                  %1043 = vst [vmem:[%s769 + $0x440] sm:$0xff] %v1042
                  %v1044 = vld [vmem:[%s768 + $0x890] sm:$0xff]
                  %1045 = vst [vmem:[%s769 + $0x448] sm:$0xff] %v1044
                  %v1046 = vld [vmem:[%s768 + $0x8a0] sm:$0xff]
                  %1047 = vst [vmem:[%s769 + $0x450] sm:$0xff] %v1046
                  %v1048 = vld [vmem:[%s768 + $0x8b0] sm:$0xff]
                  %1049 = vst [vmem:[%s769 + $0x458] sm:$0xff] %v1048
                  %v1050 = vld [vmem:[%s768 + $0x8c0] sm:$0xff]
                  %1051 = vst [vmem:[%s769 + $0x460] sm:$0xff] %v1050
                  %v1052 = vld [vmem:[%s768 + $0x8d0] sm:$0xff]
                  %1053 = vst [vmem:[%s769 + $0x468] sm:$0xff] %v1052
                  %v1054 = vld [vmem:[%s768 + $0x8e0] sm:$0xff]
                  %1055 = vst [vmem:[%s769 + $0x470] sm:$0xff] %v1054
                  %v1056 = vld [vmem:[%s768 + $0x8f0] sm:$0xff]
                  %1057 = vst [vmem:[%s769 + $0x478] sm:$0xff] %v1056
                  %v1058 = vld [vmem:[%s768 + $0x900] sm:$0xff]
                  %1059 = vst [vmem:[%s769 + $0x480] sm:$0xff] %v1058
                  %v1060 = vld [vmem:[%s768 + $0x910] sm:$0xff]
                  %1061 = vst [vmem:[%s769 + $0x488] sm:$0xff] %v1060
                  %v1062 = vld [vmem:[%s768 + $0x920] sm:$0xff]
                  %1063 = vst [vmem:[%s769 + $0x490] sm:$0xff] %v1062
                  %v1064 = vld [vmem:[%s768 + $0x930] sm:$0xff]
                  %1065 = vst [vmem:[%s769 + $0x498] sm:$0xff] %v1064
                  %v1066 = vld [vmem:[%s768 + $0x940] sm:$0xff]
                  %1067 = vst [vmem:[%s769 + $0x4a0] sm:$0xff] %v1066
                  %v1068 = vld [vmem:[%s768 + $0x950] sm:$0xff]
                  %1069 = vst [vmem:[%s769 + $0x4a8] sm:$0xff] %v1068
                  %v1070 = vld [vmem:[%s768 + $0x960] sm:$0xff]
                  %1071 = vst [vmem:[%s769 + $0x4b0] sm:$0xff] %v1070
                  %v1072 = vld [vmem:[%s768 + $0x970] sm:$0xff]
                  %1073 = vst [vmem:[%s769 + $0x4b8] sm:$0xff] %v1072
                  %v1074 = vld [vmem:[%s768 + $0x980] sm:$0xff]
                  %1075 = vst [vmem:[%s769 + $0x4c0] sm:$0xff] %v1074
                  %v1076 = vld [vmem:[%s768 + $0x990] sm:$0xff]
                  %1077 = vst [vmem:[%s769 + $0x4c8] sm:$0xff] %v1076
                  %v1078 = vld [vmem:[%s768 + $0x9a0] sm:$0xff]
                  %1079 = vst [vmem:[%s769 + $0x4d0] sm:$0xff] %v1078
                  %v1080 = vld [vmem:[%s768 + $0x9b0] sm:$0xff]
                  %1081 = vst [vmem:[%s769 + $0x4d8] sm:$0xff] %v1080
                  %v1082 = vld [vmem:[%s768 + $0x9c0] sm:$0xff]
                  %1083 = vst [vmem:[%s769 + $0x4e0] sm:$0xff] %v1082
                  %v1084 = vld [vmem:[%s768 + $0x9d0] sm:$0xff]
                  %1085 = vst [vmem:[%s769 + $0x4e8] sm:$0xff] %v1084
                  %v1086 = vld [vmem:[%s768 + $0x9e0] sm:$0xff]
                  %1087 = vst [vmem:[%s769 + $0x4f0] sm:$0xff] %v1086
                  %v1088 = vld [vmem:[%s768 + $0x9f0] sm:$0xff]
                  %1089 = vst [vmem:[%s769 + $0x4f8] sm:$0xff] %v1088
                  %v1090 = vld [vmem:[%s768 + $0xa00] sm:$0xff]
                  %1091 = vst [vmem:[%s769 + $0x500] sm:$0xff] %v1090
                  %v1092 = vld [vmem:[%s768 + $0xa10] sm:$0xff]
                  %1093 = vst [vmem:[%s769 + $0x508] sm:$0xff] %v1092
                  %v1094 = vld [vmem:[%s768 + $0xa20] sm:$0xff]
                  %1095 = vst [vmem:[%s769 + $0x510] sm:$0xff] %v1094
                  %v1096 = vld [vmem:[%s768 + $0xa30] sm:$0xff]
                  %1097 = vst [vmem:[%s769 + $0x518] sm:$0xff] %v1096
                  %v1098 = vld [vmem:[%s768 + $0xa40] sm:$0xff]
                  %1099 = vst [vmem:[%s769 + $0x520] sm:$0xff] %v1098
                  %v1100 = vld [vmem:[%s768 + $0xa50] sm:$0xff]
                  %1101 = vst [vmem:[%s769 + $0x528] sm:$0xff] %v1100
                  %v1102 = vld [vmem:[%s768 + $0xa60] sm:$0xff]
                  %1103 = vst [vmem:[%s769 + $0x530] sm:$0xff] %v1102
                  %v1104 = vld [vmem:[%s768 + $0xa70] sm:$0xff]
                  %1105 = vst [vmem:[%s769 + $0x538] sm:$0xff] %v1104
                  %v1106 = vld [vmem:[%s768 + $0xa80] sm:$0xff]
                  %1107 = vst [vmem:[%s769 + $0x540] sm:$0xff] %v1106
                  %v1108 = vld [vmem:[%s768 + $0xa90] sm:$0xff]
                  %1109 = vst [vmem:[%s769 + $0x548] sm:$0xff] %v1108
                  %v1110 = vld [vmem:[%s768 + $0xaa0] sm:$0xff]
                  %1111 = vst [vmem:[%s769 + $0x550] sm:$0xff] %v1110
                  %v1112 = vld [vmem:[%s768 + $0xab0] sm:$0xff]
                  %1113 = vst [vmem:[%s769 + $0x558] sm:$0xff] %v1112
                  %v1114 = vld [vmem:[%s768 + $0xac0] sm:$0xff]
                  %1115 = vst [vmem:[%s769 + $0x560] sm:$0xff] %v1114
                  %v1116 = vld [vmem:[%s768 + $0xad0] sm:$0xff]
                  %1117 = vst [vmem:[%s769 + $0x568] sm:$0xff] %v1116
                  %v1118 = vld [vmem:[%s768 + $0xae0] sm:$0xff]
                  %1119 = vst [vmem:[%s769 + $0x570] sm:$0xff] %v1118
                  %v1120 = vld [vmem:[%s768 + $0xaf0] sm:$0xff]
                  %1121 = vst [vmem:[%s769 + $0x578] sm:$0xff] %v1120
                  %v1122 = vld [vmem:[%s768 + $0xb00] sm:$0xff]
                  %1123 = vst [vmem:[%s769 + $0x580] sm:$0xff] %v1122
                  %v1124 = vld [vmem:[%s768 + $0xb10] sm:$0xff]
                  %1125 = vst [vmem:[%s769 + $0x588] sm:$0xff] %v1124
                  %v1126 = vld [vmem:[%s768 + $0xb20] sm:$0xff]
                  %1127 = vst [vmem:[%s769 + $0x590] sm:$0xff] %v1126
                  %v1128 = vld [vmem:[%s768 + $0xb30] sm:$0xff]
                  %1129 = vst [vmem:[%s769 + $0x598] sm:$0xff] %v1128
                  %v1130 = vld [vmem:[%s768 + $0xb40] sm:$0xff]
                  %1131 = vst [vmem:[%s769 + $0x5a0] sm:$0xff] %v1130
                  %v1132 = vld [vmem:[%s768 + $0xb50] sm:$0xff]
                  %1133 = vst [vmem:[%s769 + $0x5a8] sm:$0xff] %v1132
                  %v1134 = vld [vmem:[%s768 + $0xb60] sm:$0xff]
                  %1135 = vst [vmem:[%s769 + $0x5b0] sm:$0xff] %v1134
                  %v1136 = vld [vmem:[%s768 + $0xb70] sm:$0xff]
                  %1137 = vst [vmem:[%s769 + $0x5b8] sm:$0xff] %v1136
                  %v1138 = vld [vmem:[%s768 + $0xb80] sm:$0xff]
                  %1139 = vst [vmem:[%s769 + $0x5c0] sm:$0xff] %v1138
                  %v1140 = vld [vmem:[%s768 + $0xb90] sm:$0xff]
                  %1141 = vst [vmem:[%s769 + $0x5c8] sm:$0xff] %v1140
                  %v1142 = vld [vmem:[%s768 + $0xba0] sm:$0xff]
                  %1143 = vst [vmem:[%s769 + $0x5d0] sm:$0xff] %v1142
                  %v1144 = vld [vmem:[%s768 + $0xbb0] sm:$0xff]
                  %1145 = vst [vmem:[%s769 + $0x5d8] sm:$0xff] %v1144
                  %v1146 = vld [vmem:[%s768 + $0xbc0] sm:$0xff]
                  %1147 = vst [vmem:[%s769 + $0x5e0] sm:$0xff] %v1146
                  %v1148 = vld [vmem:[%s768 + $0xbd0] sm:$0xff]
                  %1149 = vst [vmem:[%s769 + $0x5e8] sm:$0xff] %v1148
                  %v1150 = vld [vmem:[%s768 + $0xbe0] sm:$0xff]
                  %1151 = vst [vmem:[%s769 + $0x5f0] sm:$0xff] %v1150
                  %v1152 = vld [vmem:[%s768 + $0xbf0] sm:$0xff]
                  %1153 = vst [vmem:[%s769 + $0x5f8] sm:$0xff] %v1152
                  %v1154 = vld [vmem:[%s768 + $0xc00] sm:$0xff]
                  %1155 = vst [vmem:[%s769 + $0x600] sm:$0xff] %v1154
                  %v1156 = vld [vmem:[%s768 + $0xc10] sm:$0xff]
                  %1157 = vst [vmem:[%s769 + $0x608] sm:$0xff] %v1156
                  %v1158 = vld [vmem:[%s768 + $0xc20] sm:$0xff]
                  %1159 = vst [vmem:[%s769 + $0x610] sm:$0xff] %v1158
                  %v1160 = vld [vmem:[%s768 + $0xc30] sm:$0xff]
                  %1161 = vst [vmem:[%s769 + $0x618] sm:$0xff] %v1160
                  %v1162 = vld [vmem:[%s768 + $0xc40] sm:$0xff]
                  %1163 = vst [vmem:[%s769 + $0x620] sm:$0xff] %v1162
                  %v1164 = vld [vmem:[%s768 + $0xc50] sm:$0xff]
                  %1165 = vst [vmem:[%s769 + $0x628] sm:$0xff] %v1164
                  %v1166 = vld [vmem:[%s768 + $0xc60] sm:$0xff]
                  %1167 = vst [vmem:[%s769 + $0x630] sm:$0xff] %v1166
                  %v1168 = vld [vmem:[%s768 + $0xc70] sm:$0xff]
                  %1169 = vst [vmem:[%s769 + $0x638] sm:$0xff] %v1168
                  %v1170 = vld [vmem:[%s768 + $0xc80] sm:$0xff]
                  %1171 = vst [vmem:[%s769 + $0x640] sm:$0xff] %v1170
                  %v1172 = vld [vmem:[%s768 + $0xc90] sm:$0xff]
                  %1173 = vst [vmem:[%s769 + $0x648] sm:$0xff] %v1172
                  %v1174 = vld [vmem:[%s768 + $0xca0] sm:$0xff]
                  %1175 = vst [vmem:[%s769 + $0x650] sm:$0xff] %v1174
                  %v1176 = vld [vmem:[%s768 + $0xcb0] sm:$0xff]
                  %1177 = vst [vmem:[%s769 + $0x658] sm:$0xff] %v1176
                  %v1178 = vld [vmem:[%s768 + $0xcc0] sm:$0xff]
                  %1179 = vst [vmem:[%s769 + $0x660] sm:$0xff] %v1178
                  %v1180 = vld [vmem:[%s768 + $0xcd0] sm:$0xff]
                  %1181 = vst [vmem:[%s769 + $0x668] sm:$0xff] %v1180
                  %v1182 = vld [vmem:[%s768 + $0xce0] sm:$0xff]
                  %1183 = vst [vmem:[%s769 + $0x670] sm:$0xff] %v1182
                  %v1184 = vld [vmem:[%s768 + $0xcf0] sm:$0xff]
                  %1185 = vst [vmem:[%s769 + $0x678] sm:$0xff] %v1184
                  %v1186 = vld [vmem:[%s768 + $0xd00] sm:$0xff]
                  %1187 = vst [vmem:[%s769 + $0x680] sm:$0xff] %v1186
                  %v1188 = vld [vmem:[%s768 + $0xd10] sm:$0xff]
                  %1189 = vst [vmem:[%s769 + $0x688] sm:$0xff] %v1188
                  %v1190 = vld [vmem:[%s768 + $0xd20] sm:$0xff]
                  %1191 = vst [vmem:[%s769 + $0x690] sm:$0xff] %v1190
                  %v1192 = vld [vmem:[%s768 + $0xd30] sm:$0xff]
                  %1193 = vst [vmem:[%s769 + $0x698] sm:$0xff] %v1192
                  %v1194 = vld [vmem:[%s768 + $0xd40] sm:$0xff]
                  %1195 = vst [vmem:[%s769 + $0x6a0] sm:$0xff] %v1194
                  %v1196 = vld [vmem:[%s768 + $0xd50] sm:$0xff]
                  %1197 = vst [vmem:[%s769 + $0x6a8] sm:$0xff] %v1196
                  %v1198 = vld [vmem:[%s768 + $0xd60] sm:$0xff]
                  %1199 = vst [vmem:[%s769 + $0x6b0] sm:$0xff] %v1198
                  %v1200 = vld [vmem:[%s768 + $0xd70] sm:$0xff]
                  %1201 = vst [vmem:[%s769 + $0x6b8] sm:$0xff] %v1200
                  %v1202 = vld [vmem:[%s768 + $0xd80] sm:$0xff]
                  %1203 = vst [vmem:[%s769 + $0x6c0] sm:$0xff] %v1202
                  %v1204 = vld [vmem:[%s768 + $0xd90] sm:$0xff]
                  %1205 = vst [vmem:[%s769 + $0x6c8] sm:$0xff] %v1204
                  %v1206 = vld [vmem:[%s768 + $0xda0] sm:$0xff]
                  %1207 = vst [vmem:[%s769 + $0x6d0] sm:$0xff] %v1206
                  %v1208 = vld [vmem:[%s768 + $0xdb0] sm:$0xff]
                  %1209 = vst [vmem:[%s769 + $0x6d8] sm:$0xff] %v1208
                  %v1210 = vld [vmem:[%s768 + $0xdc0] sm:$0xff]
                  %1211 = vst [vmem:[%s769 + $0x6e0] sm:$0xff] %v1210
                  %v1212 = vld [vmem:[%s768 + $0xdd0] sm:$0xff]
                  %1213 = vst [vmem:[%s769 + $0x6e8] sm:$0xff] %v1212
                  %v1214 = vld [vmem:[%s768 + $0xde0] sm:$0xff]
                  %1215 = vst [vmem:[%s769 + $0x6f0] sm:$0xff] %v1214
                  %v1216 = vld [vmem:[%s768 + $0xdf0] sm:$0xff]
                  %1217 = vst [vmem:[%s769 + $0x6f8] sm:$0xff] %v1216
                  %v1218 = vld [vmem:[%s768 + $0xe00] sm:$0xff]
                  %1219 = vst [vmem:[%s769 + $0x700] sm:$0xff] %v1218
                  %v1220 = vld [vmem:[%s768 + $0xe10] sm:$0xff]
                  %1221 = vst [vmem:[%s769 + $0x708] sm:$0xff] %v1220
                  %v1222 = vld [vmem:[%s768 + $0xe20] sm:$0xff]
                  %1223 = vst [vmem:[%s769 + $0x710] sm:$0xff] %v1222
                  %v1224 = vld [vmem:[%s768 + $0xe30] sm:$0xff]
                  %1225 = vst [vmem:[%s769 + $0x718] sm:$0xff] %v1224
                  %v1226 = vld [vmem:[%s768 + $0xe40] sm:$0xff]
                  %1227 = vst [vmem:[%s769 + $0x720] sm:$0xff] %v1226
                  %v1228 = vld [vmem:[%s768 + $0xe50] sm:$0xff]
                  %1229 = vst [vmem:[%s769 + $0x728] sm:$0xff] %v1228
                  %v1230 = vld [vmem:[%s768 + $0xe60] sm:$0xff]
                  %1231 = vst [vmem:[%s769 + $0x730] sm:$0xff] %v1230
                  %v1232 = vld [vmem:[%s768 + $0xe70] sm:$0xff]
                  %1233 = vst [vmem:[%s769 + $0x738] sm:$0xff] %v1232
                  %v1234 = vld [vmem:[%s768 + $0xe80] sm:$0xff]
                  %1235 = vst [vmem:[%s769 + $0x740] sm:$0xff] %v1234
                  %v1236 = vld [vmem:[%s768 + $0xe90] sm:$0xff]
                  %1237 = vst [vmem:[%s769 + $0x748] sm:$0xff] %v1236
                  %v1238 = vld [vmem:[%s768 + $0xea0] sm:$0xff]
                  %1239 = vst [vmem:[%s769 + $0x750] sm:$0xff] %v1238
                  %v1240 = vld [vmem:[%s768 + $0xeb0] sm:$0xff]
                  %1241 = vst [vmem:[%s769 + $0x758] sm:$0xff] %v1240
                  %v1242 = vld [vmem:[%s768 + $0xec0] sm:$0xff]
                  %1243 = vst [vmem:[%s769 + $0x760] sm:$0xff] %v1242
                  %v1244 = vld [vmem:[%s768 + $0xed0] sm:$0xff]
                  %1245 = vst [vmem:[%s769 + $0x768] sm:$0xff] %v1244
                  %v1246 = vld [vmem:[%s768 + $0xee0] sm:$0xff]
                  %1247 = vst [vmem:[%s769 + $0x770] sm:$0xff] %v1246
                  %v1248 = vld [vmem:[%s768 + $0xef0] sm:$0xff]
                  %1249 = vst [vmem:[%s769 + $0x778] sm:$0xff] %v1248
                  %v1250 = vld [vmem:[%s768 + $0xf00] sm:$0xff]
                  %1251 = vst [vmem:[%s769 + $0x780] sm:$0xff] %v1250
                  %v1252 = vld [vmem:[%s768 + $0xf10] sm:$0xff]
                  %1253 = vst [vmem:[%s769 + $0x788] sm:$0xff] %v1252
                  %v1254 = vld [vmem:[%s768 + $0xf20] sm:$0xff]
                  %1255 = vst [vmem:[%s769 + $0x790] sm:$0xff] %v1254
                  %v1256 = vld [vmem:[%s768 + $0xf30] sm:$0xff]
                  %1257 = vst [vmem:[%s769 + $0x798] sm:$0xff] %v1256
                  %v1258 = vld [vmem:[%s768 + $0xf40] sm:$0xff]
                  %1259 = vst [vmem:[%s769 + $0x7a0] sm:$0xff] %v1258
                  %v1260 = vld [vmem:[%s768 + $0xf50] sm:$0xff]
                  %1261 = vst [vmem:[%s769 + $0x7a8] sm:$0xff] %v1260
                  %v1262 = vld [vmem:[%s768 + $0xf60] sm:$0xff]
                  %1263 = vst [vmem:[%s769 + $0x7b0] sm:$0xff] %v1262
                  %v1264 = vld [vmem:[%s768 + $0xf70] sm:$0xff]
                  %1265 = vst [vmem:[%s769 + $0x7b8] sm:$0xff] %v1264
                  %v1266 = vld [vmem:[%s768 + $0xf80] sm:$0xff]
                  %1267 = vst [vmem:[%s769 + $0x7c0] sm:$0xff] %v1266
                  %v1268 = vld [vmem:[%s768 + $0xf90] sm:$0xff]
                  %1269 = vst [vmem:[%s769 + $0x7c8] sm:$0xff] %v1268
                  %v1270 = vld [vmem:[%s768 + $0xfa0] sm:$0xff]
                  %1271 = vst [vmem:[%s769 + $0x7d0] sm:$0xff] %v1270
                  %v1272 = vld [vmem:[%s768 + $0xfb0] sm:$0xff]
                  %1273 = vst [vmem:[%s769 + $0x7d8] sm:$0xff] %v1272
                  %v1274 = vld [vmem:[%s768 + $0xfc0] sm:$0xff]
                  %1275 = vst [vmem:[%s769 + $0x7e0] sm:$0xff] %v1274
                  %v1276 = vld [vmem:[%s768 + $0xfd0] sm:$0xff]
                  %1277 = vst [vmem:[%s769 + $0x7e8] sm:$0xff] %v1276
                  %v1278 = vld [vmem:[%s768 + $0xfe0] sm:$0xff]
                  %1279 = vst [vmem:[%s769 + $0x7f0] sm:$0xff] %v1278
                  %v1280 = vld [vmem:[%s768 + $0xff0] sm:$0xff]
                  %1281 = vst [vmem:[%s769 + $0x7f8] sm:$0xff] %v1280
                  %v1282 = vld [vmem:[%s768 + $0x1000] sm:$0xff]
                  %1283 = vst [vmem:[%s769 + $0x800] sm:$0xff] %v1282
                  %v1284 = vld [vmem:[%s768 + $0x1010] sm:$0xff]
                  %1285 = vst [vmem:[%s769 + $0x808] sm:$0xff] %v1284
                  %v1286 = vld [vmem:[%s768 + $0x1020] sm:$0xff]
                  %1287 = vst [vmem:[%s769 + $0x810] sm:$0xff] %v1286
                  %v1288 = vld [vmem:[%s768 + $0x1030] sm:$0xff]
                  %1289 = vst [vmem:[%s769 + $0x818] sm:$0xff] %v1288
                  %v1290 = vld [vmem:[%s768 + $0x1040] sm:$0xff]
                  %1291 = vst [vmem:[%s769 + $0x820] sm:$0xff] %v1290
                  %v1292 = vld [vmem:[%s768 + $0x1050] sm:$0xff]
                  %1293 = vst [vmem:[%s769 + $0x828] sm:$0xff] %v1292
                  %v1294 = vld [vmem:[%s768 + $0x1060] sm:$0xff]
                  %1295 = vst [vmem:[%s769 + $0x830] sm:$0xff] %v1294
                  %v1296 = vld [vmem:[%s768 + $0x1070] sm:$0xff]
                  %1297 = vst [vmem:[%s769 + $0x838] sm:$0xff] %v1296
                  %v1298 = vld [vmem:[%s768 + $0x1080] sm:$0xff]
                  %1299 = vst [vmem:[%s769 + $0x840] sm:$0xff] %v1298
                  %v1300 = vld [vmem:[%s768 + $0x1090] sm:$0xff]
                  %1301 = vst [vmem:[%s769 + $0x848] sm:$0xff] %v1300
                  %v1302 = vld [vmem:[%s768 + $0x10a0] sm:$0xff]
                  %1303 = vst [vmem:[%s769 + $0x850] sm:$0xff] %v1302
                  %v1304 = vld [vmem:[%s768 + $0x10b0] sm:$0xff]
                  %1305 = vst [vmem:[%s769 + $0x858] sm:$0xff] %v1304
                  %v1306 = vld [vmem:[%s768 + $0x10c0] sm:$0xff]
                  %1307 = vst [vmem:[%s769 + $0x860] sm:$0xff] %v1306
                  %v1308 = vld [vmem:[%s768 + $0x10d0] sm:$0xff]
                  %1309 = vst [vmem:[%s769 + $0x868] sm:$0xff] %v1308
                  %v1310 = vld [vmem:[%s768 + $0x10e0] sm:$0xff]
                  %1311 = vst [vmem:[%s769 + $0x870] sm:$0xff] %v1310
                  %v1312 = vld [vmem:[%s768 + $0x10f0] sm:$0xff]
                  %1313 = vst [vmem:[%s769 + $0x878] sm:$0xff] %v1312
                  %v1314 = vld [vmem:[%s768 + $0x1100] sm:$0xff]
                  %1315 = vst [vmem:[%s769 + $0x880] sm:$0xff] %v1314
                  %v1316 = vld [vmem:[%s768 + $0x1110] sm:$0xff]
                  %1317 = vst [vmem:[%s769 + $0x888] sm:$0xff] %v1316
                  %v1318 = vld [vmem:[%s768 + $0x1120] sm:$0xff]
                  %1319 = vst [vmem:[%s769 + $0x890] sm:$0xff] %v1318
                  %v1320 = vld [vmem:[%s768 + $0x1130] sm:$0xff]
                  %1321 = vst [vmem:[%s769 + $0x898] sm:$0xff] %v1320
                  %v1322 = vld [vmem:[%s768 + $0x1140] sm:$0xff]
                  %1323 = vst [vmem:[%s769 + $0x8a0] sm:$0xff] %v1322
                  %v1324 = vld [vmem:[%s768 + $0x1150] sm:$0xff]
                  %1325 = vst [vmem:[%s769 + $0x8a8] sm:$0xff] %v1324
                  %v1326 = vld [vmem:[%s768 + $0x1160] sm:$0xff]
                  %1327 = vst [vmem:[%s769 + $0x8b0] sm:$0xff] %v1326
                  %v1328 = vld [vmem:[%s768 + $0x1170] sm:$0xff]
                  %1329 = vst [vmem:[%s769 + $0x8b8] sm:$0xff] %v1328
                  %v1330 = vld [vmem:[%s768 + $0x1180] sm:$0xff]
                  %1331 = vst [vmem:[%s769 + $0x8c0] sm:$0xff] %v1330
                  %v1332 = vld [vmem:[%s768 + $0x1190] sm:$0xff]
                  %1333 = vst [vmem:[%s769 + $0x8c8] sm:$0xff] %v1332
                  %v1334 = vld [vmem:[%s768 + $0x11a0] sm:$0xff]
                  %1335 = vst [vmem:[%s769 + $0x8d0] sm:$0xff] %v1334
                  %v1336 = vld [vmem:[%s768 + $0x11b0] sm:$0xff]
                  %1337 = vst [vmem:[%s769 + $0x8d8] sm:$0xff] %v1336
                  %v1338 = vld [vmem:[%s768 + $0x11c0] sm:$0xff]
                  %1339 = vst [vmem:[%s769 + $0x8e0] sm:$0xff] %v1338
                  %v1340 = vld [vmem:[%s768 + $0x11d0] sm:$0xff]
                  %1341 = vst [vmem:[%s769 + $0x8e8] sm:$0xff] %v1340
                  %v1342 = vld [vmem:[%s768 + $0x11e0] sm:$0xff]
                  %1343 = vst [vmem:[%s769 + $0x8f0] sm:$0xff] %v1342
                  %v1344 = vld [vmem:[%s768 + $0x11f0] sm:$0xff]
                  %1345 = vst [vmem:[%s769 + $0x8f8] sm:$0xff] %v1344
                  %s1346 = sadd.s32 1, %s767
                  %p1347 = scmp.ge.s32.totalorder %s1346, 1
                  %s1348 = scalar_select %p1347, 0, %s1346
                  %s1349 = smul.u32 %s1348, 8
                  %s1350 = smul.u32 %s1348, 8
                  %s1351 = scalar_lea.vmem %s166, %s1349
                  %s1352 = scalar_lea.vmem %s163, %s1350 [#allocation2]
                $region52: #{qnetwork_forward.7} parent=46 // loop_footer
                  %s766 = sadd.s32 1, %s762
                $region53: #{qnetwork_forward.7} parent=46 // loop_footer_branch
                  %761 = sbr.rel target = $region49
                $region54: #{qnetwork_forward.7} parent=46 // loop_exit
                  _
              $region47: #{qnetwork_forward.7} parent=31 // pred_fallthru
                _
              // Predicated region
              $region55: #{qnetwork_forward.7} parent=31 // pred_check
                _
              $region56: #{qnetwork_forward.7} parent=31 // pred_check_branch
                %1354 = sbr.rel target = $region58
              $region57: #{qnetwork_forward.7} parent=31 // pred_region
                %s1355 = scalar_lea.vmem %s166, 8
                %s1356 = scalar_lea.vmem %s163, 8 [#allocation2]
                loop: start=0, step=1, limit=1
                $region59: #{qnetwork_forward.7} parent=57 // loop_pre_header
                  _
                $region60: #{qnetwork_forward.7} parent=57 // loop_header
                  %s1358 = sphi 0, %s1362
                  %p1359 = scmp.ge.s32.totalorder %s1358, 1
                  %s1363 = sphi 0, %s1944
                  %s1364 = sphi %s166, %s1947
                  %s1365 = sphi %s163, %s1948
                $region61: #{qnetwork_forward.7} parent=57 // loop_header_branch
                  %1361 = sbr.rel (%p1359) target = $region65
                $region62: #{qnetwork_forward.7} parent=57 // loop_body
                  %v1366 = vld [vmem:[%s1364] sm:$0xff]
                  %1367 = vst [vmem:[%s1365] sm:$0xff] %v1366
                  %v1368 = vld [vmem:[%s1364 + $0x10] sm:$0xff]
                  %1369 = vst [vmem:[%s1365 + $0x8] sm:$0xff] %v1368
                  %v1370 = vld [vmem:[%s1364 + $0x20] sm:$0xff]
                  %1371 = vst [vmem:[%s1365 + $0x10] sm:$0xff] %v1370
                  %v1372 = vld [vmem:[%s1364 + $0x30] sm:$0xff]
                  %1373 = vst [vmem:[%s1365 + $0x18] sm:$0xff] %v1372
                  %v1374 = vld [vmem:[%s1364 + $0x40] sm:$0xff]
                  %1375 = vst [vmem:[%s1365 + $0x20] sm:$0xff] %v1374
                  %v1376 = vld [vmem:[%s1364 + $0x50] sm:$0xff]
                  %1377 = vst [vmem:[%s1365 + $0x28] sm:$0xff] %v1376
                  %v1378 = vld [vmem:[%s1364 + $0x60] sm:$0xff]
                  %1379 = vst [vmem:[%s1365 + $0x30] sm:$0xff] %v1378
                  %v1380 = vld [vmem:[%s1364 + $0x70] sm:$0xff]
                  %1381 = vst [vmem:[%s1365 + $0x38] sm:$0xff] %v1380
                  %v1382 = vld [vmem:[%s1364 + $0x80] sm:$0xff]
                  %1383 = vst [vmem:[%s1365 + $0x40] sm:$0xff] %v1382
                  %v1384 = vld [vmem:[%s1364 + $0x90] sm:$0xff]
                  %1385 = vst [vmem:[%s1365 + $0x48] sm:$0xff] %v1384
                  %v1386 = vld [vmem:[%s1364 + $0xa0] sm:$0xff]
                  %1387 = vst [vmem:[%s1365 + $0x50] sm:$0xff] %v1386
                  %v1388 = vld [vmem:[%s1364 + $0xb0] sm:$0xff]
                  %1389 = vst [vmem:[%s1365 + $0x58] sm:$0xff] %v1388
                  %v1390 = vld [vmem:[%s1364 + $0xc0] sm:$0xff]
                  %1391 = vst [vmem:[%s1365 + $0x60] sm:$0xff] %v1390
                  %v1392 = vld [vmem:[%s1364 + $0xd0] sm:$0xff]
                  %1393 = vst [vmem:[%s1365 + $0x68] sm:$0xff] %v1392
                  %v1394 = vld [vmem:[%s1364 + $0xe0] sm:$0xff]
                  %1395 = vst [vmem:[%s1365 + $0x70] sm:$0xff] %v1394
                  %v1396 = vld [vmem:[%s1364 + $0xf0] sm:$0xff]
                  %1397 = vst [vmem:[%s1365 + $0x78] sm:$0xff] %v1396
                  %v1398 = vld [vmem:[%s1364 + $0x100] sm:$0xff]
                  %1399 = vst [vmem:[%s1365 + $0x80] sm:$0xff] %v1398
                  %v1400 = vld [vmem:[%s1364 + $0x110] sm:$0xff]
                  %1401 = vst [vmem:[%s1365 + $0x88] sm:$0xff] %v1400
                  %v1402 = vld [vmem:[%s1364 + $0x120] sm:$0xff]
                  %1403 = vst [vmem:[%s1365 + $0x90] sm:$0xff] %v1402
                  %v1404 = vld [vmem:[%s1364 + $0x130] sm:$0xff]
                  %1405 = vst [vmem:[%s1365 + $0x98] sm:$0xff] %v1404
                  %v1406 = vld [vmem:[%s1364 + $0x140] sm:$0xff]
                  %1407 = vst [vmem:[%s1365 + $0xa0] sm:$0xff] %v1406
                  %v1408 = vld [vmem:[%s1364 + $0x150] sm:$0xff]
                  %1409 = vst [vmem:[%s1365 + $0xa8] sm:$0xff] %v1408
                  %v1410 = vld [vmem:[%s1364 + $0x160] sm:$0xff]
                  %1411 = vst [vmem:[%s1365 + $0xb0] sm:$0xff] %v1410
                  %v1412 = vld [vmem:[%s1364 + $0x170] sm:$0xff]
                  %1413 = vst [vmem:[%s1365 + $0xb8] sm:$0xff] %v1412
                  %v1414 = vld [vmem:[%s1364 + $0x180] sm:$0xff]
                  %1415 = vst [vmem:[%s1365 + $0xc0] sm:$0xff] %v1414
                  %v1416 = vld [vmem:[%s1364 + $0x190] sm:$0xff]
                  %1417 = vst [vmem:[%s1365 + $0xc8] sm:$0xff] %v1416
                  %v1418 = vld [vmem:[%s1364 + $0x1a0] sm:$0xff]
                  %1419 = vst [vmem:[%s1365 + $0xd0] sm:$0xff] %v1418
                  %v1420 = vld [vmem:[%s1364 + $0x1b0] sm:$0xff]
                  %1421 = vst [vmem:[%s1365 + $0xd8] sm:$0xff] %v1420
                  %v1422 = vld [vmem:[%s1364 + $0x1c0] sm:$0xff]
                  %1423 = vst [vmem:[%s1365 + $0xe0] sm:$0xff] %v1422
                  %v1424 = vld [vmem:[%s1364 + $0x1d0] sm:$0xff]
                  %1425 = vst [vmem:[%s1365 + $0xe8] sm:$0xff] %v1424
                  %v1426 = vld [vmem:[%s1364 + $0x1e0] sm:$0xff]
                  %1427 = vst [vmem:[%s1365 + $0xf0] sm:$0xff] %v1426
                  %v1428 = vld [vmem:[%s1364 + $0x1f0] sm:$0xff]
                  %1429 = vst [vmem:[%s1365 + $0xf8] sm:$0xff] %v1428
                  %v1430 = vld [vmem:[%s1364 + $0x200] sm:$0xff]
                  %1431 = vst [vmem:[%s1365 + $0x100] sm:$0xff] %v1430
                  %v1432 = vld [vmem:[%s1364 + $0x210] sm:$0xff]
                  %1433 = vst [vmem:[%s1365 + $0x108] sm:$0xff] %v1432
                  %v1434 = vld [vmem:[%s1364 + $0x220] sm:$0xff]
                  %1435 = vst [vmem:[%s1365 + $0x110] sm:$0xff] %v1434
                  %v1436 = vld [vmem:[%s1364 + $0x230] sm:$0xff]
                  %1437 = vst [vmem:[%s1365 + $0x118] sm:$0xff] %v1436
                  %v1438 = vld [vmem:[%s1364 + $0x240] sm:$0xff]
                  %1439 = vst [vmem:[%s1365 + $0x120] sm:$0xff] %v1438
                  %v1440 = vld [vmem:[%s1364 + $0x250] sm:$0xff]
                  %1441 = vst [vmem:[%s1365 + $0x128] sm:$0xff] %v1440
                  %v1442 = vld [vmem:[%s1364 + $0x260] sm:$0xff]
                  %1443 = vst [vmem:[%s1365 + $0x130] sm:$0xff] %v1442
                  %v1444 = vld [vmem:[%s1364 + $0x270] sm:$0xff]
                  %1445 = vst [vmem:[%s1365 + $0x138] sm:$0xff] %v1444
                  %v1446 = vld [vmem:[%s1364 + $0x280] sm:$0xff]
                  %1447 = vst [vmem:[%s1365 + $0x140] sm:$0xff] %v1446
                  %v1448 = vld [vmem:[%s1364 + $0x290] sm:$0xff]
                  %1449 = vst [vmem:[%s1365 + $0x148] sm:$0xff] %v1448
                  %v1450 = vld [vmem:[%s1364 + $0x2a0] sm:$0xff]
                  %1451 = vst [vmem:[%s1365 + $0x150] sm:$0xff] %v1450
                  %v1452 = vld [vmem:[%s1364 + $0x2b0] sm:$0xff]
                  %1453 = vst [vmem:[%s1365 + $0x158] sm:$0xff] %v1452
                  %v1454 = vld [vmem:[%s1364 + $0x2c0] sm:$0xff]
                  %1455 = vst [vmem:[%s1365 + $0x160] sm:$0xff] %v1454
                  %v1456 = vld [vmem:[%s1364 + $0x2d0] sm:$0xff]
                  %1457 = vst [vmem:[%s1365 + $0x168] sm:$0xff] %v1456
                  %v1458 = vld [vmem:[%s1364 + $0x2e0] sm:$0xff]
                  %1459 = vst [vmem:[%s1365 + $0x170] sm:$0xff] %v1458
                  %v1460 = vld [vmem:[%s1364 + $0x2f0] sm:$0xff]
                  %1461 = vst [vmem:[%s1365 + $0x178] sm:$0xff] %v1460
                  %v1462 = vld [vmem:[%s1364 + $0x300] sm:$0xff]
                  %1463 = vst [vmem:[%s1365 + $0x180] sm:$0xff] %v1462
                  %v1464 = vld [vmem:[%s1364 + $0x310] sm:$0xff]
                  %1465 = vst [vmem:[%s1365 + $0x188] sm:$0xff] %v1464
                  %v1466 = vld [vmem:[%s1364 + $0x320] sm:$0xff]
                  %1467 = vst [vmem:[%s1365 + $0x190] sm:$0xff] %v1466
                  %v1468 = vld [vmem:[%s1364 + $0x330] sm:$0xff]
                  %1469 = vst [vmem:[%s1365 + $0x198] sm:$0xff] %v1468
                  %v1470 = vld [vmem:[%s1364 + $0x340] sm:$0xff]
                  %1471 = vst [vmem:[%s1365 + $0x1a0] sm:$0xff] %v1470
                  %v1472 = vld [vmem:[%s1364 + $0x350] sm:$0xff]
                  %1473 = vst [vmem:[%s1365 + $0x1a8] sm:$0xff] %v1472
                  %v1474 = vld [vmem:[%s1364 + $0x360] sm:$0xff]
                  %1475 = vst [vmem:[%s1365 + $0x1b0] sm:$0xff] %v1474
                  %v1476 = vld [vmem:[%s1364 + $0x370] sm:$0xff]
                  %1477 = vst [vmem:[%s1365 + $0x1b8] sm:$0xff] %v1476
                  %v1478 = vld [vmem:[%s1364 + $0x380] sm:$0xff]
                  %1479 = vst [vmem:[%s1365 + $0x1c0] sm:$0xff] %v1478
                  %v1480 = vld [vmem:[%s1364 + $0x390] sm:$0xff]
                  %1481 = vst [vmem:[%s1365 + $0x1c8] sm:$0xff] %v1480
                  %v1482 = vld [vmem:[%s1364 + $0x3a0] sm:$0xff]
                  %1483 = vst [vmem:[%s1365 + $0x1d0] sm:$0xff] %v1482
                  %v1484 = vld [vmem:[%s1364 + $0x3b0] sm:$0xff]
                  %1485 = vst [vmem:[%s1365 + $0x1d8] sm:$0xff] %v1484
                  %v1486 = vld [vmem:[%s1364 + $0x3c0] sm:$0xff]
                  %1487 = vst [vmem:[%s1365 + $0x1e0] sm:$0xff] %v1486
                  %v1488 = vld [vmem:[%s1364 + $0x3d0] sm:$0xff]
                  %1489 = vst [vmem:[%s1365 + $0x1e8] sm:$0xff] %v1488
                  %v1490 = vld [vmem:[%s1364 + $0x3e0] sm:$0xff]
                  %1491 = vst [vmem:[%s1365 + $0x1f0] sm:$0xff] %v1490
                  %v1492 = vld [vmem:[%s1364 + $0x3f0] sm:$0xff]
                  %1493 = vst [vmem:[%s1365 + $0x1f8] sm:$0xff] %v1492
                  %v1494 = vld [vmem:[%s1364 + $0x400] sm:$0xff]
                  %1495 = vst [vmem:[%s1365 + $0x200] sm:$0xff] %v1494
                  %v1496 = vld [vmem:[%s1364 + $0x410] sm:$0xff]
                  %1497 = vst [vmem:[%s1365 + $0x208] sm:$0xff] %v1496
                  %v1498 = vld [vmem:[%s1364 + $0x420] sm:$0xff]
                  %1499 = vst [vmem:[%s1365 + $0x210] sm:$0xff] %v1498
                  %v1500 = vld [vmem:[%s1364 + $0x430] sm:$0xff]
                  %1501 = vst [vmem:[%s1365 + $0x218] sm:$0xff] %v1500
                  %v1502 = vld [vmem:[%s1364 + $0x440] sm:$0xff]
                  %1503 = vst [vmem:[%s1365 + $0x220] sm:$0xff] %v1502
                  %v1504 = vld [vmem:[%s1364 + $0x450] sm:$0xff]
                  %1505 = vst [vmem:[%s1365 + $0x228] sm:$0xff] %v1504
                  %v1506 = vld [vmem:[%s1364 + $0x460] sm:$0xff]
                  %1507 = vst [vmem:[%s1365 + $0x230] sm:$0xff] %v1506
                  %v1508 = vld [vmem:[%s1364 + $0x470] sm:$0xff]
                  %1509 = vst [vmem:[%s1365 + $0x238] sm:$0xff] %v1508
                  %v1510 = vld [vmem:[%s1364 + $0x480] sm:$0xff]
                  %1511 = vst [vmem:[%s1365 + $0x240] sm:$0xff] %v1510
                  %v1512 = vld [vmem:[%s1364 + $0x490] sm:$0xff]
                  %1513 = vst [vmem:[%s1365 + $0x248] sm:$0xff] %v1512
                  %v1514 = vld [vmem:[%s1364 + $0x4a0] sm:$0xff]
                  %1515 = vst [vmem:[%s1365 + $0x250] sm:$0xff] %v1514
                  %v1516 = vld [vmem:[%s1364 + $0x4b0] sm:$0xff]
                  %1517 = vst [vmem:[%s1365 + $0x258] sm:$0xff] %v1516
                  %v1518 = vld [vmem:[%s1364 + $0x4c0] sm:$0xff]
                  %1519 = vst [vmem:[%s1365 + $0x260] sm:$0xff] %v1518
                  %v1520 = vld [vmem:[%s1364 + $0x4d0] sm:$0xff]
                  %1521 = vst [vmem:[%s1365 + $0x268] sm:$0xff] %v1520
                  %v1522 = vld [vmem:[%s1364 + $0x4e0] sm:$0xff]
                  %1523 = vst [vmem:[%s1365 + $0x270] sm:$0xff] %v1522
                  %v1524 = vld [vmem:[%s1364 + $0x4f0] sm:$0xff]
                  %1525 = vst [vmem:[%s1365 + $0x278] sm:$0xff] %v1524
                  %v1526 = vld [vmem:[%s1364 + $0x500] sm:$0xff]
                  %1527 = vst [vmem:[%s1365 + $0x280] sm:$0xff] %v1526
                  %v1528 = vld [vmem:[%s1364 + $0x510] sm:$0xff]
                  %1529 = vst [vmem:[%s1365 + $0x288] sm:$0xff] %v1528
                  %v1530 = vld [vmem:[%s1364 + $0x520] sm:$0xff]
                  %1531 = vst [vmem:[%s1365 + $0x290] sm:$0xff] %v1530
                  %v1532 = vld [vmem:[%s1364 + $0x530] sm:$0xff]
                  %1533 = vst [vmem:[%s1365 + $0x298] sm:$0xff] %v1532
                  %v1534 = vld [vmem:[%s1364 + $0x540] sm:$0xff]
                  %1535 = vst [vmem:[%s1365 + $0x2a0] sm:$0xff] %v1534
                  %v1536 = vld [vmem:[%s1364 + $0x550] sm:$0xff]
                  %1537 = vst [vmem:[%s1365 + $0x2a8] sm:$0xff] %v1536
                  %v1538 = vld [vmem:[%s1364 + $0x560] sm:$0xff]
                  %1539 = vst [vmem:[%s1365 + $0x2b0] sm:$0xff] %v1538
                  %v1540 = vld [vmem:[%s1364 + $0x570] sm:$0xff]
                  %1541 = vst [vmem:[%s1365 + $0x2b8] sm:$0xff] %v1540
                  %v1542 = vld [vmem:[%s1364 + $0x580] sm:$0xff]
                  %1543 = vst [vmem:[%s1365 + $0x2c0] sm:$0xff] %v1542
                  %v1544 = vld [vmem:[%s1364 + $0x590] sm:$0xff]
                  %1545 = vst [vmem:[%s1365 + $0x2c8] sm:$0xff] %v1544
                  %v1546 = vld [vmem:[%s1364 + $0x5a0] sm:$0xff]
                  %1547 = vst [vmem:[%s1365 + $0x2d0] sm:$0xff] %v1546
                  %v1548 = vld [vmem:[%s1364 + $0x5b0] sm:$0xff]
                  %1549 = vst [vmem:[%s1365 + $0x2d8] sm:$0xff] %v1548
                  %v1550 = vld [vmem:[%s1364 + $0x5c0] sm:$0xff]
                  %1551 = vst [vmem:[%s1365 + $0x2e0] sm:$0xff] %v1550
                  %v1552 = vld [vmem:[%s1364 + $0x5d0] sm:$0xff]
                  %1553 = vst [vmem:[%s1365 + $0x2e8] sm:$0xff] %v1552
                  %v1554 = vld [vmem:[%s1364 + $0x5e0] sm:$0xff]
                  %1555 = vst [vmem:[%s1365 + $0x2f0] sm:$0xff] %v1554
                  %v1556 = vld [vmem:[%s1364 + $0x5f0] sm:$0xff]
                  %1557 = vst [vmem:[%s1365 + $0x2f8] sm:$0xff] %v1556
                  %v1558 = vld [vmem:[%s1364 + $0x600] sm:$0xff]
                  %1559 = vst [vmem:[%s1365 + $0x300] sm:$0xff] %v1558
                  %v1560 = vld [vmem:[%s1364 + $0x610] sm:$0xff]
                  %1561 = vst [vmem:[%s1365 + $0x308] sm:$0xff] %v1560
                  %v1562 = vld [vmem:[%s1364 + $0x620] sm:$0xff]
                  %1563 = vst [vmem:[%s1365 + $0x310] sm:$0xff] %v1562
                  %v1564 = vld [vmem:[%s1364 + $0x630] sm:$0xff]
                  %1565 = vst [vmem:[%s1365 + $0x318] sm:$0xff] %v1564
                  %v1566 = vld [vmem:[%s1364 + $0x640] sm:$0xff]
                  %1567 = vst [vmem:[%s1365 + $0x320] sm:$0xff] %v1566
                  %v1568 = vld [vmem:[%s1364 + $0x650] sm:$0xff]
                  %1569 = vst [vmem:[%s1365 + $0x328] sm:$0xff] %v1568
                  %v1570 = vld [vmem:[%s1364 + $0x660] sm:$0xff]
                  %1571 = vst [vmem:[%s1365 + $0x330] sm:$0xff] %v1570
                  %v1572 = vld [vmem:[%s1364 + $0x670] sm:$0xff]
                  %1573 = vst [vmem:[%s1365 + $0x338] sm:$0xff] %v1572
                  %v1574 = vld [vmem:[%s1364 + $0x680] sm:$0xff]
                  %1575 = vst [vmem:[%s1365 + $0x340] sm:$0xff] %v1574
                  %v1576 = vld [vmem:[%s1364 + $0x690] sm:$0xff]
                  %1577 = vst [vmem:[%s1365 + $0x348] sm:$0xff] %v1576
                  %v1578 = vld [vmem:[%s1364 + $0x6a0] sm:$0xff]
                  %1579 = vst [vmem:[%s1365 + $0x350] sm:$0xff] %v1578
                  %v1580 = vld [vmem:[%s1364 + $0x6b0] sm:$0xff]
                  %1581 = vst [vmem:[%s1365 + $0x358] sm:$0xff] %v1580
                  %v1582 = vld [vmem:[%s1364 + $0x6c0] sm:$0xff]
                  %1583 = vst [vmem:[%s1365 + $0x360] sm:$0xff] %v1582
                  %v1584 = vld [vmem:[%s1364 + $0x6d0] sm:$0xff]
                  %1585 = vst [vmem:[%s1365 + $0x368] sm:$0xff] %v1584
                  %v1586 = vld [vmem:[%s1364 + $0x6e0] sm:$0xff]
                  %1587 = vst [vmem:[%s1365 + $0x370] sm:$0xff] %v1586
                  %v1588 = vld [vmem:[%s1364 + $0x6f0] sm:$0xff]
                  %1589 = vst [vmem:[%s1365 + $0x378] sm:$0xff] %v1588
                  %v1590 = vld [vmem:[%s1364 + $0x700] sm:$0xff]
                  %1591 = vst [vmem:[%s1365 + $0x380] sm:$0xff] %v1590
                  %v1592 = vld [vmem:[%s1364 + $0x710] sm:$0xff]
                  %1593 = vst [vmem:[%s1365 + $0x388] sm:$0xff] %v1592
                  %v1594 = vld [vmem:[%s1364 + $0x720] sm:$0xff]
                  %1595 = vst [vmem:[%s1365 + $0x390] sm:$0xff] %v1594
                  %v1596 = vld [vmem:[%s1364 + $0x730] sm:$0xff]
                  %1597 = vst [vmem:[%s1365 + $0x398] sm:$0xff] %v1596
                  %v1598 = vld [vmem:[%s1364 + $0x740] sm:$0xff]
                  %1599 = vst [vmem:[%s1365 + $0x3a0] sm:$0xff] %v1598
                  %v1600 = vld [vmem:[%s1364 + $0x750] sm:$0xff]
                  %1601 = vst [vmem:[%s1365 + $0x3a8] sm:$0xff] %v1600
                  %v1602 = vld [vmem:[%s1364 + $0x760] sm:$0xff]
                  %1603 = vst [vmem:[%s1365 + $0x3b0] sm:$0xff] %v1602
                  %v1604 = vld [vmem:[%s1364 + $0x770] sm:$0xff]
                  %1605 = vst [vmem:[%s1365 + $0x3b8] sm:$0xff] %v1604
                  %v1606 = vld [vmem:[%s1364 + $0x780] sm:$0xff]
                  %1607 = vst [vmem:[%s1365 + $0x3c0] sm:$0xff] %v1606
                  %v1608 = vld [vmem:[%s1364 + $0x790] sm:$0xff]
                  %1609 = vst [vmem:[%s1365 + $0x3c8] sm:$0xff] %v1608
                  %v1610 = vld [vmem:[%s1364 + $0x7a0] sm:$0xff]
                  %1611 = vst [vmem:[%s1365 + $0x3d0] sm:$0xff] %v1610
                  %v1612 = vld [vmem:[%s1364 + $0x7b0] sm:$0xff]
                  %1613 = vst [vmem:[%s1365 + $0x3d8] sm:$0xff] %v1612
                  %v1614 = vld [vmem:[%s1364 + $0x7c0] sm:$0xff]
                  %1615 = vst [vmem:[%s1365 + $0x3e0] sm:$0xff] %v1614
                  %v1616 = vld [vmem:[%s1364 + $0x7d0] sm:$0xff]
                  %1617 = vst [vmem:[%s1365 + $0x3e8] sm:$0xff] %v1616
                  %v1618 = vld [vmem:[%s1364 + $0x7e0] sm:$0xff]
                  %1619 = vst [vmem:[%s1365 + $0x3f0] sm:$0xff] %v1618
                  %v1620 = vld [vmem:[%s1364 + $0x7f0] sm:$0xff]
                  %1621 = vst [vmem:[%s1365 + $0x3f8] sm:$0xff] %v1620
                  %v1622 = vld [vmem:[%s1364 + $0x800] sm:$0xff]
                  %1623 = vst [vmem:[%s1365 + $0x400] sm:$0xff] %v1622
                  %v1624 = vld [vmem:[%s1364 + $0x810] sm:$0xff]
                  %1625 = vst [vmem:[%s1365 + $0x408] sm:$0xff] %v1624
                  %v1626 = vld [vmem:[%s1364 + $0x820] sm:$0xff]
                  %1627 = vst [vmem:[%s1365 + $0x410] sm:$0xff] %v1626
                  %v1628 = vld [vmem:[%s1364 + $0x830] sm:$0xff]
                  %1629 = vst [vmem:[%s1365 + $0x418] sm:$0xff] %v1628
                  %v1630 = vld [vmem:[%s1364 + $0x840] sm:$0xff]
                  %1631 = vst [vmem:[%s1365 + $0x420] sm:$0xff] %v1630
                  %v1632 = vld [vmem:[%s1364 + $0x850] sm:$0xff]
                  %1633 = vst [vmem:[%s1365 + $0x428] sm:$0xff] %v1632
                  %v1634 = vld [vmem:[%s1364 + $0x860] sm:$0xff]
                  %1635 = vst [vmem:[%s1365 + $0x430] sm:$0xff] %v1634
                  %v1636 = vld [vmem:[%s1364 + $0x870] sm:$0xff]
                  %1637 = vst [vmem:[%s1365 + $0x438] sm:$0xff] %v1636
                  %v1638 = vld [vmem:[%s1364 + $0x880] sm:$0xff]
                  %1639 = vst [vmem:[%s1365 + $0x440] sm:$0xff] %v1638
                  %v1640 = vld [vmem:[%s1364 + $0x890] sm:$0xff]
                  %1641 = vst [vmem:[%s1365 + $0x448] sm:$0xff] %v1640
                  %v1642 = vld [vmem:[%s1364 + $0x8a0] sm:$0xff]
                  %1643 = vst [vmem:[%s1365 + $0x450] sm:$0xff] %v1642
                  %v1644 = vld [vmem:[%s1364 + $0x8b0] sm:$0xff]
                  %1645 = vst [vmem:[%s1365 + $0x458] sm:$0xff] %v1644
                  %v1646 = vld [vmem:[%s1364 + $0x8c0] sm:$0xff]
                  %1647 = vst [vmem:[%s1365 + $0x460] sm:$0xff] %v1646
                  %v1648 = vld [vmem:[%s1364 + $0x8d0] sm:$0xff]
                  %1649 = vst [vmem:[%s1365 + $0x468] sm:$0xff] %v1648
                  %v1650 = vld [vmem:[%s1364 + $0x8e0] sm:$0xff]
                  %1651 = vst [vmem:[%s1365 + $0x470] sm:$0xff] %v1650
                  %v1652 = vld [vmem:[%s1364 + $0x8f0] sm:$0xff]
                  %1653 = vst [vmem:[%s1365 + $0x478] sm:$0xff] %v1652
                  %v1654 = vld [vmem:[%s1364 + $0x900] sm:$0xff]
                  %1655 = vst [vmem:[%s1365 + $0x480] sm:$0xff] %v1654
                  %v1656 = vld [vmem:[%s1364 + $0x910] sm:$0xff]
                  %1657 = vst [vmem:[%s1365 + $0x488] sm:$0xff] %v1656
                  %v1658 = vld [vmem:[%s1364 + $0x920] sm:$0xff]
                  %1659 = vst [vmem:[%s1365 + $0x490] sm:$0xff] %v1658
                  %v1660 = vld [vmem:[%s1364 + $0x930] sm:$0xff]
                  %1661 = vst [vmem:[%s1365 + $0x498] sm:$0xff] %v1660
                  %v1662 = vld [vmem:[%s1364 + $0x940] sm:$0xff]
                  %1663 = vst [vmem:[%s1365 + $0x4a0] sm:$0xff] %v1662
                  %v1664 = vld [vmem:[%s1364 + $0x950] sm:$0xff]
                  %1665 = vst [vmem:[%s1365 + $0x4a8] sm:$0xff] %v1664
                  %v1666 = vld [vmem:[%s1364 + $0x960] sm:$0xff]
                  %1667 = vst [vmem:[%s1365 + $0x4b0] sm:$0xff] %v1666
                  %v1668 = vld [vmem:[%s1364 + $0x970] sm:$0xff]
                  %1669 = vst [vmem:[%s1365 + $0x4b8] sm:$0xff] %v1668
                  %v1670 = vld [vmem:[%s1364 + $0x980] sm:$0xff]
                  %1671 = vst [vmem:[%s1365 + $0x4c0] sm:$0xff] %v1670
                  %v1672 = vld [vmem:[%s1364 + $0x990] sm:$0xff]
                  %1673 = vst [vmem:[%s1365 + $0x4c8] sm:$0xff] %v1672
                  %v1674 = vld [vmem:[%s1364 + $0x9a0] sm:$0xff]
                  %1675 = vst [vmem:[%s1365 + $0x4d0] sm:$0xff] %v1674
                  %v1676 = vld [vmem:[%s1364 + $0x9b0] sm:$0xff]
                  %1677 = vst [vmem:[%s1365 + $0x4d8] sm:$0xff] %v1676
                  %v1678 = vld [vmem:[%s1364 + $0x9c0] sm:$0xff]
                  %1679 = vst [vmem:[%s1365 + $0x4e0] sm:$0xff] %v1678
                  %v1680 = vld [vmem:[%s1364 + $0x9d0] sm:$0xff]
                  %1681 = vst [vmem:[%s1365 + $0x4e8] sm:$0xff] %v1680
                  %v1682 = vld [vmem:[%s1364 + $0x9e0] sm:$0xff]
                  %1683 = vst [vmem:[%s1365 + $0x4f0] sm:$0xff] %v1682
                  %v1684 = vld [vmem:[%s1364 + $0x9f0] sm:$0xff]
                  %1685 = vst [vmem:[%s1365 + $0x4f8] sm:$0xff] %v1684
                  %v1686 = vld [vmem:[%s1364 + $0xa00] sm:$0xff]
                  %1687 = vst [vmem:[%s1365 + $0x500] sm:$0xff] %v1686
                  %v1688 = vld [vmem:[%s1364 + $0xa10] sm:$0xff]
                  %1689 = vst [vmem:[%s1365 + $0x508] sm:$0xff] %v1688
                  %v1690 = vld [vmem:[%s1364 + $0xa20] sm:$0xff]
                  %1691 = vst [vmem:[%s1365 + $0x510] sm:$0xff] %v1690
                  %v1692 = vld [vmem:[%s1364 + $0xa30] sm:$0xff]
                  %1693 = vst [vmem:[%s1365 + $0x518] sm:$0xff] %v1692
                  %v1694 = vld [vmem:[%s1364 + $0xa40] sm:$0xff]
                  %1695 = vst [vmem:[%s1365 + $0x520] sm:$0xff] %v1694
                  %v1696 = vld [vmem:[%s1364 + $0xa50] sm:$0xff]
                  %1697 = vst [vmem:[%s1365 + $0x528] sm:$0xff] %v1696
                  %v1698 = vld [vmem:[%s1364 + $0xa60] sm:$0xff]
                  %1699 = vst [vmem:[%s1365 + $0x530] sm:$0xff] %v1698
                  %v1700 = vld [vmem:[%s1364 + $0xa70] sm:$0xff]
                  %1701 = vst [vmem:[%s1365 + $0x538] sm:$0xff] %v1700
                  %v1702 = vld [vmem:[%s1364 + $0xa80] sm:$0xff]
                  %1703 = vst [vmem:[%s1365 + $0x540] sm:$0xff] %v1702
                  %v1704 = vld [vmem:[%s1364 + $0xa90] sm:$0xff]
                  %1705 = vst [vmem:[%s1365 + $0x548] sm:$0xff] %v1704
                  %v1706 = vld [vmem:[%s1364 + $0xaa0] sm:$0xff]
                  %1707 = vst [vmem:[%s1365 + $0x550] sm:$0xff] %v1706
                  %v1708 = vld [vmem:[%s1364 + $0xab0] sm:$0xff]
                  %1709 = vst [vmem:[%s1365 + $0x558] sm:$0xff] %v1708
                  %v1710 = vld [vmem:[%s1364 + $0xac0] sm:$0xff]
                  %1711 = vst [vmem:[%s1365 + $0x560] sm:$0xff] %v1710
                  %v1712 = vld [vmem:[%s1364 + $0xad0] sm:$0xff]
                  %1713 = vst [vmem:[%s1365 + $0x568] sm:$0xff] %v1712
                  %v1714 = vld [vmem:[%s1364 + $0xae0] sm:$0xff]
                  %1715 = vst [vmem:[%s1365 + $0x570] sm:$0xff] %v1714
                  %v1716 = vld [vmem:[%s1364 + $0xaf0] sm:$0xff]
                  %1717 = vst [vmem:[%s1365 + $0x578] sm:$0xff] %v1716
                  %v1718 = vld [vmem:[%s1364 + $0xb00] sm:$0xff]
                  %1719 = vst [vmem:[%s1365 + $0x580] sm:$0xff] %v1718
                  %v1720 = vld [vmem:[%s1364 + $0xb10] sm:$0xff]
                  %1721 = vst [vmem:[%s1365 + $0x588] sm:$0xff] %v1720
                  %v1722 = vld [vmem:[%s1364 + $0xb20] sm:$0xff]
                  %1723 = vst [vmem:[%s1365 + $0x590] sm:$0xff] %v1722
                  %v1724 = vld [vmem:[%s1364 + $0xb30] sm:$0xff]
                  %1725 = vst [vmem:[%s1365 + $0x598] sm:$0xff] %v1724
                  %v1726 = vld [vmem:[%s1364 + $0xb40] sm:$0xff]
                  %1727 = vst [vmem:[%s1365 + $0x5a0] sm:$0xff] %v1726
                  %v1728 = vld [vmem:[%s1364 + $0xb50] sm:$0xff]
                  %1729 = vst [vmem:[%s1365 + $0x5a8] sm:$0xff] %v1728
                  %v1730 = vld [vmem:[%s1364 + $0xb60] sm:$0xff]
                  %1731 = vst [vmem:[%s1365 + $0x5b0] sm:$0xff] %v1730
                  %v1732 = vld [vmem:[%s1364 + $0xb70] sm:$0xff]
                  %1733 = vst [vmem:[%s1365 + $0x5b8] sm:$0xff] %v1732
                  %v1734 = vld [vmem:[%s1364 + $0xb80] sm:$0xff]
                  %1735 = vst [vmem:[%s1365 + $0x5c0] sm:$0xff] %v1734
                  %v1736 = vld [vmem:[%s1364 + $0xb90] sm:$0xff]
                  %1737 = vst [vmem:[%s1365 + $0x5c8] sm:$0xff] %v1736
                  %v1738 = vld [vmem:[%s1364 + $0xba0] sm:$0xff]
                  %1739 = vst [vmem:[%s1365 + $0x5d0] sm:$0xff] %v1738
                  %v1740 = vld [vmem:[%s1364 + $0xbb0] sm:$0xff]
                  %1741 = vst [vmem:[%s1365 + $0x5d8] sm:$0xff] %v1740
                  %v1742 = vld [vmem:[%s1364 + $0xbc0] sm:$0xff]
                  %1743 = vst [vmem:[%s1365 + $0x5e0] sm:$0xff] %v1742
                  %v1744 = vld [vmem:[%s1364 + $0xbd0] sm:$0xff]
                  %1745 = vst [vmem:[%s1365 + $0x5e8] sm:$0xff] %v1744
                  %v1746 = vld [vmem:[%s1364 + $0xbe0] sm:$0xff]
                  %1747 = vst [vmem:[%s1365 + $0x5f0] sm:$0xff] %v1746
                  %v1748 = vld [vmem:[%s1364 + $0xbf0] sm:$0xff]
                  %1749 = vst [vmem:[%s1365 + $0x5f8] sm:$0xff] %v1748
                  %v1750 = vld [vmem:[%s1364 + $0xc00] sm:$0xff]
                  %1751 = vst [vmem:[%s1365 + $0x600] sm:$0xff] %v1750
                  %v1752 = vld [vmem:[%s1364 + $0xc10] sm:$0xff]
                  %1753 = vst [vmem:[%s1365 + $0x608] sm:$0xff] %v1752
                  %v1754 = vld [vmem:[%s1364 + $0xc20] sm:$0xff]
                  %1755 = vst [vmem:[%s1365 + $0x610] sm:$0xff] %v1754
                  %v1756 = vld [vmem:[%s1364 + $0xc30] sm:$0xff]
                  %1757 = vst [vmem:[%s1365 + $0x618] sm:$0xff] %v1756
                  %v1758 = vld [vmem:[%s1364 + $0xc40] sm:$0xff]
                  %1759 = vst [vmem:[%s1365 + $0x620] sm:$0xff] %v1758
                  %v1760 = vld [vmem:[%s1364 + $0xc50] sm:$0xff]
                  %1761 = vst [vmem:[%s1365 + $0x628] sm:$0xff] %v1760
                  %v1762 = vld [vmem:[%s1364 + $0xc60] sm:$0xff]
                  %1763 = vst [vmem:[%s1365 + $0x630] sm:$0xff] %v1762
                  %v1764 = vld [vmem:[%s1364 + $0xc70] sm:$0xff]
                  %1765 = vst [vmem:[%s1365 + $0x638] sm:$0xff] %v1764
                  %v1766 = vld [vmem:[%s1364 + $0xc80] sm:$0xff]
                  %1767 = vst [vmem:[%s1365 + $0x640] sm:$0xff] %v1766
                  %v1768 = vld [vmem:[%s1364 + $0xc90] sm:$0xff]
                  %1769 = vst [vmem:[%s1365 + $0x648] sm:$0xff] %v1768
                  %v1770 = vld [vmem:[%s1364 + $0xca0] sm:$0xff]
                  %1771 = vst [vmem:[%s1365 + $0x650] sm:$0xff] %v1770
                  %v1772 = vld [vmem:[%s1364 + $0xcb0] sm:$0xff]
                  %1773 = vst [vmem:[%s1365 + $0x658] sm:$0xff] %v1772
                  %v1774 = vld [vmem:[%s1364 + $0xcc0] sm:$0xff]
                  %1775 = vst [vmem:[%s1365 + $0x660] sm:$0xff] %v1774
                  %v1776 = vld [vmem:[%s1364 + $0xcd0] sm:$0xff]
                  %1777 = vst [vmem:[%s1365 + $0x668] sm:$0xff] %v1776
                  %v1778 = vld [vmem:[%s1364 + $0xce0] sm:$0xff]
                  %1779 = vst [vmem:[%s1365 + $0x670] sm:$0xff] %v1778
                  %v1780 = vld [vmem:[%s1364 + $0xcf0] sm:$0xff]
                  %1781 = vst [vmem:[%s1365 + $0x678] sm:$0xff] %v1780
                  %v1782 = vld [vmem:[%s1364 + $0xd00] sm:$0xff]
                  %1783 = vst [vmem:[%s1365 + $0x680] sm:$0xff] %v1782
                  %v1784 = vld [vmem:[%s1364 + $0xd10] sm:$0xff]
                  %1785 = vst [vmem:[%s1365 + $0x688] sm:$0xff] %v1784
                  %v1786 = vld [vmem:[%s1364 + $0xd20] sm:$0xff]
                  %1787 = vst [vmem:[%s1365 + $0x690] sm:$0xff] %v1786
                  %v1788 = vld [vmem:[%s1364 + $0xd30] sm:$0xff]
                  %1789 = vst [vmem:[%s1365 + $0x698] sm:$0xff] %v1788
                  %v1790 = vld [vmem:[%s1364 + $0xd40] sm:$0xff]
                  %1791 = vst [vmem:[%s1365 + $0x6a0] sm:$0xff] %v1790
                  %v1792 = vld [vmem:[%s1364 + $0xd50] sm:$0xff]
                  %1793 = vst [vmem:[%s1365 + $0x6a8] sm:$0xff] %v1792
                  %v1794 = vld [vmem:[%s1364 + $0xd60] sm:$0xff]
                  %1795 = vst [vmem:[%s1365 + $0x6b0] sm:$0xff] %v1794
                  %v1796 = vld [vmem:[%s1364 + $0xd70] sm:$0xff]
                  %1797 = vst [vmem:[%s1365 + $0x6b8] sm:$0xff] %v1796
                  %v1798 = vld [vmem:[%s1364 + $0xd80] sm:$0xff]
                  %1799 = vst [vmem:[%s1365 + $0x6c0] sm:$0xff] %v1798
                  %v1800 = vld [vmem:[%s1364 + $0xd90] sm:$0xff]
                  %1801 = vst [vmem:[%s1365 + $0x6c8] sm:$0xff] %v1800
                  %v1802 = vld [vmem:[%s1364 + $0xda0] sm:$0xff]
                  %1803 = vst [vmem:[%s1365 + $0x6d0] sm:$0xff] %v1802
                  %v1804 = vld [vmem:[%s1364 + $0xdb0] sm:$0xff]
                  %1805 = vst [vmem:[%s1365 + $0x6d8] sm:$0xff] %v1804
                  %v1806 = vld [vmem:[%s1364 + $0xdc0] sm:$0xff]
                  %1807 = vst [vmem:[%s1365 + $0x6e0] sm:$0xff] %v1806
                  %v1808 = vld [vmem:[%s1364 + $0xdd0] sm:$0xff]
                  %1809 = vst [vmem:[%s1365 + $0x6e8] sm:$0xff] %v1808
                  %v1810 = vld [vmem:[%s1364 + $0xde0] sm:$0xff]
                  %1811 = vst [vmem:[%s1365 + $0x6f0] sm:$0xff] %v1810
                  %v1812 = vld [vmem:[%s1364 + $0xdf0] sm:$0xff]
                  %1813 = vst [vmem:[%s1365 + $0x6f8] sm:$0xff] %v1812
                  %v1814 = vld [vmem:[%s1364 + $0xe00] sm:$0xff]
                  %1815 = vst [vmem:[%s1365 + $0x700] sm:$0xff] %v1814
                  %v1816 = vld [vmem:[%s1364 + $0xe10] sm:$0xff]
                  %1817 = vst [vmem:[%s1365 + $0x708] sm:$0xff] %v1816
                  %v1818 = vld [vmem:[%s1364 + $0xe20] sm:$0xff]
                  %1819 = vst [vmem:[%s1365 + $0x710] sm:$0xff] %v1818
                  %v1820 = vld [vmem:[%s1364 + $0xe30] sm:$0xff]
                  %1821 = vst [vmem:[%s1365 + $0x718] sm:$0xff] %v1820
                  %v1822 = vld [vmem:[%s1364 + $0xe40] sm:$0xff]
                  %1823 = vst [vmem:[%s1365 + $0x720] sm:$0xff] %v1822
                  %v1824 = vld [vmem:[%s1364 + $0xe50] sm:$0xff]
                  %1825 = vst [vmem:[%s1365 + $0x728] sm:$0xff] %v1824
                  %v1826 = vld [vmem:[%s1364 + $0xe60] sm:$0xff]
                  %1827 = vst [vmem:[%s1365 + $0x730] sm:$0xff] %v1826
                  %v1828 = vld [vmem:[%s1364 + $0xe70] sm:$0xff]
                  %1829 = vst [vmem:[%s1365 + $0x738] sm:$0xff] %v1828
                  %v1830 = vld [vmem:[%s1364 + $0xe80] sm:$0xff]
                  %1831 = vst [vmem:[%s1365 + $0x740] sm:$0xff] %v1830
                  %v1832 = vld [vmem:[%s1364 + $0xe90] sm:$0xff]
                  %1833 = vst [vmem:[%s1365 + $0x748] sm:$0xff] %v1832
                  %v1834 = vld [vmem:[%s1364 + $0xea0] sm:$0xff]
                  %1835 = vst [vmem:[%s1365 + $0x750] sm:$0xff] %v1834
                  %v1836 = vld [vmem:[%s1364 + $0xeb0] sm:$0xff]
                  %1837 = vst [vmem:[%s1365 + $0x758] sm:$0xff] %v1836
                  %v1838 = vld [vmem:[%s1364 + $0xec0] sm:$0xff]
                  %1839 = vst [vmem:[%s1365 + $0x760] sm:$0xff] %v1838
                  %v1840 = vld [vmem:[%s1364 + $0xed0] sm:$0xff]
                  %1841 = vst [vmem:[%s1365 + $0x768] sm:$0xff] %v1840
                  %v1842 = vld [vmem:[%s1364 + $0xee0] sm:$0xff]
                  %1843 = vst [vmem:[%s1365 + $0x770] sm:$0xff] %v1842
                  %v1844 = vld [vmem:[%s1364 + $0xef0] sm:$0xff]
                  %1845 = vst [vmem:[%s1365 + $0x778] sm:$0xff] %v1844
                  %v1846 = vld [vmem:[%s1364 + $0xf00] sm:$0xff]
                  %1847 = vst [vmem:[%s1365 + $0x780] sm:$0xff] %v1846
                  %v1848 = vld [vmem:[%s1364 + $0xf10] sm:$0xff]
                  %1849 = vst [vmem:[%s1365 + $0x788] sm:$0xff] %v1848
                  %v1850 = vld [vmem:[%s1364 + $0xf20] sm:$0xff]
                  %1851 = vst [vmem:[%s1365 + $0x790] sm:$0xff] %v1850
                  %v1852 = vld [vmem:[%s1364 + $0xf30] sm:$0xff]
                  %1853 = vst [vmem:[%s1365 + $0x798] sm:$0xff] %v1852
                  %v1854 = vld [vmem:[%s1364 + $0xf40] sm:$0xff]
                  %1855 = vst [vmem:[%s1365 + $0x7a0] sm:$0xff] %v1854
                  %v1856 = vld [vmem:[%s1364 + $0xf50] sm:$0xff]
                  %1857 = vst [vmem:[%s1365 + $0x7a8] sm:$0xff] %v1856
                  %v1858 = vld [vmem:[%s1364 + $0xf60] sm:$0xff]
                  %1859 = vst [vmem:[%s1365 + $0x7b0] sm:$0xff] %v1858
                  %v1860 = vld [vmem:[%s1364 + $0xf70] sm:$0xff]
                  %1861 = vst [vmem:[%s1365 + $0x7b8] sm:$0xff] %v1860
                  %v1862 = vld [vmem:[%s1364 + $0xf80] sm:$0xff]
                  %1863 = vst [vmem:[%s1365 + $0x7c0] sm:$0xff] %v1862
                  %v1864 = vld [vmem:[%s1364 + $0xf90] sm:$0xff]
                  %1865 = vst [vmem:[%s1365 + $0x7c8] sm:$0xff] %v1864
                  %v1866 = vld [vmem:[%s1364 + $0xfa0] sm:$0xff]
                  %1867 = vst [vmem:[%s1365 + $0x7d0] sm:$0xff] %v1866
                  %v1868 = vld [vmem:[%s1364 + $0xfb0] sm:$0xff]
                  %1869 = vst [vmem:[%s1365 + $0x7d8] sm:$0xff] %v1868
                  %v1870 = vld [vmem:[%s1364 + $0xfc0] sm:$0xff]
                  %1871 = vst [vmem:[%s1365 + $0x7e0] sm:$0xff] %v1870
                  %v1872 = vld [vmem:[%s1364 + $0xfd0] sm:$0xff]
                  %1873 = vst [vmem:[%s1365 + $0x7e8] sm:$0xff] %v1872
                  %v1874 = vld [vmem:[%s1364 + $0xfe0] sm:$0xff]
                  %1875 = vst [vmem:[%s1365 + $0x7f0] sm:$0xff] %v1874
                  %v1876 = vld [vmem:[%s1364 + $0xff0] sm:$0xff]
                  %1877 = vst [vmem:[%s1365 + $0x7f8] sm:$0xff] %v1876
                  %v1878 = vld [vmem:[%s1364 + $0x1000] sm:$0xff]
                  %1879 = vst [vmem:[%s1365 + $0x800] sm:$0xff] %v1878
                  %v1880 = vld [vmem:[%s1364 + $0x1010] sm:$0xff]
                  %1881 = vst [vmem:[%s1365 + $0x808] sm:$0xff] %v1880
                  %v1882 = vld [vmem:[%s1364 + $0x1020] sm:$0xff]
                  %1883 = vst [vmem:[%s1365 + $0x810] sm:$0xff] %v1882
                  %v1884 = vld [vmem:[%s1364 + $0x1030] sm:$0xff]
                  %1885 = vst [vmem:[%s1365 + $0x818] sm:$0xff] %v1884
                  %v1886 = vld [vmem:[%s1364 + $0x1040] sm:$0xff]
                  %1887 = vst [vmem:[%s1365 + $0x820] sm:$0xff] %v1886
                  %v1888 = vld [vmem:[%s1364 + $0x1050] sm:$0xff]
                  %1889 = vst [vmem:[%s1365 + $0x828] sm:$0xff] %v1888
                  %v1890 = vld [vmem:[%s1364 + $0x1060] sm:$0xff]
                  %1891 = vst [vmem:[%s1365 + $0x830] sm:$0xff] %v1890
                  %v1892 = vld [vmem:[%s1364 + $0x1070] sm:$0xff]
                  %1893 = vst [vmem:[%s1365 + $0x838] sm:$0xff] %v1892
                  %v1894 = vld [vmem:[%s1364 + $0x1080] sm:$0xff]
                  %1895 = vst [vmem:[%s1365 + $0x840] sm:$0xff] %v1894
                  %v1896 = vld [vmem:[%s1364 + $0x1090] sm:$0xff]
                  %1897 = vst [vmem:[%s1365 + $0x848] sm:$0xff] %v1896
                  %v1898 = vld [vmem:[%s1364 + $0x10a0] sm:$0xff]
                  %1899 = vst [vmem:[%s1365 + $0x850] sm:$0xff] %v1898
                  %v1900 = vld [vmem:[%s1364 + $0x10b0] sm:$0xff]
                  %1901 = vst [vmem:[%s1365 + $0x858] sm:$0xff] %v1900
                  %v1902 = vld [vmem:[%s1364 + $0x10c0] sm:$0xff]
                  %1903 = vst [vmem:[%s1365 + $0x860] sm:$0xff] %v1902
                  %v1904 = vld [vmem:[%s1364 + $0x10d0] sm:$0xff]
                  %1905 = vst [vmem:[%s1365 + $0x868] sm:$0xff] %v1904
                  %v1906 = vld [vmem:[%s1364 + $0x10e0] sm:$0xff]
                  %1907 = vst [vmem:[%s1365 + $0x870] sm:$0xff] %v1906
                  %v1908 = vld [vmem:[%s1364 + $0x10f0] sm:$0xff]
                  %1909 = vst [vmem:[%s1365 + $0x878] sm:$0xff] %v1908
                  %v1910 = vld [vmem:[%s1364 + $0x1100] sm:$0xff]
                  %1911 = vst [vmem:[%s1365 + $0x880] sm:$0xff] %v1910
                  %v1912 = vld [vmem:[%s1364 + $0x1110] sm:$0xff]
                  %1913 = vst [vmem:[%s1365 + $0x888] sm:$0xff] %v1912
                  %v1914 = vld [vmem:[%s1364 + $0x1120] sm:$0xff]
                  %1915 = vst [vmem:[%s1365 + $0x890] sm:$0xff] %v1914
                  %v1916 = vld [vmem:[%s1364 + $0x1130] sm:$0xff]
                  %1917 = vst [vmem:[%s1365 + $0x898] sm:$0xff] %v1916
                  %v1918 = vld [vmem:[%s1364 + $0x1140] sm:$0xff]
                  %1919 = vst [vmem:[%s1365 + $0x8a0] sm:$0xff] %v1918
                  %v1920 = vld [vmem:[%s1364 + $0x1150] sm:$0xff]
                  %1921 = vst [vmem:[%s1365 + $0x8a8] sm:$0xff] %v1920
                  %v1922 = vld [vmem:[%s1364 + $0x1160] sm:$0xff]
                  %1923 = vst [vmem:[%s1365 + $0x8b0] sm:$0xff] %v1922
                  %v1924 = vld [vmem:[%s1364 + $0x1170] sm:$0xff]
                  %1925 = vst [vmem:[%s1365 + $0x8b8] sm:$0xff] %v1924
                  %v1926 = vld [vmem:[%s1364 + $0x1180] sm:$0xff]
                  %1927 = vst [vmem:[%s1365 + $0x8c0] sm:$0xff] %v1926
                  %v1928 = vld [vmem:[%s1364 + $0x1190] sm:$0xff]
                  %1929 = vst [vmem:[%s1365 + $0x8c8] sm:$0xff] %v1928
                  %v1930 = vld [vmem:[%s1364 + $0x11a0] sm:$0xff]
                  %1931 = vst [vmem:[%s1365 + $0x8d0] sm:$0xff] %v1930
                  %v1932 = vld [vmem:[%s1364 + $0x11b0] sm:$0xff]
                  %1933 = vst [vmem:[%s1365 + $0x8d8] sm:$0xff] %v1932
                  %v1934 = vld [vmem:[%s1364 + $0x11c0] sm:$0xff]
                  %1935 = vst [vmem:[%s1365 + $0x8e0] sm:$0xff] %v1934
                  %v1936 = vld [vmem:[%s1364 + $0x11d0] sm:$0xff]
                  %1937 = vst [vmem:[%s1365 + $0x8e8] sm:$0xff] %v1936
                  %v1938 = vld [vmem:[%s1364 + $0x11e0] sm:$0xff]
                  %1939 = vst [vmem:[%s1365 + $0x8f0] sm:$0xff] %v1938
                  %v1940 = vld [vmem:[%s1364 + $0x11f0] sm:$0xff]
                  %1941 = vst [vmem:[%s1365 + $0x8f8] sm:$0xff] %v1940
                  %s1942 = sadd.s32 1, %s1363
                  %p1943 = scmp.ge.s32.totalorder %s1942, 1
                  %s1944 = scalar_select %p1943, 0, %s1942
                  %s1945 = smul.u32 %s1944, 8
                  %s1946 = smul.u32 %s1944, 8
                  %s1947 = scalar_lea.vmem %s166, %s1945
                  %s1948 = scalar_lea.vmem %s163, %s1946 [#allocation2]
                $region63: #{qnetwork_forward.7} parent=57 // loop_footer
                  %s1362 = sadd.s32 1, %s1358
                $region64: #{qnetwork_forward.7} parent=57 // loop_footer_branch
                  %1357 = sbr.rel target = $region60
                $region65: #{qnetwork_forward.7} parent=57 // loop_exit
                  _
                %s1950 = ssub.s32 1, 1
                loop: start=0, step=1, limit=1
                $region66: #{qnetwork_forward.7} parent=57 // loop_pre_header
                  _
                $region67: #{qnetwork_forward.7} parent=57 // loop_header
                  %s1952 = sphi 0, %s1956
                  %p1953 = scmp.ge.s32.totalorder %s1952, 1
                  %s1957 = sphi %s1355, %s1355
                  %s1958 = sphi %s1356, %s1356
                $region68: #{qnetwork_forward.7} parent=57 // loop_header_branch
                  %1955 = sbr.rel (%p1953) target = $region72
                $region69: #{qnetwork_forward.7} parent=57 // loop_body
                  %v1959 = vld [vmem:[%s1957] sm:%s1950]
                  %1960 = vst [vmem:[%s1958] sm:%s1950] %v1959
                  %v1961 = vld [vmem:[%s1957 + $0x10] sm:%s1950]
                  %1962 = vst [vmem:[%s1958 + $0x8] sm:%s1950] %v1961
                  %v1963 = vld [vmem:[%s1957 + $0x20] sm:%s1950]
                  %1964 = vst [vmem:[%s1958 + $0x10] sm:%s1950] %v1963
                  %v1965 = vld [vmem:[%s1957 + $0x30] sm:%s1950]
                  %1966 = vst [vmem:[%s1958 + $0x18] sm:%s1950] %v1965
                  %v1967 = vld [vmem:[%s1957 + $0x40] sm:%s1950]
                  %1968 = vst [vmem:[%s1958 + $0x20] sm:%s1950] %v1967
                  %v1969 = vld [vmem:[%s1957 + $0x50] sm:%s1950]
                  %1970 = vst [vmem:[%s1958 + $0x28] sm:%s1950] %v1969
                  %v1971 = vld [vmem:[%s1957 + $0x60] sm:%s1950]
                  %1972 = vst [vmem:[%s1958 + $0x30] sm:%s1950] %v1971
                  %v1973 = vld [vmem:[%s1957 + $0x70] sm:%s1950]
                  %1974 = vst [vmem:[%s1958 + $0x38] sm:%s1950] %v1973
                  %v1975 = vld [vmem:[%s1957 + $0x80] sm:%s1950]
                  %1976 = vst [vmem:[%s1958 + $0x40] sm:%s1950] %v1975
                  %v1977 = vld [vmem:[%s1957 + $0x90] sm:%s1950]
                  %1978 = vst [vmem:[%s1958 + $0x48] sm:%s1950] %v1977
                  %v1979 = vld [vmem:[%s1957 + $0xa0] sm:%s1950]
                  %1980 = vst [vmem:[%s1958 + $0x50] sm:%s1950] %v1979
                  %v1981 = vld [vmem:[%s1957 + $0xb0] sm:%s1950]
                  %1982 = vst [vmem:[%s1958 + $0x58] sm:%s1950] %v1981
                  %v1983 = vld [vmem:[%s1957 + $0xc0] sm:%s1950]
                  %1984 = vst [vmem:[%s1958 + $0x60] sm:%s1950] %v1983
                  %v1985 = vld [vmem:[%s1957 + $0xd0] sm:%s1950]
                  %1986 = vst [vmem:[%s1958 + $0x68] sm:%s1950] %v1985
                  %v1987 = vld [vmem:[%s1957 + $0xe0] sm:%s1950]
                  %1988 = vst [vmem:[%s1958 + $0x70] sm:%s1950] %v1987
                  %v1989 = vld [vmem:[%s1957 + $0xf0] sm:%s1950]
                  %1990 = vst [vmem:[%s1958 + $0x78] sm:%s1950] %v1989
                  %v1991 = vld [vmem:[%s1957 + $0x100] sm:%s1950]
                  %1992 = vst [vmem:[%s1958 + $0x80] sm:%s1950] %v1991
                  %v1993 = vld [vmem:[%s1957 + $0x110] sm:%s1950]
                  %1994 = vst [vmem:[%s1958 + $0x88] sm:%s1950] %v1993
                  %v1995 = vld [vmem:[%s1957 + $0x120] sm:%s1950]
                  %1996 = vst [vmem:[%s1958 + $0x90] sm:%s1950] %v1995
                  %v1997 = vld [vmem:[%s1957 + $0x130] sm:%s1950]
                  %1998 = vst [vmem:[%s1958 + $0x98] sm:%s1950] %v1997
                  %v1999 = vld [vmem:[%s1957 + $0x140] sm:%s1950]
                  %2000 = vst [vmem:[%s1958 + $0xa0] sm:%s1950] %v1999
                  %v2001 = vld [vmem:[%s1957 + $0x150] sm:%s1950]
                  %2002 = vst [vmem:[%s1958 + $0xa8] sm:%s1950] %v2001
                  %v2003 = vld [vmem:[%s1957 + $0x160] sm:%s1950]
                  %2004 = vst [vmem:[%s1958 + $0xb0] sm:%s1950] %v2003
                  %v2005 = vld [vmem:[%s1957 + $0x170] sm:%s1950]
                  %2006 = vst [vmem:[%s1958 + $0xb8] sm:%s1950] %v2005
                  %v2007 = vld [vmem:[%s1957 + $0x180] sm:%s1950]
                  %2008 = vst [vmem:[%s1958 + $0xc0] sm:%s1950] %v2007
                  %v2009 = vld [vmem:[%s1957 + $0x190] sm:%s1950]
                  %2010 = vst [vmem:[%s1958 + $0xc8] sm:%s1950] %v2009
                  %v2011 = vld [vmem:[%s1957 + $0x1a0] sm:%s1950]
                  %2012 = vst [vmem:[%s1958 + $0xd0] sm:%s1950] %v2011
                  %v2013 = vld [vmem:[%s1957 + $0x1b0] sm:%s1950]
                  %2014 = vst [vmem:[%s1958 + $0xd8] sm:%s1950] %v2013
                  %v2015 = vld [vmem:[%s1957 + $0x1c0] sm:%s1950]
                  %2016 = vst [vmem:[%s1958 + $0xe0] sm:%s1950] %v2015
                  %v2017 = vld [vmem:[%s1957 + $0x1d0] sm:%s1950]
                  %2018 = vst [vmem:[%s1958 + $0xe8] sm:%s1950] %v2017
                  %v2019 = vld [vmem:[%s1957 + $0x1e0] sm:%s1950]
                  %2020 = vst [vmem:[%s1958 + $0xf0] sm:%s1950] %v2019
                  %v2021 = vld [vmem:[%s1957 + $0x1f0] sm:%s1950]
                  %2022 = vst [vmem:[%s1958 + $0xf8] sm:%s1950] %v2021
                  %v2023 = vld [vmem:[%s1957 + $0x200] sm:%s1950]
                  %2024 = vst [vmem:[%s1958 + $0x100] sm:%s1950] %v2023
                  %v2025 = vld [vmem:[%s1957 + $0x210] sm:%s1950]
                  %2026 = vst [vmem:[%s1958 + $0x108] sm:%s1950] %v2025
                  %v2027 = vld [vmem:[%s1957 + $0x220] sm:%s1950]
                  %2028 = vst [vmem:[%s1958 + $0x110] sm:%s1950] %v2027
                  %v2029 = vld [vmem:[%s1957 + $0x230] sm:%s1950]
                  %2030 = vst [vmem:[%s1958 + $0x118] sm:%s1950] %v2029
                  %v2031 = vld [vmem:[%s1957 + $0x240] sm:%s1950]
                  %2032 = vst [vmem:[%s1958 + $0x120] sm:%s1950] %v2031
                  %v2033 = vld [vmem:[%s1957 + $0x250] sm:%s1950]
                  %2034 = vst [vmem:[%s1958 + $0x128] sm:%s1950] %v2033
                  %v2035 = vld [vmem:[%s1957 + $0x260] sm:%s1950]
                  %2036 = vst [vmem:[%s1958 + $0x130] sm:%s1950] %v2035
                  %v2037 = vld [vmem:[%s1957 + $0x270] sm:%s1950]
                  %2038 = vst [vmem:[%s1958 + $0x138] sm:%s1950] %v2037
                  %v2039 = vld [vmem:[%s1957 + $0x280] sm:%s1950]
                  %2040 = vst [vmem:[%s1958 + $0x140] sm:%s1950] %v2039
                  %v2041 = vld [vmem:[%s1957 + $0x290] sm:%s1950]
                  %2042 = vst [vmem:[%s1958 + $0x148] sm:%s1950] %v2041
                  %v2043 = vld [vmem:[%s1957 + $0x2a0] sm:%s1950]
                  %2044 = vst [vmem:[%s1958 + $0x150] sm:%s1950] %v2043
                  %v2045 = vld [vmem:[%s1957 + $0x2b0] sm:%s1950]
                  %2046 = vst [vmem:[%s1958 + $0x158] sm:%s1950] %v2045
                  %v2047 = vld [vmem:[%s1957 + $0x2c0] sm:%s1950]
                  %2048 = vst [vmem:[%s1958 + $0x160] sm:%s1950] %v2047
                  %v2049 = vld [vmem:[%s1957 + $0x2d0] sm:%s1950]
                  %2050 = vst [vmem:[%s1958 + $0x168] sm:%s1950] %v2049
                  %v2051 = vld [vmem:[%s1957 + $0x2e0] sm:%s1950]
                  %2052 = vst [vmem:[%s1958 + $0x170] sm:%s1950] %v2051
                  %v2053 = vld [vmem:[%s1957 + $0x2f0] sm:%s1950]
                  %2054 = vst [vmem:[%s1958 + $0x178] sm:%s1950] %v2053
                  %v2055 = vld [vmem:[%s1957 + $0x300] sm:%s1950]
                  %2056 = vst [vmem:[%s1958 + $0x180] sm:%s1950] %v2055
                  %v2057 = vld [vmem:[%s1957 + $0x310] sm:%s1950]
                  %2058 = vst [vmem:[%s1958 + $0x188] sm:%s1950] %v2057
                  %v2059 = vld [vmem:[%s1957 + $0x320] sm:%s1950]
                  %2060 = vst [vmem:[%s1958 + $0x190] sm:%s1950] %v2059
                  %v2061 = vld [vmem:[%s1957 + $0x330] sm:%s1950]
                  %2062 = vst [vmem:[%s1958 + $0x198] sm:%s1950] %v2061
                  %v2063 = vld [vmem:[%s1957 + $0x340] sm:%s1950]
                  %2064 = vst [vmem:[%s1958 + $0x1a0] sm:%s1950] %v2063
                  %v2065 = vld [vmem:[%s1957 + $0x350] sm:%s1950]
                  %2066 = vst [vmem:[%s1958 + $0x1a8] sm:%s1950] %v2065
                  %v2067 = vld [vmem:[%s1957 + $0x360] sm:%s1950]
                  %2068 = vst [vmem:[%s1958 + $0x1b0] sm:%s1950] %v2067
                  %v2069 = vld [vmem:[%s1957 + $0x370] sm:%s1950]
                  %2070 = vst [vmem:[%s1958 + $0x1b8] sm:%s1950] %v2069
                  %v2071 = vld [vmem:[%s1957 + $0x380] sm:%s1950]
                  %2072 = vst [vmem:[%s1958 + $0x1c0] sm:%s1950] %v2071
                  %v2073 = vld [vmem:[%s1957 + $0x390] sm:%s1950]
                  %2074 = vst [vmem:[%s1958 + $0x1c8] sm:%s1950] %v2073
                  %v2075 = vld [vmem:[%s1957 + $0x3a0] sm:%s1950]
                  %2076 = vst [vmem:[%s1958 + $0x1d0] sm:%s1950] %v2075
                  %v2077 = vld [vmem:[%s1957 + $0x3b0] sm:%s1950]
                  %2078 = vst [vmem:[%s1958 + $0x1d8] sm:%s1950] %v2077
                  %v2079 = vld [vmem:[%s1957 + $0x3c0] sm:%s1950]
                  %2080 = vst [vmem:[%s1958 + $0x1e0] sm:%s1950] %v2079
                  %v2081 = vld [vmem:[%s1957 + $0x3d0] sm:%s1950]
                  %2082 = vst [vmem:[%s1958 + $0x1e8] sm:%s1950] %v2081
                  %v2083 = vld [vmem:[%s1957 + $0x3e0] sm:%s1950]
                  %2084 = vst [vmem:[%s1958 + $0x1f0] sm:%s1950] %v2083
                  %v2085 = vld [vmem:[%s1957 + $0x3f0] sm:%s1950]
                  %2086 = vst [vmem:[%s1958 + $0x1f8] sm:%s1950] %v2085
                  %v2087 = vld [vmem:[%s1957 + $0x400] sm:%s1950]
                  %2088 = vst [vmem:[%s1958 + $0x200] sm:%s1950] %v2087
                  %v2089 = vld [vmem:[%s1957 + $0x410] sm:%s1950]
                  %2090 = vst [vmem:[%s1958 + $0x208] sm:%s1950] %v2089
                  %v2091 = vld [vmem:[%s1957 + $0x420] sm:%s1950]
                  %2092 = vst [vmem:[%s1958 + $0x210] sm:%s1950] %v2091
                  %v2093 = vld [vmem:[%s1957 + $0x430] sm:%s1950]
                  %2094 = vst [vmem:[%s1958 + $0x218] sm:%s1950] %v2093
                  %v2095 = vld [vmem:[%s1957 + $0x440] sm:%s1950]
                  %2096 = vst [vmem:[%s1958 + $0x220] sm:%s1950] %v2095
                  %v2097 = vld [vmem:[%s1957 + $0x450] sm:%s1950]
                  %2098 = vst [vmem:[%s1958 + $0x228] sm:%s1950] %v2097
                  %v2099 = vld [vmem:[%s1957 + $0x460] sm:%s1950]
                  %2100 = vst [vmem:[%s1958 + $0x230] sm:%s1950] %v2099
                  %v2101 = vld [vmem:[%s1957 + $0x470] sm:%s1950]
                  %2102 = vst [vmem:[%s1958 + $0x238] sm:%s1950] %v2101
                  %v2103 = vld [vmem:[%s1957 + $0x480] sm:%s1950]
                  %2104 = vst [vmem:[%s1958 + $0x240] sm:%s1950] %v2103
                  %v2105 = vld [vmem:[%s1957 + $0x490] sm:%s1950]
                  %2106 = vst [vmem:[%s1958 + $0x248] sm:%s1950] %v2105
                  %v2107 = vld [vmem:[%s1957 + $0x4a0] sm:%s1950]
                  %2108 = vst [vmem:[%s1958 + $0x250] sm:%s1950] %v2107
                  %v2109 = vld [vmem:[%s1957 + $0x4b0] sm:%s1950]
                  %2110 = vst [vmem:[%s1958 + $0x258] sm:%s1950] %v2109
                  %v2111 = vld [vmem:[%s1957 + $0x4c0] sm:%s1950]
                  %2112 = vst [vmem:[%s1958 + $0x260] sm:%s1950] %v2111
                  %v2113 = vld [vmem:[%s1957 + $0x4d0] sm:%s1950]
                  %2114 = vst [vmem:[%s1958 + $0x268] sm:%s1950] %v2113
                  %v2115 = vld [vmem:[%s1957 + $0x4e0] sm:%s1950]
                  %2116 = vst [vmem:[%s1958 + $0x270] sm:%s1950] %v2115
                  %v2117 = vld [vmem:[%s1957 + $0x4f0] sm:%s1950]
                  %2118 = vst [vmem:[%s1958 + $0x278] sm:%s1950] %v2117
                  %v2119 = vld [vmem:[%s1957 + $0x500] sm:%s1950]
                  %2120 = vst [vmem:[%s1958 + $0x280] sm:%s1950] %v2119
                  %v2121 = vld [vmem:[%s1957 + $0x510] sm:%s1950]
                  %2122 = vst [vmem:[%s1958 + $0x288] sm:%s1950] %v2121
                  %v2123 = vld [vmem:[%s1957 + $0x520] sm:%s1950]
                  %2124 = vst [vmem:[%s1958 + $0x290] sm:%s1950] %v2123
                  %v2125 = vld [vmem:[%s1957 + $0x530] sm:%s1950]
                  %2126 = vst [vmem:[%s1958 + $0x298] sm:%s1950] %v2125
                  %v2127 = vld [vmem:[%s1957 + $0x540] sm:%s1950]
                  %2128 = vst [vmem:[%s1958 + $0x2a0] sm:%s1950] %v2127
                  %v2129 = vld [vmem:[%s1957 + $0x550] sm:%s1950]
                  %2130 = vst [vmem:[%s1958 + $0x2a8] sm:%s1950] %v2129
                  %v2131 = vld [vmem:[%s1957 + $0x560] sm:%s1950]
                  %2132 = vst [vmem:[%s1958 + $0x2b0] sm:%s1950] %v2131
                  %v2133 = vld [vmem:[%s1957 + $0x570] sm:%s1950]
                  %2134 = vst [vmem:[%s1958 + $0x2b8] sm:%s1950] %v2133
                  %v2135 = vld [vmem:[%s1957 + $0x580] sm:%s1950]
                  %2136 = vst [vmem:[%s1958 + $0x2c0] sm:%s1950] %v2135
                  %v2137 = vld [vmem:[%s1957 + $0x590] sm:%s1950]
                  %2138 = vst [vmem:[%s1958 + $0x2c8] sm:%s1950] %v2137
                  %v2139 = vld [vmem:[%s1957 + $0x5a0] sm:%s1950]
                  %2140 = vst [vmem:[%s1958 + $0x2d0] sm:%s1950] %v2139
                  %v2141 = vld [vmem:[%s1957 + $0x5b0] sm:%s1950]
                  %2142 = vst [vmem:[%s1958 + $0x2d8] sm:%s1950] %v2141
                  %v2143 = vld [vmem:[%s1957 + $0x5c0] sm:%s1950]
                  %2144 = vst [vmem:[%s1958 + $0x2e0] sm:%s1950] %v2143
                  %v2145 = vld [vmem:[%s1957 + $0x5d0] sm:%s1950]
                  %2146 = vst [vmem:[%s1958 + $0x2e8] sm:%s1950] %v2145
                  %v2147 = vld [vmem:[%s1957 + $0x5e0] sm:%s1950]
                  %2148 = vst [vmem:[%s1958 + $0x2f0] sm:%s1950] %v2147
                  %v2149 = vld [vmem:[%s1957 + $0x5f0] sm:%s1950]
                  %2150 = vst [vmem:[%s1958 + $0x2f8] sm:%s1950] %v2149
                  %v2151 = vld [vmem:[%s1957 + $0x600] sm:%s1950]
                  %2152 = vst [vmem:[%s1958 + $0x300] sm:%s1950] %v2151
                  %v2153 = vld [vmem:[%s1957 + $0x610] sm:%s1950]
                  %2154 = vst [vmem:[%s1958 + $0x308] sm:%s1950] %v2153
                  %v2155 = vld [vmem:[%s1957 + $0x620] sm:%s1950]
                  %2156 = vst [vmem:[%s1958 + $0x310] sm:%s1950] %v2155
                  %v2157 = vld [vmem:[%s1957 + $0x630] sm:%s1950]
                  %2158 = vst [vmem:[%s1958 + $0x318] sm:%s1950] %v2157
                  %v2159 = vld [vmem:[%s1957 + $0x640] sm:%s1950]
                  %2160 = vst [vmem:[%s1958 + $0x320] sm:%s1950] %v2159
                  %v2161 = vld [vmem:[%s1957 + $0x650] sm:%s1950]
                  %2162 = vst [vmem:[%s1958 + $0x328] sm:%s1950] %v2161
                  %v2163 = vld [vmem:[%s1957 + $0x660] sm:%s1950]
                  %2164 = vst [vmem:[%s1958 + $0x330] sm:%s1950] %v2163
                  %v2165 = vld [vmem:[%s1957 + $0x670] sm:%s1950]
                  %2166 = vst [vmem:[%s1958 + $0x338] sm:%s1950] %v2165
                  %v2167 = vld [vmem:[%s1957 + $0x680] sm:%s1950]
                  %2168 = vst [vmem:[%s1958 + $0x340] sm:%s1950] %v2167
                  %v2169 = vld [vmem:[%s1957 + $0x690] sm:%s1950]
                  %2170 = vst [vmem:[%s1958 + $0x348] sm:%s1950] %v2169
                  %v2171 = vld [vmem:[%s1957 + $0x6a0] sm:%s1950]
                  %2172 = vst [vmem:[%s1958 + $0x350] sm:%s1950] %v2171
                  %v2173 = vld [vmem:[%s1957 + $0x6b0] sm:%s1950]
                  %2174 = vst [vmem:[%s1958 + $0x358] sm:%s1950] %v2173
                  %v2175 = vld [vmem:[%s1957 + $0x6c0] sm:%s1950]
                  %2176 = vst [vmem:[%s1958 + $0x360] sm:%s1950] %v2175
                  %v2177 = vld [vmem:[%s1957 + $0x6d0] sm:%s1950]
                  %2178 = vst [vmem:[%s1958 + $0x368] sm:%s1950] %v2177
                  %v2179 = vld [vmem:[%s1957 + $0x6e0] sm:%s1950]
                  %2180 = vst [vmem:[%s1958 + $0x370] sm:%s1950] %v2179
                  %v2181 = vld [vmem:[%s1957 + $0x6f0] sm:%s1950]
                  %2182 = vst [vmem:[%s1958 + $0x378] sm:%s1950] %v2181
                  %v2183 = vld [vmem:[%s1957 + $0x700] sm:%s1950]
                  %2184 = vst [vmem:[%s1958 + $0x380] sm:%s1950] %v2183
                  %v2185 = vld [vmem:[%s1957 + $0x710] sm:%s1950]
                  %2186 = vst [vmem:[%s1958 + $0x388] sm:%s1950] %v2185
                  %v2187 = vld [vmem:[%s1957 + $0x720] sm:%s1950]
                  %2188 = vst [vmem:[%s1958 + $0x390] sm:%s1950] %v2187
                  %v2189 = vld [vmem:[%s1957 + $0x730] sm:%s1950]
                  %2190 = vst [vmem:[%s1958 + $0x398] sm:%s1950] %v2189
                  %v2191 = vld [vmem:[%s1957 + $0x740] sm:%s1950]
                  %2192 = vst [vmem:[%s1958 + $0x3a0] sm:%s1950] %v2191
                  %v2193 = vld [vmem:[%s1957 + $0x750] sm:%s1950]
                  %2194 = vst [vmem:[%s1958 + $0x3a8] sm:%s1950] %v2193
                  %v2195 = vld [vmem:[%s1957 + $0x760] sm:%s1950]
                  %2196 = vst [vmem:[%s1958 + $0x3b0] sm:%s1950] %v2195
                  %v2197 = vld [vmem:[%s1957 + $0x770] sm:%s1950]
                  %2198 = vst [vmem:[%s1958 + $0x3b8] sm:%s1950] %v2197
                  %v2199 = vld [vmem:[%s1957 + $0x780] sm:%s1950]
                  %2200 = vst [vmem:[%s1958 + $0x3c0] sm:%s1950] %v2199
                  %v2201 = vld [vmem:[%s1957 + $0x790] sm:%s1950]
                  %2202 = vst [vmem:[%s1958 + $0x3c8] sm:%s1950] %v2201
                  %v2203 = vld [vmem:[%s1957 + $0x7a0] sm:%s1950]
                  %2204 = vst [vmem:[%s1958 + $0x3d0] sm:%s1950] %v2203
                  %v2205 = vld [vmem:[%s1957 + $0x7b0] sm:%s1950]
                  %2206 = vst [vmem:[%s1958 + $0x3d8] sm:%s1950] %v2205
                  %v2207 = vld [vmem:[%s1957 + $0x7c0] sm:%s1950]
                  %2208 = vst [vmem:[%s1958 + $0x3e0] sm:%s1950] %v2207
                  %v2209 = vld [vmem:[%s1957 + $0x7d0] sm:%s1950]
                  %2210 = vst [vmem:[%s1958 + $0x3e8] sm:%s1950] %v2209
                  %v2211 = vld [vmem:[%s1957 + $0x7e0] sm:%s1950]
                  %2212 = vst [vmem:[%s1958 + $0x3f0] sm:%s1950] %v2211
                  %v2213 = vld [vmem:[%s1957 + $0x7f0] sm:%s1950]
                  %2214 = vst [vmem:[%s1958 + $0x3f8] sm:%s1950] %v2213
                  %v2215 = vld [vmem:[%s1957 + $0x800] sm:%s1950]
                  %2216 = vst [vmem:[%s1958 + $0x400] sm:%s1950] %v2215
                  %v2217 = vld [vmem:[%s1957 + $0x810] sm:%s1950]
                  %2218 = vst [vmem:[%s1958 + $0x408] sm:%s1950] %v2217
                  %v2219 = vld [vmem:[%s1957 + $0x820] sm:%s1950]
                  %2220 = vst [vmem:[%s1958 + $0x410] sm:%s1950] %v2219
                  %v2221 = vld [vmem:[%s1957 + $0x830] sm:%s1950]
                  %2222 = vst [vmem:[%s1958 + $0x418] sm:%s1950] %v2221
                  %v2223 = vld [vmem:[%s1957 + $0x840] sm:%s1950]
                  %2224 = vst [vmem:[%s1958 + $0x420] sm:%s1950] %v2223
                  %v2225 = vld [vmem:[%s1957 + $0x850] sm:%s1950]
                  %2226 = vst [vmem:[%s1958 + $0x428] sm:%s1950] %v2225
                  %v2227 = vld [vmem:[%s1957 + $0x860] sm:%s1950]
                  %2228 = vst [vmem:[%s1958 + $0x430] sm:%s1950] %v2227
                  %v2229 = vld [vmem:[%s1957 + $0x870] sm:%s1950]
                  %2230 = vst [vmem:[%s1958 + $0x438] sm:%s1950] %v2229
                  %v2231 = vld [vmem:[%s1957 + $0x880] sm:%s1950]
                  %2232 = vst [vmem:[%s1958 + $0x440] sm:%s1950] %v2231
                  %v2233 = vld [vmem:[%s1957 + $0x890] sm:%s1950]
                  %2234 = vst [vmem:[%s1958 + $0x448] sm:%s1950] %v2233
                  %v2235 = vld [vmem:[%s1957 + $0x8a0] sm:%s1950]
                  %2236 = vst [vmem:[%s1958 + $0x450] sm:%s1950] %v2235
                  %v2237 = vld [vmem:[%s1957 + $0x8b0] sm:%s1950]
                  %2238 = vst [vmem:[%s1958 + $0x458] sm:%s1950] %v2237
                  %v2239 = vld [vmem:[%s1957 + $0x8c0] sm:%s1950]
                  %2240 = vst [vmem:[%s1958 + $0x460] sm:%s1950] %v2239
                  %v2241 = vld [vmem:[%s1957 + $0x8d0] sm:%s1950]
                  %2242 = vst [vmem:[%s1958 + $0x468] sm:%s1950] %v2241
                  %v2243 = vld [vmem:[%s1957 + $0x8e0] sm:%s1950]
                  %2244 = vst [vmem:[%s1958 + $0x470] sm:%s1950] %v2243
                  %v2245 = vld [vmem:[%s1957 + $0x8f0] sm:%s1950]
                  %2246 = vst [vmem:[%s1958 + $0x478] sm:%s1950] %v2245
                  %v2247 = vld [vmem:[%s1957 + $0x900] sm:%s1950]
                  %2248 = vst [vmem:[%s1958 + $0x480] sm:%s1950] %v2247
                  %v2249 = vld [vmem:[%s1957 + $0x910] sm:%s1950]
                  %2250 = vst [vmem:[%s1958 + $0x488] sm:%s1950] %v2249
                  %v2251 = vld [vmem:[%s1957 + $0x920] sm:%s1950]
                  %2252 = vst [vmem:[%s1958 + $0x490] sm:%s1950] %v2251
                  %v2253 = vld [vmem:[%s1957 + $0x930] sm:%s1950]
                  %2254 = vst [vmem:[%s1958 + $0x498] sm:%s1950] %v2253
                  %v2255 = vld [vmem:[%s1957 + $0x940] sm:%s1950]
                  %2256 = vst [vmem:[%s1958 + $0x4a0] sm:%s1950] %v2255
                  %v2257 = vld [vmem:[%s1957 + $0x950] sm:%s1950]
                  %2258 = vst [vmem:[%s1958 + $0x4a8] sm:%s1950] %v2257
                  %v2259 = vld [vmem:[%s1957 + $0x960] sm:%s1950]
                  %2260 = vst [vmem:[%s1958 + $0x4b0] sm:%s1950] %v2259
                  %v2261 = vld [vmem:[%s1957 + $0x970] sm:%s1950]
                  %2262 = vst [vmem:[%s1958 + $0x4b8] sm:%s1950] %v2261
                  %v2263 = vld [vmem:[%s1957 + $0x980] sm:%s1950]
                  %2264 = vst [vmem:[%s1958 + $0x4c0] sm:%s1950] %v2263
                  %v2265 = vld [vmem:[%s1957 + $0x990] sm:%s1950]
                  %2266 = vst [vmem:[%s1958 + $0x4c8] sm:%s1950] %v2265
                  %v2267 = vld [vmem:[%s1957 + $0x9a0] sm:%s1950]
                  %2268 = vst [vmem:[%s1958 + $0x4d0] sm:%s1950] %v2267
                  %v2269 = vld [vmem:[%s1957 + $0x9b0] sm:%s1950]
                  %2270 = vst [vmem:[%s1958 + $0x4d8] sm:%s1950] %v2269
                  %v2271 = vld [vmem:[%s1957 + $0x9c0] sm:%s1950]
                  %2272 = vst [vmem:[%s1958 + $0x4e0] sm:%s1950] %v2271
                  %v2273 = vld [vmem:[%s1957 + $0x9d0] sm:%s1950]
                  %2274 = vst [vmem:[%s1958 + $0x4e8] sm:%s1950] %v2273
                  %v2275 = vld [vmem:[%s1957 + $0x9e0] sm:%s1950]
                  %2276 = vst [vmem:[%s1958 + $0x4f0] sm:%s1950] %v2275
                  %v2277 = vld [vmem:[%s1957 + $0x9f0] sm:%s1950]
                  %2278 = vst [vmem:[%s1958 + $0x4f8] sm:%s1950] %v2277
                  %v2279 = vld [vmem:[%s1957 + $0xa00] sm:%s1950]
                  %2280 = vst [vmem:[%s1958 + $0x500] sm:%s1950] %v2279
                  %v2281 = vld [vmem:[%s1957 + $0xa10] sm:%s1950]
                  %2282 = vst [vmem:[%s1958 + $0x508] sm:%s1950] %v2281
                  %v2283 = vld [vmem:[%s1957 + $0xa20] sm:%s1950]
                  %2284 = vst [vmem:[%s1958 + $0x510] sm:%s1950] %v2283
                  %v2285 = vld [vmem:[%s1957 + $0xa30] sm:%s1950]
                  %2286 = vst [vmem:[%s1958 + $0x518] sm:%s1950] %v2285
                  %v2287 = vld [vmem:[%s1957 + $0xa40] sm:%s1950]
                  %2288 = vst [vmem:[%s1958 + $0x520] sm:%s1950] %v2287
                  %v2289 = vld [vmem:[%s1957 + $0xa50] sm:%s1950]
                  %2290 = vst [vmem:[%s1958 + $0x528] sm:%s1950] %v2289
                  %v2291 = vld [vmem:[%s1957 + $0xa60] sm:%s1950]
                  %2292 = vst [vmem:[%s1958 + $0x530] sm:%s1950] %v2291
                  %v2293 = vld [vmem:[%s1957 + $0xa70] sm:%s1950]
                  %2294 = vst [vmem:[%s1958 + $0x538] sm:%s1950] %v2293
                  %v2295 = vld [vmem:[%s1957 + $0xa80] sm:%s1950]
                  %2296 = vst [vmem:[%s1958 + $0x540] sm:%s1950] %v2295
                  %v2297 = vld [vmem:[%s1957 + $0xa90] sm:%s1950]
                  %2298 = vst [vmem:[%s1958 + $0x548] sm:%s1950] %v2297
                  %v2299 = vld [vmem:[%s1957 + $0xaa0] sm:%s1950]
                  %2300 = vst [vmem:[%s1958 + $0x550] sm:%s1950] %v2299
                  %v2301 = vld [vmem:[%s1957 + $0xab0] sm:%s1950]
                  %2302 = vst [vmem:[%s1958 + $0x558] sm:%s1950] %v2301
                  %v2303 = vld [vmem:[%s1957 + $0xac0] sm:%s1950]
                  %2304 = vst [vmem:[%s1958 + $0x560] sm:%s1950] %v2303
                  %v2305 = vld [vmem:[%s1957 + $0xad0] sm:%s1950]
                  %2306 = vst [vmem:[%s1958 + $0x568] sm:%s1950] %v2305
                  %v2307 = vld [vmem:[%s1957 + $0xae0] sm:%s1950]
                  %2308 = vst [vmem:[%s1958 + $0x570] sm:%s1950] %v2307
                  %v2309 = vld [vmem:[%s1957 + $0xaf0] sm:%s1950]
                  %2310 = vst [vmem:[%s1958 + $0x578] sm:%s1950] %v2309
                  %v2311 = vld [vmem:[%s1957 + $0xb00] sm:%s1950]
                  %2312 = vst [vmem:[%s1958 + $0x580] sm:%s1950] %v2311
                  %v2313 = vld [vmem:[%s1957 + $0xb10] sm:%s1950]
                  %2314 = vst [vmem:[%s1958 + $0x588] sm:%s1950] %v2313
                  %v2315 = vld [vmem:[%s1957 + $0xb20] sm:%s1950]
                  %2316 = vst [vmem:[%s1958 + $0x590] sm:%s1950] %v2315
                  %v2317 = vld [vmem:[%s1957 + $0xb30] sm:%s1950]
                  %2318 = vst [vmem:[%s1958 + $0x598] sm:%s1950] %v2317
                  %v2319 = vld [vmem:[%s1957 + $0xb40] sm:%s1950]
                  %2320 = vst [vmem:[%s1958 + $0x5a0] sm:%s1950] %v2319
                  %v2321 = vld [vmem:[%s1957 + $0xb50] sm:%s1950]
                  %2322 = vst [vmem:[%s1958 + $0x5a8] sm:%s1950] %v2321
                  %v2323 = vld [vmem:[%s1957 + $0xb60] sm:%s1950]
                  %2324 = vst [vmem:[%s1958 + $0x5b0] sm:%s1950] %v2323
                  %v2325 = vld [vmem:[%s1957 + $0xb70] sm:%s1950]
                  %2326 = vst [vmem:[%s1958 + $0x5b8] sm:%s1950] %v2325
                  %v2327 = vld [vmem:[%s1957 + $0xb80] sm:%s1950]
                  %2328 = vst [vmem:[%s1958 + $0x5c0] sm:%s1950] %v2327
                  %v2329 = vld [vmem:[%s1957 + $0xb90] sm:%s1950]
                  %2330 = vst [vmem:[%s1958 + $0x5c8] sm:%s1950] %v2329
                  %v2331 = vld [vmem:[%s1957 + $0xba0] sm:%s1950]
                  %2332 = vst [vmem:[%s1958 + $0x5d0] sm:%s1950] %v2331
                  %v2333 = vld [vmem:[%s1957 + $0xbb0] sm:%s1950]
                  %2334 = vst [vmem:[%s1958 + $0x5d8] sm:%s1950] %v2333
                  %v2335 = vld [vmem:[%s1957 + $0xbc0] sm:%s1950]
                  %2336 = vst [vmem:[%s1958 + $0x5e0] sm:%s1950] %v2335
                  %v2337 = vld [vmem:[%s1957 + $0xbd0] sm:%s1950]
                  %2338 = vst [vmem:[%s1958 + $0x5e8] sm:%s1950] %v2337
                  %v2339 = vld [vmem:[%s1957 + $0xbe0] sm:%s1950]
                  %2340 = vst [vmem:[%s1958 + $0x5f0] sm:%s1950] %v2339
                  %v2341 = vld [vmem:[%s1957 + $0xbf0] sm:%s1950]
                  %2342 = vst [vmem:[%s1958 + $0x5f8] sm:%s1950] %v2341
                  %v2343 = vld [vmem:[%s1957 + $0xc00] sm:%s1950]
                  %2344 = vst [vmem:[%s1958 + $0x600] sm:%s1950] %v2343
                  %v2345 = vld [vmem:[%s1957 + $0xc10] sm:%s1950]
                  %2346 = vst [vmem:[%s1958 + $0x608] sm:%s1950] %v2345
                  %v2347 = vld [vmem:[%s1957 + $0xc20] sm:%s1950]
                  %2348 = vst [vmem:[%s1958 + $0x610] sm:%s1950] %v2347
                  %v2349 = vld [vmem:[%s1957 + $0xc30] sm:%s1950]
                  %2350 = vst [vmem:[%s1958 + $0x618] sm:%s1950] %v2349
                  %v2351 = vld [vmem:[%s1957 + $0xc40] sm:%s1950]
                  %2352 = vst [vmem:[%s1958 + $0x620] sm:%s1950] %v2351
                  %v2353 = vld [vmem:[%s1957 + $0xc50] sm:%s1950]
                  %2354 = vst [vmem:[%s1958 + $0x628] sm:%s1950] %v2353
                  %v2355 = vld [vmem:[%s1957 + $0xc60] sm:%s1950]
                  %2356 = vst [vmem:[%s1958 + $0x630] sm:%s1950] %v2355
                  %v2357 = vld [vmem:[%s1957 + $0xc70] sm:%s1950]
                  %2358 = vst [vmem:[%s1958 + $0x638] sm:%s1950] %v2357
                  %v2359 = vld [vmem:[%s1957 + $0xc80] sm:%s1950]
                  %2360 = vst [vmem:[%s1958 + $0x640] sm:%s1950] %v2359
                  %v2361 = vld [vmem:[%s1957 + $0xc90] sm:%s1950]
                  %2362 = vst [vmem:[%s1958 + $0x648] sm:%s1950] %v2361
                  %v2363 = vld [vmem:[%s1957 + $0xca0] sm:%s1950]
                  %2364 = vst [vmem:[%s1958 + $0x650] sm:%s1950] %v2363
                  %v2365 = vld [vmem:[%s1957 + $0xcb0] sm:%s1950]
                  %2366 = vst [vmem:[%s1958 + $0x658] sm:%s1950] %v2365
                  %v2367 = vld [vmem:[%s1957 + $0xcc0] sm:%s1950]
                  %2368 = vst [vmem:[%s1958 + $0x660] sm:%s1950] %v2367
                  %v2369 = vld [vmem:[%s1957 + $0xcd0] sm:%s1950]
                  %2370 = vst [vmem:[%s1958 + $0x668] sm:%s1950] %v2369
                  %v2371 = vld [vmem:[%s1957 + $0xce0] sm:%s1950]
                  %2372 = vst [vmem:[%s1958 + $0x670] sm:%s1950] %v2371
                  %v2373 = vld [vmem:[%s1957 + $0xcf0] sm:%s1950]
                  %2374 = vst [vmem:[%s1958 + $0x678] sm:%s1950] %v2373
                  %v2375 = vld [vmem:[%s1957 + $0xd00] sm:%s1950]
                  %2376 = vst [vmem:[%s1958 + $0x680] sm:%s1950] %v2375
                  %v2377 = vld [vmem:[%s1957 + $0xd10] sm:%s1950]
                  %2378 = vst [vmem:[%s1958 + $0x688] sm:%s1950] %v2377
                  %v2379 = vld [vmem:[%s1957 + $0xd20] sm:%s1950]
                  %2380 = vst [vmem:[%s1958 + $0x690] sm:%s1950] %v2379
                  %v2381 = vld [vmem:[%s1957 + $0xd30] sm:%s1950]
                  %2382 = vst [vmem:[%s1958 + $0x698] sm:%s1950] %v2381
                  %v2383 = vld [vmem:[%s1957 + $0xd40] sm:%s1950]
                  %2384 = vst [vmem:[%s1958 + $0x6a0] sm:%s1950] %v2383
                  %v2385 = vld [vmem:[%s1957 + $0xd50] sm:%s1950]
                  %2386 = vst [vmem:[%s1958 + $0x6a8] sm:%s1950] %v2385
                  %v2387 = vld [vmem:[%s1957 + $0xd60] sm:%s1950]
                  %2388 = vst [vmem:[%s1958 + $0x6b0] sm:%s1950] %v2387
                  %v2389 = vld [vmem:[%s1957 + $0xd70] sm:%s1950]
                  %2390 = vst [vmem:[%s1958 + $0x6b8] sm:%s1950] %v2389
                  %v2391 = vld [vmem:[%s1957 + $0xd80] sm:%s1950]
                  %2392 = vst [vmem:[%s1958 + $0x6c0] sm:%s1950] %v2391
                  %v2393 = vld [vmem:[%s1957 + $0xd90] sm:%s1950]
                  %2394 = vst [vmem:[%s1958 + $0x6c8] sm:%s1950] %v2393
                  %v2395 = vld [vmem:[%s1957 + $0xda0] sm:%s1950]
                  %2396 = vst [vmem:[%s1958 + $0x6d0] sm:%s1950] %v2395
                  %v2397 = vld [vmem:[%s1957 + $0xdb0] sm:%s1950]
                  %2398 = vst [vmem:[%s1958 + $0x6d8] sm:%s1950] %v2397
                  %v2399 = vld [vmem:[%s1957 + $0xdc0] sm:%s1950]
                  %2400 = vst [vmem:[%s1958 + $0x6e0] sm:%s1950] %v2399
                  %v2401 = vld [vmem:[%s1957 + $0xdd0] sm:%s1950]
                  %2402 = vst [vmem:[%s1958 + $0x6e8] sm:%s1950] %v2401
                  %v2403 = vld [vmem:[%s1957 + $0xde0] sm:%s1950]
                  %2404 = vst [vmem:[%s1958 + $0x6f0] sm:%s1950] %v2403
                  %v2405 = vld [vmem:[%s1957 + $0xdf0] sm:%s1950]
                  %2406 = vst [vmem:[%s1958 + $0x6f8] sm:%s1950] %v2405
                  %v2407 = vld [vmem:[%s1957 + $0xe00] sm:%s1950]
                  %2408 = vst [vmem:[%s1958 + $0x700] sm:%s1950] %v2407
                  %v2409 = vld [vmem:[%s1957 + $0xe10] sm:%s1950]
                  %2410 = vst [vmem:[%s1958 + $0x708] sm:%s1950] %v2409
                  %v2411 = vld [vmem:[%s1957 + $0xe20] sm:%s1950]
                  %2412 = vst [vmem:[%s1958 + $0x710] sm:%s1950] %v2411
                  %v2413 = vld [vmem:[%s1957 + $0xe30] sm:%s1950]
                  %2414 = vst [vmem:[%s1958 + $0x718] sm:%s1950] %v2413
                  %v2415 = vld [vmem:[%s1957 + $0xe40] sm:%s1950]
                  %2416 = vst [vmem:[%s1958 + $0x720] sm:%s1950] %v2415
                  %v2417 = vld [vmem:[%s1957 + $0xe50] sm:%s1950]
                  %2418 = vst [vmem:[%s1958 + $0x728] sm:%s1950] %v2417
                  %v2419 = vld [vmem:[%s1957 + $0xe60] sm:%s1950]
                  %2420 = vst [vmem:[%s1958 + $0x730] sm:%s1950] %v2419
                  %v2421 = vld [vmem:[%s1957 + $0xe70] sm:%s1950]
                  %2422 = vst [vmem:[%s1958 + $0x738] sm:%s1950] %v2421
                  %v2423 = vld [vmem:[%s1957 + $0xe80] sm:%s1950]
                  %2424 = vst [vmem:[%s1958 + $0x740] sm:%s1950] %v2423
                  %v2425 = vld [vmem:[%s1957 + $0xe90] sm:%s1950]
                  %2426 = vst [vmem:[%s1958 + $0x748] sm:%s1950] %v2425
                  %v2427 = vld [vmem:[%s1957 + $0xea0] sm:%s1950]
                  %2428 = vst [vmem:[%s1958 + $0x750] sm:%s1950] %v2427
                  %v2429 = vld [vmem:[%s1957 + $0xeb0] sm:%s1950]
                  %2430 = vst [vmem:[%s1958 + $0x758] sm:%s1950] %v2429
                  %v2431 = vld [vmem:[%s1957 + $0xec0] sm:%s1950]
                  %2432 = vst [vmem:[%s1958 + $0x760] sm:%s1950] %v2431
                  %v2433 = vld [vmem:[%s1957 + $0xed0] sm:%s1950]
                  %2434 = vst [vmem:[%s1958 + $0x768] sm:%s1950] %v2433
                  %v2435 = vld [vmem:[%s1957 + $0xee0] sm:%s1950]
                  %2436 = vst [vmem:[%s1958 + $0x770] sm:%s1950] %v2435
                  %v2437 = vld [vmem:[%s1957 + $0xef0] sm:%s1950]
                  %2438 = vst [vmem:[%s1958 + $0x778] sm:%s1950] %v2437
                  %v2439 = vld [vmem:[%s1957 + $0xf00] sm:%s1950]
                  %2440 = vst [vmem:[%s1958 + $0x780] sm:%s1950] %v2439
                  %v2441 = vld [vmem:[%s1957 + $0xf10] sm:%s1950]
                  %2442 = vst [vmem:[%s1958 + $0x788] sm:%s1950] %v2441
                  %v2443 = vld [vmem:[%s1957 + $0xf20] sm:%s1950]
                  %2444 = vst [vmem:[%s1958 + $0x790] sm:%s1950] %v2443
                  %v2445 = vld [vmem:[%s1957 + $0xf30] sm:%s1950]
                  %2446 = vst [vmem:[%s1958 + $0x798] sm:%s1950] %v2445
                  %v2447 = vld [vmem:[%s1957 + $0xf40] sm:%s1950]
                  %2448 = vst [vmem:[%s1958 + $0x7a0] sm:%s1950] %v2447
                  %v2449 = vld [vmem:[%s1957 + $0xf50] sm:%s1950]
                  %2450 = vst [vmem:[%s1958 + $0x7a8] sm:%s1950] %v2449
                  %v2451 = vld [vmem:[%s1957 + $0xf60] sm:%s1950]
                  %2452 = vst [vmem:[%s1958 + $0x7b0] sm:%s1950] %v2451
                  %v2453 = vld [vmem:[%s1957 + $0xf70] sm:%s1950]
                  %2454 = vst [vmem:[%s1958 + $0x7b8] sm:%s1950] %v2453
                  %v2455 = vld [vmem:[%s1957 + $0xf80] sm:%s1950]
                  %2456 = vst [vmem:[%s1958 + $0x7c0] sm:%s1950] %v2455
                  %v2457 = vld [vmem:[%s1957 + $0xf90] sm:%s1950]
                  %2458 = vst [vmem:[%s1958 + $0x7c8] sm:%s1950] %v2457
                  %v2459 = vld [vmem:[%s1957 + $0xfa0] sm:%s1950]
                  %2460 = vst [vmem:[%s1958 + $0x7d0] sm:%s1950] %v2459
                  %v2461 = vld [vmem:[%s1957 + $0xfb0] sm:%s1950]
                  %2462 = vst [vmem:[%s1958 + $0x7d8] sm:%s1950] %v2461
                  %v2463 = vld [vmem:[%s1957 + $0xfc0] sm:%s1950]
                  %2464 = vst [vmem:[%s1958 + $0x7e0] sm:%s1950] %v2463
                  %v2465 = vld [vmem:[%s1957 + $0xfd0] sm:%s1950]
                  %2466 = vst [vmem:[%s1958 + $0x7e8] sm:%s1950] %v2465
                  %v2467 = vld [vmem:[%s1957 + $0xfe0] sm:%s1950]
                  %2468 = vst [vmem:[%s1958 + $0x7f0] sm:%s1950] %v2467
                  %v2469 = vld [vmem:[%s1957 + $0xff0] sm:%s1950]
                  %2470 = vst [vmem:[%s1958 + $0x7f8] sm:%s1950] %v2469
                  %v2471 = vld [vmem:[%s1957 + $0x1000] sm:%s1950]
                  %2472 = vst [vmem:[%s1958 + $0x800] sm:%s1950] %v2471
                  %v2473 = vld [vmem:[%s1957 + $0x1010] sm:%s1950]
                  %2474 = vst [vmem:[%s1958 + $0x808] sm:%s1950] %v2473
                  %v2475 = vld [vmem:[%s1957 + $0x1020] sm:%s1950]
                  %2476 = vst [vmem:[%s1958 + $0x810] sm:%s1950] %v2475
                  %v2477 = vld [vmem:[%s1957 + $0x1030] sm:%s1950]
                  %2478 = vst [vmem:[%s1958 + $0x818] sm:%s1950] %v2477
                  %v2479 = vld [vmem:[%s1957 + $0x1040] sm:%s1950]
                  %2480 = vst [vmem:[%s1958 + $0x820] sm:%s1950] %v2479
                  %v2481 = vld [vmem:[%s1957 + $0x1050] sm:%s1950]
                  %2482 = vst [vmem:[%s1958 + $0x828] sm:%s1950] %v2481
                  %v2483 = vld [vmem:[%s1957 + $0x1060] sm:%s1950]
                  %2484 = vst [vmem:[%s1958 + $0x830] sm:%s1950] %v2483
                  %v2485 = vld [vmem:[%s1957 + $0x1070] sm:%s1950]
                  %2486 = vst [vmem:[%s1958 + $0x838] sm:%s1950] %v2485
                  %v2487 = vld [vmem:[%s1957 + $0x1080] sm:%s1950]
                  %2488 = vst [vmem:[%s1958 + $0x840] sm:%s1950] %v2487
                  %v2489 = vld [vmem:[%s1957 + $0x1090] sm:%s1950]
                  %2490 = vst [vmem:[%s1958 + $0x848] sm:%s1950] %v2489
                  %v2491 = vld [vmem:[%s1957 + $0x10a0] sm:%s1950]
                  %2492 = vst [vmem:[%s1958 + $0x850] sm:%s1950] %v2491
                  %v2493 = vld [vmem:[%s1957 + $0x10b0] sm:%s1950]
                  %2494 = vst [vmem:[%s1958 + $0x858] sm:%s1950] %v2493
                  %v2495 = vld [vmem:[%s1957 + $0x10c0] sm:%s1950]
                  %2496 = vst [vmem:[%s1958 + $0x860] sm:%s1950] %v2495
                  %v2497 = vld [vmem:[%s1957 + $0x10d0] sm:%s1950]
                  %2498 = vst [vmem:[%s1958 + $0x868] sm:%s1950] %v2497
                  %v2499 = vld [vmem:[%s1957 + $0x10e0] sm:%s1950]
                  %2500 = vst [vmem:[%s1958 + $0x870] sm:%s1950] %v2499
                  %v2501 = vld [vmem:[%s1957 + $0x10f0] sm:%s1950]
                  %2502 = vst [vmem:[%s1958 + $0x878] sm:%s1950] %v2501
                  %v2503 = vld [vmem:[%s1957 + $0x1100] sm:%s1950]
                  %2504 = vst [vmem:[%s1958 + $0x880] sm:%s1950] %v2503
                  %v2505 = vld [vmem:[%s1957 + $0x1110] sm:%s1950]
                  %2506 = vst [vmem:[%s1958 + $0x888] sm:%s1950] %v2505
                  %v2507 = vld [vmem:[%s1957 + $0x1120] sm:%s1950]
                  %2508 = vst [vmem:[%s1958 + $0x890] sm:%s1950] %v2507
                  %v2509 = vld [vmem:[%s1957 + $0x1130] sm:%s1950]
                  %2510 = vst [vmem:[%s1958 + $0x898] sm:%s1950] %v2509
                  %v2511 = vld [vmem:[%s1957 + $0x1140] sm:%s1950]
                  %2512 = vst [vmem:[%s1958 + $0x8a0] sm:%s1950] %v2511
                  %v2513 = vld [vmem:[%s1957 + $0x1150] sm:%s1950]
                  %2514 = vst [vmem:[%s1958 + $0x8a8] sm:%s1950] %v2513
                  %v2515 = vld [vmem:[%s1957 + $0x1160] sm:%s1950]
                  %2516 = vst [vmem:[%s1958 + $0x8b0] sm:%s1950] %v2515
                  %v2517 = vld [vmem:[%s1957 + $0x1170] sm:%s1950]
                  %2518 = vst [vmem:[%s1958 + $0x8b8] sm:%s1950] %v2517
                  %v2519 = vld [vmem:[%s1957 + $0x1180] sm:%s1950]
                  %2520 = vst [vmem:[%s1958 + $0x8c0] sm:%s1950] %v2519
                  %v2521 = vld [vmem:[%s1957 + $0x1190] sm:%s1950]
                  %2522 = vst [vmem:[%s1958 + $0x8c8] sm:%s1950] %v2521
                  %v2523 = vld [vmem:[%s1957 + $0x11a0] sm:%s1950]
                  %2524 = vst [vmem:[%s1958 + $0x8d0] sm:%s1950] %v2523
                  %v2525 = vld [vmem:[%s1957 + $0x11b0] sm:%s1950]
                  %2526 = vst [vmem:[%s1958 + $0x8d8] sm:%s1950] %v2525
                  %v2527 = vld [vmem:[%s1957 + $0x11c0] sm:%s1950]
                  %2528 = vst [vmem:[%s1958 + $0x8e0] sm:%s1950] %v2527
                  %v2529 = vld [vmem:[%s1957 + $0x11d0] sm:%s1950]
                  %2530 = vst [vmem:[%s1958 + $0x8e8] sm:%s1950] %v2529
                  %v2531 = vld [vmem:[%s1957 + $0x11e0] sm:%s1950]
                  %2532 = vst [vmem:[%s1958 + $0x8f0] sm:%s1950] %v2531
                  %v2533 = vld [vmem:[%s1957 + $0x11f0] sm:%s1950]
                  %2534 = vst [vmem:[%s1958 + $0x8f8] sm:%s1950] %v2533
                $region70: #{qnetwork_forward.7} parent=57 // loop_footer
                  %s1956 = sadd.s32 1, %s1952
                $region71: #{qnetwork_forward.7} parent=57 // loop_footer_branch
                  %1951 = sbr.rel target = $region67
                $region72: #{qnetwork_forward.7} parent=57 // loop_exit
                  _
              $region58: #{qnetwork_forward.7} parent=31 // pred_fallthru
                _
            $region32: #{qnetwork_forward.7} parent=27 // pred_fallthru
              _
            // Predicated region
            $region33: #{qnetwork_forward.7} parent=27 // pred_check
              _
            $region34: #{qnetwork_forward.7} parent=27 // pred_check_branch
              %172 = sbr.rel target = $region36
            $region35: #{qnetwork_forward.7} parent=27 // pred_region
              %s174 = ssub.s32 256, 1
              loop: start=0, step=1, limit=1
              $region37: #{qnetwork_forward.7} parent=35 // loop_pre_header
                _
              $region38: #{qnetwork_forward.7} parent=35 // loop_header
                %s176 = sphi 0, %s180
                %p177 = scmp.ge.s32.totalorder %s176, 1
                %s181 = sphi %s166, %s166
                %s182 = sphi %s163, %s163
              $region39: #{qnetwork_forward.7} parent=35 // loop_header_branch
                %179 = sbr.rel (%p177) target = $region43
              $region40: #{qnetwork_forward.7} parent=35 // loop_body
                %v183 = vld [vmem:[%s181] sm:%s174]
                %184 = vst [vmem:[%s182] sm:%s174] %v183
                %v185 = vld [vmem:[%s181 + $0x10] sm:%s174]
                %186 = vst [vmem:[%s182 + $0x8] sm:%s174] %v185
                %v187 = vld [vmem:[%s181 + $0x20] sm:%s174]
                %188 = vst [vmem:[%s182 + $0x10] sm:%s174] %v187
                %v189 = vld [vmem:[%s181 + $0x30] sm:%s174]
                %190 = vst [vmem:[%s182 + $0x18] sm:%s174] %v189
                %v191 = vld [vmem:[%s181 + $0x40] sm:%s174]
                %192 = vst [vmem:[%s182 + $0x20] sm:%s174] %v191
                %v193 = vld [vmem:[%s181 + $0x50] sm:%s174]
                %194 = vst [vmem:[%s182 + $0x28] sm:%s174] %v193
                %v195 = vld [vmem:[%s181 + $0x60] sm:%s174]
                %196 = vst [vmem:[%s182 + $0x30] sm:%s174] %v195
                %v197 = vld [vmem:[%s181 + $0x70] sm:%s174]
                %198 = vst [vmem:[%s182 + $0x38] sm:%s174] %v197
                %v199 = vld [vmem:[%s181 + $0x80] sm:%s174]
                %200 = vst [vmem:[%s182 + $0x40] sm:%s174] %v199
                %v201 = vld [vmem:[%s181 + $0x90] sm:%s174]
                %202 = vst [vmem:[%s182 + $0x48] sm:%s174] %v201
                %v203 = vld [vmem:[%s181 + $0xa0] sm:%s174]
                %204 = vst [vmem:[%s182 + $0x50] sm:%s174] %v203
                %v205 = vld [vmem:[%s181 + $0xb0] sm:%s174]
                %206 = vst [vmem:[%s182 + $0x58] sm:%s174] %v205
                %v207 = vld [vmem:[%s181 + $0xc0] sm:%s174]
                %208 = vst [vmem:[%s182 + $0x60] sm:%s174] %v207
                %v209 = vld [vmem:[%s181 + $0xd0] sm:%s174]
                %210 = vst [vmem:[%s182 + $0x68] sm:%s174] %v209
                %v211 = vld [vmem:[%s181 + $0xe0] sm:%s174]
                %212 = vst [vmem:[%s182 + $0x70] sm:%s174] %v211
                %v213 = vld [vmem:[%s181 + $0xf0] sm:%s174]
                %214 = vst [vmem:[%s182 + $0x78] sm:%s174] %v213
                %v215 = vld [vmem:[%s181 + $0x100] sm:%s174]
                %216 = vst [vmem:[%s182 + $0x80] sm:%s174] %v215
                %v217 = vld [vmem:[%s181 + $0x110] sm:%s174]
                %218 = vst [vmem:[%s182 + $0x88] sm:%s174] %v217
                %v219 = vld [vmem:[%s181 + $0x120] sm:%s174]
                %220 = vst [vmem:[%s182 + $0x90] sm:%s174] %v219
                %v221 = vld [vmem:[%s181 + $0x130] sm:%s174]
                %222 = vst [vmem:[%s182 + $0x98] sm:%s174] %v221
                %v223 = vld [vmem:[%s181 + $0x140] sm:%s174]
                %224 = vst [vmem:[%s182 + $0xa0] sm:%s174] %v223
                %v225 = vld [vmem:[%s181 + $0x150] sm:%s174]
                %226 = vst [vmem:[%s182 + $0xa8] sm:%s174] %v225
                %v227 = vld [vmem:[%s181 + $0x160] sm:%s174]
                %228 = vst [vmem:[%s182 + $0xb0] sm:%s174] %v227
                %v229 = vld [vmem:[%s181 + $0x170] sm:%s174]
                %230 = vst [vmem:[%s182 + $0xb8] sm:%s174] %v229
                %v231 = vld [vmem:[%s181 + $0x180] sm:%s174]
                %232 = vst [vmem:[%s182 + $0xc0] sm:%s174] %v231
                %v233 = vld [vmem:[%s181 + $0x190] sm:%s174]
                %234 = vst [vmem:[%s182 + $0xc8] sm:%s174] %v233
                %v235 = vld [vmem:[%s181 + $0x1a0] sm:%s174]
                %236 = vst [vmem:[%s182 + $0xd0] sm:%s174] %v235
                %v237 = vld [vmem:[%s181 + $0x1b0] sm:%s174]
                %238 = vst [vmem:[%s182 + $0xd8] sm:%s174] %v237
                %v239 = vld [vmem:[%s181 + $0x1c0] sm:%s174]
                %240 = vst [vmem:[%s182 + $0xe0] sm:%s174] %v239
                %v241 = vld [vmem:[%s181 + $0x1d0] sm:%s174]
                %242 = vst [vmem:[%s182 + $0xe8] sm:%s174] %v241
                %v243 = vld [vmem:[%s181 + $0x1e0] sm:%s174]
                %244 = vst [vmem:[%s182 + $0xf0] sm:%s174] %v243
                %v245 = vld [vmem:[%s181 + $0x1f0] sm:%s174]
                %246 = vst [vmem:[%s182 + $0xf8] sm:%s174] %v245
                %v247 = vld [vmem:[%s181 + $0x200] sm:%s174]
                %248 = vst [vmem:[%s182 + $0x100] sm:%s174] %v247
                %v249 = vld [vmem:[%s181 + $0x210] sm:%s174]
                %250 = vst [vmem:[%s182 + $0x108] sm:%s174] %v249
                %v251 = vld [vmem:[%s181 + $0x220] sm:%s174]
                %252 = vst [vmem:[%s182 + $0x110] sm:%s174] %v251
                %v253 = vld [vmem:[%s181 + $0x230] sm:%s174]
                %254 = vst [vmem:[%s182 + $0x118] sm:%s174] %v253
                %v255 = vld [vmem:[%s181 + $0x240] sm:%s174]
                %256 = vst [vmem:[%s182 + $0x120] sm:%s174] %v255
                %v257 = vld [vmem:[%s181 + $0x250] sm:%s174]
                %258 = vst [vmem:[%s182 + $0x128] sm:%s174] %v257
                %v259 = vld [vmem:[%s181 + $0x260] sm:%s174]
                %260 = vst [vmem:[%s182 + $0x130] sm:%s174] %v259
                %v261 = vld [vmem:[%s181 + $0x270] sm:%s174]
                %262 = vst [vmem:[%s182 + $0x138] sm:%s174] %v261
                %v263 = vld [vmem:[%s181 + $0x280] sm:%s174]
                %264 = vst [vmem:[%s182 + $0x140] sm:%s174] %v263
                %v265 = vld [vmem:[%s181 + $0x290] sm:%s174]
                %266 = vst [vmem:[%s182 + $0x148] sm:%s174] %v265
                %v267 = vld [vmem:[%s181 + $0x2a0] sm:%s174]
                %268 = vst [vmem:[%s182 + $0x150] sm:%s174] %v267
                %v269 = vld [vmem:[%s181 + $0x2b0] sm:%s174]
                %270 = vst [vmem:[%s182 + $0x158] sm:%s174] %v269
                %v271 = vld [vmem:[%s181 + $0x2c0] sm:%s174]
                %272 = vst [vmem:[%s182 + $0x160] sm:%s174] %v271
                %v273 = vld [vmem:[%s181 + $0x2d0] sm:%s174]
                %274 = vst [vmem:[%s182 + $0x168] sm:%s174] %v273
                %v275 = vld [vmem:[%s181 + $0x2e0] sm:%s174]
                %276 = vst [vmem:[%s182 + $0x170] sm:%s174] %v275
                %v277 = vld [vmem:[%s181 + $0x2f0] sm:%s174]
                %278 = vst [vmem:[%s182 + $0x178] sm:%s174] %v277
                %v279 = vld [vmem:[%s181 + $0x300] sm:%s174]
                %280 = vst [vmem:[%s182 + $0x180] sm:%s174] %v279
                %v281 = vld [vmem:[%s181 + $0x310] sm:%s174]
                %282 = vst [vmem:[%s182 + $0x188] sm:%s174] %v281
                %v283 = vld [vmem:[%s181 + $0x320] sm:%s174]
                %284 = vst [vmem:[%s182 + $0x190] sm:%s174] %v283
                %v285 = vld [vmem:[%s181 + $0x330] sm:%s174]
                %286 = vst [vmem:[%s182 + $0x198] sm:%s174] %v285
                %v287 = vld [vmem:[%s181 + $0x340] sm:%s174]
                %288 = vst [vmem:[%s182 + $0x1a0] sm:%s174] %v287
                %v289 = vld [vmem:[%s181 + $0x350] sm:%s174]
                %290 = vst [vmem:[%s182 + $0x1a8] sm:%s174] %v289
                %v291 = vld [vmem:[%s181 + $0x360] sm:%s174]
                %292 = vst [vmem:[%s182 + $0x1b0] sm:%s174] %v291
                %v293 = vld [vmem:[%s181 + $0x370] sm:%s174]
                %294 = vst [vmem:[%s182 + $0x1b8] sm:%s174] %v293
                %v295 = vld [vmem:[%s181 + $0x380] sm:%s174]
                %296 = vst [vmem:[%s182 + $0x1c0] sm:%s174] %v295
                %v297 = vld [vmem:[%s181 + $0x390] sm:%s174]
                %298 = vst [vmem:[%s182 + $0x1c8] sm:%s174] %v297
                %v299 = vld [vmem:[%s181 + $0x3a0] sm:%s174]
                %300 = vst [vmem:[%s182 + $0x1d0] sm:%s174] %v299
                %v301 = vld [vmem:[%s181 + $0x3b0] sm:%s174]
                %302 = vst [vmem:[%s182 + $0x1d8] sm:%s174] %v301
                %v303 = vld [vmem:[%s181 + $0x3c0] sm:%s174]
                %304 = vst [vmem:[%s182 + $0x1e0] sm:%s174] %v303
                %v305 = vld [vmem:[%s181 + $0x3d0] sm:%s174]
                %306 = vst [vmem:[%s182 + $0x1e8] sm:%s174] %v305
                %v307 = vld [vmem:[%s181 + $0x3e0] sm:%s174]
                %308 = vst [vmem:[%s182 + $0x1f0] sm:%s174] %v307
                %v309 = vld [vmem:[%s181 + $0x3f0] sm:%s174]
                %310 = vst [vmem:[%s182 + $0x1f8] sm:%s174] %v309
                %v311 = vld [vmem:[%s181 + $0x400] sm:%s174]
                %312 = vst [vmem:[%s182 + $0x200] sm:%s174] %v311
                %v313 = vld [vmem:[%s181 + $0x410] sm:%s174]
                %314 = vst [vmem:[%s182 + $0x208] sm:%s174] %v313
                %v315 = vld [vmem:[%s181 + $0x420] sm:%s174]
                %316 = vst [vmem:[%s182 + $0x210] sm:%s174] %v315
                %v317 = vld [vmem:[%s181 + $0x430] sm:%s174]
                %318 = vst [vmem:[%s182 + $0x218] sm:%s174] %v317
                %v319 = vld [vmem:[%s181 + $0x440] sm:%s174]
                %320 = vst [vmem:[%s182 + $0x220] sm:%s174] %v319
                %v321 = vld [vmem:[%s181 + $0x450] sm:%s174]
                %322 = vst [vmem:[%s182 + $0x228] sm:%s174] %v321
                %v323 = vld [vmem:[%s181 + $0x460] sm:%s174]
                %324 = vst [vmem:[%s182 + $0x230] sm:%s174] %v323
                %v325 = vld [vmem:[%s181 + $0x470] sm:%s174]
                %326 = vst [vmem:[%s182 + $0x238] sm:%s174] %v325
                %v327 = vld [vmem:[%s181 + $0x480] sm:%s174]
                %328 = vst [vmem:[%s182 + $0x240] sm:%s174] %v327
                %v329 = vld [vmem:[%s181 + $0x490] sm:%s174]
                %330 = vst [vmem:[%s182 + $0x248] sm:%s174] %v329
                %v331 = vld [vmem:[%s181 + $0x4a0] sm:%s174]
                %332 = vst [vmem:[%s182 + $0x250] sm:%s174] %v331
                %v333 = vld [vmem:[%s181 + $0x4b0] sm:%s174]
                %334 = vst [vmem:[%s182 + $0x258] sm:%s174] %v333
                %v335 = vld [vmem:[%s181 + $0x4c0] sm:%s174]
                %336 = vst [vmem:[%s182 + $0x260] sm:%s174] %v335
                %v337 = vld [vmem:[%s181 + $0x4d0] sm:%s174]
                %338 = vst [vmem:[%s182 + $0x268] sm:%s174] %v337
                %v339 = vld [vmem:[%s181 + $0x4e0] sm:%s174]
                %340 = vst [vmem:[%s182 + $0x270] sm:%s174] %v339
                %v341 = vld [vmem:[%s181 + $0x4f0] sm:%s174]
                %342 = vst [vmem:[%s182 + $0x278] sm:%s174] %v341
                %v343 = vld [vmem:[%s181 + $0x500] sm:%s174]
                %344 = vst [vmem:[%s182 + $0x280] sm:%s174] %v343
                %v345 = vld [vmem:[%s181 + $0x510] sm:%s174]
                %346 = vst [vmem:[%s182 + $0x288] sm:%s174] %v345
                %v347 = vld [vmem:[%s181 + $0x520] sm:%s174]
                %348 = vst [vmem:[%s182 + $0x290] sm:%s174] %v347
                %v349 = vld [vmem:[%s181 + $0x530] sm:%s174]
                %350 = vst [vmem:[%s182 + $0x298] sm:%s174] %v349
                %v351 = vld [vmem:[%s181 + $0x540] sm:%s174]
                %352 = vst [vmem:[%s182 + $0x2a0] sm:%s174] %v351
                %v353 = vld [vmem:[%s181 + $0x550] sm:%s174]
                %354 = vst [vmem:[%s182 + $0x2a8] sm:%s174] %v353
                %v355 = vld [vmem:[%s181 + $0x560] sm:%s174]
                %356 = vst [vmem:[%s182 + $0x2b0] sm:%s174] %v355
                %v357 = vld [vmem:[%s181 + $0x570] sm:%s174]
                %358 = vst [vmem:[%s182 + $0x2b8] sm:%s174] %v357
                %v359 = vld [vmem:[%s181 + $0x580] sm:%s174]
                %360 = vst [vmem:[%s182 + $0x2c0] sm:%s174] %v359
                %v361 = vld [vmem:[%s181 + $0x590] sm:%s174]
                %362 = vst [vmem:[%s182 + $0x2c8] sm:%s174] %v361
                %v363 = vld [vmem:[%s181 + $0x5a0] sm:%s174]
                %364 = vst [vmem:[%s182 + $0x2d0] sm:%s174] %v363
                %v365 = vld [vmem:[%s181 + $0x5b0] sm:%s174]
                %366 = vst [vmem:[%s182 + $0x2d8] sm:%s174] %v365
                %v367 = vld [vmem:[%s181 + $0x5c0] sm:%s174]
                %368 = vst [vmem:[%s182 + $0x2e0] sm:%s174] %v367
                %v369 = vld [vmem:[%s181 + $0x5d0] sm:%s174]
                %370 = vst [vmem:[%s182 + $0x2e8] sm:%s174] %v369
                %v371 = vld [vmem:[%s181 + $0x5e0] sm:%s174]
                %372 = vst [vmem:[%s182 + $0x2f0] sm:%s174] %v371
                %v373 = vld [vmem:[%s181 + $0x5f0] sm:%s174]
                %374 = vst [vmem:[%s182 + $0x2f8] sm:%s174] %v373
                %v375 = vld [vmem:[%s181 + $0x600] sm:%s174]
                %376 = vst [vmem:[%s182 + $0x300] sm:%s174] %v375
                %v377 = vld [vmem:[%s181 + $0x610] sm:%s174]
                %378 = vst [vmem:[%s182 + $0x308] sm:%s174] %v377
                %v379 = vld [vmem:[%s181 + $0x620] sm:%s174]
                %380 = vst [vmem:[%s182 + $0x310] sm:%s174] %v379
                %v381 = vld [vmem:[%s181 + $0x630] sm:%s174]
                %382 = vst [vmem:[%s182 + $0x318] sm:%s174] %v381
                %v383 = vld [vmem:[%s181 + $0x640] sm:%s174]
                %384 = vst [vmem:[%s182 + $0x320] sm:%s174] %v383
                %v385 = vld [vmem:[%s181 + $0x650] sm:%s174]
                %386 = vst [vmem:[%s182 + $0x328] sm:%s174] %v385
                %v387 = vld [vmem:[%s181 + $0x660] sm:%s174]
                %388 = vst [vmem:[%s182 + $0x330] sm:%s174] %v387
                %v389 = vld [vmem:[%s181 + $0x670] sm:%s174]
                %390 = vst [vmem:[%s182 + $0x338] sm:%s174] %v389
                %v391 = vld [vmem:[%s181 + $0x680] sm:%s174]
                %392 = vst [vmem:[%s182 + $0x340] sm:%s174] %v391
                %v393 = vld [vmem:[%s181 + $0x690] sm:%s174]
                %394 = vst [vmem:[%s182 + $0x348] sm:%s174] %v393
                %v395 = vld [vmem:[%s181 + $0x6a0] sm:%s174]
                %396 = vst [vmem:[%s182 + $0x350] sm:%s174] %v395
                %v397 = vld [vmem:[%s181 + $0x6b0] sm:%s174]
                %398 = vst [vmem:[%s182 + $0x358] sm:%s174] %v397
                %v399 = vld [vmem:[%s181 + $0x6c0] sm:%s174]
                %400 = vst [vmem:[%s182 + $0x360] sm:%s174] %v399
                %v401 = vld [vmem:[%s181 + $0x6d0] sm:%s174]
                %402 = vst [vmem:[%s182 + $0x368] sm:%s174] %v401
                %v403 = vld [vmem:[%s181 + $0x6e0] sm:%s174]
                %404 = vst [vmem:[%s182 + $0x370] sm:%s174] %v403
                %v405 = vld [vmem:[%s181 + $0x6f0] sm:%s174]
                %406 = vst [vmem:[%s182 + $0x378] sm:%s174] %v405
                %v407 = vld [vmem:[%s181 + $0x700] sm:%s174]
                %408 = vst [vmem:[%s182 + $0x380] sm:%s174] %v407
                %v409 = vld [vmem:[%s181 + $0x710] sm:%s174]
                %410 = vst [vmem:[%s182 + $0x388] sm:%s174] %v409
                %v411 = vld [vmem:[%s181 + $0x720] sm:%s174]
                %412 = vst [vmem:[%s182 + $0x390] sm:%s174] %v411
                %v413 = vld [vmem:[%s181 + $0x730] sm:%s174]
                %414 = vst [vmem:[%s182 + $0x398] sm:%s174] %v413
                %v415 = vld [vmem:[%s181 + $0x740] sm:%s174]
                %416 = vst [vmem:[%s182 + $0x3a0] sm:%s174] %v415
                %v417 = vld [vmem:[%s181 + $0x750] sm:%s174]
                %418 = vst [vmem:[%s182 + $0x3a8] sm:%s174] %v417
                %v419 = vld [vmem:[%s181 + $0x760] sm:%s174]
                %420 = vst [vmem:[%s182 + $0x3b0] sm:%s174] %v419
                %v421 = vld [vmem:[%s181 + $0x770] sm:%s174]
                %422 = vst [vmem:[%s182 + $0x3b8] sm:%s174] %v421
                %v423 = vld [vmem:[%s181 + $0x780] sm:%s174]
                %424 = vst [vmem:[%s182 + $0x3c0] sm:%s174] %v423
                %v425 = vld [vmem:[%s181 + $0x790] sm:%s174]
                %426 = vst [vmem:[%s182 + $0x3c8] sm:%s174] %v425
                %v427 = vld [vmem:[%s181 + $0x7a0] sm:%s174]
                %428 = vst [vmem:[%s182 + $0x3d0] sm:%s174] %v427
                %v429 = vld [vmem:[%s181 + $0x7b0] sm:%s174]
                %430 = vst [vmem:[%s182 + $0x3d8] sm:%s174] %v429
                %v431 = vld [vmem:[%s181 + $0x7c0] sm:%s174]
                %432 = vst [vmem:[%s182 + $0x3e0] sm:%s174] %v431
                %v433 = vld [vmem:[%s181 + $0x7d0] sm:%s174]
                %434 = vst [vmem:[%s182 + $0x3e8] sm:%s174] %v433
                %v435 = vld [vmem:[%s181 + $0x7e0] sm:%s174]
                %436 = vst [vmem:[%s182 + $0x3f0] sm:%s174] %v435
                %v437 = vld [vmem:[%s181 + $0x7f0] sm:%s174]
                %438 = vst [vmem:[%s182 + $0x3f8] sm:%s174] %v437
                %v439 = vld [vmem:[%s181 + $0x800] sm:%s174]
                %440 = vst [vmem:[%s182 + $0x400] sm:%s174] %v439
                %v441 = vld [vmem:[%s181 + $0x810] sm:%s174]
                %442 = vst [vmem:[%s182 + $0x408] sm:%s174] %v441
                %v443 = vld [vmem:[%s181 + $0x820] sm:%s174]
                %444 = vst [vmem:[%s182 + $0x410] sm:%s174] %v443
                %v445 = vld [vmem:[%s181 + $0x830] sm:%s174]
                %446 = vst [vmem:[%s182 + $0x418] sm:%s174] %v445
                %v447 = vld [vmem:[%s181 + $0x840] sm:%s174]
                %448 = vst [vmem:[%s182 + $0x420] sm:%s174] %v447
                %v449 = vld [vmem:[%s181 + $0x850] sm:%s174]
                %450 = vst [vmem:[%s182 + $0x428] sm:%s174] %v449
                %v451 = vld [vmem:[%s181 + $0x860] sm:%s174]
                %452 = vst [vmem:[%s182 + $0x430] sm:%s174] %v451
                %v453 = vld [vmem:[%s181 + $0x870] sm:%s174]
                %454 = vst [vmem:[%s182 + $0x438] sm:%s174] %v453
                %v455 = vld [vmem:[%s181 + $0x880] sm:%s174]
                %456 = vst [vmem:[%s182 + $0x440] sm:%s174] %v455
                %v457 = vld [vmem:[%s181 + $0x890] sm:%s174]
                %458 = vst [vmem:[%s182 + $0x448] sm:%s174] %v457
                %v459 = vld [vmem:[%s181 + $0x8a0] sm:%s174]
                %460 = vst [vmem:[%s182 + $0x450] sm:%s174] %v459
                %v461 = vld [vmem:[%s181 + $0x8b0] sm:%s174]
                %462 = vst [vmem:[%s182 + $0x458] sm:%s174] %v461
                %v463 = vld [vmem:[%s181 + $0x8c0] sm:%s174]
                %464 = vst [vmem:[%s182 + $0x460] sm:%s174] %v463
                %v465 = vld [vmem:[%s181 + $0x8d0] sm:%s174]
                %466 = vst [vmem:[%s182 + $0x468] sm:%s174] %v465
                %v467 = vld [vmem:[%s181 + $0x8e0] sm:%s174]
                %468 = vst [vmem:[%s182 + $0x470] sm:%s174] %v467
                %v469 = vld [vmem:[%s181 + $0x8f0] sm:%s174]
                %470 = vst [vmem:[%s182 + $0x478] sm:%s174] %v469
                %v471 = vld [vmem:[%s181 + $0x900] sm:%s174]
                %472 = vst [vmem:[%s182 + $0x480] sm:%s174] %v471
                %v473 = vld [vmem:[%s181 + $0x910] sm:%s174]
                %474 = vst [vmem:[%s182 + $0x488] sm:%s174] %v473
                %v475 = vld [vmem:[%s181 + $0x920] sm:%s174]
                %476 = vst [vmem:[%s182 + $0x490] sm:%s174] %v475
                %v477 = vld [vmem:[%s181 + $0x930] sm:%s174]
                %478 = vst [vmem:[%s182 + $0x498] sm:%s174] %v477
                %v479 = vld [vmem:[%s181 + $0x940] sm:%s174]
                %480 = vst [vmem:[%s182 + $0x4a0] sm:%s174] %v479
                %v481 = vld [vmem:[%s181 + $0x950] sm:%s174]
                %482 = vst [vmem:[%s182 + $0x4a8] sm:%s174] %v481
                %v483 = vld [vmem:[%s181 + $0x960] sm:%s174]
                %484 = vst [vmem:[%s182 + $0x4b0] sm:%s174] %v483
                %v485 = vld [vmem:[%s181 + $0x970] sm:%s174]
                %486 = vst [vmem:[%s182 + $0x4b8] sm:%s174] %v485
                %v487 = vld [vmem:[%s181 + $0x980] sm:%s174]
                %488 = vst [vmem:[%s182 + $0x4c0] sm:%s174] %v487
                %v489 = vld [vmem:[%s181 + $0x990] sm:%s174]
                %490 = vst [vmem:[%s182 + $0x4c8] sm:%s174] %v489
                %v491 = vld [vmem:[%s181 + $0x9a0] sm:%s174]
                %492 = vst [vmem:[%s182 + $0x4d0] sm:%s174] %v491
                %v493 = vld [vmem:[%s181 + $0x9b0] sm:%s174]
                %494 = vst [vmem:[%s182 + $0x4d8] sm:%s174] %v493
                %v495 = vld [vmem:[%s181 + $0x9c0] sm:%s174]
                %496 = vst [vmem:[%s182 + $0x4e0] sm:%s174] %v495
                %v497 = vld [vmem:[%s181 + $0x9d0] sm:%s174]
                %498 = vst [vmem:[%s182 + $0x4e8] sm:%s174] %v497
                %v499 = vld [vmem:[%s181 + $0x9e0] sm:%s174]
                %500 = vst [vmem:[%s182 + $0x4f0] sm:%s174] %v499
                %v501 = vld [vmem:[%s181 + $0x9f0] sm:%s174]
                %502 = vst [vmem:[%s182 + $0x4f8] sm:%s174] %v501
                %v503 = vld [vmem:[%s181 + $0xa00] sm:%s174]
                %504 = vst [vmem:[%s182 + $0x500] sm:%s174] %v503
                %v505 = vld [vmem:[%s181 + $0xa10] sm:%s174]
                %506 = vst [vmem:[%s182 + $0x508] sm:%s174] %v505
                %v507 = vld [vmem:[%s181 + $0xa20] sm:%s174]
                %508 = vst [vmem:[%s182 + $0x510] sm:%s174] %v507
                %v509 = vld [vmem:[%s181 + $0xa30] sm:%s174]
                %510 = vst [vmem:[%s182 + $0x518] sm:%s174] %v509
                %v511 = vld [vmem:[%s181 + $0xa40] sm:%s174]
                %512 = vst [vmem:[%s182 + $0x520] sm:%s174] %v511
                %v513 = vld [vmem:[%s181 + $0xa50] sm:%s174]
                %514 = vst [vmem:[%s182 + $0x528] sm:%s174] %v513
                %v515 = vld [vmem:[%s181 + $0xa60] sm:%s174]
                %516 = vst [vmem:[%s182 + $0x530] sm:%s174] %v515
                %v517 = vld [vmem:[%s181 + $0xa70] sm:%s174]
                %518 = vst [vmem:[%s182 + $0x538] sm:%s174] %v517
                %v519 = vld [vmem:[%s181 + $0xa80] sm:%s174]
                %520 = vst [vmem:[%s182 + $0x540] sm:%s174] %v519
                %v521 = vld [vmem:[%s181 + $0xa90] sm:%s174]
                %522 = vst [vmem:[%s182 + $0x548] sm:%s174] %v521
                %v523 = vld [vmem:[%s181 + $0xaa0] sm:%s174]
                %524 = vst [vmem:[%s182 + $0x550] sm:%s174] %v523
                %v525 = vld [vmem:[%s181 + $0xab0] sm:%s174]
                %526 = vst [vmem:[%s182 + $0x558] sm:%s174] %v525
                %v527 = vld [vmem:[%s181 + $0xac0] sm:%s174]
                %528 = vst [vmem:[%s182 + $0x560] sm:%s174] %v527
                %v529 = vld [vmem:[%s181 + $0xad0] sm:%s174]
                %530 = vst [vmem:[%s182 + $0x568] sm:%s174] %v529
                %v531 = vld [vmem:[%s181 + $0xae0] sm:%s174]
                %532 = vst [vmem:[%s182 + $0x570] sm:%s174] %v531
                %v533 = vld [vmem:[%s181 + $0xaf0] sm:%s174]
                %534 = vst [vmem:[%s182 + $0x578] sm:%s174] %v533
                %v535 = vld [vmem:[%s181 + $0xb00] sm:%s174]
                %536 = vst [vmem:[%s182 + $0x580] sm:%s174] %v535
                %v537 = vld [vmem:[%s181 + $0xb10] sm:%s174]
                %538 = vst [vmem:[%s182 + $0x588] sm:%s174] %v537
                %v539 = vld [vmem:[%s181 + $0xb20] sm:%s174]
                %540 = vst [vmem:[%s182 + $0x590] sm:%s174] %v539
                %v541 = vld [vmem:[%s181 + $0xb30] sm:%s174]
                %542 = vst [vmem:[%s182 + $0x598] sm:%s174] %v541
                %v543 = vld [vmem:[%s181 + $0xb40] sm:%s174]
                %544 = vst [vmem:[%s182 + $0x5a0] sm:%s174] %v543
                %v545 = vld [vmem:[%s181 + $0xb50] sm:%s174]
                %546 = vst [vmem:[%s182 + $0x5a8] sm:%s174] %v545
                %v547 = vld [vmem:[%s181 + $0xb60] sm:%s174]
                %548 = vst [vmem:[%s182 + $0x5b0] sm:%s174] %v547
                %v549 = vld [vmem:[%s181 + $0xb70] sm:%s174]
                %550 = vst [vmem:[%s182 + $0x5b8] sm:%s174] %v549
                %v551 = vld [vmem:[%s181 + $0xb80] sm:%s174]
                %552 = vst [vmem:[%s182 + $0x5c0] sm:%s174] %v551
                %v553 = vld [vmem:[%s181 + $0xb90] sm:%s174]
                %554 = vst [vmem:[%s182 + $0x5c8] sm:%s174] %v553
                %v555 = vld [vmem:[%s181 + $0xba0] sm:%s174]
                %556 = vst [vmem:[%s182 + $0x5d0] sm:%s174] %v555
                %v557 = vld [vmem:[%s181 + $0xbb0] sm:%s174]
                %558 = vst [vmem:[%s182 + $0x5d8] sm:%s174] %v557
                %v559 = vld [vmem:[%s181 + $0xbc0] sm:%s174]
                %560 = vst [vmem:[%s182 + $0x5e0] sm:%s174] %v559
                %v561 = vld [vmem:[%s181 + $0xbd0] sm:%s174]
                %562 = vst [vmem:[%s182 + $0x5e8] sm:%s174] %v561
                %v563 = vld [vmem:[%s181 + $0xbe0] sm:%s174]
                %564 = vst [vmem:[%s182 + $0x5f0] sm:%s174] %v563
                %v565 = vld [vmem:[%s181 + $0xbf0] sm:%s174]
                %566 = vst [vmem:[%s182 + $0x5f8] sm:%s174] %v565
                %v567 = vld [vmem:[%s181 + $0xc00] sm:%s174]
                %568 = vst [vmem:[%s182 + $0x600] sm:%s174] %v567
                %v569 = vld [vmem:[%s181 + $0xc10] sm:%s174]
                %570 = vst [vmem:[%s182 + $0x608] sm:%s174] %v569
                %v571 = vld [vmem:[%s181 + $0xc20] sm:%s174]
                %572 = vst [vmem:[%s182 + $0x610] sm:%s174] %v571
                %v573 = vld [vmem:[%s181 + $0xc30] sm:%s174]
                %574 = vst [vmem:[%s182 + $0x618] sm:%s174] %v573
                %v575 = vld [vmem:[%s181 + $0xc40] sm:%s174]
                %576 = vst [vmem:[%s182 + $0x620] sm:%s174] %v575
                %v577 = vld [vmem:[%s181 + $0xc50] sm:%s174]
                %578 = vst [vmem:[%s182 + $0x628] sm:%s174] %v577
                %v579 = vld [vmem:[%s181 + $0xc60] sm:%s174]
                %580 = vst [vmem:[%s182 + $0x630] sm:%s174] %v579
                %v581 = vld [vmem:[%s181 + $0xc70] sm:%s174]
                %582 = vst [vmem:[%s182 + $0x638] sm:%s174] %v581
                %v583 = vld [vmem:[%s181 + $0xc80] sm:%s174]
                %584 = vst [vmem:[%s182 + $0x640] sm:%s174] %v583
                %v585 = vld [vmem:[%s181 + $0xc90] sm:%s174]
                %586 = vst [vmem:[%s182 + $0x648] sm:%s174] %v585
                %v587 = vld [vmem:[%s181 + $0xca0] sm:%s174]
                %588 = vst [vmem:[%s182 + $0x650] sm:%s174] %v587
                %v589 = vld [vmem:[%s181 + $0xcb0] sm:%s174]
                %590 = vst [vmem:[%s182 + $0x658] sm:%s174] %v589
                %v591 = vld [vmem:[%s181 + $0xcc0] sm:%s174]
                %592 = vst [vmem:[%s182 + $0x660] sm:%s174] %v591
                %v593 = vld [vmem:[%s181 + $0xcd0] sm:%s174]
                %594 = vst [vmem:[%s182 + $0x668] sm:%s174] %v593
                %v595 = vld [vmem:[%s181 + $0xce0] sm:%s174]
                %596 = vst [vmem:[%s182 + $0x670] sm:%s174] %v595
                %v597 = vld [vmem:[%s181 + $0xcf0] sm:%s174]
                %598 = vst [vmem:[%s182 + $0x678] sm:%s174] %v597
                %v599 = vld [vmem:[%s181 + $0xd00] sm:%s174]
                %600 = vst [vmem:[%s182 + $0x680] sm:%s174] %v599
                %v601 = vld [vmem:[%s181 + $0xd10] sm:%s174]
                %602 = vst [vmem:[%s182 + $0x688] sm:%s174] %v601
                %v603 = vld [vmem:[%s181 + $0xd20] sm:%s174]
                %604 = vst [vmem:[%s182 + $0x690] sm:%s174] %v603
                %v605 = vld [vmem:[%s181 + $0xd30] sm:%s174]
                %606 = vst [vmem:[%s182 + $0x698] sm:%s174] %v605
                %v607 = vld [vmem:[%s181 + $0xd40] sm:%s174]
                %608 = vst [vmem:[%s182 + $0x6a0] sm:%s174] %v607
                %v609 = vld [vmem:[%s181 + $0xd50] sm:%s174]
                %610 = vst [vmem:[%s182 + $0x6a8] sm:%s174] %v609
                %v611 = vld [vmem:[%s181 + $0xd60] sm:%s174]
                %612 = vst [vmem:[%s182 + $0x6b0] sm:%s174] %v611
                %v613 = vld [vmem:[%s181 + $0xd70] sm:%s174]
                %614 = vst [vmem:[%s182 + $0x6b8] sm:%s174] %v613
                %v615 = vld [vmem:[%s181 + $0xd80] sm:%s174]
                %616 = vst [vmem:[%s182 + $0x6c0] sm:%s174] %v615
                %v617 = vld [vmem:[%s181 + $0xd90] sm:%s174]
                %618 = vst [vmem:[%s182 + $0x6c8] sm:%s174] %v617
                %v619 = vld [vmem:[%s181 + $0xda0] sm:%s174]
                %620 = vst [vmem:[%s182 + $0x6d0] sm:%s174] %v619
                %v621 = vld [vmem:[%s181 + $0xdb0] sm:%s174]
                %622 = vst [vmem:[%s182 + $0x6d8] sm:%s174] %v621
                %v623 = vld [vmem:[%s181 + $0xdc0] sm:%s174]
                %624 = vst [vmem:[%s182 + $0x6e0] sm:%s174] %v623
                %v625 = vld [vmem:[%s181 + $0xdd0] sm:%s174]
                %626 = vst [vmem:[%s182 + $0x6e8] sm:%s174] %v625
                %v627 = vld [vmem:[%s181 + $0xde0] sm:%s174]
                %628 = vst [vmem:[%s182 + $0x6f0] sm:%s174] %v627
                %v629 = vld [vmem:[%s181 + $0xdf0] sm:%s174]
                %630 = vst [vmem:[%s182 + $0x6f8] sm:%s174] %v629
                %v631 = vld [vmem:[%s181 + $0xe00] sm:%s174]
                %632 = vst [vmem:[%s182 + $0x700] sm:%s174] %v631
                %v633 = vld [vmem:[%s181 + $0xe10] sm:%s174]
                %634 = vst [vmem:[%s182 + $0x708] sm:%s174] %v633
                %v635 = vld [vmem:[%s181 + $0xe20] sm:%s174]
                %636 = vst [vmem:[%s182 + $0x710] sm:%s174] %v635
                %v637 = vld [vmem:[%s181 + $0xe30] sm:%s174]
                %638 = vst [vmem:[%s182 + $0x718] sm:%s174] %v637
                %v639 = vld [vmem:[%s181 + $0xe40] sm:%s174]
                %640 = vst [vmem:[%s182 + $0x720] sm:%s174] %v639
                %v641 = vld [vmem:[%s181 + $0xe50] sm:%s174]
                %642 = vst [vmem:[%s182 + $0x728] sm:%s174] %v641
                %v643 = vld [vmem:[%s181 + $0xe60] sm:%s174]
                %644 = vst [vmem:[%s182 + $0x730] sm:%s174] %v643
                %v645 = vld [vmem:[%s181 + $0xe70] sm:%s174]
                %646 = vst [vmem:[%s182 + $0x738] sm:%s174] %v645
                %v647 = vld [vmem:[%s181 + $0xe80] sm:%s174]
                %648 = vst [vmem:[%s182 + $0x740] sm:%s174] %v647
                %v649 = vld [vmem:[%s181 + $0xe90] sm:%s174]
                %650 = vst [vmem:[%s182 + $0x748] sm:%s174] %v649
                %v651 = vld [vmem:[%s181 + $0xea0] sm:%s174]
                %652 = vst [vmem:[%s182 + $0x750] sm:%s174] %v651
                %v653 = vld [vmem:[%s181 + $0xeb0] sm:%s174]
                %654 = vst [vmem:[%s182 + $0x758] sm:%s174] %v653
                %v655 = vld [vmem:[%s181 + $0xec0] sm:%s174]
                %656 = vst [vmem:[%s182 + $0x760] sm:%s174] %v655
                %v657 = vld [vmem:[%s181 + $0xed0] sm:%s174]
                %658 = vst [vmem:[%s182 + $0x768] sm:%s174] %v657
                %v659 = vld [vmem:[%s181 + $0xee0] sm:%s174]
                %660 = vst [vmem:[%s182 + $0x770] sm:%s174] %v659
                %v661 = vld [vmem:[%s181 + $0xef0] sm:%s174]
                %662 = vst [vmem:[%s182 + $0x778] sm:%s174] %v661
                %v663 = vld [vmem:[%s181 + $0xf00] sm:%s174]
                %664 = vst [vmem:[%s182 + $0x780] sm:%s174] %v663
                %v665 = vld [vmem:[%s181 + $0xf10] sm:%s174]
                %666 = vst [vmem:[%s182 + $0x788] sm:%s174] %v665
                %v667 = vld [vmem:[%s181 + $0xf20] sm:%s174]
                %668 = vst [vmem:[%s182 + $0x790] sm:%s174] %v667
                %v669 = vld [vmem:[%s181 + $0xf30] sm:%s174]
                %670 = vst [vmem:[%s182 + $0x798] sm:%s174] %v669
                %v671 = vld [vmem:[%s181 + $0xf40] sm:%s174]
                %672 = vst [vmem:[%s182 + $0x7a0] sm:%s174] %v671
                %v673 = vld [vmem:[%s181 + $0xf50] sm:%s174]
                %674 = vst [vmem:[%s182 + $0x7a8] sm:%s174] %v673
                %v675 = vld [vmem:[%s181 + $0xf60] sm:%s174]
                %676 = vst [vmem:[%s182 + $0x7b0] sm:%s174] %v675
                %v677 = vld [vmem:[%s181 + $0xf70] sm:%s174]
                %678 = vst [vmem:[%s182 + $0x7b8] sm:%s174] %v677
                %v679 = vld [vmem:[%s181 + $0xf80] sm:%s174]
                %680 = vst [vmem:[%s182 + $0x7c0] sm:%s174] %v679
                %v681 = vld [vmem:[%s181 + $0xf90] sm:%s174]
                %682 = vst [vmem:[%s182 + $0x7c8] sm:%s174] %v681
                %v683 = vld [vmem:[%s181 + $0xfa0] sm:%s174]
                %684 = vst [vmem:[%s182 + $0x7d0] sm:%s174] %v683
                %v685 = vld [vmem:[%s181 + $0xfb0] sm:%s174]
                %686 = vst [vmem:[%s182 + $0x7d8] sm:%s174] %v685
                %v687 = vld [vmem:[%s181 + $0xfc0] sm:%s174]
                %688 = vst [vmem:[%s182 + $0x7e0] sm:%s174] %v687
                %v689 = vld [vmem:[%s181 + $0xfd0] sm:%s174]
                %690 = vst [vmem:[%s182 + $0x7e8] sm:%s174] %v689
                %v691 = vld [vmem:[%s181 + $0xfe0] sm:%s174]
                %692 = vst [vmem:[%s182 + $0x7f0] sm:%s174] %v691
                %v693 = vld [vmem:[%s181 + $0xff0] sm:%s174]
                %694 = vst [vmem:[%s182 + $0x7f8] sm:%s174] %v693
                %v695 = vld [vmem:[%s181 + $0x1000] sm:%s174]
                %696 = vst [vmem:[%s182 + $0x800] sm:%s174] %v695
                %v697 = vld [vmem:[%s181 + $0x1010] sm:%s174]
                %698 = vst [vmem:[%s182 + $0x808] sm:%s174] %v697
                %v699 = vld [vmem:[%s181 + $0x1020] sm:%s174]
                %700 = vst [vmem:[%s182 + $0x810] sm:%s174] %v699
                %v701 = vld [vmem:[%s181 + $0x1030] sm:%s174]
                %702 = vst [vmem:[%s182 + $0x818] sm:%s174] %v701
                %v703 = vld [vmem:[%s181 + $0x1040] sm:%s174]
                %704 = vst [vmem:[%s182 + $0x820] sm:%s174] %v703
                %v705 = vld [vmem:[%s181 + $0x1050] sm:%s174]
                %706 = vst [vmem:[%s182 + $0x828] sm:%s174] %v705
                %v707 = vld [vmem:[%s181 + $0x1060] sm:%s174]
                %708 = vst [vmem:[%s182 + $0x830] sm:%s174] %v707
                %v709 = vld [vmem:[%s181 + $0x1070] sm:%s174]
                %710 = vst [vmem:[%s182 + $0x838] sm:%s174] %v709
                %v711 = vld [vmem:[%s181 + $0x1080] sm:%s174]
                %712 = vst [vmem:[%s182 + $0x840] sm:%s174] %v711
                %v713 = vld [vmem:[%s181 + $0x1090] sm:%s174]
                %714 = vst [vmem:[%s182 + $0x848] sm:%s174] %v713
                %v715 = vld [vmem:[%s181 + $0x10a0] sm:%s174]
                %716 = vst [vmem:[%s182 + $0x850] sm:%s174] %v715
                %v717 = vld [vmem:[%s181 + $0x10b0] sm:%s174]
                %718 = vst [vmem:[%s182 + $0x858] sm:%s174] %v717
                %v719 = vld [vmem:[%s181 + $0x10c0] sm:%s174]
                %720 = vst [vmem:[%s182 + $0x860] sm:%s174] %v719
                %v721 = vld [vmem:[%s181 + $0x10d0] sm:%s174]
                %722 = vst [vmem:[%s182 + $0x868] sm:%s174] %v721
                %v723 = vld [vmem:[%s181 + $0x10e0] sm:%s174]
                %724 = vst [vmem:[%s182 + $0x870] sm:%s174] %v723
                %v725 = vld [vmem:[%s181 + $0x10f0] sm:%s174]
                %726 = vst [vmem:[%s182 + $0x878] sm:%s174] %v725
                %v727 = vld [vmem:[%s181 + $0x1100] sm:%s174]
                %728 = vst [vmem:[%s182 + $0x880] sm:%s174] %v727
                %v729 = vld [vmem:[%s181 + $0x1110] sm:%s174]
                %730 = vst [vmem:[%s182 + $0x888] sm:%s174] %v729
                %v731 = vld [vmem:[%s181 + $0x1120] sm:%s174]
                %732 = vst [vmem:[%s182 + $0x890] sm:%s174] %v731
                %v733 = vld [vmem:[%s181 + $0x1130] sm:%s174]
                %734 = vst [vmem:[%s182 + $0x898] sm:%s174] %v733
                %v735 = vld [vmem:[%s181 + $0x1140] sm:%s174]
                %736 = vst [vmem:[%s182 + $0x8a0] sm:%s174] %v735
                %v737 = vld [vmem:[%s181 + $0x1150] sm:%s174]
                %738 = vst [vmem:[%s182 + $0x8a8] sm:%s174] %v737
                %v739 = vld [vmem:[%s181 + $0x1160] sm:%s174]
                %740 = vst [vmem:[%s182 + $0x8b0] sm:%s174] %v739
                %v741 = vld [vmem:[%s181 + $0x1170] sm:%s174]
                %742 = vst [vmem:[%s182 + $0x8b8] sm:%s174] %v741
                %v743 = vld [vmem:[%s181 + $0x1180] sm:%s174]
                %744 = vst [vmem:[%s182 + $0x8c0] sm:%s174] %v743
                %v745 = vld [vmem:[%s181 + $0x1190] sm:%s174]
                %746 = vst [vmem:[%s182 + $0x8c8] sm:%s174] %v745
                %v747 = vld [vmem:[%s181 + $0x11a0] sm:%s174]
                %748 = vst [vmem:[%s182 + $0x8d0] sm:%s174] %v747
                %v749 = vld [vmem:[%s181 + $0x11b0] sm:%s174]
                %750 = vst [vmem:[%s182 + $0x8d8] sm:%s174] %v749
                %v751 = vld [vmem:[%s181 + $0x11c0] sm:%s174]
                %752 = vst [vmem:[%s182 + $0x8e0] sm:%s174] %v751
                %v753 = vld [vmem:[%s181 + $0x11d0] sm:%s174]
                %754 = vst [vmem:[%s182 + $0x8e8] sm:%s174] %v753
                %v755 = vld [vmem:[%s181 + $0x11e0] sm:%s174]
                %756 = vst [vmem:[%s182 + $0x8f0] sm:%s174] %v755
                %v757 = vld [vmem:[%s181 + $0x11f0] sm:%s174]
                %758 = vst [vmem:[%s182 + $0x8f8] sm:%s174] %v757
              $region41: #{qnetwork_forward.7} parent=35 // loop_footer
                %s180 = sadd.s32 1, %s176
              $region42: #{qnetwork_forward.7} parent=35 // loop_footer_branch
                %175 = sbr.rel target = $region38
              $region43: #{qnetwork_forward.7} parent=35 // loop_exit
                _
            $region36: #{qnetwork_forward.7} parent=27 // pred_fallthru
              _
          $region28: #{qnetwork_forward.7} parent=23 // pred_fallthru
            _
          %2535 = vnop
        $region24: #{qnetwork_forward.7} parent=19 // pred_fallthru
          _
        // Predicated region
        $region73: #{qnetwork_forward.7} parent=19 // pred_check
          %p2536 = pneg %p77
        $region74: #{qnetwork_forward.7} parent=19 // pred_check_branch
          %2538 = sbr.rel (%p2536) target = $region76
        $region75: #{qnetwork_forward.7} parent=19 // pred_region
          %s2539 = smul.u32 2, %s10
          %p2540 = scmp.lt.s32.totalorder %s2539, 3
          %s2541 = scalar_select %p2540, %s2539, 3
          %s2542 = scalar_lea.vmem %s2, %s2541
          %s2543 = smul.u32 2, %s10
        $region76: #{qnetwork_forward.7} parent=19 // pred_fallthru
          _
        // Predicated region
        $region77: #{qnetwork_forward.7} parent=19 // pred_check
          %p2544 = pneg %p103
        $region78: #{qnetwork_forward.7} parent=19 // pred_check_branch
          %2546 = sbr.rel (%p2544) target = $region80
        $region79: #{qnetwork_forward.7} parent=19 // pred_region
          %s2547 = smul.u32 32, %s10
          %p2548 = scmp.lt.s32.totalorder %s2547, 63
          %s2549 = scalar_select %p2548, %s2547, 63
          %s2550 = smul.addr %s2549, 4
          %s2551 = scalar_lea.vmem %s3, %s2550
          %s2552 = smul.u32 32, %s10
        $region80: #{qnetwork_forward.7} parent=19 // pred_fallthru
          _
      $region20: #{qnetwork_forward.7} parent=5 // pred_fallthru
        _
      %p2553 = scmp.le.s32.totalorder 1, %s10
      %p2554 = scmp.lt.s32.totalorder %s10, 3
      %p2555 = pnand %p2553, %p2554
      %p2556 = pneg %p2555
      // Predicated region
      $region81: #{qnetwork_forward.7} parent=5 // pred_check
        _
      $region82: #{qnetwork_forward.7} parent=5 // pred_check_branch
        %2558 = sbr.rel (%p2555) target = $region84
      $region83: #{qnetwork_forward.7} parent=5 // pred_region
        %s2559 = ssub.s32 %s10, 1
        %s2560 = sand.u32 %s44, 1
        %s2561 = sand.u32 %s44, 1
        %s2562 = smul.addr %s2561, 2304
        %s2563 = scalar_lea.vmem [#allocation2], %s2562
        // Predicated region
        $region85: #{qnetwork_forward.7} parent=83 // pred_check
          %p2564 = pneg %p57
        $region86: #{qnetwork_forward.7} parent=83 // pred_check_branch
          %2566 = sbr.rel (%p2564) target = $region88
        $region87: #{qnetwork_forward.7} parent=83 // pred_region
          _
        $region88: #{qnetwork_forward.7} parent=83 // pred_fallthru
          _
        %p2567 = pneg %p31
        %p2568 = pneg %p28
        %s2569 = sand.u32 %s44, 1
        %s2570 = sand.u32 %s44, 1
        %s2571 = smul.addr %s2570, 2304
        %s2572 = scalar_lea.vmem [#allocation2], %s2571
        %p2573 = pneg %p57
        %p2574 = pneg %p54
        %s2575 = smul.u32 2, %s15
        %p2576 = scmp.lt.s32.totalorder %s2575, 3
        %s2577 = scalar_select %p2576, %s2575, 3
        %s2578 = scalar_lea.vmem %s2, %s2577
        %p2579 = pneg %p83
        %p2580 = pneg %p80
        %s2581 = smul.u32 32, %s15
        %p2582 = scmp.lt.s32.totalorder %s2581, 63
        %s2583 = scalar_select %p2582, %s2581, 63
        %s2584 = smul.addr %s2583, 4
        %s2585 = scalar_lea.vmem %s3, %s2584
        %p2586 = pneg %p109
        %p2587 = pneg %p106
        %p2588 = pneg %p135
        %p2589 = pneg %p132
        %p2590 = scmp.lt.s32.totalorder %s15, 1
        %s2591 = scalar_select %p2590, %s15, 1
        %s2592 = smul.addr %s2591, 2
        %s2593 = scalar_lea.vmem %s4, %s2592
        %s2594 = smul.u32 2, %s15
        %s2595 = smul.u32 2, %s15
        %p2596 = scmp.lt.s32.totalorder %s2595, 3
        %s2597 = scalar_select %p2596, %s2595, 3
        %s2598 = scalar_lea.vmem %s2, %s2597
        %s2599 = smul.u32 2, %s15
        %s2600 = smul.u32 32, %s15
        %p2601 = scmp.lt.s32.totalorder %s2600, 63
        %s2602 = scalar_select %p2601, %s2600, 63
        %s2603 = smul.addr %s2602, 4
        %s2604 = scalar_lea.vmem %s3, %s2603
        %s2605 = smul.u32 32, %s15
        %p2606 = scmp.lt.s32.totalorder %s15, 1
        %s2607 = scalar_select %p2606, %s15, 1
        %s2608 = smul.addr %s2607, 2
        %s2609 = scalar_lea.vmem %s4, %s2608
        %v2610 = vld [vmem:[%s0] sm:$0xff]
        %v2611 = vld [vmem:[%s0 + $0x8] sm:$0xff]
        %v2612 = vld [vmem:[%s0 + $0x10] sm:$0x3]
        %v2613 = vld [vmem:[%s2563] sm:$0xff]
        %v2614 = vld [vmem:[%s2563 + $0x8] sm:$0xff]
        %v2615 = vld [vmem:[%s2563 + $0x10] sm:$0xff]
        %v2616 = vld [vmem:[%s2563 + $0x18] sm:$0xff]
        %v2617 = vld [vmem:[%s2563 + $0x20] sm:$0xff]
        %v2618 = vld [vmem:[%s2563 + $0x28] sm:$0xff]
        %v2619 = vld [vmem:[%s2563 + $0x30] sm:$0xff]
        %v2620 = vld [vmem:[%s2563 + $0x38] sm:$0xff]
        %v2621 = vld [vmem:[%s2563 + $0x40] sm:$0xff]
        %v2622 = vld [vmem:[%s2563 + $0x48] sm:$0xff]
        %v2623 = vld [vmem:[%s2563 + $0x50] sm:$0xff]
        %v2624 = vld [vmem:[%s2563 + $0x58] sm:$0xff]
        %v2625 = vld [vmem:[%s2563 + $0x60] sm:$0xff]
        %v2626 = vld [vmem:[%s2563 + $0x68] sm:$0xff]
        %v2627 = vld [vmem:[%s2563 + $0x70] sm:$0xff]
        %v2628 = vld [vmem:[%s2563 + $0x78] sm:$0xff]
        %v2629 = vld [vmem:[%s2563 + $0x80] sm:$0xff]
        %v2630 = vld [vmem:[%s2563 + $0x88] sm:$0xff]
        %v2631 = vld [vmem:[%s2563 + $0x90] sm:$0xff]
        %v2632 = vld [vmem:[%s2563 + $0x98] sm:$0xff]
        %v2633 = vld [vmem:[%s2563 + $0xa0] sm:$0xff]
        %v2634 = vld [vmem:[%s2563 + $0xa8] sm:$0xff]
        %v2635 = vld [vmem:[%s2563 + $0xb0] sm:$0xff]
        %v2636 = vld [vmem:[%s2563 + $0xb8] sm:$0xff]
        %v2637 = vld [vmem:[%s2563 + $0xc0] sm:$0xff]
        %v2638 = vld [vmem:[%s2563 + $0xc8] sm:$0xff]
        %v2639 = vld [vmem:[%s2563 + $0xd0] sm:$0xff]
        %v2640 = vld [vmem:[%s2563 + $0xd8] sm:$0xff]
        %v2641 = vld [vmem:[%s2563 + $0xe0] sm:$0xff]
        %v2642 = vld [vmem:[%s2563 + $0xe8] sm:$0xff]
        %v2643 = vld [vmem:[%s2563 + $0xf0] sm:$0xff]
        %v2644 = vld [vmem:[%s2563 + $0xf8] sm:$0xff]
        %v2645 = vld [vmem:[%s2563 + $0x100] sm:$0xff]
        %v2646 = vld [vmem:[%s2563 + $0x108] sm:$0xff]
        %v2647 = vld [vmem:[%s2563 + $0x110] sm:$0xff]
        %v2648 = vld [vmem:[%s2563 + $0x118] sm:$0xff]
        %v2649 = vld [vmem:[%s2563 + $0x120] sm:$0xff]
        %v2650 = vld [vmem:[%s2563 + $0x128] sm:$0xff]
        %v2651 = vld [vmem:[%s2563 + $0x130] sm:$0xff]
        %v2652 = vld [vmem:[%s2563 + $0x138] sm:$0xff]
        %v2653 = vld [vmem:[%s2563 + $0x140] sm:$0xff]
        %v2654 = vld [vmem:[%s2563 + $0x148] sm:$0xff]
        %v2655 = vld [vmem:[%s2563 + $0x150] sm:$0xff]
        %v2656 = vld [vmem:[%s2563 + $0x158] sm:$0xff]
        %v2657 = vld [vmem:[%s2563 + $0x160] sm:$0xff]
        %v2658 = vld [vmem:[%s2563 + $0x168] sm:$0xff]
        %v2659 = vld [vmem:[%s2563 + $0x170] sm:$0xff]
        %v2660 = vld [vmem:[%s2563 + $0x178] sm:$0xff]
        %v2661 = vld [vmem:[%s2563 + $0x180] sm:$0xff]
        %v2662 = vld [vmem:[%s2563 + $0x188] sm:$0xff]
        %v2663 = vld [vmem:[%s2563 + $0x190] sm:$0xff]
        %v2664 = vld [vmem:[%s2563 + $0x198] sm:$0xff]
        %v2665 = vld [vmem:[%s2563 + $0x1a0] sm:$0xff]
        %v2666 = vld [vmem:[%s2563 + $0x1a8] sm:$0xff]
        %v2667 = vld [vmem:[%s2563 + $0x1b0] sm:$0xff]
        %v2668 = vld [vmem:[%s2563 + $0x1b8] sm:$0xff]
        %v2669 = vld [vmem:[%s2563 + $0x1c0] sm:$0xff]
        %v2670 = vld [vmem:[%s2563 + $0x1c8] sm:$0xff]
        %v2671 = vld [vmem:[%s2563 + $0x1d0] sm:$0xff]
        %v2672 = vld [vmem:[%s2563 + $0x1d8] sm:$0xff]
        %v2673 = vld [vmem:[%s2563 + $0x1e0] sm:$0xff]
        %v2674 = vld [vmem:[%s2563 + $0x1e8] sm:$0xff]
        %v2675 = vld [vmem:[%s2563 + $0x1f0] sm:$0xff]
        %v2676 = vld [vmem:[%s2563 + $0x1f8] sm:$0xff]
        %v2677 = vld [vmem:[%s2563 + $0x200] sm:$0xff]
        %v2678 = vld [vmem:[%s2563 + $0x208] sm:$0xff]
        %v2679 = vld [vmem:[%s2563 + $0x210] sm:$0xff]
        %v2680 = vld [vmem:[%s2563 + $0x218] sm:$0xff]
        %v2681 = vld [vmem:[%s2563 + $0x220] sm:$0xff]
        %v2682 = vld [vmem:[%s2563 + $0x228] sm:$0xff]
        %v2683 = vld [vmem:[%s2563 + $0x230] sm:$0xff]
        %v2684 = vld [vmem:[%s2563 + $0x238] sm:$0xff]
        %v2685 = vld [vmem:[%s2563 + $0x240] sm:$0xff]
        %v2686 = vld [vmem:[%s2563 + $0x248] sm:$0xff]
        %v2687 = vld [vmem:[%s2563 + $0x250] sm:$0xff]
        %v2688 = vld [vmem:[%s2563 + $0x258] sm:$0xff]
        %v2689 = vld [vmem:[%s2563 + $0x260] sm:$0xff]
        %v2690 = vld [vmem:[%s2563 + $0x268] sm:$0xff]
        %v2691 = vld [vmem:[%s2563 + $0x270] sm:$0xff]
        %v2692 = vld [vmem:[%s2563 + $0x278] sm:$0xff]
        %v2693 = vld [vmem:[%s2563 + $0x280] sm:$0xff]
        %v2694 = vld [vmem:[%s2563 + $0x288] sm:$0xff]
        %v2695 = vld [vmem:[%s2563 + $0x290] sm:$0xff]
        %v2696 = vld [vmem:[%s2563 + $0x298] sm:$0xff]
        %v2697 = vld [vmem:[%s2563 + $0x2a0] sm:$0xff]
        %v2698 = vld [vmem:[%s2563 + $0x2a8] sm:$0xff]
        %v2699 = vld [vmem:[%s2563 + $0x2b0] sm:$0xff]
        %v2700 = vld [vmem:[%s2563 + $0x2b8] sm:$0xff]
        %v2701 = vld [vmem:[%s2563 + $0x2c0] sm:$0xff]
        %v2702 = vld [vmem:[%s2563 + $0x2c8] sm:$0xff]
        %v2703 = vld [vmem:[%s2563 + $0x2d0] sm:$0xff]
        %v2704 = vld [vmem:[%s2563 + $0x2d8] sm:$0xff]
        %v2705 = vld [vmem:[%s2563 + $0x2e0] sm:$0xff]
        %v2706 = vld [vmem:[%s2563 + $0x2e8] sm:$0xff]
        %v2707 = vld [vmem:[%s2563 + $0x2f0] sm:$0xff]
        %v2708 = vld [vmem:[%s2563 + $0x2f8] sm:$0xff]
        %v2709 = vld [vmem:[%s2563 + $0x300] sm:$0xff]
        %v2710 = vld [vmem:[%s2563 + $0x308] sm:$0xff]
        %v2711 = vld [vmem:[%s2563 + $0x310] sm:$0xff]
        %v2712 = vld [vmem:[%s2563 + $0x318] sm:$0xff]
        %v2713 = vld [vmem:[%s2563 + $0x320] sm:$0xff]
        %v2714 = vld [vmem:[%s2563 + $0x328] sm:$0xff]
        %v2715 = vld [vmem:[%s2563 + $0x330] sm:$0xff]
        %v2716 = vld [vmem:[%s2563 + $0x338] sm:$0xff]
        %v2717 = vld [vmem:[%s2563 + $0x340] sm:$0xff]
        %v2718 = vld [vmem:[%s2563 + $0x348] sm:$0xff]
        %v2719 = vld [vmem:[%s2563 + $0x350] sm:$0xff]
        %v2720 = vld [vmem:[%s2563 + $0x358] sm:$0xff]
        %v2721 = vld [vmem:[%s2563 + $0x360] sm:$0xff]
        %v2722 = vld [vmem:[%s2563 + $0x368] sm:$0xff]
        %v2723 = vld [vmem:[%s2563 + $0x370] sm:$0xff]
        %v2724 = vld [vmem:[%s2563 + $0x378] sm:$0xff]
        %v2725 = vld [vmem:[%s2563 + $0x380] sm:$0xff]
        %v2726 = vld [vmem:[%s2563 + $0x388] sm:$0xff]
        %v2727 = vld [vmem:[%s2563 + $0x390] sm:$0xff]
        %v2728 = vld [vmem:[%s2563 + $0x398] sm:$0xff]
        %v2729 = vld [vmem:[%s2563 + $0x3a0] sm:$0xff]
        %v2730 = vld [vmem:[%s2563 + $0x3a8] sm:$0xff]
        %v2731 = vld [vmem:[%s2563 + $0x3b0] sm:$0xff]
        %v2732 = vld [vmem:[%s2563 + $0x3b8] sm:$0xff]
        %v2733 = vld [vmem:[%s2563 + $0x3c0] sm:$0xff]
        %v2734 = vld [vmem:[%s2563 + $0x3c8] sm:$0xff]
        %v2735 = vld [vmem:[%s2563 + $0x3d0] sm:$0xff]
        %v2736 = vld [vmem:[%s2563 + $0x3d8] sm:$0xff]
        %v2737 = vld [vmem:[%s2563 + $0x3e0] sm:$0xff]
        %v2738 = vld [vmem:[%s2563 + $0x3e8] sm:$0xff]
        %v2739 = vld [vmem:[%s2563 + $0x3f0] sm:$0xff]
        %v2740 = vld [vmem:[%s2563 + $0x3f8] sm:$0xff]
        %v2741 = vld [vmem:[%s2563 + $0x400] sm:$0xff]
        %v2742 = vld [vmem:[%s2563 + $0x408] sm:$0xff]
        %v2743 = vld [vmem:[%s2563 + $0x410] sm:$0xff]
        %v2744 = vld [vmem:[%s2563 + $0x418] sm:$0xff]
        %v2745 = vld [vmem:[%s2563 + $0x420] sm:$0xff]
        %v2746 = vld [vmem:[%s2563 + $0x428] sm:$0xff]
        %v2747 = vld [vmem:[%s2563 + $0x430] sm:$0xff]
        %v2748 = vld [vmem:[%s2563 + $0x438] sm:$0xff]
        %v2749 = vld [vmem:[%s2563 + $0x440] sm:$0xff]
        %v2750 = vld [vmem:[%s2563 + $0x448] sm:$0xff]
        %v2751 = vld [vmem:[%s2563 + $0x450] sm:$0xff]
        %v2752 = vld [vmem:[%s2563 + $0x458] sm:$0xff]
        %v2753 = vld [vmem:[%s2563 + $0x460] sm:$0xff]
        %v2754 = vld [vmem:[%s2563 + $0x468] sm:$0xff]
        %v2755 = vld [vmem:[%s2563 + $0x470] sm:$0xff]
        %v2756 = vld [vmem:[%s2563 + $0x478] sm:$0xff]
        %v2757 = vld [vmem:[%s2563 + $0x480] sm:$0xff]
        %v2758 = vld [vmem:[%s2563 + $0x488] sm:$0xff]
        %v2759 = vld [vmem:[%s2563 + $0x490] sm:$0xff]
        %v2760 = vld [vmem:[%s2563 + $0x498] sm:$0xff]
        %v2761 = vld [vmem:[%s2563 + $0x4a0] sm:$0xff]
        %v2762 = vld [vmem:[%s2563 + $0x4a8] sm:$0xff]
        %v2763 = vld [vmem:[%s2563 + $0x4b0] sm:$0xff]
        %v2764 = vld [vmem:[%s2563 + $0x4b8] sm:$0xff]
        %v2765 = vld [vmem:[%s2563 + $0x4c0] sm:$0xff]
        %v2766 = vld [vmem:[%s2563 + $0x4c8] sm:$0xff]
        %v2767 = vld [vmem:[%s2563 + $0x4d0] sm:$0xff]
        %v2768 = vld [vmem:[%s2563 + $0x4d8] sm:$0xff]
        %v2769 = vld [vmem:[%s2563 + $0x4e0] sm:$0xff]
        %v2770 = vld [vmem:[%s2563 + $0x4e8] sm:$0xff]
        %v2771 = vld [vmem:[%s2563 + $0x4f0] sm:$0xff]
        %v2772 = vld [vmem:[%s2563 + $0x4f8] sm:$0xff]
        %v2773 = vld [vmem:[%s2563 + $0x500] sm:$0xff]
        %v2774 = vld [vmem:[%s2563 + $0x508] sm:$0xff]
        %v2775 = vld [vmem:[%s2563 + $0x510] sm:$0xff]
        %v2776 = vld [vmem:[%s2563 + $0x518] sm:$0xff]
        %v2777 = vld [vmem:[%s2563 + $0x520] sm:$0xff]
        %v2778 = vld [vmem:[%s2563 + $0x528] sm:$0xff]
        %v2779 = vld [vmem:[%s2563 + $0x530] sm:$0xff]
        %v2780 = vld [vmem:[%s2563 + $0x538] sm:$0xff]
        %v2781 = vld [vmem:[%s2563 + $0x540] sm:$0xff]
        %v2782 = vld [vmem:[%s2563 + $0x548] sm:$0xff]
        %v2783 = vld [vmem:[%s2563 + $0x550] sm:$0xff]
        %v2784 = vld [vmem:[%s2563 + $0x558] sm:$0xff]
        %v2785 = vld [vmem:[%s2563 + $0x560] sm:$0xff]
        %v2786 = vld [vmem:[%s2563 + $0x568] sm:$0xff]
        %v2787 = vld [vmem:[%s2563 + $0x570] sm:$0xff]
        %v2788 = vld [vmem:[%s2563 + $0x578] sm:$0xff]
        %v2789 = vld [vmem:[%s2563 + $0x580] sm:$0xff]
        %v2790 = vld [vmem:[%s2563 + $0x588] sm:$0xff]
        %v2791 = vld [vmem:[%s2563 + $0x590] sm:$0xff]
        %v2792 = vld [vmem:[%s2563 + $0x598] sm:$0xff]
        %v2793 = vld [vmem:[%s2563 + $0x5a0] sm:$0xff]
        %v2794 = vld [vmem:[%s2563 + $0x5a8] sm:$0xff]
        %v2795 = vld [vmem:[%s2563 + $0x5b0] sm:$0xff]
        %v2796 = vld [vmem:[%s2563 + $0x5b8] sm:$0xff]
        %v2797 = vld [vmem:[%s2563 + $0x5c0] sm:$0xff]
        %v2798 = vld [vmem:[%s2563 + $0x5c8] sm:$0xff]
        %v2799 = vld [vmem:[%s2563 + $0x5d0] sm:$0xff]
        %v2800 = vld [vmem:[%s2563 + $0x5d8] sm:$0xff]
        %v2801 = vld [vmem:[%s2563 + $0x5e0] sm:$0xff]
        %v2802 = vld [vmem:[%s2563 + $0x5e8] sm:$0xff]
        %v2803 = vld [vmem:[%s2563 + $0x5f0] sm:$0xff]
        %v2804 = vld [vmem:[%s2563 + $0x5f8] sm:$0xff]
        %v2805 = vld [vmem:[%s2563 + $0x600] sm:$0xff]
        %v2806 = vld [vmem:[%s2563 + $0x608] sm:$0xff]
        %v2807 = vld [vmem:[%s2563 + $0x610] sm:$0xff]
        %v2808 = vld [vmem:[%s2563 + $0x618] sm:$0xff]
        %v2809 = vld [vmem:[%s2563 + $0x620] sm:$0xff]
        %v2810 = vld [vmem:[%s2563 + $0x628] sm:$0xff]
        %v2811 = vld [vmem:[%s2563 + $0x630] sm:$0xff]
        %v2812 = vld [vmem:[%s2563 + $0x638] sm:$0xff]
        %v2813 = vld [vmem:[%s2563 + $0x640] sm:$0xff]
        %v2814 = vld [vmem:[%s2563 + $0x648] sm:$0xff]
        %v2815 = vld [vmem:[%s2563 + $0x650] sm:$0xff]
        %v2816 = vld [vmem:[%s2563 + $0x658] sm:$0xff]
        %v2817 = vld [vmem:[%s2563 + $0x660] sm:$0xff]
        %v2818 = vld [vmem:[%s2563 + $0x668] sm:$0xff]
        %v2819 = vld [vmem:[%s2563 + $0x670] sm:$0xff]
        %v2820 = vld [vmem:[%s2563 + $0x678] sm:$0xff]
        %v2821 = vld [vmem:[%s2563 + $0x680] sm:$0xff]
        %v2822 = vld [vmem:[%s2563 + $0x688] sm:$0xff]
        %v2823 = vld [vmem:[%s2563 + $0x690] sm:$0xff]
        %v2824 = vld [vmem:[%s2563 + $0x698] sm:$0xff]
        %v2825 = vld [vmem:[%s2563 + $0x6a0] sm:$0xff]
        %v2826 = vld [vmem:[%s2563 + $0x6a8] sm:$0xff]
        %v2827 = vld [vmem:[%s2563 + $0x6b0] sm:$0xff]
        %v2828 = vld [vmem:[%s2563 + $0x6b8] sm:$0xff]
        %v2829 = vld [vmem:[%s2563 + $0x6c0] sm:$0xff]
        %v2830 = vld [vmem:[%s2563 + $0x6c8] sm:$0xff]
        %v2831 = vld [vmem:[%s2563 + $0x6d0] sm:$0xff]
        %v2832 = vld [vmem:[%s2563 + $0x6d8] sm:$0xff]
        %v2833 = vld [vmem:[%s2563 + $0x6e0] sm:$0xff]
        %v2834 = vld [vmem:[%s2563 + $0x6e8] sm:$0xff]
        %v2835 = vld [vmem:[%s2563 + $0x6f0] sm:$0xff]
        %v2836 = vld [vmem:[%s2563 + $0x6f8] sm:$0xff]
        %v2837 = vld [vmem:[%s2563 + $0x700] sm:$0xff]
        %v2838 = vld [vmem:[%s2563 + $0x708] sm:$0xff]
        %v2839 = vld [vmem:[%s2563 + $0x710] sm:$0xff]
        %v2840 = vld [vmem:[%s2563 + $0x718] sm:$0xff]
        %v2841 = vld [vmem:[%s2563 + $0x720] sm:$0xff]
        %v2842 = vld [vmem:[%s2563 + $0x728] sm:$0xff]
        %v2843 = vld [vmem:[%s2563 + $0x730] sm:$0xff]
        %v2844 = vld [vmem:[%s2563 + $0x738] sm:$0xff]
        %v2845 = vld [vmem:[%s2563 + $0x740] sm:$0xff]
        %v2846 = vld [vmem:[%s2563 + $0x748] sm:$0xff]
        %v2847 = vld [vmem:[%s2563 + $0x750] sm:$0xff]
        %v2848 = vld [vmem:[%s2563 + $0x758] sm:$0xff]
        %v2849 = vld [vmem:[%s2563 + $0x760] sm:$0xff]
        %v2850 = vld [vmem:[%s2563 + $0x768] sm:$0xff]
        %v2851 = vld [vmem:[%s2563 + $0x770] sm:$0xff]
        %v2852 = vld [vmem:[%s2563 + $0x778] sm:$0xff]
        %v2853 = vld [vmem:[%s2563 + $0x780] sm:$0xff]
        %v2854 = vld [vmem:[%s2563 + $0x788] sm:$0xff]
        %v2855 = vld [vmem:[%s2563 + $0x790] sm:$0xff]
        %v2856 = vld [vmem:[%s2563 + $0x798] sm:$0xff]
        %v2857 = vld [vmem:[%s2563 + $0x7a0] sm:$0xff]
        %v2858 = vld [vmem:[%s2563 + $0x7a8] sm:$0xff]
        %v2859 = vld [vmem:[%s2563 + $0x7b0] sm:$0xff]
        %v2860 = vld [vmem:[%s2563 + $0x7b8] sm:$0xff]
        %v2861 = vld [vmem:[%s2563 + $0x7c0] sm:$0xff]
        %v2862 = vld [vmem:[%s2563 + $0x7c8] sm:$0xff]
        %v2863 = vld [vmem:[%s2563 + $0x7d0] sm:$0xff]
        %v2864 = vld [vmem:[%s2563 + $0x7d8] sm:$0xff]
        %v2865 = vld [vmem:[%s2563 + $0x7e0] sm:$0xff]
        %v2866 = vld [vmem:[%s2563 + $0x7e8] sm:$0xff]
        %v2867 = vld [vmem:[%s2563 + $0x7f0] sm:$0xff]
        %v2868 = vld [vmem:[%s2563 + $0x7f8] sm:$0xff]
        %v2869 = vld [vmem:[%s2563 + $0x800] sm:$0xff]
        %v2870 = vld [vmem:[%s2563 + $0x808] sm:$0xff]
        %v2871 = vld [vmem:[%s2563 + $0x810] sm:$0xff]
        %v2872 = vld [vmem:[%s2563 + $0x818] sm:$0xff]
        %v2873 = vld [vmem:[%s2563 + $0x820] sm:$0xff]
        %v2874 = vld [vmem:[%s2563 + $0x828] sm:$0xff]
        %v2875 = vld [vmem:[%s2563 + $0x830] sm:$0xff]
        %v2876 = vld [vmem:[%s2563 + $0x838] sm:$0xff]
        %v2877 = vld [vmem:[%s2563 + $0x840] sm:$0xff]
        %v2878 = vld [vmem:[%s2563 + $0x848] sm:$0xff]
        %v2879 = vld [vmem:[%s2563 + $0x850] sm:$0xff]
        %v2880 = vld [vmem:[%s2563 + $0x858] sm:$0xff]
        %v2881 = vld [vmem:[%s2563 + $0x860] sm:$0xff]
        %v2882 = vld [vmem:[%s2563 + $0x868] sm:$0xff]
        %v2883 = vld [vmem:[%s2563 + $0x870] sm:$0xff]
        %v2884 = vld [vmem:[%s2563 + $0x878] sm:$0xff]
        %v2885 = vld [vmem:[%s2563 + $0x880] sm:$0xff]
        %v2886 = vld [vmem:[%s2563 + $0x888] sm:$0xff]
        %v2887 = vld [vmem:[%s2563 + $0x890] sm:$0xff]
        %v2888 = vld [vmem:[%s2563 + $0x898] sm:$0xff]
        %v2889 = vld [vmem:[%s2563 + $0x8a0] sm:$0xff]
        %v2890 = vld [vmem:[%s2563 + $0x8a8] sm:$0xff]
        %v2891 = vld [vmem:[%s2563 + $0x8b0] sm:$0xff]
        %v2892 = vld [vmem:[%s2563 + $0x8b8] sm:$0xff]
        %v2893 = vld [vmem:[%s2563 + $0x8c0] sm:$0xff]
        %v2894 = vld [vmem:[%s2563 + $0x8c8] sm:$0xff]
        %v2895 = vld [vmem:[%s2563 + $0x8d0] sm:$0xff]
        %v2896 = vld [vmem:[%s2563 + $0x8d8] sm:$0xff]
        %v2897 = vld [vmem:[%s2563 + $0x8e0] sm:$0xff]
        %v2898 = vld [vmem:[%s2563 + $0x8e8] sm:$0xff]
        %v2899 = vld [vmem:[%s2563 + $0x8f0] sm:$0xff]
        %v2900 = vld [vmem:[%s2563 + $0x8f8] sm:$0xff]
        %v2901 = vld [vmem:[%s2598] sm:$0x3]
        %v2903 = vperm.slane %v2901, 0
        %v2904 = vperm.slane %v2901, 1
        %2908 = vst [vmem:[#allocation1] ss:$9 sm:$0xff] %v2610
        %v2909 = vld [vmem:[#allocation1] sm:$0xff]
        %v2910 = vld [vmem:[#allocation1 + $0x9] sm:$0xff]
        %v2911 = vld [vmem:[#allocation1 + $0x12] sm:$0xff]
        %v2912 = vld [vmem:[#allocation1 + $0x1b] sm:$0xff]
        %v2913 = vld [vmem:[#allocation1 + $0x24] sm:$0xff]
        %v2914 = vld [vmem:[#allocation1 + $0x2d] sm:$0xff]
        %v2915 = vld [vmem:[#allocation1 + $0x36] sm:$0xff]
        %v2916 = vld [vmem:[#allocation1 + $0x3f] sm:$0xff]
        %2918 = vst [vmem:[#allocation1] ss:$9 sm:$0xff] %v2611
        %v2919 = vld [vmem:[#allocation1] sm:$0xff]
        %v2920 = vld [vmem:[#allocation1 + $0x9] sm:$0xff]
        %v2921 = vld [vmem:[#allocation1 + $0x12] sm:$0xff]
        %v2922 = vld [vmem:[#allocation1 + $0x1b] sm:$0xff]
        %v2923 = vld [vmem:[#allocation1 + $0x24] sm:$0xff]
        %v2924 = vld [vmem:[#allocation1 + $0x2d] sm:$0xff]
        %v2925 = vld [vmem:[#allocation1 + $0x36] sm:$0xff]
        %v2926 = vld [vmem:[#allocation1 + $0x3f] sm:$0xff]
        %2928 = vst [vmem:[#allocation1] ss:$9 sm:$0xff] %v2612
        %v2929 = vld [vmem:[#allocation1] sm:$0xff]
        %v2930 = vld [vmem:[#allocation1 + $0x9] sm:$0xff]
        %v3237 = vunpack.c.l.b16 %v2613
        %v3238 = vunpack.c.h.b16 %v2613
        %v3239 = vunpack.c.l.b16 %v2614
        %v3240 = vunpack.c.h.b16 %v2614
        %v3241 = vunpack.c.l.b16 %v2615
        %v3242 = vunpack.c.h.b16 %v2615
        %v3243 = vunpack.c.l.b16 %v2616
        %v3244 = vunpack.c.h.b16 %v2616
        %v3245 = vunpack.c.l.b16 %v2617
        %v3246 = vunpack.c.h.b16 %v2617
        %v3247 = vunpack.c.l.b16 %v2618
        %v3248 = vunpack.c.h.b16 %v2618
        %v3249 = vunpack.c.l.b16 %v2619
        %v3250 = vunpack.c.h.b16 %v2619
        %v3251 = vunpack.c.l.b16 %v2620
        %v3252 = vunpack.c.h.b16 %v2620
        %v3253 = vunpack.c.l.b16 %v2621
        %v3254 = vunpack.c.h.b16 %v2621
        %v3255 = vunpack.c.l.b16 %v2622
        %v3256 = vunpack.c.h.b16 %v2622
        %v3257 = vunpack.c.l.b16 %v2623
        %v3258 = vunpack.c.h.b16 %v2623
        %v3259 = vunpack.c.l.b16 %v2624
        %v3260 = vunpack.c.h.b16 %v2624
        %v3261 = vunpack.c.l.b16 %v2625
        %v3262 = vunpack.c.h.b16 %v2625
        %v3263 = vunpack.c.l.b16 %v2626
        %v3264 = vunpack.c.h.b16 %v2626
        %v3265 = vunpack.c.l.b16 %v2627
        %v3266 = vunpack.c.h.b16 %v2627
        %v3267 = vunpack.c.l.b16 %v2628
        %v3268 = vunpack.c.h.b16 %v2628
        %v3269 = vunpack.c.l.b16 %v2629
        %v3270 = vunpack.c.h.b16 %v2629
        %v3271 = vunpack.c.l.b16 %v2630
        %v3272 = vunpack.c.h.b16 %v2630
        %v3273 = vunpack.c.l.b16 %v2631
        %v3274 = vunpack.c.h.b16 %v2631
        %v3275 = vunpack.c.l.b16 %v2632
        %v3276 = vunpack.c.h.b16 %v2632
        %v3277 = vunpack.c.l.b16 %v2633
        %v3278 = vunpack.c.h.b16 %v2633
        %v3279 = vunpack.c.l.b16 %v2634
        %v3280 = vunpack.c.h.b16 %v2634
        %v3281 = vunpack.c.l.b16 %v2635
        %v3282 = vunpack.c.h.b16 %v2635
        %v3283 = vunpack.c.l.b16 %v2636
        %v3284 = vunpack.c.h.b16 %v2636
        %v3285 = vunpack.c.l.b16 %v2637
        %v3286 = vunpack.c.h.b16 %v2637
        %v3287 = vunpack.c.l.b16 %v2638
        %v3288 = vunpack.c.h.b16 %v2638
        %v3289 = vunpack.c.l.b16 %v2639
        %v3290 = vunpack.c.h.b16 %v2639
        %v3291 = vunpack.c.l.b16 %v2640
        %v3292 = vunpack.c.h.b16 %v2640
        %v3293 = vunpack.c.l.b16 %v2641
        %v3294 = vunpack.c.h.b16 %v2641
        %v3295 = vunpack.c.l.b16 %v2642
        %v3296 = vunpack.c.h.b16 %v2642
        %v3297 = vunpack.c.l.b16 %v2643
        %v3298 = vunpack.c.h.b16 %v2643
        %v3299 = vunpack.c.l.b16 %v2644
        %v3300 = vunpack.c.h.b16 %v2644
        %v3301 = vunpack.c.l.b16 %v2645
        %v3302 = vunpack.c.h.b16 %v2645
        %v3303 = vunpack.c.l.b16 %v2646
        %v3304 = vunpack.c.h.b16 %v2646
        %v3305 = vunpack.c.l.b16 %v2647
        %v3306 = vunpack.c.h.b16 %v2647
        %v3307 = vunpack.c.l.b16 %v2648
        %v3308 = vunpack.c.h.b16 %v2648
        %v3309 = vunpack.c.l.b16 %v2649
        %v3310 = vunpack.c.h.b16 %v2649
        %v3311 = vunpack.c.l.b16 %v2650
        %v3312 = vunpack.c.h.b16 %v2650
        %v3313 = vunpack.c.l.b16 %v2651
        %v3314 = vunpack.c.h.b16 %v2651
        %v3315 = vunpack.c.l.b16 %v2652
        %v3316 = vunpack.c.h.b16 %v2652
        %v3317 = vunpack.c.l.b16 %v2653
        %v3318 = vunpack.c.h.b16 %v2653
        %v3319 = vunpack.c.l.b16 %v2654
        %v3320 = vunpack.c.h.b16 %v2654
        %v3321 = vunpack.c.l.b16 %v2655
        %v3322 = vunpack.c.h.b16 %v2655
        %v3323 = vunpack.c.l.b16 %v2656
        %v3324 = vunpack.c.h.b16 %v2656
        %v3325 = vunpack.c.l.b16 %v2657
        %v3326 = vunpack.c.h.b16 %v2657
        %v3327 = vunpack.c.l.b16 %v2658
        %v3328 = vunpack.c.h.b16 %v2658
        %v3329 = vunpack.c.l.b16 %v2659
        %v3330 = vunpack.c.h.b16 %v2659
        %v3331 = vunpack.c.l.b16 %v2660
        %v3332 = vunpack.c.h.b16 %v2660
        %v3333 = vunpack.c.l.b16 %v2661
        %v3334 = vunpack.c.h.b16 %v2661
        %v3335 = vunpack.c.l.b16 %v2662
        %v3336 = vunpack.c.h.b16 %v2662
        %v3337 = vunpack.c.l.b16 %v2663
        %v3338 = vunpack.c.h.b16 %v2663
        %v3339 = vunpack.c.l.b16 %v2664
        %v3340 = vunpack.c.h.b16 %v2664
        %v3341 = vunpack.c.l.b16 %v2665
        %v3342 = vunpack.c.h.b16 %v2665
        %v3343 = vunpack.c.l.b16 %v2666
        %v3344 = vunpack.c.h.b16 %v2666
        %v3345 = vunpack.c.l.b16 %v2667
        %v3346 = vunpack.c.h.b16 %v2667
        %v3347 = vunpack.c.l.b16 %v2668
        %v3348 = vunpack.c.h.b16 %v2668
        %v3349 = vunpack.c.l.b16 %v2669
        %v3350 = vunpack.c.h.b16 %v2669
        %v3351 = vunpack.c.l.b16 %v2670
        %v3352 = vunpack.c.h.b16 %v2670
        %v3353 = vunpack.c.l.b16 %v2671
        %v3354 = vunpack.c.h.b16 %v2671
        %v3355 = vunpack.c.l.b16 %v2672
        %v3356 = vunpack.c.h.b16 %v2672
        %v3357 = vunpack.c.l.b16 %v2673
        %v3358 = vunpack.c.h.b16 %v2673
        %v3359 = vunpack.c.l.b16 %v2674
        %v3360 = vunpack.c.h.b16 %v2674
        %v3361 = vunpack.c.l.b16 %v2675
        %v3362 = vunpack.c.h.b16 %v2675
        %v3363 = vunpack.c.l.b16 %v2676
        %v3364 = vunpack.c.h.b16 %v2676
        %v3365 = vunpack.c.l.b16 %v2677
        %v3366 = vunpack.c.h.b16 %v2677
        %v3367 = vunpack.c.l.b16 %v2678
        %v3368 = vunpack.c.h.b16 %v2678
        %v3369 = vunpack.c.l.b16 %v2679
        %v3370 = vunpack.c.h.b16 %v2679
        %v3371 = vunpack.c.l.b16 %v2680
        %v3372 = vunpack.c.h.b16 %v2680
        %v3373 = vunpack.c.l.b16 %v2681
        %v3374 = vunpack.c.h.b16 %v2681
        %v3375 = vunpack.c.l.b16 %v2682
        %v3376 = vunpack.c.h.b16 %v2682
        %v3377 = vunpack.c.l.b16 %v2683
        %v3378 = vunpack.c.h.b16 %v2683
        %v3379 = vunpack.c.l.b16 %v2684
        %v3380 = vunpack.c.h.b16 %v2684
        %v3381 = vunpack.c.l.b16 %v2685
        %v3382 = vunpack.c.h.b16 %v2685
        %v3383 = vunpack.c.l.b16 %v2686
        %v3384 = vunpack.c.h.b16 %v2686
        %v3385 = vunpack.c.l.b16 %v2687
        %v3386 = vunpack.c.h.b16 %v2687
        %v3387 = vunpack.c.l.b16 %v2688
        %v3388 = vunpack.c.h.b16 %v2688
        %v3389 = vunpack.c.l.b16 %v2689
        %v3390 = vunpack.c.h.b16 %v2689
        %v3391 = vunpack.c.l.b16 %v2690
        %v3392 = vunpack.c.h.b16 %v2690
        %v3393 = vunpack.c.l.b16 %v2691
        %v3394 = vunpack.c.h.b16 %v2691
        %v3395 = vunpack.c.l.b16 %v2692
        %v3396 = vunpack.c.h.b16 %v2692
        %v3397 = vunpack.c.l.b16 %v2693
        %v3398 = vunpack.c.h.b16 %v2693
        %v3399 = vunpack.c.l.b16 %v2694
        %v3400 = vunpack.c.h.b16 %v2694
        %v3401 = vunpack.c.l.b16 %v2695
        %v3402 = vunpack.c.h.b16 %v2695
        %v3403 = vunpack.c.l.b16 %v2696
        %v3404 = vunpack.c.h.b16 %v2696
        %v3405 = vunpack.c.l.b16 %v2697
        %v3406 = vunpack.c.h.b16 %v2697
        %v3407 = vunpack.c.l.b16 %v2698
        %v3408 = vunpack.c.h.b16 %v2698
        %v3409 = vunpack.c.l.b16 %v2699
        %v3410 = vunpack.c.h.b16 %v2699
        %v3411 = vunpack.c.l.b16 %v2700
        %v3412 = vunpack.c.h.b16 %v2700
        %v3413 = vunpack.c.l.b16 %v2701
        %v3414 = vunpack.c.h.b16 %v2701
        %v3415 = vunpack.c.l.b16 %v2702
        %v3416 = vunpack.c.h.b16 %v2702
        %v3417 = vunpack.c.l.b16 %v2703
        %v3418 = vunpack.c.h.b16 %v2703
        %v3419 = vunpack.c.l.b16 %v2704
        %v3420 = vunpack.c.h.b16 %v2704
        %v3421 = vunpack.c.l.b16 %v2705
        %v3422 = vunpack.c.h.b16 %v2705
        %v3423 = vunpack.c.l.b16 %v2706
        %v3424 = vunpack.c.h.b16 %v2706
        %v3425 = vunpack.c.l.b16 %v2707
        %v3426 = vunpack.c.h.b16 %v2707
        %v3427 = vunpack.c.l.b16 %v2708
        %v3428 = vunpack.c.h.b16 %v2708
        %v3429 = vunpack.c.l.b16 %v2709
        %v3430 = vunpack.c.h.b16 %v2709
        %v3431 = vunpack.c.l.b16 %v2710
        %v3432 = vunpack.c.h.b16 %v2710
        %v3433 = vunpack.c.l.b16 %v2711
        %v3434 = vunpack.c.h.b16 %v2711
        %v3435 = vunpack.c.l.b16 %v2712
        %v3436 = vunpack.c.h.b16 %v2712
        %v3437 = vunpack.c.l.b16 %v2713
        %v3438 = vunpack.c.h.b16 %v2713
        %v3439 = vunpack.c.l.b16 %v2714
        %v3440 = vunpack.c.h.b16 %v2714
        %v3441 = vunpack.c.l.b16 %v2715
        %v3442 = vunpack.c.h.b16 %v2715
        %v3443 = vunpack.c.l.b16 %v2716
        %v3444 = vunpack.c.h.b16 %v2716
        %v3445 = vunpack.c.l.b16 %v2717
        %v3446 = vunpack.c.h.b16 %v2717
        %v3447 = vunpack.c.l.b16 %v2718
        %v3448 = vunpack.c.h.b16 %v2718
        %v3449 = vunpack.c.l.b16 %v2719
        %v3450 = vunpack.c.h.b16 %v2719
        %v3451 = vunpack.c.l.b16 %v2720
        %v3452 = vunpack.c.h.b16 %v2720
        %v3453 = vunpack.c.l.b16 %v2721
        %v3454 = vunpack.c.h.b16 %v2721
        %v3455 = vunpack.c.l.b16 %v2722
        %v3456 = vunpack.c.h.b16 %v2722
        %v3457 = vunpack.c.l.b16 %v2723
        %v3458 = vunpack.c.h.b16 %v2723
        %v3459 = vunpack.c.l.b16 %v2724
        %v3460 = vunpack.c.h.b16 %v2724
        %v3461 = vunpack.c.l.b16 %v2725
        %v3462 = vunpack.c.h.b16 %v2725
        %v3463 = vunpack.c.l.b16 %v2726
        %v3464 = vunpack.c.h.b16 %v2726
        %v3465 = vunpack.c.l.b16 %v2727
        %v3466 = vunpack.c.h.b16 %v2727
        %v3467 = vunpack.c.l.b16 %v2728
        %v3468 = vunpack.c.h.b16 %v2728
        %v3469 = vunpack.c.l.b16 %v2729
        %v3470 = vunpack.c.h.b16 %v2729
        %v3471 = vunpack.c.l.b16 %v2730
        %v3472 = vunpack.c.h.b16 %v2730
        %v3473 = vunpack.c.l.b16 %v2731
        %v3474 = vunpack.c.h.b16 %v2731
        %v3475 = vunpack.c.l.b16 %v2732
        %v3476 = vunpack.c.h.b16 %v2732
        %v3477 = vunpack.c.l.b16 %v2733
        %v3478 = vunpack.c.h.b16 %v2733
        %v3479 = vunpack.c.l.b16 %v2734
        %v3480 = vunpack.c.h.b16 %v2734
        %v3481 = vunpack.c.l.b16 %v2735
        %v3482 = vunpack.c.h.b16 %v2735
        %v3483 = vunpack.c.l.b16 %v2736
        %v3484 = vunpack.c.h.b16 %v2736
        %v3485 = vunpack.c.l.b16 %v2737
        %v3486 = vunpack.c.h.b16 %v2737
        %v3487 = vunpack.c.l.b16 %v2738
        %v3488 = vunpack.c.h.b16 %v2738
        %v3489 = vunpack.c.l.b16 %v2739
        %v3490 = vunpack.c.h.b16 %v2739
        %v3491 = vunpack.c.l.b16 %v2740
        %v3492 = vunpack.c.h.b16 %v2740
        %v3493 = vunpack.c.l.b16 %v2741
        %v3494 = vunpack.c.h.b16 %v2741
        %v3495 = vunpack.c.l.b16 %v2742
        %v3496 = vunpack.c.h.b16 %v2742
        %v3497 = vunpack.c.l.b16 %v2743
        %v3498 = vunpack.c.h.b16 %v2743
        %v3499 = vunpack.c.l.b16 %v2744
        %v3500 = vunpack.c.h.b16 %v2744
        %v3501 = vunpack.c.l.b16 %v2745
        %v3502 = vunpack.c.h.b16 %v2745
        %v3503 = vunpack.c.l.b16 %v2746
        %v3504 = vunpack.c.h.b16 %v2746
        %v3505 = vunpack.c.l.b16 %v2747
        %v3506 = vunpack.c.h.b16 %v2747
        %v3507 = vunpack.c.l.b16 %v2748
        %v3508 = vunpack.c.h.b16 %v2748
        %v3509 = vunpack.c.l.b16 %v2749
        %v3510 = vunpack.c.h.b16 %v2749
        %v3511 = vunpack.c.l.b16 %v2750
        %v3512 = vunpack.c.h.b16 %v2750
        %v3513 = vunpack.c.l.b16 %v2751
        %v3514 = vunpack.c.h.b16 %v2751
        %v3515 = vunpack.c.l.b16 %v2752
        %v3516 = vunpack.c.h.b16 %v2752
        %v3517 = vunpack.c.l.b16 %v2753
        %v3518 = vunpack.c.h.b16 %v2753
        %v3519 = vunpack.c.l.b16 %v2754
        %v3520 = vunpack.c.h.b16 %v2754
        %v3521 = vunpack.c.l.b16 %v2755
        %v3522 = vunpack.c.h.b16 %v2755
        %v3523 = vunpack.c.l.b16 %v2756
        %v3524 = vunpack.c.h.b16 %v2756
        %v3525 = vunpack.c.l.b16 %v2757
        %v3526 = vunpack.c.h.b16 %v2757
        %v3527 = vunpack.c.l.b16 %v2758
        %v3528 = vunpack.c.h.b16 %v2758
        %v3529 = vunpack.c.l.b16 %v2759
        %v3530 = vunpack.c.h.b16 %v2759
        %v3531 = vunpack.c.l.b16 %v2760
        %v3532 = vunpack.c.h.b16 %v2760
        %v3533 = vunpack.c.l.b16 %v2761
        %v3534 = vunpack.c.h.b16 %v2761
        %v3535 = vunpack.c.l.b16 %v2762
        %v3536 = vunpack.c.h.b16 %v2762
        %v3537 = vunpack.c.l.b16 %v2763
        %v3538 = vunpack.c.h.b16 %v2763
        %v3539 = vunpack.c.l.b16 %v2764
        %v3540 = vunpack.c.h.b16 %v2764
        %v3541 = vunpack.c.l.b16 %v2765
        %v3542 = vunpack.c.h.b16 %v2765
        %v3543 = vunpack.c.l.b16 %v2766
        %v3544 = vunpack.c.h.b16 %v2766
        %v3545 = vunpack.c.l.b16 %v2767
        %v3546 = vunpack.c.h.b16 %v2767
        %v3547 = vunpack.c.l.b16 %v2768
        %v3548 = vunpack.c.h.b16 %v2768
        %v3549 = vunpack.c.l.b16 %v2769
        %v3550 = vunpack.c.h.b16 %v2769
        %v3551 = vunpack.c.l.b16 %v2770
        %v3552 = vunpack.c.h.b16 %v2770
        %v3553 = vunpack.c.l.b16 %v2771
        %v3554 = vunpack.c.h.b16 %v2771
        %v3555 = vunpack.c.l.b16 %v2772
        %v3556 = vunpack.c.h.b16 %v2772
        %v3557 = vunpack.c.l.b16 %v2773
        %v3558 = vunpack.c.h.b16 %v2773
        %v3559 = vunpack.c.l.b16 %v2774
        %v3560 = vunpack.c.h.b16 %v2774
        %v3561 = vunpack.c.l.b16 %v2775
        %v3562 = vunpack.c.h.b16 %v2775
        %v3563 = vunpack.c.l.b16 %v2776
        %v3564 = vunpack.c.h.b16 %v2776
        %v3565 = vunpack.c.l.b16 %v2777
        %v3566 = vunpack.c.h.b16 %v2777
        %v3567 = vunpack.c.l.b16 %v2778
        %v3568 = vunpack.c.h.b16 %v2778
        %v3569 = vunpack.c.l.b16 %v2779
        %v3570 = vunpack.c.h.b16 %v2779
        %v3571 = vunpack.c.l.b16 %v2780
        %v3572 = vunpack.c.h.b16 %v2780
        %v3573 = vunpack.c.l.b16 %v2781
        %v3574 = vunpack.c.h.b16 %v2781
        %v3575 = vunpack.c.l.b16 %v2782
        %v3576 = vunpack.c.h.b16 %v2782
        %v3577 = vunpack.c.l.b16 %v2783
        %v3578 = vunpack.c.h.b16 %v2783
        %v3579 = vunpack.c.l.b16 %v2784
        %v3580 = vunpack.c.h.b16 %v2784
        %v3581 = vunpack.c.l.b16 %v2785
        %v3582 = vunpack.c.h.b16 %v2785
        %v3583 = vunpack.c.l.b16 %v2786
        %v3584 = vunpack.c.h.b16 %v2786
        %v3585 = vunpack.c.l.b16 %v2787
        %v3586 = vunpack.c.h.b16 %v2787
        %v3587 = vunpack.c.l.b16 %v2788
        %v3588 = vunpack.c.h.b16 %v2788
        %v3589 = vunpack.c.l.b16 %v2789
        %v3590 = vunpack.c.h.b16 %v2789
        %v3591 = vunpack.c.l.b16 %v2790
        %v3592 = vunpack.c.h.b16 %v2790
        %v3593 = vunpack.c.l.b16 %v2791
        %v3594 = vunpack.c.h.b16 %v2791
        %v3595 = vunpack.c.l.b16 %v2792
        %v3596 = vunpack.c.h.b16 %v2792
        %v3597 = vunpack.c.l.b16 %v2793
        %v3598 = vunpack.c.h.b16 %v2793
        %v3599 = vunpack.c.l.b16 %v2794
        %v3600 = vunpack.c.h.b16 %v2794
        %v3601 = vunpack.c.l.b16 %v2795
        %v3602 = vunpack.c.h.b16 %v2795
        %v3603 = vunpack.c.l.b16 %v2796
        %v3604 = vunpack.c.h.b16 %v2796
        %v3605 = vunpack.c.l.b16 %v2797
        %v3606 = vunpack.c.h.b16 %v2797
        %v3607 = vunpack.c.l.b16 %v2798
        %v3608 = vunpack.c.h.b16 %v2798
        %v3609 = vunpack.c.l.b16 %v2799
        %v3610 = vunpack.c.h.b16 %v2799
        %v3611 = vunpack.c.l.b16 %v2800
        %v3612 = vunpack.c.h.b16 %v2800
        %v3613 = vunpack.c.l.b16 %v2801
        %v3614 = vunpack.c.h.b16 %v2801
        %v3615 = vunpack.c.l.b16 %v2802
        %v3616 = vunpack.c.h.b16 %v2802
        %v3617 = vunpack.c.l.b16 %v2803
        %v3618 = vunpack.c.h.b16 %v2803
        %v3619 = vunpack.c.l.b16 %v2804
        %v3620 = vunpack.c.h.b16 %v2804
        %v3621 = vunpack.c.l.b16 %v2805
        %v3622 = vunpack.c.h.b16 %v2805
        %v3623 = vunpack.c.l.b16 %v2806
        %v3624 = vunpack.c.h.b16 %v2806
        %v3625 = vunpack.c.l.b16 %v2807
        %v3626 = vunpack.c.h.b16 %v2807
        %v3627 = vunpack.c.l.b16 %v2808
        %v3628 = vunpack.c.h.b16 %v2808
        %v3629 = vunpack.c.l.b16 %v2809
        %v3630 = vunpack.c.h.b16 %v2809
        %v3631 = vunpack.c.l.b16 %v2810
        %v3632 = vunpack.c.h.b16 %v2810
        %v3633 = vunpack.c.l.b16 %v2811
        %v3634 = vunpack.c.h.b16 %v2811
        %v3635 = vunpack.c.l.b16 %v2812
        %v3636 = vunpack.c.h.b16 %v2812
        %v3637 = vunpack.c.l.b16 %v2813
        %v3638 = vunpack.c.h.b16 %v2813
        %v3639 = vunpack.c.l.b16 %v2814
        %v3640 = vunpack.c.h.b16 %v2814
        %v3641 = vunpack.c.l.b16 %v2815
        %v3642 = vunpack.c.h.b16 %v2815
        %v3643 = vunpack.c.l.b16 %v2816
        %v3644 = vunpack.c.h.b16 %v2816
        %v3645 = vunpack.c.l.b16 %v2817
        %v3646 = vunpack.c.h.b16 %v2817
        %v3647 = vunpack.c.l.b16 %v2818
        %v3648 = vunpack.c.h.b16 %v2818
        %v3649 = vunpack.c.l.b16 %v2819
        %v3650 = vunpack.c.h.b16 %v2819
        %v3651 = vunpack.c.l.b16 %v2820
        %v3652 = vunpack.c.h.b16 %v2820
        %v3653 = vunpack.c.l.b16 %v2821
        %v3654 = vunpack.c.h.b16 %v2821
        %v3655 = vunpack.c.l.b16 %v2822
        %v3656 = vunpack.c.h.b16 %v2822
        %v3657 = vunpack.c.l.b16 %v2823
        %v3658 = vunpack.c.h.b16 %v2823
        %v3659 = vunpack.c.l.b16 %v2824
        %v3660 = vunpack.c.h.b16 %v2824
        %v3661 = vunpack.c.l.b16 %v2825
        %v3662 = vunpack.c.h.b16 %v2825
        %v3663 = vunpack.c.l.b16 %v2826
        %v3664 = vunpack.c.h.b16 %v2826
        %v3665 = vunpack.c.l.b16 %v2827
        %v3666 = vunpack.c.h.b16 %v2827
        %v3667 = vunpack.c.l.b16 %v2828
        %v3668 = vunpack.c.h.b16 %v2828
        %v3669 = vunpack.c.l.b16 %v2829
        %v3670 = vunpack.c.h.b16 %v2829
        %v3671 = vunpack.c.l.b16 %v2830
        %v3672 = vunpack.c.h.b16 %v2830
        %v3673 = vunpack.c.l.b16 %v2831
        %v3674 = vunpack.c.h.b16 %v2831
        %v3675 = vunpack.c.l.b16 %v2832
        %v3676 = vunpack.c.h.b16 %v2832
        %v3677 = vunpack.c.l.b16 %v2833
        %v3678 = vunpack.c.h.b16 %v2833
        %v3679 = vunpack.c.l.b16 %v2834
        %v3680 = vunpack.c.h.b16 %v2834
        %v3681 = vunpack.c.l.b16 %v2835
        %v3682 = vunpack.c.h.b16 %v2835
        %v3683 = vunpack.c.l.b16 %v2836
        %v3684 = vunpack.c.h.b16 %v2836
        %v3685 = vunpack.c.l.b16 %v2837
        %v3686 = vunpack.c.h.b16 %v2837
        %v3687 = vunpack.c.l.b16 %v2838
        %v3688 = vunpack.c.h.b16 %v2838
        %v3689 = vunpack.c.l.b16 %v2839
        %v3690 = vunpack.c.h.b16 %v2839
        %v3691 = vunpack.c.l.b16 %v2840
        %v3692 = vunpack.c.h.b16 %v2840
        %v3693 = vunpack.c.l.b16 %v2841
        %v3694 = vunpack.c.h.b16 %v2841
        %v3695 = vunpack.c.l.b16 %v2842
        %v3696 = vunpack.c.h.b16 %v2842
        %v3697 = vunpack.c.l.b16 %v2843
        %v3698 = vunpack.c.h.b16 %v2843
        %v3699 = vunpack.c.l.b16 %v2844
        %v3700 = vunpack.c.h.b16 %v2844
        %v3701 = vunpack.c.l.b16 %v2845
        %v3702 = vunpack.c.h.b16 %v2845
        %v3703 = vunpack.c.l.b16 %v2846
        %v3704 = vunpack.c.h.b16 %v2846
        %v3705 = vunpack.c.l.b16 %v2847
        %v3706 = vunpack.c.h.b16 %v2847
        %v3707 = vunpack.c.l.b16 %v2848
        %v3708 = vunpack.c.h.b16 %v2848
        %v3709 = vunpack.c.l.b16 %v2849
        %v3710 = vunpack.c.h.b16 %v2849
        %v3711 = vunpack.c.l.b16 %v2850
        %v3712 = vunpack.c.h.b16 %v2850
        %v3713 = vunpack.c.l.b16 %v2851
        %v3714 = vunpack.c.h.b16 %v2851
        %v3715 = vunpack.c.l.b16 %v2852
        %v3716 = vunpack.c.h.b16 %v2852
        %v3717 = vunpack.c.l.b16 %v2853
        %v3718 = vunpack.c.h.b16 %v2853
        %v3719 = vunpack.c.l.b16 %v2854
        %v3720 = vunpack.c.h.b16 %v2854
        %v3721 = vunpack.c.l.b16 %v2855
        %v3722 = vunpack.c.h.b16 %v2855
        %v3723 = vunpack.c.l.b16 %v2856
        %v3724 = vunpack.c.h.b16 %v2856
        %v3725 = vunpack.c.l.b16 %v2857
        %v3726 = vunpack.c.h.b16 %v2857
        %v3727 = vunpack.c.l.b16 %v2858
        %v3728 = vunpack.c.h.b16 %v2858
        %v3729 = vunpack.c.l.b16 %v2859
        %v3730 = vunpack.c.h.b16 %v2859
        %v3731 = vunpack.c.l.b16 %v2860
        %v3732 = vunpack.c.h.b16 %v2860
        %v3733 = vunpack.c.l.b16 %v2861
        %v3734 = vunpack.c.h.b16 %v2861
        %v3735 = vunpack.c.l.b16 %v2862
        %v3736 = vunpack.c.h.b16 %v2862
        %v3737 = vunpack.c.l.b16 %v2863
        %v3738 = vunpack.c.h.b16 %v2863
        %v3739 = vunpack.c.l.b16 %v2864
        %v3740 = vunpack.c.h.b16 %v2864
        %v3741 = vunpack.c.l.b16 %v2865
        %v3742 = vunpack.c.h.b16 %v2865
        %v3743 = vunpack.c.l.b16 %v2866
        %v3744 = vunpack.c.h.b16 %v2866
        %v3745 = vunpack.c.l.b16 %v2867
        %v3746 = vunpack.c.h.b16 %v2867
        %v3747 = vunpack.c.l.b16 %v2868
        %v3748 = vunpack.c.h.b16 %v2868
        %v3749 = vunpack.c.l.b16 %v2869
        %v3750 = vunpack.c.h.b16 %v2869
        %v3751 = vunpack.c.l.b16 %v2870
        %v3752 = vunpack.c.h.b16 %v2870
        %v3753 = vunpack.c.l.b16 %v2871
        %v3754 = vunpack.c.h.b16 %v2871
        %v3755 = vunpack.c.l.b16 %v2872
        %v3756 = vunpack.c.h.b16 %v2872
        %v3757 = vunpack.c.l.b16 %v2873
        %v3758 = vunpack.c.h.b16 %v2873
        %v3759 = vunpack.c.l.b16 %v2874
        %v3760 = vunpack.c.h.b16 %v2874
        %v3761 = vunpack.c.l.b16 %v2875
        %v3762 = vunpack.c.h.b16 %v2875
        %v3763 = vunpack.c.l.b16 %v2876
        %v3764 = vunpack.c.h.b16 %v2876
        %v3765 = vunpack.c.l.b16 %v2877
        %v3766 = vunpack.c.h.b16 %v2877
        %v3767 = vunpack.c.l.b16 %v2878
        %v3768 = vunpack.c.h.b16 %v2878
        %v3769 = vunpack.c.l.b16 %v2879
        %v3770 = vunpack.c.h.b16 %v2879
        %v3771 = vunpack.c.l.b16 %v2880
        %v3772 = vunpack.c.h.b16 %v2880
        %v3773 = vunpack.c.l.b16 %v2881
        %v3774 = vunpack.c.h.b16 %v2881
        %v3775 = vunpack.c.l.b16 %v2882
        %v3776 = vunpack.c.h.b16 %v2882
        %v3777 = vunpack.c.l.b16 %v2883
        %v3778 = vunpack.c.h.b16 %v2883
        %v3779 = vunpack.c.l.b16 %v2884
        %v3780 = vunpack.c.h.b16 %v2884
        %v3781 = vunpack.c.l.b16 %v2885
        %v3782 = vunpack.c.h.b16 %v2885
        %v3783 = vunpack.c.l.b16 %v2886
        %v3784 = vunpack.c.h.b16 %v2886
        %v3785 = vunpack.c.l.b16 %v2887
        %v3786 = vunpack.c.h.b16 %v2887
        %v3787 = vunpack.c.l.b16 %v2888
        %v3788 = vunpack.c.h.b16 %v2888
        %v3789 = vunpack.c.l.b16 %v2889
        %v3790 = vunpack.c.h.b16 %v2889
        %v3791 = vunpack.c.l.b16 %v2890
        %v3792 = vunpack.c.h.b16 %v2890
        %v3793 = vunpack.c.l.b16 %v2891
        %v3794 = vunpack.c.h.b16 %v2891
        %v3795 = vunpack.c.l.b16 %v2892
        %v3796 = vunpack.c.h.b16 %v2892
        %v3797 = vunpack.c.l.b16 %v2893
        %v3798 = vunpack.c.h.b16 %v2893
        %v3799 = vunpack.c.l.b16 %v2894
        %v3800 = vunpack.c.h.b16 %v2894
        %v3801 = vunpack.c.l.b16 %v2895
        %v3802 = vunpack.c.h.b16 %v2895
        %v3803 = vunpack.c.l.b16 %v2896
        %v3804 = vunpack.c.h.b16 %v2896
        %v3805 = vunpack.c.l.b16 %v2897
        %v3806 = vunpack.c.h.b16 %v2897
        %v3807 = vunpack.c.l.b16 %v2898
        %v3808 = vunpack.c.h.b16 %v2898
        %v3809 = vunpack.c.l.b16 %v2899
        %v3810 = vunpack.c.h.b16 %v2899
        %v3811 = vunpack.c.l.b16 %v2900
        %v3812 = vunpack.c.h.b16 %v2900
        %v3813 = vpack.c.b16 %v3239, %v3237
        %v3814 = vpack.c.b16 %v3240, %v3238
        %v3815 = vpack.c.b16 %v3243, %v3241
        %v3816 = vpack.c.b16 %v3244, %v3242
        %v3817 = vpack.c.b16 %v3247, %v3245
        %v3818 = vpack.c.b16 %v3248, %v3246
        %v3819 = vpack.c.b16 %v3251, %v3249
        %v3820 = vpack.c.b16 %v3252, %v3250
        %v3821 = vpack.c.b16 %v3255, %v3253
        %v3822 = vpack.c.b16 %v3256, %v3254
        %v3823 = vpack.c.b16 %v3259, %v3257
        %v3824 = vpack.c.b16 %v3260, %v3258
        %v3825 = vpack.c.b16 %v3263, %v3261
        %v3826 = vpack.c.b16 %v3264, %v3262
        %v3827 = vpack.c.b16 %v3267, %v3265
        %v3828 = vpack.c.b16 %v3268, %v3266
        %v3829 = vpack.c.b16 %v3271, %v3269
        %v3830 = vpack.c.b16 %v3272, %v3270
        %v3831 = vpack.c.b16 %v3275, %v3273
        %v3832 = vpack.c.b16 %v3276, %v3274
        %v3833 = vpack.c.b16 %v3279, %v3277
        %v3834 = vpack.c.b16 %v3280, %v3278
        %v3835 = vpack.c.b16 %v3283, %v3281
        %v3836 = vpack.c.b16 %v3284, %v3282
        %v3837 = vpack.c.b16 %v3287, %v3285
        %v3838 = vpack.c.b16 %v3288, %v3286
        %v3839 = vpack.c.b16 %v3291, %v3289
        %v3840 = vpack.c.b16 %v3292, %v3290
        %v3841 = vpack.c.b16 %v3295, %v3293
        %v3842 = vpack.c.b16 %v3296, %v3294
        %v3843 = vpack.c.b16 %v3299, %v3297
        %v3844 = vpack.c.b16 %v3300, %v3298
        %v3845 = vpack.c.b16 %v3303, %v3301
        %v3846 = vpack.c.b16 %v3304, %v3302
        %v3847 = vpack.c.b16 %v3307, %v3305
        %v3848 = vpack.c.b16 %v3308, %v3306
        %v3849 = vpack.c.b16 %v3311, %v3309
        %v3850 = vpack.c.b16 %v3312, %v3310
        %v3851 = vpack.c.b16 %v3315, %v3313
        %v3852 = vpack.c.b16 %v3316, %v3314
        %v3853 = vpack.c.b16 %v3319, %v3317
        %v3854 = vpack.c.b16 %v3320, %v3318
        %v3855 = vpack.c.b16 %v3323, %v3321
        %v3856 = vpack.c.b16 %v3324, %v3322
        %v3857 = vpack.c.b16 %v3327, %v3325
        %v3858 = vpack.c.b16 %v3328, %v3326
        %v3859 = vpack.c.b16 %v3331, %v3329
        %v3860 = vpack.c.b16 %v3332, %v3330
        %v3861 = vpack.c.b16 %v3335, %v3333
        %v3862 = vpack.c.b16 %v3336, %v3334
        %v3863 = vpack.c.b16 %v3339, %v3337
        %v3864 = vpack.c.b16 %v3340, %v3338
        %v3865 = vpack.c.b16 %v3343, %v3341
        %v3866 = vpack.c.b16 %v3344, %v3342
        %v3867 = vpack.c.b16 %v3347, %v3345
        %v3868 = vpack.c.b16 %v3348, %v3346
        %v3869 = vpack.c.b16 %v3351, %v3349
        %v3870 = vpack.c.b16 %v3352, %v3350
        %v3871 = vpack.c.b16 %v3355, %v3353
        %v3872 = vpack.c.b16 %v3356, %v3354
        %v3873 = vpack.c.b16 %v3359, %v3357
        %v3874 = vpack.c.b16 %v3360, %v3358
        %v3875 = vpack.c.b16 %v3363, %v3361
        %v3876 = vpack.c.b16 %v3364, %v3362
        %v3877 = vpack.c.b16 %v3367, %v3365
        %v3878 = vpack.c.b16 %v3368, %v3366
        %v3879 = vpack.c.b16 %v3371, %v3369
        %v3880 = vpack.c.b16 %v3372, %v3370
        %v3881 = vpack.c.b16 %v3375, %v3373
        %v3882 = vpack.c.b16 %v3376, %v3374
        %v3883 = vpack.c.b16 %v3379, %v3377
        %v3884 = vpack.c.b16 %v3380, %v3378
        %v3885 = vpack.c.b16 %v3383, %v3381
        %v3886 = vpack.c.b16 %v3384, %v3382
        %v3887 = vpack.c.b16 %v3387, %v3385
        %v3888 = vpack.c.b16 %v3388, %v3386
        %v3889 = vpack.c.b16 %v3391, %v3389
        %v3890 = vpack.c.b16 %v3392, %v3390
        %v3891 = vpack.c.b16 %v3395, %v3393
        %v3892 = vpack.c.b16 %v3396, %v3394
        %v3893 = vpack.c.b16 %v3399, %v3397
        %v3894 = vpack.c.b16 %v3400, %v3398
        %v3895 = vpack.c.b16 %v3403, %v3401
        %v3896 = vpack.c.b16 %v3404, %v3402
        %v3897 = vpack.c.b16 %v3407, %v3405
        %v3898 = vpack.c.b16 %v3408, %v3406
        %v3899 = vpack.c.b16 %v3411, %v3409
        %v3900 = vpack.c.b16 %v3412, %v3410
        %v3901 = vpack.c.b16 %v3415, %v3413
        %v3902 = vpack.c.b16 %v3416, %v3414
        %v3903 = vpack.c.b16 %v3419, %v3417
        %v3904 = vpack.c.b16 %v3420, %v3418
        %v3905 = vpack.c.b16 %v3423, %v3421
        %v3906 = vpack.c.b16 %v3424, %v3422
        %v3907 = vpack.c.b16 %v3427, %v3425
        %v3908 = vpack.c.b16 %v3428, %v3426
        %v3909 = vpack.c.b16 %v3431, %v3429
        %v3910 = vpack.c.b16 %v3432, %v3430
        %v3911 = vpack.c.b16 %v3435, %v3433
        %v3912 = vpack.c.b16 %v3436, %v3434
        %v3913 = vpack.c.b16 %v3439, %v3437
        %v3914 = vpack.c.b16 %v3440, %v3438
        %v3915 = vpack.c.b16 %v3443, %v3441
        %v3916 = vpack.c.b16 %v3444, %v3442
        %v3917 = vpack.c.b16 %v3447, %v3445
        %v3918 = vpack.c.b16 %v3448, %v3446
        %v3919 = vpack.c.b16 %v3451, %v3449
        %v3920 = vpack.c.b16 %v3452, %v3450
        %v3921 = vpack.c.b16 %v3455, %v3453
        %v3922 = vpack.c.b16 %v3456, %v3454
        %v3923 = vpack.c.b16 %v3459, %v3457
        %v3924 = vpack.c.b16 %v3460, %v3458
        %v3925 = vpack.c.b16 %v3463, %v3461
        %v3926 = vpack.c.b16 %v3464, %v3462
        %v3927 = vpack.c.b16 %v3467, %v3465
        %v3928 = vpack.c.b16 %v3468, %v3466
        %v3929 = vpack.c.b16 %v3471, %v3469
        %v3930 = vpack.c.b16 %v3472, %v3470
        %v3931 = vpack.c.b16 %v3475, %v3473
        %v3932 = vpack.c.b16 %v3476, %v3474
        %v3933 = vpack.c.b16 %v3479, %v3477
        %v3934 = vpack.c.b16 %v3480, %v3478
        %v3935 = vpack.c.b16 %v3483, %v3481
        %v3936 = vpack.c.b16 %v3484, %v3482
        %v3937 = vpack.c.b16 %v3487, %v3485
        %v3938 = vpack.c.b16 %v3488, %v3486
        %v3939 = vpack.c.b16 %v3491, %v3489
        %v3940 = vpack.c.b16 %v3492, %v3490
        %v3941 = vpack.c.b16 %v3495, %v3493
        %v3942 = vpack.c.b16 %v3496, %v3494
        %v3943 = vpack.c.b16 %v3499, %v3497
        %v3944 = vpack.c.b16 %v3500, %v3498
        %v3945 = vpack.c.b16 %v3503, %v3501
        %v3946 = vpack.c.b16 %v3504, %v3502
        %v3947 = vpack.c.b16 %v3507, %v3505
        %v3948 = vpack.c.b16 %v3508, %v3506
        %v3949 = vpack.c.b16 %v3511, %v3509
        %v3950 = vpack.c.b16 %v3512, %v3510
        %v3951 = vpack.c.b16 %v3515, %v3513
        %v3952 = vpack.c.b16 %v3516, %v3514
        %v3953 = vpack.c.b16 %v3519, %v3517
        %v3954 = vpack.c.b16 %v3520, %v3518
        %v3955 = vpack.c.b16 %v3523, %v3521
        %v3956 = vpack.c.b16 %v3524, %v3522
        %v3957 = vpack.c.b16 %v3527, %v3525
        %v3958 = vpack.c.b16 %v3528, %v3526
        %v3959 = vpack.c.b16 %v3531, %v3529
        %v3960 = vpack.c.b16 %v3532, %v3530
        %v3961 = vpack.c.b16 %v3535, %v3533
        %v3962 = vpack.c.b16 %v3536, %v3534
        %v3963 = vpack.c.b16 %v3539, %v3537
        %v3964 = vpack.c.b16 %v3540, %v3538
        %v3965 = vpack.c.b16 %v3543, %v3541
        %v3966 = vpack.c.b16 %v3544, %v3542
        %v3967 = vpack.c.b16 %v3547, %v3545
        %v3968 = vpack.c.b16 %v3548, %v3546
        %v3969 = vpack.c.b16 %v3551, %v3549
        %v3970 = vpack.c.b16 %v3552, %v3550
        %v3971 = vpack.c.b16 %v3555, %v3553
        %v3972 = vpack.c.b16 %v3556, %v3554
        %v3973 = vpack.c.b16 %v3559, %v3557
        %v3974 = vpack.c.b16 %v3560, %v3558
        %v3975 = vpack.c.b16 %v3563, %v3561
        %v3976 = vpack.c.b16 %v3564, %v3562
        %v3977 = vpack.c.b16 %v3567, %v3565
        %v3978 = vpack.c.b16 %v3568, %v3566
        %v3979 = vpack.c.b16 %v3571, %v3569
        %v3980 = vpack.c.b16 %v3572, %v3570
        %v3981 = vpack.c.b16 %v3575, %v3573
        %v3982 = vpack.c.b16 %v3576, %v3574
        %v3983 = vpack.c.b16 %v3579, %v3577
        %v3984 = vpack.c.b16 %v3580, %v3578
        %v3985 = vpack.c.b16 %v3583, %v3581
        %v3986 = vpack.c.b16 %v3584, %v3582
        %v3987 = vpack.c.b16 %v3587, %v3585
        %v3988 = vpack.c.b16 %v3588, %v3586
        %v3989 = vpack.c.b16 %v3591, %v3589
        %v3990 = vpack.c.b16 %v3592, %v3590
        %v3991 = vpack.c.b16 %v3595, %v3593
        %v3992 = vpack.c.b16 %v3596, %v3594
        %v3993 = vpack.c.b16 %v3599, %v3597
        %v3994 = vpack.c.b16 %v3600, %v3598
        %v3995 = vpack.c.b16 %v3603, %v3601
        %v3996 = vpack.c.b16 %v3604, %v3602
        %v3997 = vpack.c.b16 %v3607, %v3605
        %v3998 = vpack.c.b16 %v3608, %v3606
        %v3999 = vpack.c.b16 %v3611, %v3609
        %v4000 = vpack.c.b16 %v3612, %v3610
        %v4001 = vpack.c.b16 %v3615, %v3613
        %v4002 = vpack.c.b16 %v3616, %v3614
        %v4003 = vpack.c.b16 %v3619, %v3617
        %v4004 = vpack.c.b16 %v3620, %v3618
        %v4005 = vpack.c.b16 %v3623, %v3621
        %v4006 = vpack.c.b16 %v3624, %v3622
        %v4007 = vpack.c.b16 %v3627, %v3625
        %v4008 = vpack.c.b16 %v3628, %v3626
        %v4009 = vpack.c.b16 %v3631, %v3629
        %v4010 = vpack.c.b16 %v3632, %v3630
        %v4011 = vpack.c.b16 %v3635, %v3633
        %v4012 = vpack.c.b16 %v3636, %v3634
        %v4013 = vpack.c.b16 %v3639, %v3637
        %v4014 = vpack.c.b16 %v3640, %v3638
        %v4015 = vpack.c.b16 %v3643, %v3641
        %v4016 = vpack.c.b16 %v3644, %v3642
        %v4017 = vpack.c.b16 %v3647, %v3645
        %v4018 = vpack.c.b16 %v3648, %v3646
        %v4019 = vpack.c.b16 %v3651, %v3649
        %v4020 = vpack.c.b16 %v3652, %v3650
        %v4021 = vpack.c.b16 %v3655, %v3653
        %v4022 = vpack.c.b16 %v3656, %v3654
        %v4023 = vpack.c.b16 %v3659, %v3657
        %v4024 = vpack.c.b16 %v3660, %v3658
        %v4025 = vpack.c.b16 %v3663, %v3661
        %v4026 = vpack.c.b16 %v3664, %v3662
        %v4027 = vpack.c.b16 %v3667, %v3665
        %v4028 = vpack.c.b16 %v3668, %v3666
        %v4029 = vpack.c.b16 %v3671, %v3669
        %v4030 = vpack.c.b16 %v3672, %v3670
        %v4031 = vpack.c.b16 %v3675, %v3673
        %v4032 = vpack.c.b16 %v3676, %v3674
        %v4033 = vpack.c.b16 %v3679, %v3677
        %v4034 = vpack.c.b16 %v3680, %v3678
        %v4035 = vpack.c.b16 %v3683, %v3681
        %v4036 = vpack.c.b16 %v3684, %v3682
        %v4037 = vpack.c.b16 %v3687, %v3685
        %v4038 = vpack.c.b16 %v3688, %v3686
        %v4039 = vpack.c.b16 %v3691, %v3689
        %v4040 = vpack.c.b16 %v3692, %v3690
        %v4041 = vpack.c.b16 %v3695, %v3693
        %v4042 = vpack.c.b16 %v3696, %v3694
        %v4043 = vpack.c.b16 %v3699, %v3697
        %v4044 = vpack.c.b16 %v3700, %v3698
        %v4045 = vpack.c.b16 %v3703, %v3701
        %v4046 = vpack.c.b16 %v3704, %v3702
        %v4047 = vpack.c.b16 %v3707, %v3705
        %v4048 = vpack.c.b16 %v3708, %v3706
        %v4049 = vpack.c.b16 %v3711, %v3709
        %v4050 = vpack.c.b16 %v3712, %v3710
        %v4051 = vpack.c.b16 %v3715, %v3713
        %v4052 = vpack.c.b16 %v3716, %v3714
        %v4053 = vpack.c.b16 %v3719, %v3717
        %v4054 = vpack.c.b16 %v3720, %v3718
        %v4055 = vpack.c.b16 %v3723, %v3721
        %v4056 = vpack.c.b16 %v3724, %v3722
        %v4057 = vpack.c.b16 %v3727, %v3725
        %v4058 = vpack.c.b16 %v3728, %v3726
        %v4059 = vpack.c.b16 %v3731, %v3729
        %v4060 = vpack.c.b16 %v3732, %v3730
        %v4061 = vpack.c.b16 %v3735, %v3733
        %v4062 = vpack.c.b16 %v3736, %v3734
        %v4063 = vpack.c.b16 %v3739, %v3737
        %v4064 = vpack.c.b16 %v3740, %v3738
        %v4065 = vpack.c.b16 %v3743, %v3741
        %v4066 = vpack.c.b16 %v3744, %v3742
        %v4067 = vpack.c.b16 %v3747, %v3745
        %v4068 = vpack.c.b16 %v3748, %v3746
        %v4069 = vpack.c.b16 %v3751, %v3749
        %v4070 = vpack.c.b16 %v3752, %v3750
        %v4071 = vpack.c.b16 %v3755, %v3753
        %v4072 = vpack.c.b16 %v3756, %v3754
        %v4073 = vpack.c.b16 %v3759, %v3757
        %v4074 = vpack.c.b16 %v3760, %v3758
        %v4075 = vpack.c.b16 %v3763, %v3761
        %v4076 = vpack.c.b16 %v3764, %v3762
        %v4077 = vpack.c.b16 %v3767, %v3765
        %v4078 = vpack.c.b16 %v3768, %v3766
        %v4079 = vpack.c.b16 %v3771, %v3769
        %v4080 = vpack.c.b16 %v3772, %v3770
        %v4081 = vpack.c.b16 %v3775, %v3773
        %v4082 = vpack.c.b16 %v3776, %v3774
        %v4083 = vpack.c.b16 %v3779, %v3777
        %v4084 = vpack.c.b16 %v3780, %v3778
        %v4085 = vpack.c.b16 %v3783, %v3781
        %v4086 = vpack.c.b16 %v3784, %v3782
        %v4087 = vpack.c.b16 %v3787, %v3785
        %v4088 = vpack.c.b16 %v3788, %v3786
        %v4089 = vpack.c.b16 %v3791, %v3789
        %v4090 = vpack.c.b16 %v3792, %v3790
        %v4091 = vpack.c.b16 %v3795, %v3793
        %v4092 = vpack.c.b16 %v3796, %v3794
        %v4093 = vpack.c.b16 %v3799, %v3797
        %v4094 = vpack.c.b16 %v3800, %v3798
        %v4095 = vpack.c.b16 %v3803, %v3801
        %v4096 = vpack.c.b16 %v3804, %v3802
        %v4097 = vpack.c.b16 %v3807, %v3805
        %v4098 = vpack.c.b16 %v3808, %v3806
        %v4099 = vpack.c.b16 %v3811, %v3809
        %v4100 = vpack.c.b16 %v3812, %v3810
        %4389 = vmatpush.bf16.msra.mxu0 %v3827
        %4390 = vmatpush.bf16.msra.mxu0 %v3825
        %4391 = vmatpush.bf16.msra.mxu0 %v3823
        %4392 = vmatpush.bf16.msra.mxu0 %v3821
        %4393 = vmatpush.bf16.msra.mxu0 %v3819
        %4394 = vmatpush.bf16.msra.mxu0 %v3817
        %4395 = vmatpush.bf16.msra.mxu0 %v3815
        %4396 = vmatpush.bf16.msra.mxu0 %v3813
        %4397 = vmatmul.bf16.gmra.mxu0 %v2909
        %v4398 = vpop.f32.mrf.mxu0
        %v4399 = vadd.f32 %v2903, %v4398
        %v4400 = vpop.f32.mrf.mxu0
        %4401 = vdwg.mxu0
        %4402 = vmatpush.bf16.msra.mxu0 %v3843
        %4403 = vmatpush.bf16.msra.mxu0 %v3841
        %4404 = vmatpush.bf16.msra.mxu0 %v3839
        %4405 = vmatpush.bf16.msra.mxu0 %v3837
        %4406 = vmatpush.bf16.msra.mxu0 %v3835
        %4407 = vmatpush.bf16.msra.mxu0 %v3833
        %4408 = vmatpush.bf16.msra.mxu0 %v3831
        %4409 = vmatpush.bf16.msra.mxu0 %v3829
        %4410 = vmatmul.bf16.gmra.mxu0 %v2910
        %v4411 = vpop.f32.mrf.mxu0
        %v4412 = vadd.f32 %v4399, %v4411
        %v4413 = vpop.f32.mrf.mxu0
        %4414 = vdwg.mxu0
        %4415 = vmatpush.bf16.msra.mxu0 %v3859
        %4416 = vmatpush.bf16.msra.mxu0 %v3857
        %4417 = vmatpush.bf16.msra.mxu0 %v3855
        %4418 = vmatpush.bf16.msra.mxu0 %v3853
        %4419 = vmatpush.bf16.msra.mxu0 %v3851
        %4420 = vmatpush.bf16.msra.mxu0 %v3849
        %4421 = vmatpush.bf16.msra.mxu0 %v3847
        %4422 = vmatpush.bf16.msra.mxu0 %v3845
        %4423 = vmatmul.bf16.gmra.mxu0 %v2911
        %v4424 = vpop.f32.mrf.mxu0
        %v4425 = vadd.f32 %v4412, %v4424
        %v4426 = vpop.f32.mrf.mxu0
        %4427 = vdwg.mxu0
        %4428 = vmatpush.bf16.msra.mxu0 %v3875
        %4429 = vmatpush.bf16.msra.mxu0 %v3873
        %4430 = vmatpush.bf16.msra.mxu0 %v3871
        %4431 = vmatpush.bf16.msra.mxu0 %v3869
        %4432 = vmatpush.bf16.msra.mxu0 %v3867
        %4433 = vmatpush.bf16.msra.mxu0 %v3865
        %4434 = vmatpush.bf16.msra.mxu0 %v3863
        %4435 = vmatpush.bf16.msra.mxu0 %v3861
        %4436 = vmatmul.bf16.gmra.mxu0 %v2912
        %v4437 = vpop.f32.mrf.mxu0
        %v4438 = vadd.f32 %v4425, %v4437
        %v4439 = vpop.f32.mrf.mxu0
        %4440 = vdwg.mxu0
        %4441 = vmatpush.bf16.msra.mxu0 %v3891
        %4442 = vmatpush.bf16.msra.mxu0 %v3889
        %4443 = vmatpush.bf16.msra.mxu0 %v3887
        %4444 = vmatpush.bf16.msra.mxu0 %v3885
        %4445 = vmatpush.bf16.msra.mxu0 %v3883
        %4446 = vmatpush.bf16.msra.mxu0 %v3881
        %4447 = vmatpush.bf16.msra.mxu0 %v3879
        %4448 = vmatpush.bf16.msra.mxu0 %v3877
        %4449 = vmatmul.bf16.gmra.mxu0 %v2913
        %v4450 = vpop.f32.mrf.mxu0
        %v4451 = vadd.f32 %v4438, %v4450
        %v4452 = vpop.f32.mrf.mxu0
        %4453 = vdwg.mxu0
        %4454 = vmatpush.bf16.msra.mxu0 %v3907
        %4455 = vmatpush.bf16.msra.mxu0 %v3905
        %4456 = vmatpush.bf16.msra.mxu0 %v3903
        %4457 = vmatpush.bf16.msra.mxu0 %v3901
        %4458 = vmatpush.bf16.msra.mxu0 %v3899
        %4459 = vmatpush.bf16.msra.mxu0 %v3897
        %4460 = vmatpush.bf16.msra.mxu0 %v3895
        %4461 = vmatpush.bf16.msra.mxu0 %v3893
        %4462 = vmatmul.bf16.gmra.mxu0 %v2914
        %v4463 = vpop.f32.mrf.mxu0
        %v4464 = vadd.f32 %v4451, %v4463
        %v4465 = vpop.f32.mrf.mxu0
        %4466 = vdwg.mxu0
        %4467 = vmatpush.bf16.msra.mxu0 %v3923
        %4468 = vmatpush.bf16.msra.mxu0 %v3921
        %4469 = vmatpush.bf16.msra.mxu0 %v3919
        %4470 = vmatpush.bf16.msra.mxu0 %v3917
        %4471 = vmatpush.bf16.msra.mxu0 %v3915
        %4472 = vmatpush.bf16.msra.mxu0 %v3913
        %4473 = vmatpush.bf16.msra.mxu0 %v3911
        %4474 = vmatpush.bf16.msra.mxu0 %v3909
        %4475 = vmatmul.bf16.gmra.mxu0 %v2915
        %v4476 = vpop.f32.mrf.mxu0
        %v4477 = vadd.f32 %v4464, %v4476
        %v4478 = vpop.f32.mrf.mxu0
        %4479 = vdwg.mxu0
        %4480 = vmatpush.bf16.msra.mxu0 %v3939
        %4481 = vmatpush.bf16.msra.mxu0 %v3937
        %4482 = vmatpush.bf16.msra.mxu0 %v3935
        %4483 = vmatpush.bf16.msra.mxu0 %v3933
        %4484 = vmatpush.bf16.msra.mxu0 %v3931
        %4485 = vmatpush.bf16.msra.mxu0 %v3929
        %4486 = vmatpush.bf16.msra.mxu0 %v3927
        %4487 = vmatpush.bf16.msra.mxu0 %v3925
        %4488 = vmatmul.bf16.gmra.mxu0 %v2916
        %v4489 = vpop.f32.mrf.mxu0
        %v4490 = vadd.f32 %v4477, %v4489
        %v4491 = vpop.f32.mrf.mxu0
        %4492 = vdwg.mxu0
        %4493 = vmatpush.bf16.msra.mxu0 %v3955
        %4494 = vmatpush.bf16.msra.mxu0 %v3953
        %4495 = vmatpush.bf16.msra.mxu0 %v3951
        %4496 = vmatpush.bf16.msra.mxu0 %v3949
        %4497 = vmatpush.bf16.msra.mxu0 %v3947
        %4498 = vmatpush.bf16.msra.mxu0 %v3945
        %4499 = vmatpush.bf16.msra.mxu0 %v3943
        %4500 = vmatpush.bf16.msra.mxu0 %v3941
        %4501 = vmatmul.bf16.gmra.mxu0 %v2919
        %v4502 = vpop.f32.mrf.mxu0
        %v4503 = vadd.f32 %v4490, %v4502
        %v4504 = vpop.f32.mrf.mxu0
        %4505 = vdwg.mxu0
        %4506 = vmatpush.bf16.msra.mxu0 %v3971
        %4507 = vmatpush.bf16.msra.mxu0 %v3969
        %4508 = vmatpush.bf16.msra.mxu0 %v3967
        %4509 = vmatpush.bf16.msra.mxu0 %v3965
        %4510 = vmatpush.bf16.msra.mxu0 %v3963
        %4511 = vmatpush.bf16.msra.mxu0 %v3961
        %4512 = vmatpush.bf16.msra.mxu0 %v3959
        %4513 = vmatpush.bf16.msra.mxu0 %v3957
        %4514 = vmatmul.bf16.gmra.mxu0 %v2920
        %v4515 = vpop.f32.mrf.mxu0
        %v4516 = vadd.f32 %v4503, %v4515
        %v4517 = vpop.f32.mrf.mxu0
        %4518 = vdwg.mxu0
        %4519 = vmatpush.bf16.msra.mxu0 %v3987
        %4520 = vmatpush.bf16.msra.mxu0 %v3985
        %4521 = vmatpush.bf16.msra.mxu0 %v3983
        %4522 = vmatpush.bf16.msra.mxu0 %v3981
        %4523 = vmatpush.bf16.msra.mxu0 %v3979
        %4524 = vmatpush.bf16.msra.mxu0 %v3977
        %4525 = vmatpush.bf16.msra.mxu0 %v3975
        %4526 = vmatpush.bf16.msra.mxu0 %v3973
        %4527 = vmatmul.bf16.gmra.mxu0 %v2921
        %v4528 = vpop.f32.mrf.mxu0
        %v4529 = vadd.f32 %v4516, %v4528
        %v4530 = vpop.f32.mrf.mxu0
        %4531 = vdwg.mxu0
        %4532 = vmatpush.bf16.msra.mxu0 %v4003
        %4533 = vmatpush.bf16.msra.mxu0 %v4001
        %4534 = vmatpush.bf16.msra.mxu0 %v3999
        %4535 = vmatpush.bf16.msra.mxu0 %v3997
        %4536 = vmatpush.bf16.msra.mxu0 %v3995
        %4537 = vmatpush.bf16.msra.mxu0 %v3993
        %4538 = vmatpush.bf16.msra.mxu0 %v3991
        %4539 = vmatpush.bf16.msra.mxu0 %v3989
        %4540 = vmatmul.bf16.gmra.mxu0 %v2922
        %v4541 = vpop.f32.mrf.mxu0
        %v4542 = vadd.f32 %v4529, %v4541
        %v4543 = vpop.f32.mrf.mxu0
        %4544 = vdwg.mxu0
        %4545 = vmatpush.bf16.msra.mxu0 %v4019
        %4546 = vmatpush.bf16.msra.mxu0 %v4017
        %4547 = vmatpush.bf16.msra.mxu0 %v4015
        %4548 = vmatpush.bf16.msra.mxu0 %v4013
        %4549 = vmatpush.bf16.msra.mxu0 %v4011
        %4550 = vmatpush.bf16.msra.mxu0 %v4009
        %4551 = vmatpush.bf16.msra.mxu0 %v4007
        %4552 = vmatpush.bf16.msra.mxu0 %v4005
        %4553 = vmatmul.bf16.gmra.mxu0 %v2923
        %v4554 = vpop.f32.mrf.mxu0
        %v4555 = vadd.f32 %v4542, %v4554
        %v4556 = vpop.f32.mrf.mxu0
        %4557 = vdwg.mxu0
        %4558 = vmatpush.bf16.msra.mxu0 %v4035
        %4559 = vmatpush.bf16.msra.mxu0 %v4033
        %4560 = vmatpush.bf16.msra.mxu0 %v4031
        %4561 = vmatpush.bf16.msra.mxu0 %v4029
        %4562 = vmatpush.bf16.msra.mxu0 %v4027
        %4563 = vmatpush.bf16.msra.mxu0 %v4025
        %4564 = vmatpush.bf16.msra.mxu0 %v4023
        %4565 = vmatpush.bf16.msra.mxu0 %v4021
        %4566 = vmatmul.bf16.gmra.mxu0 %v2924
        %v4567 = vpop.f32.mrf.mxu0
        %v4568 = vadd.f32 %v4555, %v4567
        %v4569 = vpop.f32.mrf.mxu0
        %4570 = vdwg.mxu0
        %4571 = vmatpush.bf16.msra.mxu0 %v4051
        %4572 = vmatpush.bf16.msra.mxu0 %v4049
        %4573 = vmatpush.bf16.msra.mxu0 %v4047
        %4574 = vmatpush.bf16.msra.mxu0 %v4045
        %4575 = vmatpush.bf16.msra.mxu0 %v4043
        %4576 = vmatpush.bf16.msra.mxu0 %v4041
        %4577 = vmatpush.bf16.msra.mxu0 %v4039
        %4578 = vmatpush.bf16.msra.mxu0 %v4037
        %4579 = vmatmul.bf16.gmra.mxu0 %v2925
        %v4580 = vpop.f32.mrf.mxu0
        %v4581 = vadd.f32 %v4568, %v4580
        %v4582 = vpop.f32.mrf.mxu0
        %4583 = vdwg.mxu0
        %4584 = vmatpush.bf16.msra.mxu0 %v4067
        %4585 = vmatpush.bf16.msra.mxu0 %v4065
        %4586 = vmatpush.bf16.msra.mxu0 %v4063
        %4587 = vmatpush.bf16.msra.mxu0 %v4061
        %4588 = vmatpush.bf16.msra.mxu0 %v4059
        %4589 = vmatpush.bf16.msra.mxu0 %v4057
        %4590 = vmatpush.bf16.msra.mxu0 %v4055
        %4591 = vmatpush.bf16.msra.mxu0 %v4053
        %4592 = vmatmul.bf16.gmra.mxu0 %v2926
        %v4593 = vpop.f32.mrf.mxu0
        %v4594 = vadd.f32 %v4581, %v4593
        %v4595 = vpop.f32.mrf.mxu0
        %4596 = vdwg.mxu0
        %4597 = vmatpush.bf16.msra.mxu0 %v4083
        %4598 = vmatpush.bf16.msra.mxu0 %v4081
        %4599 = vmatpush.bf16.msra.mxu0 %v4079
        %4600 = vmatpush.bf16.msra.mxu0 %v4077
        %4601 = vmatpush.bf16.msra.mxu0 %v4075
        %4602 = vmatpush.bf16.msra.mxu0 %v4073
        %4603 = vmatpush.bf16.msra.mxu0 %v4071
        %4604 = vmatpush.bf16.msra.mxu0 %v4069
        %4605 = vmatmul.bf16.gmra.mxu0 %v2929
        %v4606 = vpop.f32.mrf.mxu0
        %v4607 = vadd.f32 %v4594, %v4606
        %v4608 = vpop.f32.mrf.mxu0
        %4609 = vdwg.mxu0
        %4610 = vmatpush.bf16.msra.mxu0 %v4099
        %4611 = vmatpush.bf16.msra.mxu0 %v4097
        %4612 = vmatpush.bf16.msra.mxu0 %v4095
        %4613 = vmatpush.bf16.msra.mxu0 %v4093
        %4614 = vmatpush.bf16.msra.mxu0 %v4091
        %4615 = vmatpush.bf16.msra.mxu0 %v4089
        %4616 = vmatpush.bf16.msra.mxu0 %v4087
        %4617 = vmatpush.bf16.msra.mxu0 %v4085
        %4618 = vmatmul.bf16.gmra.mxu0 %v2930
        %v4619 = vpop.f32.mrf.mxu0
        %v4620 = vadd.f32 %v4607, %v4619
        %v4621 = vpop.f32.mrf.mxu0
        %4622 = vdwg.mxu0
        %4623 = vmatpush.bf16.msra.mxu0 %v3828
        %4624 = vmatpush.bf16.msra.mxu0 %v3826
        %4625 = vmatpush.bf16.msra.mxu0 %v3824
        %4626 = vmatpush.bf16.msra.mxu0 %v3822
        %4627 = vmatpush.bf16.msra.mxu0 %v3820
        %4628 = vmatpush.bf16.msra.mxu0 %v3818
        %4629 = vmatpush.bf16.msra.mxu0 %v3816
        %4630 = vmatpush.bf16.msra.mxu0 %v3814
        %4631 = vmatmul.bf16.gmra.mxu0 %v2909
        %v4632 = vpop.f32.mrf.mxu0
        %v4633 = vadd.f32 %v2904, %v4632
        %v4634 = vpop.f32.mrf.mxu0
        %4635 = vdwg.mxu0
        %4636 = vmatpush.bf16.msra.mxu0 %v3844
        %4637 = vmatpush.bf16.msra.mxu0 %v3842
        %4638 = vmatpush.bf16.msra.mxu0 %v3840
        %4639 = vmatpush.bf16.msra.mxu0 %v3838
        %4640 = vmatpush.bf16.msra.mxu0 %v3836
        %4641 = vmatpush.bf16.msra.mxu0 %v3834
        %4642 = vmatpush.bf16.msra.mxu0 %v3832
        %4643 = vmatpush.bf16.msra.mxu0 %v3830
        %4644 = vmatmul.bf16.gmra.mxu0 %v2910
        %v4645 = vpop.f32.mrf.mxu0
        %v4646 = vadd.f32 %v4633, %v4645
        %v4647 = vpop.f32.mrf.mxu0
        %4648 = vdwg.mxu0
        %4649 = vmatpush.bf16.msra.mxu0 %v3860
        %4650 = vmatpush.bf16.msra.mxu0 %v3858
        %4651 = vmatpush.bf16.msra.mxu0 %v3856
        %4652 = vmatpush.bf16.msra.mxu0 %v3854
        %4653 = vmatpush.bf16.msra.mxu0 %v3852
        %4654 = vmatpush.bf16.msra.mxu0 %v3850
        %4655 = vmatpush.bf16.msra.mxu0 %v3848
        %4656 = vmatpush.bf16.msra.mxu0 %v3846
        %4657 = vmatmul.bf16.gmra.mxu0 %v2911
        %v4658 = vpop.f32.mrf.mxu0
        %v4659 = vadd.f32 %v4646, %v4658
        %v4660 = vpop.f32.mrf.mxu0
        %4661 = vdwg.mxu0
        %4662 = vmatpush.bf16.msra.mxu0 %v3876
        %4663 = vmatpush.bf16.msra.mxu0 %v3874
        %4664 = vmatpush.bf16.msra.mxu0 %v3872
        %4665 = vmatpush.bf16.msra.mxu0 %v3870
        %4666 = vmatpush.bf16.msra.mxu0 %v3868
        %4667 = vmatpush.bf16.msra.mxu0 %v3866
        %4668 = vmatpush.bf16.msra.mxu0 %v3864
        %4669 = vmatpush.bf16.msra.mxu0 %v3862
        %4670 = vmatmul.bf16.gmra.mxu0 %v2912
        %v4671 = vpop.f32.mrf.mxu0
        %v4672 = vadd.f32 %v4659, %v4671
        %v4673 = vpop.f32.mrf.mxu0
        %4674 = vdwg.mxu0
        %4675 = vmatpush.bf16.msra.mxu0 %v3892
        %4676 = vmatpush.bf16.msra.mxu0 %v3890
        %4677 = vmatpush.bf16.msra.mxu0 %v3888
        %4678 = vmatpush.bf16.msra.mxu0 %v3886
        %4679 = vmatpush.bf16.msra.mxu0 %v3884
        %4680 = vmatpush.bf16.msra.mxu0 %v3882
        %4681 = vmatpush.bf16.msra.mxu0 %v3880
        %4682 = vmatpush.bf16.msra.mxu0 %v3878
        %4683 = vmatmul.bf16.gmra.mxu0 %v2913
        %v4684 = vpop.f32.mrf.mxu0
        %v4685 = vadd.f32 %v4672, %v4684
        %v4686 = vpop.f32.mrf.mxu0
        %4687 = vdwg.mxu0
        %4688 = vmatpush.bf16.msra.mxu0 %v3908
        %4689 = vmatpush.bf16.msra.mxu0 %v3906
        %4690 = vmatpush.bf16.msra.mxu0 %v3904
        %4691 = vmatpush.bf16.msra.mxu0 %v3902
        %4692 = vmatpush.bf16.msra.mxu0 %v3900
        %4693 = vmatpush.bf16.msra.mxu0 %v3898
        %4694 = vmatpush.bf16.msra.mxu0 %v3896
        %4695 = vmatpush.bf16.msra.mxu0 %v3894
        %4696 = vmatmul.bf16.gmra.mxu0 %v2914
        %v4697 = vpop.f32.mrf.mxu0
        %v4698 = vadd.f32 %v4685, %v4697
        %v4699 = vpop.f32.mrf.mxu0
        %4700 = vdwg.mxu0
        %4701 = vmatpush.bf16.msra.mxu0 %v3924
        %4702 = vmatpush.bf16.msra.mxu0 %v3922
        %4703 = vmatpush.bf16.msra.mxu0 %v3920
        %4704 = vmatpush.bf16.msra.mxu0 %v3918
        %4705 = vmatpush.bf16.msra.mxu0 %v3916
        %4706 = vmatpush.bf16.msra.mxu0 %v3914
        %4707 = vmatpush.bf16.msra.mxu0 %v3912
        %4708 = vmatpush.bf16.msra.mxu0 %v3910
        %4709 = vmatmul.bf16.gmra.mxu0 %v2915
        %v4710 = vpop.f32.mrf.mxu0
        %v4711 = vadd.f32 %v4698, %v4710
        %v4712 = vpop.f32.mrf.mxu0
        %4713 = vdwg.mxu0
        %4714 = vmatpush.bf16.msra.mxu0 %v3940
        %4715 = vmatpush.bf16.msra.mxu0 %v3938
        %4716 = vmatpush.bf16.msra.mxu0 %v3936
        %4717 = vmatpush.bf16.msra.mxu0 %v3934
        %4718 = vmatpush.bf16.msra.mxu0 %v3932
        %4719 = vmatpush.bf16.msra.mxu0 %v3930
        %4720 = vmatpush.bf16.msra.mxu0 %v3928
        %4721 = vmatpush.bf16.msra.mxu0 %v3926
        %4722 = vmatmul.bf16.gmra.mxu0 %v2916
        %v4723 = vpop.f32.mrf.mxu0
        %v4724 = vadd.f32 %v4711, %v4723
        %v4725 = vpop.f32.mrf.mxu0
        %4726 = vdwg.mxu0
        %4727 = vmatpush.bf16.msra.mxu0 %v3956
        %4728 = vmatpush.bf16.msra.mxu0 %v3954
        %4729 = vmatpush.bf16.msra.mxu0 %v3952
        %4730 = vmatpush.bf16.msra.mxu0 %v3950
        %4731 = vmatpush.bf16.msra.mxu0 %v3948
        %4732 = vmatpush.bf16.msra.mxu0 %v3946
        %4733 = vmatpush.bf16.msra.mxu0 %v3944
        %4734 = vmatpush.bf16.msra.mxu0 %v3942
        %4735 = vmatmul.bf16.gmra.mxu0 %v2919
        %v4736 = vpop.f32.mrf.mxu0
        %v4737 = vadd.f32 %v4724, %v4736
        %v4738 = vpop.f32.mrf.mxu0
        %4739 = vdwg.mxu0
        %4740 = vmatpush.bf16.msra.mxu0 %v3972
        %4741 = vmatpush.bf16.msra.mxu0 %v3970
        %4742 = vmatpush.bf16.msra.mxu0 %v3968
        %4743 = vmatpush.bf16.msra.mxu0 %v3966
        %4744 = vmatpush.bf16.msra.mxu0 %v3964
        %4745 = vmatpush.bf16.msra.mxu0 %v3962
        %4746 = vmatpush.bf16.msra.mxu0 %v3960
        %4747 = vmatpush.bf16.msra.mxu0 %v3958
        %4748 = vmatmul.bf16.gmra.mxu0 %v2920
        %v4749 = vpop.f32.mrf.mxu0
        %v4750 = vadd.f32 %v4737, %v4749
        %v4751 = vpop.f32.mrf.mxu0
        %4752 = vdwg.mxu0
        %4753 = vmatpush.bf16.msra.mxu0 %v3988
        %4754 = vmatpush.bf16.msra.mxu0 %v3986
        %4755 = vmatpush.bf16.msra.mxu0 %v3984
        %4756 = vmatpush.bf16.msra.mxu0 %v3982
        %4757 = vmatpush.bf16.msra.mxu0 %v3980
        %4758 = vmatpush.bf16.msra.mxu0 %v3978
        %4759 = vmatpush.bf16.msra.mxu0 %v3976
        %4760 = vmatpush.bf16.msra.mxu0 %v3974
        %4761 = vmatmul.bf16.gmra.mxu0 %v2921
        %v4762 = vpop.f32.mrf.mxu0
        %v4763 = vadd.f32 %v4750, %v4762
        %v4764 = vpop.f32.mrf.mxu0
        %4765 = vdwg.mxu0
        %4766 = vmatpush.bf16.msra.mxu0 %v4004
        %4767 = vmatpush.bf16.msra.mxu0 %v4002
        %4768 = vmatpush.bf16.msra.mxu0 %v4000
        %4769 = vmatpush.bf16.msra.mxu0 %v3998
        %4770 = vmatpush.bf16.msra.mxu0 %v3996
        %4771 = vmatpush.bf16.msra.mxu0 %v3994
        %4772 = vmatpush.bf16.msra.mxu0 %v3992
        %4773 = vmatpush.bf16.msra.mxu0 %v3990
        %4774 = vmatmul.bf16.gmra.mxu0 %v2922
        %v4775 = vpop.f32.mrf.mxu0
        %v4776 = vadd.f32 %v4763, %v4775
        %v4777 = vpop.f32.mrf.mxu0
        %4778 = vdwg.mxu0
        %4779 = vmatpush.bf16.msra.mxu0 %v4020
        %4780 = vmatpush.bf16.msra.mxu0 %v4018
        %4781 = vmatpush.bf16.msra.mxu0 %v4016
        %4782 = vmatpush.bf16.msra.mxu0 %v4014
        %4783 = vmatpush.bf16.msra.mxu0 %v4012
        %4784 = vmatpush.bf16.msra.mxu0 %v4010
        %4785 = vmatpush.bf16.msra.mxu0 %v4008
        %4786 = vmatpush.bf16.msra.mxu0 %v4006
        %4787 = vmatmul.bf16.gmra.mxu0 %v2923
        %v4788 = vpop.f32.mrf.mxu0
        %v4789 = vadd.f32 %v4776, %v4788
        %v4790 = vpop.f32.mrf.mxu0
        %4791 = vdwg.mxu0
        %4792 = vmatpush.bf16.msra.mxu0 %v4036
        %4793 = vmatpush.bf16.msra.mxu0 %v4034
        %4794 = vmatpush.bf16.msra.mxu0 %v4032
        %4795 = vmatpush.bf16.msra.mxu0 %v4030
        %4796 = vmatpush.bf16.msra.mxu0 %v4028
        %4797 = vmatpush.bf16.msra.mxu0 %v4026
        %4798 = vmatpush.bf16.msra.mxu0 %v4024
        %4799 = vmatpush.bf16.msra.mxu0 %v4022
        %4800 = vmatmul.bf16.gmra.mxu0 %v2924
        %v4801 = vpop.f32.mrf.mxu0
        %v4802 = vadd.f32 %v4789, %v4801
        %v4803 = vpop.f32.mrf.mxu0
        %4804 = vdwg.mxu0
        %4805 = vmatpush.bf16.msra.mxu0 %v4052
        %4806 = vmatpush.bf16.msra.mxu0 %v4050
        %4807 = vmatpush.bf16.msra.mxu0 %v4048
        %4808 = vmatpush.bf16.msra.mxu0 %v4046
        %4809 = vmatpush.bf16.msra.mxu0 %v4044
        %4810 = vmatpush.bf16.msra.mxu0 %v4042
        %4811 = vmatpush.bf16.msra.mxu0 %v4040
        %4812 = vmatpush.bf16.msra.mxu0 %v4038
        %4813 = vmatmul.bf16.gmra.mxu0 %v2925
        %v4814 = vpop.f32.mrf.mxu0
        %v4815 = vadd.f32 %v4802, %v4814
        %v4816 = vpop.f32.mrf.mxu0
        %4817 = vdwg.mxu0
        %4818 = vmatpush.bf16.msra.mxu0 %v4068
        %4819 = vmatpush.bf16.msra.mxu0 %v4066
        %4820 = vmatpush.bf16.msra.mxu0 %v4064
        %4821 = vmatpush.bf16.msra.mxu0 %v4062
        %4822 = vmatpush.bf16.msra.mxu0 %v4060
        %4823 = vmatpush.bf16.msra.mxu0 %v4058
        %4824 = vmatpush.bf16.msra.mxu0 %v4056
        %4825 = vmatpush.bf16.msra.mxu0 %v4054
        %4826 = vmatmul.bf16.gmra.mxu0 %v2926
        %v4827 = vpop.f32.mrf.mxu0
        %v4828 = vadd.f32 %v4815, %v4827
        %v4829 = vpop.f32.mrf.mxu0
        %4830 = vdwg.mxu0
        %4831 = vmatpush.bf16.msra.mxu0 %v4084
        %4832 = vmatpush.bf16.msra.mxu0 %v4082
        %4833 = vmatpush.bf16.msra.mxu0 %v4080
        %4834 = vmatpush.bf16.msra.mxu0 %v4078
        %4835 = vmatpush.bf16.msra.mxu0 %v4076
        %4836 = vmatpush.bf16.msra.mxu0 %v4074
        %4837 = vmatpush.bf16.msra.mxu0 %v4072
        %4838 = vmatpush.bf16.msra.mxu0 %v4070
        %4839 = vmatmul.bf16.gmra.mxu0 %v2929
        %v4840 = vpop.f32.mrf.mxu0
        %v4841 = vadd.f32 %v4828, %v4840
        %v4842 = vpop.f32.mrf.mxu0
        %4843 = vdwg.mxu0
        %4844 = vmatpush.bf16.msra.mxu0 %v4100
        %4845 = vmatpush.bf16.msra.mxu0 %v4098
        %4846 = vmatpush.bf16.msra.mxu0 %v4096
        %4847 = vmatpush.bf16.msra.mxu0 %v4094
        %4848 = vmatpush.bf16.msra.mxu0 %v4092
        %4849 = vmatpush.bf16.msra.mxu0 %v4090
        %4850 = vmatpush.bf16.msra.mxu0 %v4088
        %4851 = vmatpush.bf16.msra.mxu0 %v4086
        %4852 = vmatmul.bf16.gmra.mxu0 %v2930
        %v4853 = vpop.f32.mrf.mxu0
        %v4854 = vadd.f32 %v4841, %v4853
        %v4855 = vpop.f32.mrf.mxu0
        %4856 = vdwg.mxu0
        %v4857 = vmax.f32 %v4620, 0.0
        %v4858 = vmax.f32 %v4854, 0.0
        %v4859 = vpack.c.bf16 %v4857, %v4857
        %v4860 = vpack.c.bf16 %v4858, %v4858
        %v4861 = vld [vmem:[%s2604] sm:$0xf]
        %v4862 = vld [vmem:[%s2604 + $0x4] sm:$0xf]
        %v4863 = vld [vmem:[%s2604 + $0x8] sm:$0xf]
        %v4864 = vld [vmem:[%s2604 + $0xc] sm:$0xf]
        %v4865 = vld [vmem:[%s2604 + $0x10] sm:$0xf]
        %v4866 = vld [vmem:[%s2604 + $0x14] sm:$0xf]
        %v4867 = vld [vmem:[%s2604 + $0x18] sm:$0xf]
        %v4868 = vld [vmem:[%s2604 + $0x1c] sm:$0xf]
        %v4869 = vld [vmem:[%s2604 + $0x20] sm:$0xf]
        %v4870 = vld [vmem:[%s2604 + $0x24] sm:$0xf]
        %v4871 = vld [vmem:[%s2604 + $0x28] sm:$0xf]
        %v4872 = vld [vmem:[%s2604 + $0x2c] sm:$0xf]
        %v4873 = vld [vmem:[%s2604 + $0x30] sm:$0xf]
        %v4874 = vld [vmem:[%s2604 + $0x34] sm:$0xf]
        %v4875 = vld [vmem:[%s2604 + $0x38] sm:$0xf]
        %v4876 = vld [vmem:[%s2604 + $0x3c] sm:$0xf]
        %v4877 = vld [vmem:[%s2604 + $0x40] sm:$0xf]
        %v4878 = vld [vmem:[%s2604 + $0x44] sm:$0xf]
        %v4879 = vld [vmem:[%s2604 + $0x48] sm:$0xf]
        %v4880 = vld [vmem:[%s2604 + $0x4c] sm:$0xf]
        %v4881 = vld [vmem:[%s2604 + $0x50] sm:$0xf]
        %v4882 = vld [vmem:[%s2604 + $0x54] sm:$0xf]
        %v4883 = vld [vmem:[%s2604 + $0x58] sm:$0xf]
        %v4884 = vld [vmem:[%s2604 + $0x5c] sm:$0xf]
        %v4885 = vld [vmem:[%s2604 + $0x60] sm:$0xf]
        %v4886 = vld [vmem:[%s2604 + $0x64] sm:$0xf]
        %v4887 = vld [vmem:[%s2604 + $0x68] sm:$0xf]
        %v4888 = vld [vmem:[%s2604 + $0x6c] sm:$0xf]
        %v4889 = vld [vmem:[%s2604 + $0x70] sm:$0xf]
        %v4890 = vld [vmem:[%s2604 + $0x74] sm:$0xf]
        %v4891 = vld [vmem:[%s2604 + $0x78] sm:$0xf]
        %v4892 = vld [vmem:[%s2604 + $0x7c] sm:$0xf]
        %v4925 = vunpack.c.l.b16 %v4861
        %v4926 = vunpack.c.l.b16 %v4862
        %v4927 = vunpack.c.l.b16 %v4863
        %v4928 = vunpack.c.l.b16 %v4864
        %v4929 = vunpack.c.l.b16 %v4865
        %v4930 = vunpack.c.l.b16 %v4866
        %v4931 = vunpack.c.l.b16 %v4867
        %v4932 = vunpack.c.l.b16 %v4868
        %v4933 = vunpack.c.l.b16 %v4869
        %v4934 = vunpack.c.l.b16 %v4870
        %v4935 = vunpack.c.l.b16 %v4871
        %v4936 = vunpack.c.l.b16 %v4872
        %v4937 = vunpack.c.l.b16 %v4873
        %v4938 = vunpack.c.l.b16 %v4874
        %v4939 = vunpack.c.l.b16 %v4875
        %v4940 = vunpack.c.l.b16 %v4876
        %v4941 = vunpack.c.l.b16 %v4877
        %v4942 = vunpack.c.l.b16 %v4878
        %v4943 = vunpack.c.l.b16 %v4879
        %v4944 = vunpack.c.l.b16 %v4880
        %v4945 = vunpack.c.l.b16 %v4881
        %v4946 = vunpack.c.l.b16 %v4882
        %v4947 = vunpack.c.l.b16 %v4883
        %v4948 = vunpack.c.l.b16 %v4884
        %v4949 = vunpack.c.l.b16 %v4885
        %v4950 = vunpack.c.l.b16 %v4886
        %v4951 = vunpack.c.l.b16 %v4887
        %v4952 = vunpack.c.l.b16 %v4888
        %v4953 = vunpack.c.l.b16 %v4889
        %v4954 = vunpack.c.l.b16 %v4890
        %v4955 = vunpack.c.l.b16 %v4891
        %v4956 = vunpack.c.l.b16 %v4892
        %v4957 = vpack.c.b16 %v4926, %v4925
        %v4958 = vpack.c.b16 %v4928, %v4927
        %v4959 = vpack.c.b16 %v4930, %v4929
        %v4960 = vpack.c.b16 %v4932, %v4931
        %v4961 = vpack.c.b16 %v4934, %v4933
        %v4962 = vpack.c.b16 %v4936, %v4935
        %v4963 = vpack.c.b16 %v4938, %v4937
        %v4964 = vpack.c.b16 %v4940, %v4939
        %v4965 = vpack.c.b16 %v4942, %v4941
        %v4966 = vpack.c.b16 %v4944, %v4943
        %v4967 = vpack.c.b16 %v4946, %v4945
        %v4968 = vpack.c.b16 %v4948, %v4947
        %v4969 = vpack.c.b16 %v4950, %v4949
        %v4970 = vpack.c.b16 %v4952, %v4951
        %v4971 = vpack.c.b16 %v4954, %v4953
        %v4972 = vpack.c.b16 %v4956, %v4955
        %4989 = vmatpush.bf16.msra.mxu0 %v4964
        %4990 = vmatpush.bf16.msra.mxu0 %v4963
        %4991 = vmatpush.bf16.msra.mxu0 %v4962
        %4992 = vmatpush.bf16.msra.mxu0 %v4961
        %4993 = vmatpush.bf16.msra.mxu0 %v4960
        %4994 = vmatpush.bf16.msra.mxu0 %v4959
        %4995 = vmatpush.bf16.msra.mxu0 %v4958
        %4996 = vmatpush.bf16.msra.mxu0 %v4957
        %4997 = vmatmul.bf16.gmra.mxu0 %v4859
        %v4998 = vpop.f32.mrf.mxu0
        %v4999 = vadd.f32 0.0, %v4998
        %v5000 = vpop.f32.mrf.mxu0
        %5001 = vdwg.mxu0
        %5002 = vmatpush.bf16.msra.mxu0 %v4972
        %5003 = vmatpush.bf16.msra.mxu0 %v4971
        %5004 = vmatpush.bf16.msra.mxu0 %v4970
        %5005 = vmatpush.bf16.msra.mxu0 %v4969
        %5006 = vmatpush.bf16.msra.mxu0 %v4968
        %5007 = vmatpush.bf16.msra.mxu0 %v4967
        %5008 = vmatpush.bf16.msra.mxu0 %v4966
        %5009 = vmatpush.bf16.msra.mxu0 %v4965
        %5010 = vmatmul.bf16.gmra.mxu0 %v4860
        %v5011 = vpop.f32.mrf.mxu0
        %v5012 = vadd.f32 %v4999, %v5011
        %v5013 = vpop.f32.mrf.mxu0
        %5014 = vdwg.mxu0
        %vm5015 = vcmask 41984
        %5016 = vst.msk [vmem:[%s2609] sm:$0x3] %vm5015, %v5012
        %p5017 = scmp.lt.s32.totalorder %s15, 1
        %s5018 = scalar_select %p5017, %s15, 1
        %s5019 = smul.addr %s5018, 2
        %s5020 = scalar_lea.vmem %s4, %s5019
        // Predicated region
        $region89: #{qnetwork_forward.7} parent=83 // pred_check
          %p5021 = pneg %p132
        $region90: #{qnetwork_forward.7} parent=83 // pred_check_branch
          %5023 = sbr.rel (%p5021) target = $region92
        $region91: #{qnetwork_forward.7} parent=83 // pred_region
          _
        $region92: #{qnetwork_forward.7} parent=83 // pred_fallthru
          _
      $region84: #{qnetwork_forward.7} parent=5 // pred_fallthru
        _
      %p5024 = scmp.le.s32.totalorder 2, %s10
      // Predicated region
      $region93: #{qnetwork_forward.7} parent=5 // pred_check
        %p5025 = pneg %p5024
      $region94: #{qnetwork_forward.7} parent=5 // pred_check_branch
        %5027 = sbr.rel (%p5025) target = $region96
      $region95: #{qnetwork_forward.7} parent=5 // pred_region
        %s5028 = ssub.s32 %s10, 2
        // Predicated region
        $region97: #{qnetwork_forward.7} parent=95 // pred_check
          %p5029 = pneg %p138
        $region98: #{qnetwork_forward.7} parent=95 // pred_check_branch
          %5031 = sbr.rel (%p5029) target = $region100
        $region99: #{qnetwork_forward.7} parent=95 // pred_region
          %p5032 = scmp.lt.s32.totalorder %s16, 1
          %s5033 = scalar_select %p5032, %s16, 1
          %s5034 = smul.addr %s5033, 2
          %s5035 = scalar_lea.vmem %s4, %s5034
        $region100: #{qnetwork_forward.7} parent=95 // pred_fallthru
          _
      $region96: #{qnetwork_forward.7} parent=5 // pred_fallthru
        _
    $region6: #{qnetwork_forward.7} parent=1 // loop_footer
      %s14 = sadd.s32 1, %s10
    $region7: #{qnetwork_forward.7} parent=1 // loop_footer_branch
      %9 = sbr.rel target = $region3
    $region8: #{qnetwork_forward.7} parent=1 // loop_exit
      _

</llo_original>
